<compile_context>
chip_gen: v7x
topology: tpu7x:2x2x1
jax: 0.10.0
libtpu: 0.0.40
codegen_flags: <defaults>
</compile_context>

<pallas_src>
import functools

import jax
import jax.numpy as jnp
from jax.experimental import pallas as pl
from jax.experimental.pallas import tpu as pltpu

_VMEM_LIMIT = 32 * 1024 * 1024  # above v5e's 16 MiB default; within v6e/v7x budgets


# ------------------------------------------------------------ in-kernel helpers ----

def _group_norm(h, gamma, beta, *, groups, eps, silu):
    """Lane-dense GroupNorm on a (L, C) tile (f32). gamma/beta: (1, C)."""
    L, C = h.shape
    cg = C // groups
    # One-hot group-membership mask (groups, C), built from 2D iotas (no int division).
    gidx = jax.lax.broadcasted_iota(jnp.int32, (groups, C), 0)
    cidx = jax.lax.broadcasted_iota(jnp.int32, (groups, C), 1)
    mask = jnp.logical_and(cidx >= gidx * cg, cidx < (gidx + 1) * cg).astype(jnp.float32)

    # Per-channel moments over the spatial axis, then per-group via the mask.
    s1 = jnp.sum(h, axis=0, keepdims=True)                       # (1, C)
    s2 = jnp.sum(h * h, axis=0, keepdims=True)                   # (1, C)
    n = float(L * cg)
    gs1 = jnp.sum(mask * s1, axis=-1, keepdims=True)             # (groups, 1)
    gs2 = jnp.sum(mask * s2, axis=-1, keepdims=True)             # (groups, 1)
    mean_g = gs1 / n
    var_g = gs2 / n - mean_g * mean_g
    inv_g = jax.lax.rsqrt(var_g + eps)                           # (groups, 1)

    # Broadcast group stats back to per-channel rows (full-width, single pass).
    mean_c = jnp.sum(mask * mean_g, axis=0, keepdims=True)       # (1, C)
    inv_c = jnp.sum(mask * inv_g, axis=0, keepdims=True)         # (1, C)

    y = (h - mean_c) * inv_c * gamma + beta
    if silu:
        y = y * jax.nn.sigmoid(y)
    return y


def _conv3x3(h, w, b, *, H, W):
    """3x3 'same' conv as one im2col matmul. h: (L, Ci) f32; w: (9*Ci, Co) bf16."""
    L, Ci = h.shape
    x3 = h.astype(jnp.bfloat16).reshape(H, W, Ci)                # minor dim unchanged
    # Zero-pad H and W inside the kernel (no HBM padded copy), in bf16.
    zc = jnp.zeros((H, 1, Ci), jnp.bfloat16)
    xw = jnp.concatenate([zc, x3, zc], axis=1)                   # (H, W+2, Ci)
    zr = jnp.zeros((1, W + 2, Ci), jnp.bfloat16)
    xp = jnp.concatenate([zr, xw, zr], axis=0)                   # (H+2, W+2, Ci)
    # im2col: (H, W, 9*Ci) patch tensor, tap order (dy, dx) matches the weight reshape.
    patches = jnp.concatenate(
        [xp[dy:dy + H, dx:dx + W, :] for dy in range(3) for dx in range(3)],
        axis=-1)
    patches = patches.reshape(L, 9 * Ci)
    y = jnp.dot(patches, w, preferred_element_type=jnp.float32)
    return y + b                                                 # (L, Co) f32


def _resnet_core(x, temb, g1, be1, w1, b1, g2, be2, w2, b2, wr, br,
                 *, H, W, groups, eps):
    """x: (L, Cin) f32, temb: (1, Cout) f32. Returns (L, Cout) f32."""
    h = _group_norm(x, g1, be1, groups=groups, eps=eps, silu=True)
    h = _conv3x3(h, w1, b1, H=H, W=W)                            # (L, Cout)
    h = h + temb                                                 # broadcast over spatial
    h = _group_norm(h, g2, be2, groups=groups, eps=eps, silu=True)
    h = _conv3x3(h, w2, b2, H=H, W=W)                            # (L, Cout)
    # 1x1-conv residual from the block input, fused add.
    res = jnp.dot(x.astype(jnp.bfloat16), wr, preferred_element_type=jnp.float32) + br
    return h + res


def _attn_core(x, g, be, wqkv, bqkv, wo3, bo, *, num_heads, groups, eps):
    """x: (L, C) f32.  Returns x + attention(GN(x)) as (L, C) f32."""
    L, C = x.shape
    hd = C // num_heads
    scale = 1.0 / float(hd) ** 0.5

    # GroupNorm (no SiLU) — PyTorch applies attn_norms to the (b, c, h*w) view.
    xn = _group_norm(x, g, be, groups=groups, eps=eps, silu=False)

    # QKV projection: [q | k | v] packed along the output dim of wqkv (C, 3C).
    qkv = jnp.dot(xn.astype(jnp.bfloat16), wqkv,
                  preferred_element_type=jnp.float32) + bqkv     # (L, 3C) f32

    def split_heads(off):                                        # -> (nh, L, hd) bf16
        return jnp.stack(
            [qkv[:, off + h * hd: off + (h + 1) * hd].astype(jnp.bfloat16)
             for h in range(num_heads)], axis=0)

    q = split_heads(0 * C)
    k = split_heads(1 * C)
    v = split_heads(2 * C)

    # Batched-head attention: one einsum per stage (heads in the leading batch dim).
    s = jnp.einsum('hqd,hkd->hqk', q, k,
                   preferred_element_type=jnp.float32) * scale   # (nh, L, L)
    s = s - jnp.max(s, axis=-1, keepdims=True)
    p = jnp.exp(s)
    p = p * pl.reciprocal(jnp.sum(p, axis=-1, keepdims=True), approx=True)
    ctx = jnp.einsum('hqk,hkd->hqd', p.astype(jnp.bfloat16), v,
                     preferred_element_type=jnp.float32)         # (nh, L, hd)

    # Output projection with per-head weight slabs (nh, hd, C): head merge happens inside
    # the contraction + sum, so no lane-axis concatenate is needed.
    out_h = jnp.einsum('hqd,hdc->hqc', ctx.astype(jnp.bfloat16), wo3,
                       preferred_element_type=jnp.float32)       # (nh, L, C)
    attn_out = jnp.sum(out_h, axis=0) + bo                       # (L, C)

    # Residual add (PyTorch: out = out + attn_out with attn_in = GN(out)).
    return x + attn_out


# ------------------------------------------------------------ fused resnet block ----

def _resnet_kernel(x_ref, temb_ref, g1_ref, be1_ref, w1_ref, b1_ref,
                   g2_ref, be2_ref, w2_ref, b2_ref, wr_ref, br_ref,
                   o_ref, *, H, W, groups, eps):
    o_ref[0] = _resnet_core(
        x_ref[0], temb_ref[0],
        g1_ref[...], be1_ref[...], w1_ref[...], b1_ref[...],
        g2_ref[...], be2_ref[...], w2_ref[...], b2_ref[...],
        wr_ref[...], br_ref[...],
        H=H, W=W, groups=groups, eps=eps)


def _resnet_block(x_blc, temb_row, p, *, H, W, groups, eps=1e-5):
    B, L, Cin = x_blc.shape
    Cout = p['b1'].shape[-1]
    assert Cin % groups == 0 and Cout % groups == 0
    kernel = functools.partial(_resnet_kernel, H=H, W=W, groups=groups, eps=eps)
    batch3 = lambda b: (b, 0, 0)
    whole2 = lambda b: (0, 0)
    temb3 = temb_row.reshape(B, 1, Cout)
    return pl.pallas_call(
        kernel,
        out_shape=jax.ShapeDtypeStruct((B, L, Cout), jnp.float32),
        grid=(B,),
        in_specs=[
            pl.BlockSpec((1, L, Cin), batch3),                   # x
            pl.BlockSpec((1, 1, Cout), batch3),                  # projected t_emb
            pl.BlockSpec((1, Cin), whole2),                      # gn1 gamma
            pl.BlockSpec((1, Cin), whole2),                      # gn1 beta
            pl.BlockSpec((9 * Cin, Cout), whole2),               # conv1 weight (bf16)
            pl.BlockSpec((1, Cout), whole2),                     # conv1 bias
            pl.BlockSpec((1, Cout), whole2),                     # gn2 gamma
            pl.BlockSpec((1, Cout), whole2),                     # gn2 beta
            pl.BlockSpec((9 * Cout, Cout), whole2),              # conv2 weight (bf16)
            pl.BlockSpec((1, Cout), whole2),                     # conv2 bias
            pl.BlockSpec((Cin, Cout), whole2),                   # residual 1x1 weight (bf16)
            pl.BlockSpec((1, Cout), whole2),                     # residual 1x1 bias
        ],
        out_specs=pl.BlockSpec((1, L, Cout), batch3),
        compiler_params=pltpu.CompilerParams(
            dimension_semantics=("parallel",),                   # v7x: 2 TCs split batch
            vmem_limit_bytes=_VMEM_LIMIT),
    )(x_blc, temb3, p['gn1_g'], p['gn1_b'], p['w1'], p['b1'],
      p['gn2_g'], p['gn2_b'], p['w2'], p['b2'], p['wr'], p['br'])


# ------------------------------------------- fused (attention + resnet) layer -------

def _attn_resnet_kernel(x_ref, temb_ref,
                        ag_ref, abe_ref, wqkv_ref, bqkv_ref, wo3_ref, bo_ref,
                        g1_ref, be1_ref, w1_ref, b1_ref,
                        g2_ref, be2_ref, w2_ref, b2_ref, wr_ref, br_ref,
                        o_ref, *, H, W, num_heads, groups, eps):
    x = x_ref[0]                                                 # (L, C) f32
    # out = out + attention(GN(out))
    h = _attn_core(x, ag_ref[...], abe_ref[...], wqkv_ref[...], bqkv_ref[...],
                   wo3_ref[...], bo_ref[...],
                   num_heads=num_heads, groups=groups, eps=eps)
    # followed by the next resnet block on h (h is also its residual input)
    o_ref[0] = _resnet_core(
        h, temb_ref[0],
        g1_ref[...], be1_ref[...], w1_ref[...], b1_ref[...],
        g2_ref[...], be2_ref[...], w2_ref[...], b2_ref[...],
        wr_ref[...], br_ref[...],
        H=H, W=W, groups=groups, eps=eps)


def _attn_resnet_block(x_blc, temb_row, ap, rp, *, H, W, num_heads, groups, eps=1e-5):
    B, L, C = x_blc.shape
    Cout = rp['b1'].shape[-1]
    assert C == Cout and C % num_heads == 0 and C % groups == 0
    hd = C // num_heads
    wo3 = ap['wo'].reshape(num_heads, hd, C)                     # host-side reshape (bf16)
    kernel = functools.partial(_attn_resnet_kernel, H=H, W=W,
                               num_heads=num_heads, groups=groups, eps=eps)
    batch3 = lambda b: (b, 0, 0)
    whole2 = lambda b: (0, 0)
    whole3 = lambda b: (0, 0, 0)
    temb3 = temb_row.reshape(B, 1, Cout)
    return pl.pallas_call(
        kernel,
        out_shape=jax.ShapeDtypeStruct((B, L, Cout), jnp.float32),
        grid=(B,),
        in_specs=[
            pl.BlockSpec((1, L, C), batch3),                     # out (pre-norm residual)
            pl.BlockSpec((1, 1, Cout), batch3),                  # projected t_emb
            pl.BlockSpec((1, C), whole2),                        # attn gn gamma
            pl.BlockSpec((1, C), whole2),                        # attn gn beta
            pl.BlockSpec((C, 3 * C), whole2),                    # wqkv (bf16)
            pl.BlockSpec((1, 3 * C), whole2),                    # bqkv
            pl.BlockSpec((num_heads, hd, C), whole3),            # wo per-head (bf16)
            pl.BlockSpec((1, C), whole2),                        # bo
            pl.BlockSpec((1, C), whole2),                        # gn1 gamma
            pl.BlockSpec((1, C), whole2),                        # gn1 beta
            pl.BlockSpec((9 * C, Cout), whole2),                 # conv1 weight (bf16)
            pl.BlockSpec((1, Cout), whole2),                     # conv1 bias
            pl.BlockSpec((1, Cout), whole2),                     # gn2 gamma
            pl.BlockSpec((1, Cout), whole2),                     # gn2 beta
            pl.BlockSpec((9 * Cout, Cout), whole2),              # conv2 weight (bf16)
            pl.BlockSpec((1, Cout), whole2),                     # conv2 bias
            pl.BlockSpec((C, Cout), whole2),                     # residual 1x1 weight (bf16)
            pl.BlockSpec((1, Cout), whole2),                     # residual 1x1 bias
        ],
        out_specs=pl.BlockSpec((1, L, Cout), batch3),
        compiler_params=pltpu.CompilerParams(
            dimension_semantics=("parallel",),
            vmem_limit_bytes=_VMEM_LIMIT),
    )(x_blc, temb3,
      ap['gn_g'], ap['gn_b'], ap['wqkv'], ap['bqkv'], wo3, ap['bo'],
      rp['gn1_g'], rp['gn1_b'], rp['w1'], rp['b1'],
      rp['gn2_g'], rp['gn2_b'], rp['w2'], rp['b2'], rp['wr'], rp['br'])


# -------------------------------------------------------------------- MidBlock ------

def mid_block_forward(x_nchw, t_emb, params, *, num_layers, num_heads, groups=8):
    B, Cin, H, W = x_nchw.shape
    # NCHW interface -> (B, L, C) internal (channels on the lane axis).
    x = jnp.transpose(x_nchw, (0, 2, 3, 1)).reshape(B, H * W, Cin).astype(jnp.float32)

    def temb_proj(p):
        # SiLU -> Linear on the tiny (B, t_dim) embedding: plain XLA (kernel is overhead).
        t = jax.nn.silu(t_emb.astype(jnp.float32))
        return jnp.dot(t, p['wt']) + p['bt']                      # (B, Cout)

    rp = params['resnets'][0]
    out = _resnet_block(x, temb_proj(rp), rp, H=H, W=W, groups=groups)
    for i in range(num_layers):
        ap = params['attn'][i]
        rp = params['resnets'][i + 1]
        out = _attn_resnet_block(out, temb_proj(rp), ap, rp,
                                 H=H, W=W, num_heads=num_heads, groups=groups)

    Cout = out.shape[-1]
    return jnp.transpose(out.reshape(B, H, W, Cout), (0, 3, 1, 2))      # back to NCHW


# ------------------------------------------------------------------ parameters ------

def init_params(key, in_ch, out_ch, t_dim, num_layers):
    keys = iter(jax.random.split(key, 256))
    bf = jnp.bfloat16

    def nrm(shape, scale=0.05, dtype=jnp.float32):
        return (scale * jax.random.normal(next(keys), shape, jnp.float32)).astype(dtype)

    resnets = []
    for i in range(num_layers + 1):
        ci = in_ch if i == 0 else out_ch
        resnets.append(dict(
            gn1_g=1.0 + nrm((1, ci)), gn1_b=nrm((1, ci)),
            # conv weights stored pre-reshaped for im2col: (3,3,Ci,Co) -> (9*Ci, Co), bf16
            w1=nrm((3, 3, ci, out_ch)).reshape(9 * ci, out_ch).astype(bf),
            b1=nrm((1, out_ch)),
            wt=nrm((t_dim, out_ch)), bt=nrm((1, out_ch)),
            gn2_g=1.0 + nrm((1, out_ch)), gn2_b=nrm((1, out_ch)),
            w2=nrm((3, 3, out_ch, out_ch)).reshape(9 * out_ch, out_ch).astype(bf),
            b2=nrm((1, out_ch)),
            wr=nrm((ci, out_ch), dtype=bf), br=nrm((1, out_ch)),
        ))
    attns = []
    for _ in range(num_layers):
        attns.append(dict(
            gn_g=1.0 + nrm((1, out_ch)), gn_b=nrm((1, out_ch)),
            # wqkv packs [q|k|v] along the output dim, matching the kernel's split order.
            wqkv=nrm((out_ch, 3 * out_ch), dtype=bf), bqkv=nrm((1, 3 * out_ch)),
            wo=nrm((out_ch, out_ch), dtype=bf), bo=nrm((1, out_ch)),
        ))
    return dict(resnets=resnets, attn=attns)


# ------------------------------------------------------------------------ main ------

if __name__ == "__main__":
    B, C_IN, C_OUT, H, W = 2, 16, 32, 8, 8
    T_DIM, N_HEADS, N_LAYERS = 32, 4, 1

    key = jax.random.PRNGKey(0)
    kx, kt, kp = jax.random.split(key, 3)
    x = jax.random.normal(kx, (B, C_IN, H, W), jnp.float32)       # NCHW like PyTorch
    t_emb = jax.random.normal(kt, (B, T_DIM), jnp.float32)
    params = init_params(kp, C_IN, C_OUT, T_DIM, N_LAYERS)

    fwd = jax.jit(functools.partial(mid_block_forward,
                                    num_layers=N_LAYERS, num_heads=N_HEADS))
    out = fwd(x, t_emb, params)
    out = jax.block_until_ready(out)
    assert out.shape == (B, C_OUT, H, W), out.shape
    assert bool(jnp.all(jnp.isfinite(out)))
    print("KERNEL_OK")
</pallas_src>

<mosaic_0001>
module attributes {stable_mosaic.version = 11 : i64} {
  func.func @_resnet_kernel(%arg0: i32, %arg1: memref<1x64x16xf32, #tpu.memory_space<vmem>>, %arg2: memref<1x1x32xf32, #tpu.memory_space<vmem>>, %arg3: memref<1x16xf32, #tpu.memory_space<vmem>>, %arg4: memref<1x16xf32, #tpu.memory_space<vmem>>, %arg5: memref<144x32xbf16, #tpu.memory_space<vmem>>, %arg6: memref<1x32xf32, #tpu.memory_space<vmem>>, %arg7: memref<1x32xf32, #tpu.memory_space<vmem>>, %arg8: memref<1x32xf32, #tpu.memory_space<vmem>>, %arg9: memref<288x32xbf16, #tpu.memory_space<vmem>>, %arg10: memref<1x32xf32, #tpu.memory_space<vmem>>, %arg11: memref<16x32xbf16, #tpu.memory_space<vmem>>, %arg12: memref<1x32xf32, #tpu.memory_space<vmem>>, %arg13: memref<1x64x32xf32, #tpu.memory_space<vmem>>) attributes {dimension_semantics = [#tpu.dimension_semantics<parallel>], iteration_bounds = array<i64: 2>, scalar_prefetch = 0 : i64, scratch_operands = 0 : i64, tpu.core_type = #tpu.core_type<tc>, window_params = [{transform_indices = @transform_0, window_bounds = array<i64: 1, 64, 16>}, {transform_indices = @transform_1, window_bounds = array<i64: 1, 1, 32>}, {pipeline_mode = #tpu.pipeline_mode<synchronous>, transform_indices = @transform_2, window_bounds = array<i64: 1, 16>}, {pipeline_mode = #tpu.pipeline_mode<synchronous>, transform_indices = @transform_3, window_bounds = array<i64: 1, 16>}, {pipeline_mode = #tpu.pipeline_mode<synchronous>, transform_indices = @transform_4, window_bounds = array<i64: 144, 32>}, {pipeline_mode = #tpu.pipeline_mode<synchronous>, transform_indices = @transform_5, window_bounds = array<i64: 1, 32>}, {pipeline_mode = #tpu.pipeline_mode<synchronous>, transform_indices = @transform_6, window_bounds = array<i64: 1, 32>}, {pipeline_mode = #tpu.pipeline_mode<synchronous>, transform_indices = @transform_7, window_bounds = array<i64: 1, 32>}, {pipeline_mode = #tpu.pipeline_mode<synchronous>, transform_indices = @transform_8, window_bounds = array<i64: 288, 32>}, {pipeline_mode = #tpu.pipeline_mode<synchronous>, transform_indices = @transform_9, window_bounds = array<i64: 1, 32>}, {pipeline_mode = #tpu.pipeline_mode<synchronous>, transform_indices = @transform_10, window_bounds = array<i64: 16, 32>}, {pipeline_mode = #tpu.pipeline_mode<synchronous>, transform_indices = @transform_11, window_bounds = array<i64: 1, 32>}, {transform_indices = @transform_12, window_bounds = array<i64: 1, 64, 32>}]} {
    %c0 = arith.constant 0 : index
    %c0_0 = arith.constant 0 : index
    %c0_1 = arith.constant 0 : index
    %0 = vector.load %arg1[%c0, %c0_0, %c0_1] : memref<1x64x16xf32, #tpu.memory_space<vmem>>, vector<1x64x16xf32>
    %1 = vector.shape_cast %0 : vector<1x64x16xf32> to vector<64x16xf32>
    %c0_2 = arith.constant 0 : index
    %c0_3 = arith.constant 0 : index
    %c0_4 = arith.constant 0 : index
    %2 = vector.load %arg2[%c0_2, %c0_3, %c0_4] : memref<1x1x32xf32, #tpu.memory_space<vmem>>, vector<1x1x32xf32>
    %3 = vector.shape_cast %2 : vector<1x1x32xf32> to vector<1x32xf32>
    %c0_5 = arith.constant 0 : index
    %c0_6 = arith.constant 0 : index
    %4 = vector.load %arg3[%c0_5, %c0_6] : memref<1x16xf32, #tpu.memory_space<vmem>>, vector<1x16xf32>
    %c0_7 = arith.constant 0 : index
    %c0_8 = arith.constant 0 : index
    %5 = vector.load %arg4[%c0_7, %c0_8] : memref<1x16xf32, #tpu.memory_space<vmem>>, vector<1x16xf32>
    %c0_9 = arith.constant 0 : index
    %c0_10 = arith.constant 0 : index
    %6 = vector.load %arg5[%c0_9, %c0_10] : memref<144x32xbf16, #tpu.memory_space<vmem>>, vector<144x32xbf16>
    %c0_11 = arith.constant 0 : index
    %c0_12 = arith.constant 0 : index
    %7 = vector.load %arg6[%c0_11, %c0_12] : memref<1x32xf32, #tpu.memory_space<vmem>>, vector<1x32xf32>
    %c0_13 = arith.constant 0 : index
    %c0_14 = arith.constant 0 : index
    %8 = vector.load %arg7[%c0_13, %c0_14] : memref<1x32xf32, #tpu.memory_space<vmem>>, vector<1x32xf32>
    %c0_15 = arith.constant 0 : index
    %c0_16 = arith.constant 0 : index
    %9 = vector.load %arg8[%c0_15, %c0_16] : memref<1x32xf32, #tpu.memory_space<vmem>>, vector<1x32xf32>
    %c0_17 = arith.constant 0 : index
    %c0_18 = arith.constant 0 : index
    %10 = vector.load %arg9[%c0_17, %c0_18] : memref<288x32xbf16, #tpu.memory_space<vmem>>, vector<288x32xbf16>
    %c0_19 = arith.constant 0 : index
    %c0_20 = arith.constant 0 : index
    %11 = vector.load %arg10[%c0_19, %c0_20] : memref<1x32xf32, #tpu.memory_space<vmem>>, vector<1x32xf32>
    %c0_21 = arith.constant 0 : index
    %c0_22 = arith.constant 0 : index
    %12 = vector.load %arg11[%c0_21, %c0_22] : memref<16x32xbf16, #tpu.memory_space<vmem>>, vector<16x32xbf16>
    %c0_23 = arith.constant 0 : index
    %c0_24 = arith.constant 0 : index
    %13 = vector.load %arg12[%c0_23, %c0_24] : memref<1x32xf32, #tpu.memory_space<vmem>>, vector<1x32xf32>
    %14 = tpu.iota {dimensions = array<i32: 0>} : vector<8x16xi32>
    %15 = tpu.iota {dimensions = array<i32: 1>} : vector<8x16xi32>
    %c2_i32 = arith.constant 2 : i32
    %16 = vector.broadcast %c2_i32 : i32 to vector<8x16xi32>
    %17 = arith.muli %14, %16 : vector<8x16xi32>
    %18 = arith.cmpi sge, %15, %17 : vector<8x16xi32>
    %c1_i32 = arith.constant 1 : i32
    %19 = vector.broadcast %c1_i32 : i32 to vector<8x16xi32>
    %20 = arith.addi %14, %19 : vector<8x16xi32>
    %c2_i32_25 = arith.constant 2 : i32
    %21 = vector.broadcast %c2_i32_25 : i32 to vector<8x16xi32>
    %22 = arith.muli %20, %21 : vector<8x16xi32>
    %23 = arith.cmpi slt, %15, %22 : vector<8x16xi32>
    %24 = arith.andi %18, %23 : vector<8x16xi1>
    %25 = arith.extui %24 : vector<8x16xi1> to vector<8x16xi32>
    %26 = arith.sitofp %25 : vector<8x16xi32> to vector<8x16xf32>
    %cst = arith.constant dense<0.000000e+00> : vector<16xf32>
    %27 = vector.multi_reduction <add>, %1, %cst [0] : vector<64x16xf32> to vector<16xf32>
    %28 = vector.shape_cast %27 : vector<16xf32> to vector<1x16xf32>
    %29 = arith.mulf %1, %1 : vector<64x16xf32>
    %cst_26 = arith.constant dense<0.000000e+00> : vector<16xf32>
    %30 = vector.multi_reduction <add>, %29, %cst_26 [0] : vector<64x16xf32> to vector<16xf32>
    %31 = vector.shape_cast %30 : vector<16xf32> to vector<1x16xf32>
    %32 = vector.broadcast %28 : vector<1x16xf32> to vector<8x16xf32>
    %33 = arith.mulf %26, %32 : vector<8x16xf32>
    %cst_27 = arith.constant dense<0.000000e+00> : vector<8xf32>
    %34 = vector.multi_reduction <add>, %33, %cst_27 [1] : vector<8x16xf32> to vector<8xf32>
    %35 = vector.shape_cast %34 : vector<8xf32> to vector<8x1xf32>
    %36 = vector.broadcast %31 : vector<1x16xf32> to vector<8x16xf32>
    %37 = arith.mulf %26, %36 : vector<8x16xf32>
    %cst_28 = arith.constant dense<0.000000e+00> : vector<8xf32>
    %38 = vector.multi_reduction <add>, %37, %cst_28 [1] : vector<8x16xf32> to vector<8xf32>
    %39 = vector.shape_cast %38 : vector<8xf32> to vector<8x1xf32>
    %cst_29 = arith.constant 1.280000e+02 : f32
    %40 = vector.broadcast %cst_29 : f32 to vector<8x1xf32>
    %41 = arith.divf %35, %40 : vector<8x1xf32>
    %cst_30 = arith.constant 1.280000e+02 : f32
    %42 = vector.broadcast %cst_30 : f32 to vector<8x1xf32>
    %43 = arith.divf %39, %42 : vector<8x1xf32>
    %44 = arith.mulf %41, %41 : vector<8x1xf32>
    %45 = arith.subf %43, %44 : vector<8x1xf32>
    %cst_31 = arith.constant 9.99999974E-6 : f32
    %46 = vector.broadcast %cst_31 : f32 to vector<8x1xf32>
    %47 = arith.addf %45, %46 : vector<8x1xf32>
    %48 = math.rsqrt %47 : vector<8x1xf32>
    %49 = vector.broadcast %41 : vector<8x1xf32> to vector<8x16xf32>
    %50 = arith.mulf %26, %49 : vector<8x16xf32>
    %cst_32 = arith.constant dense<0.000000e+00> : vector<16xf32>
    %51 = vector.multi_reduction <add>, %50, %cst_32 [0] : vector<8x16xf32> to vector<16xf32>
    %52 = vector.shape_cast %51 : vector<16xf32> to vector<1x16xf32>
    %53 = vector.broadcast %48 : vector<8x1xf32> to vector<8x16xf32>
    %54 = arith.mulf %26, %53 : vector<8x16xf32>
    %cst_33 = arith.constant dense<0.000000e+00> : vector<16xf32>
    %55 = vector.multi_reduction <add>, %54, %cst_33 [0] : vector<8x16xf32> to vector<16xf32>
    %56 = vector.shape_cast %55 : vector<16xf32> to vector<1x16xf32>
    %57 = vector.broadcast %52 : vector<1x16xf32> to vector<64x16xf32>
    %58 = arith.subf %1, %57 : vector<64x16xf32>
    %59 = vector.broadcast %56 : vector<1x16xf32> to vector<64x16xf32>
    %60 = arith.mulf %58, %59 : vector<64x16xf32>
    %61 = vector.broadcast %4 : vector<1x16xf32> to vector<64x16xf32>
    %62 = arith.mulf %60, %61 : vector<64x16xf32>
    %63 = vector.broadcast %5 : vector<1x16xf32> to vector<64x16xf32>
    %64 = arith.addf %62, %63 : vector<64x16xf32>
    %65 = arith.negf %64 : vector<64x16xf32>
    %66 = math.exp %65 : vector<64x16xf32>
    %cst_34 = arith.constant 1.000000e+00 : f32
    %67 = vector.broadcast %cst_34 : f32 to vector<64x16xf32>
    %68 = arith.addf %67, %66 : vector<64x16xf32>
    %69 = arith.divf %67, %68 : vector<64x16xf32>
    %70 = arith.mulf %64, %69 : vector<64x16xf32>
    %71 = arith.truncf %70 : vector<64x16xf32> to vector<64x16xbf16>
    %72 = vector.shape_cast %71 : vector<64x16xbf16> to vector<8x8x16xbf16>
    %cst_35 = arith.constant 0.000000e+00 : bf16
    %73 = vector.broadcast %cst_35 : bf16 to vector<8x1x16xbf16>
    %74 = tpu.concatenate %73, %72, %73 in 1 : vector<8x1x16xbf16>, vector<8x8x16xbf16>, vector<8x1x16xbf16> -> vector<8x10x16xbf16>
    %cst_36 = arith.constant 0.000000e+00 : bf16
    %75 = vector.broadcast %cst_36 : bf16 to vector<1x10x16xbf16>
    %76 = tpu.concatenate %75, %74, %75 in 0 : vector<1x10x16xbf16>, vector<8x10x16xbf16>, vector<1x10x16xbf16> -> vector<10x10x16xbf16>
    %77 = vector.extract_strided_slice %76 {offsets = [0, 0, 0], sizes = [8, 8, 16], strides = [1, 1, 1]} : vector<10x10x16xbf16> to vector<8x8x16xbf16>
    %78 = vector.extract_strided_slice %76 {offsets = [0, 1, 0], sizes = [8, 8, 16], strides = [1, 1, 1]} : vector<10x10x16xbf16> to vector<8x8x16xbf16>
    %79 = vector.extract_strided_slice %76 {offsets = [0, 2, 0], sizes = [8, 8, 16], strides = [1, 1, 1]} : vector<10x10x16xbf16> to vector<8x8x16xbf16>
    %80 = vector.extract_strided_slice %76 {offsets = [1, 0, 0], sizes = [8, 8, 16], strides = [1, 1, 1]} : vector<10x10x16xbf16> to vector<8x8x16xbf16>
    %81 = vector.extract_strided_slice %76 {offsets = [1, 1, 0], sizes = [8, 8, 16], strides = [1, 1, 1]} : vector<10x10x16xbf16> to vector<8x8x16xbf16>
    %82 = vector.extract_strided_slice %76 {offsets = [1, 2, 0], sizes = [8, 8, 16], strides = [1, 1, 1]} : vector<10x10x16xbf16> to vector<8x8x16xbf16>
    %83 = vector.extract_strided_slice %76 {offsets = [2, 0, 0], sizes = [8, 8, 16], strides = [1, 1, 1]} : vector<10x10x16xbf16> to vector<8x8x16xbf16>
    %84 = vector.extract_strided_slice %76 {offsets = [2, 1, 0], sizes = [8, 8, 16], strides = [1, 1, 1]} : vector<10x10x16xbf16> to vector<8x8x16xbf16>
    %85 = vector.extract_strided_slice %76 {offsets = [2, 2, 0], sizes = [8, 8, 16], strides = [1, 1, 1]} : vector<10x10x16xbf16> to vector<8x8x16xbf16>
    %86 = tpu.concatenate %77, %78, %79, %80, %81, %82, %83, %84, %85 in 2 : vector<8x8x16xbf16>, vector<8x8x16xbf16>, vector<8x8x16xbf16>, vector<8x8x16xbf16>, vector<8x8x16xbf16>, vector<8x8x16xbf16>, vector<8x8x16xbf16>, vector<8x8x16xbf16>, vector<8x8x16xbf16> -> vector<8x8x144xbf16>
    %87 = vector.shape_cast %86 : vector<8x8x144xbf16> to vector<64x144xbf16>
    %cst_37 = arith.constant dense<0.000000e+00> : vector<64x32xf32>
    %88 = tpu.matmul %87, %6, %cst_37 {dimension_numbers = #tpu.dot_dimension_numbers<[1], [0], [0], [1], [0, 0, 1, 1], [], []>} : vector<64x144xbf16>, vector<144x32xbf16>, vector<64x32xf32> -> vector<64x32xf32>
    %89 = vector.broadcast %7 : vector<1x32xf32> to vector<64x32xf32>
    %90 = arith.addf %88, %89 : vector<64x32xf32>
    %91 = vector.broadcast %3 : vector<1x32xf32> to vector<64x32xf32>
    %92 = arith.addf %90, %91 : vector<64x32xf32>
    %93 = tpu.iota {dimensions = array<i32: 0>} : vector<8x32xi32>
    %94 = tpu.iota {dimensions = array<i32: 1>} : vector<8x32xi32>
    %c4_i32 = arith.constant 4 : i32
    %95 = vector.broadcast %c4_i32 : i32 to vector<8x32xi32>
    %96 = arith.muli %93, %95 : vector<8x32xi32>
    %97 = arith.cmpi sge, %94, %96 : vector<8x32xi32>
    %c1_i32_38 = arith.constant 1 : i32
    %98 = vector.broadcast %c1_i32_38 : i32 to vector<8x32xi32>
    %99 = arith.addi %93, %98 : vector<8x32xi32>
    %c4_i32_39 = arith.constant 4 : i32
    %100 = vector.broadcast %c4_i32_39 : i32 to vector<8x32xi32>
    %101 = arith.muli %99, %100 : vector<8x32xi32>
    %102 = arith.cmpi slt, %94, %101 : vector<8x32xi32>
    %103 = arith.andi %97, %102 : vector<8x32xi1>
    %104 = arith.extui %103 : vector<8x32xi1> to vector<8x32xi32>
    %105 = arith.sitofp %104 : vector<8x32xi32> to vector<8x32xf32>
    %cst_40 = arith.constant dense<0.000000e+00> : vector<32xf32>
    %106 = vector.multi_reduction <add>, %92, %cst_40 [0] : vector<64x32xf32> to vector<32xf32>
    %107 = vector.shape_cast %106 : vector<32xf32> to vector<1x32xf32>
    %108 = arith.mulf %92, %92 : vector<64x32xf32>
    %cst_41 = arith.constant dense<0.000000e+00> : vector<32xf32>
    %109 = vector.multi_reduction <add>, %108, %cst_41 [0] : vector<64x32xf32> to vector<32xf32>
    %110 = vector.shape_cast %109 : vector<32xf32> to vector<1x32xf32>
    %111 = vector.broadcast %107 : vector<1x32xf32> to vector<8x32xf32>
    %112 = arith.mulf %105, %111 : vector<8x32xf32>
    %cst_42 = arith.constant dense<0.000000e+00> : vector<8xf32>
    %113 = vector.multi_reduction <add>, %112, %cst_42 [1] : vector<8x32xf32> to vector<8xf32>
    %114 = vector.shape_cast %113 : vector<8xf32> to vector<8x1xf32>
    %115 = vector.broadcast %110 : vector<1x32xf32> to vector<8x32xf32>
    %116 = arith.mulf %105, %115 : vector<8x32xf32>
    %cst_43 = arith.constant dense<0.000000e+00> : vector<8xf32>
    %117 = vector.multi_reduction <add>, %116, %cst_43 [1] : vector<8x32xf32> to vector<8xf32>
    %118 = vector.shape_cast %117 : vector<8xf32> to vector<8x1xf32>
    %cst_44 = arith.constant 2.560000e+02 : f32
    %119 = vector.broadcast %cst_44 : f32 to vector<8x1xf32>
    %120 = arith.divf %114, %119 : vector<8x1xf32>
    %cst_45 = arith.constant 2.560000e+02 : f32
    %121 = vector.broadcast %cst_45 : f32 to vector<8x1xf32>
    %122 = arith.divf %118, %121 : vector<8x1xf32>
    %123 = arith.mulf %120, %120 : vector<8x1xf32>
    %124 = arith.subf %122, %123 : vector<8x1xf32>
    %cst_46 = arith.constant 9.99999974E-6 : f32
    %125 = vector.broadcast %cst_46 : f32 to vector<8x1xf32>
    %126 = arith.addf %124, %125 : vector<8x1xf32>
    %127 = math.rsqrt %126 : vector<8x1xf32>
    %128 = vector.broadcast %120 : vector<8x1xf32> to vector<8x32xf32>
    %129 = arith.mulf %105, %128 : vector<8x32xf32>
    %cst_47 = arith.constant dense<0.000000e+00> : vector<32xf32>
    %130 = vector.multi_reduction <add>, %129, %cst_47 [0] : vector<8x32xf32> to vector<32xf32>
    %131 = vector.shape_cast %130 : vector<32xf32> to vector<1x32xf32>
    %132 = vector.broadcast %127 : vector<8x1xf32> to vector<8x32xf32>
    %133 = arith.mulf %105, %132 : vector<8x32xf32>
    %cst_48 = arith.constant dense<0.000000e+00> : vector<32xf32>
    %134 = vector.multi_reduction <add>, %133, %cst_48 [0] : vector<8x32xf32> to vector<32xf32>
    %135 = vector.shape_cast %134 : vector<32xf32> to vector<1x32xf32>
    %136 = vector.broadcast %131 : vector<1x32xf32> to vector<64x32xf32>
    %137 = arith.subf %92, %136 : vector<64x32xf32>
    %138 = vector.broadcast %135 : vector<1x32xf32> to vector<64x32xf32>
    %139 = arith.mulf %137, %138 : vector<64x32xf32>
    %140 = vector.broadcast %8 : vector<1x32xf32> to vector<64x32xf32>
    %141 = arith.mulf %139, %140 : vector<64x32xf32>
    %142 = vector.broadcast %9 : vector<1x32xf32> to vector<64x32xf32>
    %143 = arith.addf %141, %142 : vector<64x32xf32>
    %144 = arith.negf %143 : vector<64x32xf32>
    %145 = math.exp %144 : vector<64x32xf32>
    %cst_49 = arith.constant 1.000000e+00 : f32
    %146 = vector.broadcast %cst_49 : f32 to vector<64x32xf32>
    %147 = arith.addf %146, %145 : vector<64x32xf32>
    %148 = arith.divf %146, %147 : vector<64x32xf32>
    %149 = arith.mulf %143, %148 : vector<64x32xf32>
    %150 = arith.truncf %149 : vector<64x32xf32> to vector<64x32xbf16>
    %151 = vector.shape_cast %150 : vector<64x32xbf16> to vector<8x8x32xbf16>
    %cst_50 = arith.constant 0.000000e+00 : bf16
    %152 = vector.broadcast %cst_50 : bf16 to vector<8x1x32xbf16>
    %153 = tpu.concatenate %152, %151, %152 in 1 : vector<8x1x32xbf16>, vector<8x8x32xbf16>, vector<8x1x32xbf16> -> vector<8x10x32xbf16>
    %cst_51 = arith.constant 0.000000e+00 : bf16
    %154 = vector.broadcast %cst_51 : bf16 to vector<1x10x32xbf16>
    %155 = tpu.concatenate %154, %153, %154 in 0 : vector<1x10x32xbf16>, vector<8x10x32xbf16>, vector<1x10x32xbf16> -> vector<10x10x32xbf16>
    %156 = vector.extract_strided_slice %155 {offsets = [0, 0, 0], sizes = [8, 8, 32], strides = [1, 1, 1]} : vector<10x10x32xbf16> to vector<8x8x32xbf16>
    %157 = vector.extract_strided_slice %155 {offsets = [0, 1, 0], sizes = [8, 8, 32], strides = [1, 1, 1]} : vector<10x10x32xbf16> to vector<8x8x32xbf16>
    %158 = vector.extract_strided_slice %155 {offsets = [0, 2, 0], sizes = [8, 8, 32], strides = [1, 1, 1]} : vector<10x10x32xbf16> to vector<8x8x32xbf16>
    %159 = vector.extract_strided_slice %155 {offsets = [1, 0, 0], sizes = [8, 8, 32], strides = [1, 1, 1]} : vector<10x10x32xbf16> to vector<8x8x32xbf16>
    %160 = vector.extract_strided_slice %155 {offsets = [1, 1, 0], sizes = [8, 8, 32], strides = [1, 1, 1]} : vector<10x10x32xbf16> to vector<8x8x32xbf16>
    %161 = vector.extract_strided_slice %155 {offsets = [1, 2, 0], sizes = [8, 8, 32], strides = [1, 1, 1]} : vector<10x10x32xbf16> to vector<8x8x32xbf16>
    %162 = vector.extract_strided_slice %155 {offsets = [2, 0, 0], sizes = [8, 8, 32], strides = [1, 1, 1]} : vector<10x10x32xbf16> to vector<8x8x32xbf16>
    %163 = vector.extract_strided_slice %155 {offsets = [2, 1, 0], sizes = [8, 8, 32], strides = [1, 1, 1]} : vector<10x10x32xbf16> to vector<8x8x32xbf16>
    %164 = vector.extract_strided_slice %155 {offsets = [2, 2, 0], sizes = [8, 8, 32], strides = [1, 1, 1]} : vector<10x10x32xbf16> to vector<8x8x32xbf16>
    %165 = tpu.concatenate %156, %157, %158, %159, %160, %161, %162, %163, %164 in 2 : vector<8x8x32xbf16>, vector<8x8x32xbf16>, vector<8x8x32xbf16>, vector<8x8x32xbf16>, vector<8x8x32xbf16>, vector<8x8x32xbf16>, vector<8x8x32xbf16>, vector<8x8x32xbf16>, vector<8x8x32xbf16> -> vector<8x8x288xbf16>
    %166 = vector.shape_cast %165 : vector<8x8x288xbf16> to vector<64x288xbf16>
    %cst_52 = arith.constant dense<0.000000e+00> : vector<64x32xf32>
    %167 = tpu.matmul %166, %10, %cst_52 {dimension_numbers = #tpu.dot_dimension_numbers<[1], [0], [0], [1], [0, 0, 1, 1], [], []>} : vector<64x288xbf16>, vector<288x32xbf16>, vector<64x32xf32> -> vector<64x32xf32>
    %168 = vector.broadcast %11 : vector<1x32xf32> to vector<64x32xf32>
    %169 = arith.addf %167, %168 : vector<64x32xf32>
    %170 = arith.truncf %1 : vector<64x16xf32> to vector<64x16xbf16>
    %cst_53 = arith.constant dense<0.000000e+00> : vector<64x32xf32>
    %171 = tpu.matmul %170, %12, %cst_53 {dimension_numbers = #tpu.dot_dimension_numbers<[1], [0], [0], [1], [0, 0, 1, 1], [], []>} : vector<64x16xbf16>, vector<16x32xbf16>, vector<64x32xf32> -> vector<64x32xf32>
    %172 = vector.broadcast %13 : vector<1x32xf32> to vector<64x32xf32>
    %173 = arith.addf %171, %172 : vector<64x32xf32>
    %174 = arith.addf %169, %173 : vector<64x32xf32>
    %c0_54 = arith.constant 0 : index
    %c0_55 = arith.constant 0 : index
    %c0_56 = arith.constant 0 : index
    %175 = vector.load %arg13[%c0_54, %c0_55, %c0_56] : memref<1x64x32xf32, #tpu.memory_space<vmem>>, vector<1x64x32xf32>
    %176 = vector.shape_cast %175 : vector<1x64x32xf32> to vector<64x32xf32>
    %177 = vector.shape_cast %174 : vector<64x32xf32> to vector<1x64x32xf32>
    tpu.vector_store %arg13[%c0_54, %c0_55, %c0_56], %177 {strides = array<i32>} : memref<1x64x32xf32, #tpu.memory_space<vmem>>, vector<1x64x32xf32>,
    return
  }
  func.func @transform_0(%arg0: i32) -> (i32, i32, i32) {
    %c0_i32 = arith.constant 0 : i32
    %c0_i32_0 = arith.constant 0 : i32
    %c0_i32_1 = arith.constant 0 : i32
    return %arg0, %c0_i32, %c0_i32_0 : i32, i32, i32
  }
  func.func @transform_1(%arg0: i32) -> (i32, i32, i32) {
    %c0_i32 = arith.constant 0 : i32
    %c0_i32_0 = arith.constant 0 : i32
    %c0_i32_1 = arith.constant 0 : i32
    return %arg0, %c0_i32, %c0_i32_0 : i32, i32, i32
  }
  func.func @transform_2(%arg0: i32) -> (i32, i32) {
    %c0_i32 = arith.constant 0 : i32
    %c0_i32_0 = arith.constant 0 : i32
    %c0_i32_1 = arith.constant 0 : i32
    return %c0_i32, %c0_i32_0 : i32, i32
  }
  func.func @transform_3(%arg0: i32) -> (i32, i32) {
    %c0_i32 = arith.constant 0 : i32
    %c0_i32_0 = arith.constant 0 : i32
    %c0_i32_1 = arith.constant 0 : i32
    return %c0_i32, %c0_i32_0 : i32, i32
  }
  func.func @transform_4(%arg0: i32) -> (i32, i32) {
    %c0_i32 = arith.constant 0 : i32
    %c0_i32_0 = arith.constant 0 : i32
    %c0_i32_1 = arith.constant 0 : i32
    return %c0_i32, %c0_i32_0 : i32, i32
  }
  func.func @transform_5(%arg0: i32) -> (i32, i32) {
    %c0_i32 = arith.constant 0 : i32
    %c0_i32_0 = arith.constant 0 : i32
    %c0_i32_1 = arith.constant 0 : i32
    return %c0_i32, %c0_i32_0 : i32, i32
  }
  func.func @transform_6(%arg0: i32) -> (i32, i32) {
    %c0_i32 = arith.constant 0 : i32
    %c0_i32_0 = arith.constant 0 : i32
    %c0_i32_1 = arith.constant 0 : i32
    return %c0_i32, %c0_i32_0 : i32, i32
  }
  func.func @transform_7(%arg0: i32) -> (i32, i32) {
    %c0_i32 = arith.constant 0 : i32
    %c0_i32_0 = arith.constant 0 : i32
    %c0_i32_1 = arith.constant 0 : i32
    return %c0_i32, %c0_i32_0 : i32, i32
  }
  func.func @transform_8(%arg0: i32) -> (i32, i32) {
    %c0_i32 = arith.constant 0 : i32
    %c0_i32_0 = arith.constant 0 : i32
    %c0_i32_1 = arith.constant 0 : i32
    return %c0_i32, %c0_i32_0 : i32, i32
  }
  func.func @transform_9(%arg0: i32) -> (i32, i32) {
    %c0_i32 = arith.constant 0 : i32
    %c0_i32_0 = arith.constant 0 : i32
    %c0_i32_1 = arith.constant 0 : i32
    return %c0_i32, %c0_i32_0 : i32, i32
  }
  func.func @transform_10(%arg0: i32) -> (i32, i32) {
    %c0_i32 = arith.constant 0 : i32
    %c0_i32_0 = arith.constant 0 : i32
    %c0_i32_1 = arith.constant 0 : i32
    return %c0_i32, %c0_i32_0 : i32, i32
  }
  func.func @transform_11(%arg0: i32) -> (i32, i32) {
    %c0_i32 = arith.constant 0 : i32
    %c0_i32_0 = arith.constant 0 : i32
    %c0_i32_1 = arith.constant 0 : i32
    return %c0_i32, %c0_i32_0 : i32, i32
  }
  func.func @transform_12(%arg0: i32) -> (i32, i32, i32) {
    %c0_i32 = arith.constant 0 : i32
    %c0_i32_0 = arith.constant 0 : i32
    %c0_i32_1 = arith.constant 0 : i32
    return %arg0, %c0_i32, %c0_i32_0 : i32, i32, i32
  }
}

module attributes {stable_mosaic.version = 11 : i64} {
  func.func @_attn_resnet_kernel(%arg0: i32, %arg1: memref<1x64x32xf32, #tpu.memory_space<vmem>>, %arg2: memref<1x1x32xf32, #tpu.memory_space<vmem>>, %arg3: memref<1x32xf32, #tpu.memory_space<vmem>>, %arg4: memref<1x32xf32, #tpu.memory_space<vmem>>, %arg5: memref<32x96xbf16, #tpu.memory_space<vmem>>, %arg6: memref<1x96xf32, #tpu.memory_space<vmem>>, %arg7: memref<4x8x32xbf16, #tpu.memory_space<vmem>>, %arg8: memref<1x32xf32, #tpu.memory_space<vmem>>, %arg9: memref<1x32xf32, #tpu.memory_space<vmem>>, %arg10: memref<1x32xf32, #tpu.memory_space<vmem>>, %arg11: memref<288x32xbf16, #tpu.memory_space<vmem>>, %arg12: memref<1x32xf32, #tpu.memory_space<vmem>>, %arg13: memref<1x32xf32, #tpu.memory_space<vmem>>, %arg14: memref<1x32xf32, #tpu.memory_space<vmem>>, %arg15: memref<288x32xbf16, #tpu.memory_space<vmem>>, %arg16: memref<1x32xf32, #tpu.memory_space<vmem>>, %arg17: memref<32x32xbf16, #tpu.memory_space<vmem>>, %arg18: memref<1x32xf32, #tpu.memory_space<vmem>>, %arg19: memref<1x64x32xf32, #tpu.memory_space<vmem>>) attributes {dimension_semantics = [#tpu.dimension_semantics<parallel>], iteration_bounds = array<i64: 2>, scalar_prefetch = 0 : i64, scratch_operands = 0 : i64, tpu.core_type = #tpu.core_type<tc>, window_params = [{transform_indices = @transform_0, window_bounds = array<i64: 1, 64, 32>}, {transform_indices = @transform_1, window_bounds = array<i64: 1, 1, 32>}, {pipeline_mode = #tpu.pipeline_mode<synchronous>, transform_indices = @transform_2, window_bounds = array<i64: 1, 32>}, {pipeline_mode = #tpu.pipeline_mode<synchronous>, transform_indices = @transform_3, window_bounds = array<i64: 1, 32>}, {pipeline_mode = #tpu.pipeline_mode<synchronous>, transform_indices = @transform_4, window_bounds = array<i64: 32, 96>}, {pipeline_mode = #tpu.pipeline_mode<synchronous>, transform_indices = @transform_5, window_bounds = array<i64: 1, 96>}, {pipeline_mode = #tpu.pipeline_mode<synchronous>, transform_indices = @transform_6, window_bounds = array<i64: 4, 8, 32>}, {pipeline_mode = #tpu.pipeline_mode<synchronous>, transform_indices = @transform_7, window_bounds = array<i64: 1, 32>}, {pipeline_mode = #tpu.pipeline_mode<synchronous>, transform_indices = @transform_8, window_bounds = array<i64: 1, 32>}, {pipeline_mode = #tpu.pipeline_mode<synchronous>, transform_indices = @transform_9, window_bounds = array<i64: 1, 32>}, {pipeline_mode = #tpu.pipeline_mode<synchronous>, transform_indices = @transform_10, window_bounds = array<i64: 288, 32>}, {pipeline_mode = #tpu.pipeline_mode<synchronous>, transform_indices = @transform_11, window_bounds = array<i64: 1, 32>}, {pipeline_mode = #tpu.pipeline_mode<synchronous>, transform_indices = @transform_12, window_bounds = array<i64: 1, 32>}, {pipeline_mode = #tpu.pipeline_mode<synchronous>, transform_indices = @transform_13, window_bounds = array<i64: 1, 32>}, {pipeline_mode = #tpu.pipeline_mode<synchronous>, transform_indices = @transform_14, window_bounds = array<i64: 288, 32>}, {pipeline_mode = #tpu.pipeline_mode<synchronous>, transform_indices = @transform_15, window_bounds = array<i64: 1, 32>}, {pipeline_mode = #tpu.pipeline_mode<synchronous>, transform_indices = @transform_16, window_bounds = array<i64: 32, 32>}, {pipeline_mode = #tpu.pipeline_mode<synchronous>, transform_indices = @transform_17, window_bounds = array<i64: 1, 32>}, {transform_indices = @transform_18, window_bounds = array<i64: 1, 64, 32>}]} {
    %c0 = arith.constant 0 : index
    %c0_0 = arith.constant 0 : index
    %c0_1 = arith.constant 0 : index
    %0 = vector.load %arg1[%c0, %c0_0, %c0_1] : memref<1x64x32xf32, #tpu.memory_space<vmem>>, vector<1x64x32xf32>
    %1 = vector.shape_cast %0 : vector<1x64x32xf32> to vector<64x32xf32>
    %c0_2 = arith.constant 0 : index
    %c0_3 = arith.constant 0 : index
    %2 = vector.load %arg3[%c0_2, %c0_3] : memref<1x32xf32, #tpu.memory_space<vmem>>, vector<1x32xf32>
    %c0_4 = arith.constant 0 : index
    %c0_5 = arith.constant 0 : index
    %3 = vector.load %arg4[%c0_4, %c0_5] : memref<1x32xf32, #tpu.memory_space<vmem>>, vector<1x32xf32>
    %c0_6 = arith.constant 0 : index
    %c0_7 = arith.constant 0 : index
    %4 = vector.load %arg5[%c0_6, %c0_7] : memref<32x96xbf16, #tpu.memory_space<vmem>>, vector<32x96xbf16>
    %c0_8 = arith.constant 0 : index
    %c0_9 = arith.constant 0 : index
    %5 = vector.load %arg6[%c0_8, %c0_9] : memref<1x96xf32, #tpu.memory_space<vmem>>, vector<1x96xf32>
    %c0_10 = arith.constant 0 : index
    %c0_11 = arith.constant 0 : index
    %c0_12 = arith.constant 0 : index
    %6 = vector.load %arg7[%c0_10, %c0_11, %c0_12] : memref<4x8x32xbf16, #tpu.memory_space<vmem>>, vector<4x8x32xbf16>
    %c0_13 = arith.constant 0 : index
    %c0_14 = arith.constant 0 : index
    %7 = vector.load %arg8[%c0_13, %c0_14] : memref<1x32xf32, #tpu.memory_space<vmem>>, vector<1x32xf32>
    %8 = tpu.iota {dimensions = array<i32: 0>} : vector<8x32xi32>
    %9 = tpu.iota {dimensions = array<i32: 1>} : vector<8x32xi32>
    %c4_i32 = arith.constant 4 : i32
    %10 = vector.broadcast %c4_i32 : i32 to vector<8x32xi32>
    %11 = arith.muli %8, %10 : vector<8x32xi32>
    %12 = arith.cmpi sge, %9, %11 : vector<8x32xi32>
    %c1_i32 = arith.constant 1 : i32
    %13 = vector.broadcast %c1_i32 : i32 to vector<8x32xi32>
    %14 = arith.addi %8, %13 : vector<8x32xi32>
    %c4_i32_15 = arith.constant 4 : i32
    %15 = vector.broadcast %c4_i32_15 : i32 to vector<8x32xi32>
    %16 = arith.muli %14, %15 : vector<8x32xi32>
    %17 = arith.cmpi slt, %9, %16 : vector<8x32xi32>
    %18 = arith.andi %12, %17 : vector<8x32xi1>
    %19 = arith.extui %18 : vector<8x32xi1> to vector<8x32xi32>
    %20 = arith.sitofp %19 : vector<8x32xi32> to vector<8x32xf32>
    %cst = arith.constant dense<0.000000e+00> : vector<32xf32>
    %21 = vector.multi_reduction <add>, %1, %cst [0] : vector<64x32xf32> to vector<32xf32>
    %22 = vector.shape_cast %21 : vector<32xf32> to vector<1x32xf32>
    %23 = arith.mulf %1, %1 : vector<64x32xf32>
    %cst_16 = arith.constant dense<0.000000e+00> : vector<32xf32>
    %24 = vector.multi_reduction <add>, %23, %cst_16 [0] : vector<64x32xf32> to vector<32xf32>
    %25 = vector.shape_cast %24 : vector<32xf32> to vector<1x32xf32>
    %26 = vector.broadcast %22 : vector<1x32xf32> to vector<8x32xf32>
    %27 = arith.mulf %20, %26 : vector<8x32xf32>
    %cst_17 = arith.constant dense<0.000000e+00> : vector<8xf32>
    %28 = vector.multi_reduction <add>, %27, %cst_17 [1] : vector<8x32xf32> to vector<8xf32>
    %29 = vector.shape_cast %28 : vector<8xf32> to vector<8x1xf32>
    %30 = vector.broadcast %25 : vector<1x32xf32> to vector<8x32xf32>
    %31 = arith.mulf %20, %30 : vector<8x32xf32>
    %cst_18 = arith.constant dense<0.000000e+00> : vector<8xf32>
    %32 = vector.multi_reduction <add>, %31, %cst_18 [1] : vector<8x32xf32> to vector<8xf32>
    %33 = vector.shape_cast %32 : vector<8xf32> to vector<8x1xf32>
    %cst_19 = arith.constant 2.560000e+02 : f32
    %34 = vector.broadcast %cst_19 : f32 to vector<8x1xf32>
    %35 = arith.divf %29, %34 : vector<8x1xf32>
    %cst_20 = arith.constant 2.560000e+02 : f32
    %36 = vector.broadcast %cst_20 : f32 to vector<8x1xf32>
    %37 = arith.divf %33, %36 : vector<8x1xf32>
    %38 = arith.mulf %35, %35 : vector<8x1xf32>
    %39 = arith.subf %37, %38 : vector<8x1xf32>
    %cst_21 = arith.constant 9.99999974E-6 : f32
    %40 = vector.broadcast %cst_21 : f32 to vector<8x1xf32>
    %41 = arith.addf %39, %40 : vector<8x1xf32>
    %42 = math.rsqrt %41 : vector<8x1xf32>
    %43 = vector.broadcast %35 : vector<8x1xf32> to vector<8x32xf32>
    %44 = arith.mulf %20, %43 : vector<8x32xf32>
    %cst_22 = arith.constant dense<0.000000e+00> : vector<32xf32>
    %45 = vector.multi_reduction <add>, %44, %cst_22 [0] : vector<8x32xf32> to vector<32xf32>
    %46 = vector.shape_cast %45 : vector<32xf32> to vector<1x32xf32>
    %47 = vector.broadcast %42 : vector<8x1xf32> to vector<8x32xf32>
    %48 = arith.mulf %20, %47 : vector<8x32xf32>
    %cst_23 = arith.constant dense<0.000000e+00> : vector<32xf32>
    %49 = vector.multi_reduction <add>, %48, %cst_23 [0] : vector<8x32xf32> to vector<32xf32>
    %50 = vector.shape_cast %49 : vector<32xf32> to vector<1x32xf32>
    %51 = vector.broadcast %46 : vector<1x32xf32> to vector<64x32xf32>
    %52 = arith.subf %1, %51 : vector<64x32xf32>
    %53 = vector.broadcast %50 : vector<1x32xf32> to vector<64x32xf32>
    %54 = arith.mulf %52, %53 : vector<64x32xf32>
    %55 = vector.broadcast %2 : vector<1x32xf32> to vector<64x32xf32>
    %56 = arith.mulf %54, %55 : vector<64x32xf32>
    %57 = vector.broadcast %3 : vector<1x32xf32> to vector<64x32xf32>
    %58 = arith.addf %56, %57 : vector<64x32xf32>
    %59 = arith.truncf %58 : vector<64x32xf32> to vector<64x32xbf16>
    %cst_24 = arith.constant dense<0.000000e+00> : vector<64x96xf32>
    %60 = tpu.matmul %59, %4, %cst_24 {dimension_numbers = #tpu.dot_dimension_numbers<[1], [0], [0], [1], [0, 0, 1, 1], [], []>} : vector<64x32xbf16>, vector<32x96xbf16>, vector<64x96xf32> -> vector<64x96xf32>
    %61 = vector.broadcast %5 : vector<1x96xf32> to vector<64x96xf32>
    %62 = arith.addf %60, %61 : vector<64x96xf32>
    %63 = vector.extract_strided_slice %62 {offsets = [0, 0], sizes = [64, 8], strides = [1, 1]} : vector<64x96xf32> to vector<64x8xf32>
    %64 = arith.truncf %63 : vector<64x8xf32> to vector<64x8xbf16>
    %65 = vector.extract_strided_slice %62 {offsets = [0, 8], sizes = [64, 8], strides = [1, 1]} : vector<64x96xf32> to vector<64x8xf32>
    %66 = arith.truncf %65 : vector<64x8xf32> to vector<64x8xbf16>
    %67 = vector.extract_strided_slice %62 {offsets = [0, 16], sizes = [64, 8], strides = [1, 1]} : vector<64x96xf32> to vector<64x8xf32>
    %68 = arith.truncf %67 : vector<64x8xf32> to vector<64x8xbf16>
    %69 = vector.extract_strided_slice %62 {offsets = [0, 24], sizes = [64, 8], strides = [1, 1]} : vector<64x96xf32> to vector<64x8xf32>
    %70 = arith.truncf %69 : vector<64x8xf32> to vector<64x8xbf16>
    %71 = vector.shape_cast %64 : vector<64x8xbf16> to vector<1x64x8xbf16>
    %72 = vector.shape_cast %66 : vector<64x8xbf16> to vector<1x64x8xbf16>
    %73 = vector.shape_cast %68 : vector<64x8xbf16> to vector<1x64x8xbf16>
    %74 = vector.shape_cast %70 : vector<64x8xbf16> to vector<1x64x8xbf16>
    %75 = tpu.concatenate %71, %72, %73, %74 in 0 : vector<1x64x8xbf16>, vector<1x64x8xbf16>, vector<1x64x8xbf16>, vector<1x64x8xbf16> -> vector<4x64x8xbf16>
    %76 = vector.extract_strided_slice %62 {offsets = [0, 32], sizes = [64, 8], strides = [1, 1]} : vector<64x96xf32> to vector<64x8xf32>
    %77 = arith.truncf %76 : vector<64x8xf32> to vector<64x8xbf16>
    %78 = vector.extract_strided_slice %62 {offsets = [0, 40], sizes = [64, 8], strides = [1, 1]} : vector<64x96xf32> to vector<64x8xf32>
    %79 = arith.truncf %78 : vector<64x8xf32> to vector<64x8xbf16>
    %80 = vector.extract_strided_slice %62 {offsets = [0, 48], sizes = [64, 8], strides = [1, 1]} : vector<64x96xf32> to vector<64x8xf32>
    %81 = arith.truncf %80 : vector<64x8xf32> to vector<64x8xbf16>
    %82 = vector.extract_strided_slice %62 {offsets = [0, 56], sizes = [64, 8], strides = [1, 1]} : vector<64x96xf32> to vector<64x8xf32>
    %83 = arith.truncf %82 : vector<64x8xf32> to vector<64x8xbf16>
    %84 = vector.shape_cast %77 : vector<64x8xbf16> to vector<1x64x8xbf16>
    %85 = vector.shape_cast %79 : vector<64x8xbf16> to vector<1x64x8xbf16>
    %86 = vector.shape_cast %81 : vector<64x8xbf16> to vector<1x64x8xbf16>
    %87 = vector.shape_cast %83 : vector<64x8xbf16> to vector<1x64x8xbf16>
    %88 = tpu.concatenate %84, %85, %86, %87 in 0 : vector<1x64x8xbf16>, vector<1x64x8xbf16>, vector<1x64x8xbf16>, vector<1x64x8xbf16> -> vector<4x64x8xbf16>
    %89 = vector.extract_strided_slice %62 {offsets = [0, 64], sizes = [64, 8], strides = [1, 1]} : vector<64x96xf32> to vector<64x8xf32>
    %90 = arith.truncf %89 : vector<64x8xf32> to vector<64x8xbf16>
    %91 = vector.extract_strided_slice %62 {offsets = [0, 72], sizes = [64, 8], strides = [1, 1]} : vector<64x96xf32> to vector<64x8xf32>
    %92 = arith.truncf %91 : vector<64x8xf32> to vector<64x8xbf16>
    %93 = vector.extract_strided_slice %62 {offsets = [0, 80], sizes = [64, 8], strides = [1, 1]} : vector<64x96xf32> to vector<64x8xf32>
    %94 = arith.truncf %93 : vector<64x8xf32> to vector<64x8xbf16>
    %95 = vector.extract_strided_slice %62 {offsets = [0, 88], sizes = [64, 8], strides = [1, 1]} : vector<64x96xf32> to vector<64x8xf32>
    %96 = arith.truncf %95 : vector<64x8xf32> to vector<64x8xbf16>
    %97 = vector.shape_cast %90 : vector<64x8xbf16> to vector<1x64x8xbf16>
    %98 = vector.shape_cast %92 : vector<64x8xbf16> to vector<1x64x8xbf16>
    %99 = vector.shape_cast %94 : vector<64x8xbf16> to vector<1x64x8xbf16>
    %100 = vector.shape_cast %96 : vector<64x8xbf16> to vector<1x64x8xbf16>
    %101 = tpu.concatenate %97, %98, %99, %100 in 0 : vector<1x64x8xbf16>, vector<1x64x8xbf16>, vector<1x64x8xbf16>, vector<1x64x8xbf16> -> vector<4x64x8xbf16>
    "tpu.trace_start"() <{level = 10 : i32, message = "hqd,hkd->hqk"}> : () -> ()
    %cst_25 = arith.constant dense<0.000000e+00> : vector<4x64x64xf32>
    %102 = tpu.matmul %75, %88, %cst_25 {dimension_numbers = #tpu.dot_dimension_numbers<[2], [2], [1], [1], [0, 0, 0, 1, 1, 1], [0], [0]>} : vector<4x64x8xbf16>, vector<4x64x8xbf16>, vector<4x64x64xf32> -> vector<4x64x64xf32>
    "tpu.trace_stop"() : () -> ()
    %cst_26 = arith.constant 0.353553385 : f32
    %103 = vector.broadcast %cst_26 : f32 to vector<4x64x64xf32>
    %104 = arith.mulf %102, %103 : vector<4x64x64xf32>
    %cst_27 = arith.constant dense<0xFF800000> : vector<4x64xf32>
    %105 = vector.multi_reduction <maximumf>, %104, %cst_27 [2] : vector<4x64x64xf32> to vector<4x64xf32>
    %106 = vector.shape_cast %105 : vector<4x64xf32> to vector<4x64x1xf32>
    %107 = vector.broadcast %106 : vector<4x64x1xf32> to vector<4x64x64xf32>
    %108 = arith.subf %104, %107 : vector<4x64x64xf32>
    %109 = math.exp %108 : vector<4x64x64xf32>
    %cst_28 = arith.constant dense<0.000000e+00> : vector<4x64xf32>
    %110 = vector.multi_reduction <add>, %109, %cst_28 [2] : vector<4x64x64xf32> to vector<4x64xf32>
    %111 = vector.shape_cast %110 : vector<4x64xf32> to vector<4x64x1xf32>
    %112 = tpu.reciprocal %111 {approx = true} : vector<4x64x1xf32> -> vector<4x64x1xf32>
    %113 = vector.broadcast %112 : vector<4x64x1xf32> to vector<4x64x64xf32>
    %114 = arith.mulf %109, %113 : vector<4x64x64xf32>
    %115 = arith.truncf %114 : vector<4x64x64xf32> to vector<4x64x64xbf16>
    "tpu.trace_start"() <{level = 10 : i32, message = "hqk,hkd->hqd"}> : () -> ()
    %cst_29 = arith.constant dense<0.000000e+00> : vector<4x64x8xf32>
    %116 = tpu.matmul %115, %101, %cst_29 {dimension_numbers = #tpu.dot_dimension_numbers<[2], [1], [1], [2], [0, 0, 0, 1, 1, 2], [0], [0]>} : vector<4x64x64xbf16>, vector<4x64x8xbf16>, vector<4x64x8xf32> -> vector<4x64x8xf32>
    "tpu.trace_stop"() : () -> ()
    %117 = arith.truncf %116 : vector<4x64x8xf32> to vector<4x64x8xbf16>
    "tpu.trace_start"() <{level = 10 : i32, message = "hqd,hdc->hqc"}> : () -> ()
    %cst_30 = arith.constant dense<0.000000e+00> : vector<4x64x32xf32>
    %118 = tpu.matmul %117, %6, %cst_30 {dimension_numbers = #tpu.dot_dimension_numbers<[2], [1], [1], [2], [0, 0, 0, 1, 1, 2], [0], [0]>} : vector<4x64x8xbf16>, vector<4x8x32xbf16>, vector<4x64x32xf32> -> vector<4x64x32xf32>
    "tpu.trace_stop"() : () -> ()
    %cst_31 = arith.constant dense<0.000000e+00> : vector<64x32xf32>
    %119 = vector.multi_reduction <add>, %118, %cst_31 [0] : vector<4x64x32xf32> to vector<64x32xf32>
    %120 = vector.broadcast %7 : vector<1x32xf32> to vector<64x32xf32>
    %121 = arith.addf %119, %120 : vector<64x32xf32>
    %122 = arith.addf %1, %121 : vector<64x32xf32>
    %c0_32 = arith.constant 0 : index
    %c0_33 = arith.constant 0 : index
    %c0_34 = arith.constant 0 : index
    %123 = vector.load %arg2[%c0_32, %c0_33, %c0_34] : memref<1x1x32xf32, #tpu.memory_space<vmem>>, vector<1x1x32xf32>
    %124 = vector.shape_cast %123 : vector<1x1x32xf32> to vector<1x32xf32>
    %c0_35 = arith.constant 0 : index
    %c0_36 = arith.constant 0 : index
    %125 = vector.load %arg9[%c0_35, %c0_36] : memref<1x32xf32, #tpu.memory_space<vmem>>, vector<1x32xf32>
    %c0_37 = arith.constant 0 : index
    %c0_38 = arith.constant 0 : index
    %126 = vector.load %arg10[%c0_37, %c0_38] : memref<1x32xf32, #tpu.memory_space<vmem>>, vector<1x32xf32>
    %c0_39 = arith.constant 0 : index
    %c0_40 = arith.constant 0 : index
    %127 = vector.load %arg11[%c0_39, %c0_40] : memref<288x32xbf16, #tpu.memory_space<vmem>>, vector<288x32xbf16>
    %c0_41 = arith.constant 0 : index
    %c0_42 = arith.constant 0 : index
    %128 = vector.load %arg12[%c0_41, %c0_42] : memref<1x32xf32, #tpu.memory_space<vmem>>, vector<1x32xf32>
    %c0_43 = arith.constant 0 : index
    %c0_44 = arith.constant 0 : index
    %129 = vector.load %arg13[%c0_43, %c0_44] : memref<1x32xf32, #tpu.memory_space<vmem>>, vector<1x32xf32>
    %c0_45 = arith.constant 0 : index
    %c0_46 = arith.constant 0 : index
    %130 = vector.load %arg14[%c0_45, %c0_46] : memref<1x32xf32, #tpu.memory_space<vmem>>, vector<1x32xf32>
    %c0_47 = arith.constant 0 : index
    %c0_48 = arith.constant 0 : index
    %131 = vector.load %arg15[%c0_47, %c0_48] : memref<288x32xbf16, #tpu.memory_space<vmem>>, vector<288x32xbf16>
    %c0_49 = arith.constant 0 : index
    %c0_50 = arith.constant 0 : index
    %132 = vector.load %arg16[%c0_49, %c0_50] : memref<1x32xf32, #tpu.memory_space<vmem>>, vector<1x32xf32>
    %c0_51 = arith.constant 0 : index
    %c0_52 = arith.constant 0 : index
    %133 = vector.load %arg17[%c0_51, %c0_52] : memref<32x32xbf16, #tpu.memory_space<vmem>>, vector<32x32xbf16>
    %c0_53 = arith.constant 0 : index
    %c0_54 = arith.constant 0 : index
    %134 = vector.load %arg18[%c0_53, %c0_54] : memref<1x32xf32, #tpu.memory_space<vmem>>, vector<1x32xf32>
    %135 = tpu.iota {dimensions = array<i32: 0>} : vector<8x32xi32>
    %136 = tpu.iota {dimensions = array<i32: 1>} : vector<8x32xi32>
    %c4_i32_55 = arith.constant 4 : i32
    %137 = vector.broadcast %c4_i32_55 : i32 to vector<8x32xi32>
    %138 = arith.muli %135, %137 : vector<8x32xi32>
    %139 = arith.cmpi sge, %136, %138 : vector<8x32xi32>
    %c1_i32_56 = arith.constant 1 : i32
    %140 = vector.broadcast %c1_i32_56 : i32 to vector<8x32xi32>
    %141 = arith.addi %135, %140 : vector<8x32xi32>
    %c4_i32_57 = arith.constant 4 : i32
    %142 = vector.broadcast %c4_i32_57 : i32 to vector<8x32xi32>
    %143 = arith.muli %141, %142 : vector<8x32xi32>
    %144 = arith.cmpi slt, %136, %143 : vector<8x32xi32>
    %145 = arith.andi %139, %144 : vector<8x32xi1>
    %146 = arith.extui %145 : vector<8x32xi1> to vector<8x32xi32>
    %147 = arith.sitofp %146 : vector<8x32xi32> to vector<8x32xf32>
    %cst_58 = arith.constant dense<0.000000e+00> : vector<32xf32>
    %148 = vector.multi_reduction <add>, %122, %cst_58 [0] : vector<64x32xf32> to vector<32xf32>
    %149 = vector.shape_cast %148 : vector<32xf32> to vector<1x32xf32>
    %150 = arith.mulf %122, %122 : vector<64x32xf32>
    %cst_59 = arith.constant dense<0.000000e+00> : vector<32xf32>
    %151 = vector.multi_reduction <add>, %150, %cst_59 [0] : vector<64x32xf32> to vector<32xf32>
    %152 = vector.shape_cast %151 : vector<32xf32> to vector<1x32xf32>
    %153 = vector.broadcast %149 : vector<1x32xf32> to vector<8x32xf32>
    %154 = arith.mulf %147, %153 : vector<8x32xf32>
    %cst_60 = arith.constant dense<0.000000e+00> : vector<8xf32>
    %155 = vector.multi_reduction <add>, %154, %cst_60 [1] : vector<8x32xf32> to vector<8xf32>
    %156 = vector.shape_cast %155 : vector<8xf32> to vector<8x1xf32>
    %157 = vector.broadcast %152 : vector<1x32xf32> to vector<8x32xf32>
    %158 = arith.mulf %147, %157 : vector<8x32xf32>
    %cst_61 = arith.constant dense<0.000000e+00> : vector<8xf32>
    %159 = vector.multi_reduction <add>, %158, %cst_61 [1] : vector<8x32xf32> to vector<8xf32>
    %160 = vector.shape_cast %159 : vector<8xf32> to vector<8x1xf32>
    %cst_62 = arith.constant 2.560000e+02 : f32
    %161 = vector.broadcast %cst_62 : f32 to vector<8x1xf32>
    %162 = arith.divf %156, %161 : vector<8x1xf32>
    %cst_63 = arith.constant 2.560000e+02 : f32
    %163 = vector.broadcast %cst_63 : f32 to vector<8x1xf32>
    %164 = arith.divf %160, %163 : vector<8x1xf32>
    %165 = arith.mulf %162, %162 : vector<8x1xf32>
    %166 = arith.subf %164, %165 : vector<8x1xf32>
    %cst_64 = arith.constant 9.99999974E-6 : f32
    %167 = vector.broadcast %cst_64 : f32 to vector<8x1xf32>
    %168 = arith.addf %166, %167 : vector<8x1xf32>
    %169 = math.rsqrt %168 : vector<8x1xf32>
    %170 = vector.broadcast %162 : vector<8x1xf32> to vector<8x32xf32>
    %171 = arith.mulf %147, %170 : vector<8x32xf32>
    %cst_65 = arith.constant dense<0.000000e+00> : vector<32xf32>
    %172 = vector.multi_reduction <add>, %171, %cst_65 [0] : vector<8x32xf32> to vector<32xf32>
    %173 = vector.shape_cast %172 : vector<32xf32> to vector<1x32xf32>
    %174 = vector.broadcast %169 : vector<8x1xf32> to vector<8x32xf32>
    %175 = arith.mulf %147, %174 : vector<8x32xf32>
    %cst_66 = arith.constant dense<0.000000e+00> : vector<32xf32>
    %176 = vector.multi_reduction <add>, %175, %cst_66 [0] : vector<8x32xf32> to vector<32xf32>
    %177 = vector.shape_cast %176 : vector<32xf32> to vector<1x32xf32>
    %178 = vector.broadcast %173 : vector<1x32xf32> to vector<64x32xf32>
    %179 = arith.subf %122, %178 : vector<64x32xf32>
    %180 = vector.broadcast %177 : vector<1x32xf32> to vector<64x32xf32>
    %181 = arith.mulf %179, %180 : vector<64x32xf32>
    %182 = vector.broadcast %125 : vector<1x32xf32> to vector<64x32xf32>
    %183 = arith.mulf %181, %182 : vector<64x32xf32>
    %184 = vector.broadcast %126 : vector<1x32xf32> to vector<64x32xf32>
    %185 = arith.addf %183, %184 : vector<64x32xf32>
    %186 = arith.negf %185 : vector<64x32xf32>
    %187 = math.exp %186 : vector<64x32xf32>
    %cst_67 = arith.constant 1.000000e+00 : f32
    %188 = vector.broadcast %cst_67 : f32 to vector<64x32xf32>
    %189 = arith.addf %188, %187 : vector<64x32xf32>
    %190 = arith.divf %188, %189 : vector<64x32xf32>
    %191 = arith.mulf %185, %190 : vector<64x32xf32>
    %192 = arith.truncf %191 : vector<64x32xf32> to vector<64x32xbf16>
    %193 = vector.shape_cast %192 : vector<64x32xbf16> to vector<8x8x32xbf16>
    %cst_68 = arith.constant 0.000000e+00 : bf16
    %194 = vector.broadcast %cst_68 : bf16 to vector<8x1x32xbf16>
    %195 = tpu.concatenate %194, %193, %194 in 1 : vector<8x1x32xbf16>, vector<8x8x32xbf16>, vector<8x1x32xbf16> -> vector<8x10x32xbf16>
    %cst_69 = arith.constant 0.000000e+00 : bf16
    %196 = vector.broadcast %cst_69 : bf16 to vector<1x10x32xbf16>
    %197 = tpu.concatenate %196, %195, %196 in 0 : vector<1x10x32xbf16>, vector<8x10x32xbf16>, vector<1x10x32xbf16> -> vector<10x10x32xbf16>
    %198 = vector.extract_strided_slice %197 {offsets = [0, 0, 0], sizes = [8, 8, 32], strides = [1, 1, 1]} : vector<10x10x32xbf16> to vector<8x8x32xbf16>
    %199 = vector.extract_strided_slice %197 {offsets = [0, 1, 0], sizes = [8, 8, 32], strides = [1, 1, 1]} : vector<10x10x32xbf16> to vector<8x8x32xbf16>
    %200 = vector.extract_strided_slice %197 {offsets = [0, 2, 0], sizes = [8, 8, 32], strides = [1, 1, 1]} : vector<10x10x32xbf16> to vector<8x8x32xbf16>
    %201 = vector.extract_strided_slice %197 {offsets = [1, 0, 0], sizes = [8, 8, 32], strides = [1, 1, 1]} : vector<10x10x32xbf16> to vector<8x8x32xbf16>
    %202 = vector.extract_strided_slice %197 {offsets = [1, 1, 0], sizes = [8, 8, 32], strides = [1, 1, 1]} : vector<10x10x32xbf16> to vector<8x8x32xbf16>
    %203 = vector.extract_strided_slice %197 {offsets = [1, 2, 0], sizes = [8, 8, 32], strides = [1, 1, 1]} : vector<10x10x32xbf16> to vector<8x8x32xbf16>
    %204 = vector.extract_strided_slice %197 {offsets = [2, 0, 0], sizes = [8, 8, 32], strides = [1, 1, 1]} : vector<10x10x32xbf16> to vector<8x8x32xbf16>
    %205 = vector.extract_strided_slice %197 {offsets = [2, 1, 0], sizes = [8, 8, 32], strides = [1, 1, 1]} : vector<10x10x32xbf16> to vector<8x8x32xbf16>
    %206 = vector.extract_strided_slice %197 {offsets = [2, 2, 0], sizes = [8, 8, 32], strides = [1, 1, 1]} : vector<10x10x32xbf16> to vector<8x8x32xbf16>
    %207 = tpu.concatenate %198, %199, %200, %201, %202, %203, %204, %205, %206 in 2 : vector<8x8x32xbf16>, vector<8x8x32xbf16>, vector<8x8x32xbf16>, vector<8x8x32xbf16>, vector<8x8x32xbf16>, vector<8x8x32xbf16>, vector<8x8x32xbf16>, vector<8x8x32xbf16>, vector<8x8x32xbf16> -> vector<8x8x288xbf16>
    %208 = vector.shape_cast %207 : vector<8x8x288xbf16> to vector<64x288xbf16>
    %cst_70 = arith.constant dense<0.000000e+00> : vector<64x32xf32>
    %209 = tpu.matmul %208, %127, %cst_70 {dimension_numbers = #tpu.dot_dimension_numbers<[1], [0], [0], [1], [0, 0, 1, 1], [], []>} : vector<64x288xbf16>, vector<288x32xbf16>, vector<64x32xf32> -> vector<64x32xf32>
    %210 = vector.broadcast %128 : vector<1x32xf32> to vector<64x32xf32>
    %211 = arith.addf %209, %210 : vector<64x32xf32>
    %212 = vector.broadcast %124 : vector<1x32xf32> to vector<64x32xf32>
    %213 = arith.addf %211, %212 : vector<64x32xf32>
    %214 = tpu.iota {dimensions = array<i32: 0>} : vector<8x32xi32>
    %215 = tpu.iota {dimensions = array<i32: 1>} : vector<8x32xi32>
    %c4_i32_71 = arith.constant 4 : i32
    %216 = vector.broadcast %c4_i32_71 : i32 to vector<8x32xi32>
    %217 = arith.muli %214, %216 : vector<8x32xi32>
    %218 = arith.cmpi sge, %215, %217 : vector<8x32xi32>
    %c1_i32_72 = arith.constant 1 : i32
    %219 = vector.broadcast %c1_i32_72 : i32 to vector<8x32xi32>
    %220 = arith.addi %214, %219 : vector<8x32xi32>
    %c4_i32_73 = arith.constant 4 : i32
    %221 = vector.broadcast %c4_i32_73 : i32 to vector<8x32xi32>
    %222 = arith.muli %220, %221 : vector<8x32xi32>
    %223 = arith.cmpi slt, %215, %222 : vector<8x32xi32>
    %224 = arith.andi %218, %223 : vector<8x32xi1>
    %225 = arith.extui %224 : vector<8x32xi1> to vector<8x32xi32>
    %226 = arith.sitofp %225 : vector<8x32xi32> to vector<8x32xf32>
    %cst_74 = arith.constant dense<0.000000e+00> : vector<32xf32>
    %227 = vector.multi_reduction <add>, %213, %cst_74 [0] : vector<64x32xf32> to vector<32xf32>
    %228 = vector.shape_cast %227 : vector<32xf32> to vector<1x32xf32>
    %229 = arith.mulf %213, %213 : vector<64x32xf32>
    %cst_75 = arith.constant dense<0.000000e+00> : vector<32xf32>
    %230 = vector.multi_reduction <add>, %229, %cst_75 [0] : vector<64x32xf32> to vector<32xf32>
    %231 = vector.shape_cast %230 : vector<32xf32> to vector<1x32xf32>
    %232 = vector.broadcast %228 : vector<1x32xf32> to vector<8x32xf32>
    %233 = arith.mulf %226, %232 : vector<8x32xf32>
    %cst_76 = arith.constant dense<0.000000e+00> : vector<8xf32>
    %234 = vector.multi_reduction <add>, %233, %cst_76 [1] : vector<8x32xf32> to vector<8xf32>
    %235 = vector.shape_cast %234 : vector<8xf32> to vector<8x1xf32>
    %236 = vector.broadcast %231 : vector<1x32xf32> to vector<8x32xf32>
    %237 = arith.mulf %226, %236 : vector<8x32xf32>
    %cst_77 = arith.constant dense<0.000000e+00> : vector<8xf32>
    %238 = vector.multi_reduction <add>, %237, %cst_77 [1] : vector<8x32xf32> to vector<8xf32>
    %239 = vector.shape_cast %238 : vector<8xf32> to vector<8x1xf32>
    %cst_78 = arith.constant 2.560000e+02 : f32
    %240 = vector.broadcast %cst_78 : f32 to vector<8x1xf32>
    %241 = arith.divf %235, %240 : vector<8x1xf32>
    %cst_79 = arith.constant 2.560000e+02 : f32
    %242 = vector.broadcast %cst_79 : f32 to vector<8x1xf32>
    %243 = arith.divf %239, %242 : vector<8x1xf32>
    %244 = arith.mulf %241, %241 : vector<8x1xf32>
    %245 = arith.subf %243, %244 : vector<8x1xf32>
    %cst_80 = arith.constant 9.99999974E-6 : f32
    %246 = vector.broadcast %cst_80 : f32 to vector<8x1xf32>
    %247 = arith.addf %245, %246 : vector<8x1xf32>
    %248 = math.rsqrt %247 : vector<8x1xf32>
    %249 = vector.broadcast %241 : vector<8x1xf32> to vector<8x32xf32>
    %250 = arith.mulf %226, %249 : vector<8x32xf32>
    %cst_81 = arith.constant dense<0.000000e+00> : vector<32xf32>
    %251 = vector.multi_reduction <add>, %250, %cst_81 [0] : vector<8x32xf32> to vector<32xf32>
    %252 = vector.shape_cast %251 : vector<32xf32> to vector<1x32xf32>
    %253 = vector.broadcast %248 : vector<8x1xf32> to vector<8x32xf32>
    %254 = arith.mulf %226, %253 : vector<8x32xf32>
    %cst_82 = arith.constant dense<0.000000e+00> : vector<32xf32>
    %255 = vector.multi_reduction <add>, %254, %cst_82 [0] : vector<8x32xf32> to vector<32xf32>
    %256 = vector.shape_cast %255 : vector<32xf32> to vector<1x32xf32>
    %257 = vector.broadcast %252 : vector<1x32xf32> to vector<64x32xf32>
    %258 = arith.subf %213, %257 : vector<64x32xf32>
    %259 = vector.broadcast %256 : vector<1x32xf32> to vector<64x32xf32>
    %260 = arith.mulf %258, %259 : vector<64x32xf32>
    %261 = vector.broadcast %129 : vector<1x32xf32> to vector<64x32xf32>
    %262 = arith.mulf %260, %261 : vector<64x32xf32>
    %263 = vector.broadcast %130 : vector<1x32xf32> to vector<64x32xf32>
    %264 = arith.addf %262, %263 : vector<64x32xf32>
    %265 = arith.negf %264 : vector<64x32xf32>
    %266 = math.exp %265 : vector<64x32xf32>
    %cst_83 = arith.constant 1.000000e+00 : f32
    %267 = vector.broadcast %cst_83 : f32 to vector<64x32xf32>
    %268 = arith.addf %267, %266 : vector<64x32xf32>
    %269 = arith.divf %267, %268 : vector<64x32xf32>
    %270 = arith.mulf %264, %269 : vector<64x32xf32>
    %271 = arith.truncf %270 : vector<64x32xf32> to vector<64x32xbf16>
    %272 = vector.shape_cast %271 : vector<64x32xbf16> to vector<8x8x32xbf16>
    %cst_84 = arith.constant 0.000000e+00 : bf16
    %273 = vector.broadcast %cst_84 : bf16 to vector<8x1x32xbf16>
    %274 = tpu.concatenate %273, %272, %273 in 1 : vector<8x1x32xbf16>, vector<8x8x32xbf16>, vector<8x1x32xbf16> -> vector<8x10x32xbf16>
    %cst_85 = arith.constant 0.000000e+00 : bf16
    %275 = vector.broadcast %cst_85 : bf16 to vector<1x10x32xbf16>
    %276 = tpu.concatenate %275, %274, %275 in 0 : vector<1x10x32xbf16>, vector<8x10x32xbf16>, vector<1x10x32xbf16> -> vector<10x10x32xbf16>
    %277 = vector.extract_strided_slice %276 {offsets = [0, 0, 0], sizes = [8, 8, 32], strides = [1, 1, 1]} : vector<10x10x32xbf16> to vector<8x8x32xbf16>
    %278 = vector.extract_strided_slice %276 {offsets = [0, 1, 0], sizes = [8, 8, 32], strides = [1, 1, 1]} : vector<10x10x32xbf16> to vector<8x8x32xbf16>
    %279 = vector.extract_strided_slice %276 {offsets = [0, 2, 0], sizes = [8, 8, 32], strides = [1, 1, 1]} : vector<10x10x32xbf16> to vector<8x8x32xbf16>
    %280 = vector.extract_strided_slice %276 {offsets = [1, 0, 0], sizes = [8, 8, 32], strides = [1, 1, 1]} : vector<10x10x32xbf16> to vector<8x8x32xbf16>
    %281 = vector.extract_strided_slice %276 {offsets = [1, 1, 0], sizes = [8, 8, 32], strides = [1, 1, 1]} : vector<10x10x32xbf16> to vector<8x8x32xbf16>
    %282 = vector.extract_strided_slice %276 {offsets = [1, 2, 0], sizes = [8, 8, 32], strides = [1, 1, 1]} : vector<10x10x32xbf16> to vector<8x8x32xbf16>
    %283 = vector.extract_strided_slice %276 {offsets = [2, 0, 0], sizes = [8, 8, 32], strides = [1, 1, 1]} : vector<10x10x32xbf16> to vector<8x8x32xbf16>
    %284 = vector.extract_strided_slice %276 {offsets = [2, 1, 0], sizes = [8, 8, 32], strides = [1, 1, 1]} : vector<10x10x32xbf16> to vector<8x8x32xbf16>
    %285 = vector.extract_strided_slice %276 {offsets = [2, 2, 0], sizes = [8, 8, 32], strides = [1, 1, 1]} : vector<10x10x32xbf16> to vector<8x8x32xbf16>
    %286 = tpu.concatenate %277, %278, %279, %280, %281, %282, %283, %284, %285 in 2 : vector<8x8x32xbf16>, vector<8x8x32xbf16>, vector<8x8x32xbf16>, vector<8x8x32xbf16>, vector<8x8x32xbf16>, vector<8x8x32xbf16>, vector<8x8x32xbf16>, vector<8x8x32xbf16>, vector<8x8x32xbf16> -> vector<8x8x288xbf16>
    %287 = vector.shape_cast %286 : vector<8x8x288xbf16> to vector<64x288xbf16>
    %cst_86 = arith.constant dense<0.000000e+00> : vector<64x32xf32>
    %288 = tpu.matmul %287, %131, %cst_86 {dimension_numbers = #tpu.dot_dimension_numbers<[1], [0], [0], [1], [0, 0, 1, 1], [], []>} : vector<64x288xbf16>, vector<288x32xbf16>, vector<64x32xf32> -> vector<64x32xf32>
    %289 = vector.broadcast %132 : vector<1x32xf32> to vector<64x32xf32>
    %290 = arith.addf %288, %289 : vector<64x32xf32>
    %291 = arith.truncf %122 : vector<64x32xf32> to vector<64x32xbf16>
    %cst_87 = arith.constant dense<0.000000e+00> : vector<64x32xf32>
    %292 = tpu.matmul %291, %133, %cst_87 {dimension_numbers = #tpu.dot_dimension_numbers<[1], [0], [0], [1], [0, 0, 1, 1], [], []>} : vector<64x32xbf16>, vector<32x32xbf16>, vector<64x32xf32> -> vector<64x32xf32>
    %293 = vector.broadcast %134 : vector<1x32xf32> to vector<64x32xf32>
    %294 = arith.addf %292, %293 : vector<64x32xf32>
    %295 = arith.addf %290, %294 : vector<64x32xf32>
    %c0_88 = arith.constant 0 : index
    %c0_89 = arith.constant 0 : index
    %c0_90 = arith.constant 0 : index
    %296 = vector.load %arg19[%c0_88, %c0_89, %c0_90] : memref<1x64x32xf32, #tpu.memory_space<vmem>>, vector<1x64x32xf32>
    %297 = vector.shape_cast %296 : vector<1x64x32xf32> to vector<64x32xf32>
    %298 = vector.shape_cast %295 : vector<64x32xf32> to vector<1x64x32xf32>
    tpu.vector_store %arg19[%c0_88, %c0_89, %c0_90], %298 {strides = array<i32>} : memref<1x64x32xf32, #tpu.memory_space<vmem>>, vector<1x64x32xf32>,
    return
  }
  func.func @transform_0(%arg0: i32) -> (i32, i32, i32) {
    %c0_i32 = arith.constant 0 : i32
    %c0_i32_0 = arith.constant 0 : i32
    %c0_i32_1 = arith.constant 0 : i32
    return %arg0, %c0_i32, %c0_i32_0 : i32, i32, i32
  }
  func.func @transform_1(%arg0: i32) -> (i32, i32, i32) {
    %c0_i32 = arith.constant 0 : i32
    %c0_i32_0 = arith.constant 0 : i32
    %c0_i32_1 = arith.constant 0 : i32
    return %arg0, %c0_i32, %c0_i32_0 : i32, i32, i32
  }
  func.func @transform_2(%arg0: i32) -> (i32, i32) {
    %c0_i32 = arith.constant 0 : i32
    %c0_i32_0 = arith.constant 0 : i32
    %c0_i32_1 = arith.constant 0 : i32
    return %c0_i32, %c0_i32_0 : i32, i32
  }
  func.func @transform_3(%arg0: i32) -> (i32, i32) {
    %c0_i32 = arith.constant 0 : i32
    %c0_i32_0 = arith.constant 0 : i32
    %c0_i32_1 = arith.constant 0 : i32
    return %c0_i32, %c0_i32_0 : i32, i32
  }
  func.func @transform_4(%arg0: i32) -> (i32, i32) {
    %c0_i32 = arith.constant 0 : i32
    %c0_i32_0 = arith.constant 0 : i32
    %c0_i32_1 = arith.constant 0 : i32
    return %c0_i32, %c0_i32_0 : i32, i32
  }
  func.func @transform_5(%arg0: i32) -> (i32, i32) {
    %c0_i32 = arith.constant 0 : i32
    %c0_i32_0 = arith.constant 0 : i32
    %c0_i32_1 = arith.constant 0 : i32
    return %c0_i32, %c0_i32_0 : i32, i32
  }
  func.func @transform_6(%arg0: i32) -> (i32, i32, i32) {
    %c0_i32 = arith.constant 0 : i32
    %c0_i32_0 = arith.constant 0 : i32
    %c0_i32_1 = arith.constant 0 : i32
    %c0_i32_2 = arith.constant 0 : i32
    return %c0_i32, %c0_i32_0, %c0_i32_1 : i32, i32, i32
  }
  func.func @transform_7(%arg0: i32) -> (i32, i32) {
    %c0_i32 = arith.constant 0 : i32
    %c0_i32_0 = arith.constant 0 : i32
    %c0_i32_1 = arith.constant 0 : i32
    return %c0_i32, %c0_i32_0 : i32, i32
  }
  func.func @transform_8(%arg0: i32) -> (i32, i32) {
    %c0_i32 = arith.constant 0 : i32
    %c0_i32_0 = arith.constant 0 : i32
    %c0_i32_1 = arith.constant 0 : i32
    return %c0_i32, %c0_i32_0 : i32, i32
  }
  func.func @transform_9(%arg0: i32) -> (i32, i32) {
    %c0_i32 = arith.constant 0 : i32
    %c0_i32_0 = arith.constant 0 : i32
    %c0_i32_1 = arith.constant 0 : i32
    return %c0_i32, %c0_i32_0 : i32, i32
  }
  func.func @transform_10(%arg0: i32) -> (i32, i32) {
    %c0_i32 = arith.constant 0 : i32
    %c0_i32_0 = arith.constant 0 : i32
    %c0_i32_1 = arith.constant 0 : i32
    return %c0_i32, %c0_i32_0 : i32, i32
  }
  func.func @transform_11(%arg0: i32) -> (i32, i32) {
    %c0_i32 = arith.constant 0 : i32
    %c0_i32_0 = arith.constant 0 : i32
    %c0_i32_1 = arith.constant 0 : i32
    return %c0_i32, %c0_i32_0 : i32, i32
  }
  func.func @transform_12(%arg0: i32) -> (i32, i32) {
    %c0_i32 = arith.constant 0 : i32
    %c0_i32_0 = arith.constant 0 : i32
    %c0_i32_1 = arith.constant 0 : i32
    return %c0_i32, %c0_i32_0 : i32, i32
  }
  func.func @transform_13(%arg0: i32) -> (i32, i32) {
    %c0_i32 = arith.constant 0 : i32
    %c0_i32_0 = arith.constant 0 : i32
    %c0_i32_1 = arith.constant 0 : i32
    return %c0_i32, %c0_i32_0 : i32, i32
  }
  func.func @transform_14(%arg0: i32) -> (i32, i32) {
    %c0_i32 = arith.constant 0 : i32
    %c0_i32_0 = arith.constant 0 : i32
    %c0_i32_1 = arith.constant 0 : i32
    return %c0_i32, %c0_i32_0 : i32, i32
  }
  func.func @transform_15(%arg0: i32) -> (i32, i32) {
    %c0_i32 = arith.constant 0 : i32
    %c0_i32_0 = arith.constant 0 : i32
    %c0_i32_1 = arith.constant 0 : i32
    return %c0_i32, %c0_i32_0 : i32, i32
  }
  func.func @transform_16(%arg0: i32) -> (i32, i32) {
    %c0_i32 = arith.constant 0 : i32
    %c0_i32_0 = arith.constant 0 : i32
    %c0_i32_1 = arith.constant 0 : i32
    return %c0_i32, %c0_i32_0 : i32, i32
  }
  func.func @transform_17(%arg0: i32) -> (i32, i32) {
    %c0_i32 = arith.constant 0 : i32
    %c0_i32_0 = arith.constant 0 : i32
    %c0_i32_1 = arith.constant 0 : i32
    return %c0_i32, %c0_i32_0 : i32, i32
  }
  func.func @transform_18(%arg0: i32) -> (i32, i32, i32) {
    %c0_i32 = arith.constant 0 : i32
    %c0_i32_0 = arith.constant 0 : i32
    %c0_i32_1 = arith.constant 0 : i32
    return %arg0, %c0_i32, %c0_i32_0 : i32, i32, i32
  }
}

</mosaic_0001>

<llo_original>
// kernel: mid_block_forward.2
$region0: #{mid_block_forward.2}
  #allocation0 [shape = 'u32[]', space=smem, size = 0x4, offset = 0x4, fixed_abs, tag = 'smem constant byte address 0x4 - core index']
  #allocation1 [shape = 'u32[144,128]{1,0:T(1,128)}', space=vmem, size = 0x12000, scoped, tag = 'internal scratch']
  %s0 = inlined_call_operand.vmem [shape: f32[2,64,16], index: 0, kind: input, shape index: {}]
  %s1 = inlined_call_operand.vmem [shape: f32[2,1,32], index: 1, kind: input, shape index: {}]
  %s2 = inlined_call_operand.vmem [shape: f32[1,16], index: 2, kind: input, shape index: {}]
  %s3 = inlined_call_operand.vmem [shape: f32[1,16], index: 3, kind: input, shape index: {}]
  %s4 = inlined_call_operand.vmem [shape: bf16[144,32], index: 4, kind: input, shape index: {}]
  %s5 = inlined_call_operand.vmem [shape: f32[1,32], index: 5, kind: input, shape index: {}]
  %s6 = inlined_call_operand.vmem [shape: f32[1,32], index: 6, kind: input, shape index: {}]
  %s7 = inlined_call_operand.vmem [shape: f32[1,32], index: 7, kind: input, shape index: {}]
  %s8 = inlined_call_operand.vmem [shape: bf16[288,32], index: 8, kind: input, shape index: {}]
  %s9 = inlined_call_operand.vmem [shape: f32[1,32], index: 9, kind: input, shape index: {}]
  %s10 = inlined_call_operand.vmem [shape: bf16[16,32], index: 10, kind: input, shape index: {}]
  %s11 = inlined_call_operand.vmem [shape: f32[1,32], index: 11, kind: input, shape index: {}]
  %s12 = inlined_call_operand.vmem [shape: f32[2,64,32], index: 12, kind: output, shape index: {}]
  %s13 = sld [smem:[#allocation0]]
  $region81: #{mid_block_forward.2} parent=0
    _
  %s15 = ssub.s32 1, %s13
  %s16 = scalar_select 0, %s15, %s13
  loop: start=0, step=1, limit=4
  $region2: #{mid_block_forward.2} parent=0 // loop_pre_header
    _
  $region3: #{mid_block_forward.2} parent=0 // loop_header
    %s18 = sphi 0, %s22
    %p19 = scmp.ge.s32.totalorder %s18, 4
    %s28 = sphi 0, %s30
    %s31 = sphi 0, %s28
    %s32 = sphi 0, %s31
    %s48 = sphi 0, %s32
    %s54 = sphi 0, %s56
    %s57 = sphi 0, %s54
    %s58 = sphi 0, %s57
    %s74 = sphi 0, %s58
    %s78 = sphi 0, %s78
    %s80 = sphi 0, %s78
    %s81 = sphi 0, %s80
    %s95 = sphi 0, %s81
    %s99 = sphi 0, %s99
    %s101 = sphi 0, %s99
    %s102 = sphi 0, %s101
    %s116 = sphi 0, %s102
    %s120 = sphi 0, %s120
    %s122 = sphi 0, %s120
    %s123 = sphi 0, %s122
    %s137 = sphi 0, %s123
    %s141 = sphi 0, %s141
    %s143 = sphi 0, %s141
    %s144 = sphi 0, %s143
    %s158 = sphi 0, %s144
    %s162 = sphi 0, %s162
    %s164 = sphi 0, %s162
    %s165 = sphi 0, %s164
    %s179 = sphi 0, %s165
    %s183 = sphi 0, %s183
    %s185 = sphi 0, %s183
    %s186 = sphi 0, %s185
    %s200 = sphi 0, %s186
    %s204 = sphi 0, %s204
    %s206 = sphi 0, %s204
    %s207 = sphi 0, %s206
    %s221 = sphi 0, %s207
    %s225 = sphi 0, %s225
    %s227 = sphi 0, %s225
    %s228 = sphi 0, %s227
    %s242 = sphi 0, %s228
    %s246 = sphi 0, %s246
    %s248 = sphi 0, %s246
    %s249 = sphi 0, %s248
    %s263 = sphi 0, %s249
    %s267 = sphi 0, %s267
    %s269 = sphi 0, %s267
    %s270 = sphi 0, %s269
    %s284 = sphi 0, %s270
    %s290 = sphi 0, %s292
    %s293 = sphi 0, %s290
    %s294 = sphi 0, %s293
    %s310 = sphi 0, %s294
  $region4: #{mid_block_forward.2} parent=0 // loop_header_branch
    %21 = sbr.rel (%p19) target = $region8
  $region5: #{mid_block_forward.2} parent=0 // loop_body
    %s23 = ssub.s32 %s18, 1
    %s24 = ssub.s32 %s18, 2
    %s25 = sadd.s32 %s18, 1
    %s26 = ssub.s32 %s18, %s25
    %p27 = scmp.eq.s32.totalorder %s26, 0
    %s29 = sadd.s32 %s28, 1
    %s30 = scalar_select %p27, %s28, %s29
    %p33 = pneg %p27
    %p34 = scmp.eq.s32.totalorder %s18, 1
    %p35 = por %p33, %p34
    %p36 = scmp.ne.s32.totalorder %s28, %s31
    %p37 = scmp.eq.s32.totalorder %s18, 0
    %p38 = por %p36, %p37
    %p39 = scmp.ne.s32.totalorder %s28, %s31
    %p40 = scmp.eq.s32.totalorder %s23, 1
    %p41 = por %p39, %p40
    %p42 = scmp.ne.s32.totalorder %s31, %s32
    %p43 = scmp.eq.s32.totalorder %s23, 0
    %p44 = por %p42, %p43
    %p45 = scmp.ne.s32.totalorder %s31, %s32
    %p46 = scmp.eq.s32.totalorder %s24, 1
    %p47 = por %p45, %p46
    %p49 = scmp.ne.s32.totalorder %s32, %s48
    %p50 = scmp.eq.s32.totalorder %s24, 0
    %p51 = por %p49, %p50
    %s52 = ssub.s32 %s18, %s25
    %p53 = scmp.eq.s32.totalorder %s52, 0
    %s55 = sadd.s32 %s54, 1
    %s56 = scalar_select %p53, %s54, %s55
    %p59 = pneg %p53
    %p60 = scmp.eq.s32.totalorder %s18, 1
    %p61 = por %p59, %p60
    %p62 = scmp.ne.s32.totalorder %s54, %s57
    %p63 = scmp.eq.s32.totalorder %s18, 0
    %p64 = por %p62, %p63
    %p65 = scmp.ne.s32.totalorder %s54, %s57
    %p66 = scmp.eq.s32.totalorder %s23, 1
    %p67 = por %p65, %p66
    %p68 = scmp.ne.s32.totalorder %s57, %s58
    %p69 = scmp.eq.s32.totalorder %s23, 0
    %p70 = por %p68, %p69
    %p71 = scmp.ne.s32.totalorder %s57, %s58
    %p72 = scmp.eq.s32.totalorder %s24, 1
    %p73 = por %p71, %p72
    %p75 = scmp.ne.s32.totalorder %s58, %s74
    %p76 = scmp.eq.s32.totalorder %s24, 0
    %p77 = por %p75, %p76
    %s79 = sadd.s32 %s78, 1
    %p82 = scmp.eq.s32.totalorder %s18, 1
    %p83 = scmp.ne.s32.totalorder %s78, %s80
    %p84 = scmp.eq.s32.totalorder %s18, 0
    %p85 = por %p83, %p84
    %p86 = scmp.ne.s32.totalorder %s78, %s80
    %p87 = scmp.eq.s32.totalorder %s23, 1
    %p88 = por %p86, %p87
    %p89 = scmp.ne.s32.totalorder %s80, %s81
    %p90 = scmp.eq.s32.totalorder %s23, 0
    %p91 = por %p89, %p90
    %p92 = scmp.ne.s32.totalorder %s80, %s81
    %p93 = scmp.eq.s32.totalorder %s24, 1
    %p94 = por %p92, %p93
    %p96 = scmp.ne.s32.totalorder %s81, %s95
    %p97 = scmp.eq.s32.totalorder %s24, 0
    %p98 = por %p96, %p97
    %s100 = sadd.s32 %s99, 1
    %p103 = scmp.eq.s32.totalorder %s18, 1
    %p104 = scmp.ne.s32.totalorder %s99, %s101
    %p105 = scmp.eq.s32.totalorder %s18, 0
    %p106 = por %p104, %p105
    %p107 = scmp.ne.s32.totalorder %s99, %s101
    %p108 = scmp.eq.s32.totalorder %s23, 1
    %p109 = por %p107, %p108
    %p110 = scmp.ne.s32.totalorder %s101, %s102
    %p111 = scmp.eq.s32.totalorder %s23, 0
    %p112 = por %p110, %p111
    %p113 = scmp.ne.s32.totalorder %s101, %s102
    %p114 = scmp.eq.s32.totalorder %s24, 1
    %p115 = por %p113, %p114
    %p117 = scmp.ne.s32.totalorder %s102, %s116
    %p118 = scmp.eq.s32.totalorder %s24, 0
    %p119 = por %p117, %p118
    %s121 = sadd.s32 %s120, 1
    %p124 = scmp.eq.s32.totalorder %s18, 1
    %p125 = scmp.ne.s32.totalorder %s120, %s122
    %p126 = scmp.eq.s32.totalorder %s18, 0
    %p127 = por %p125, %p126
    %p128 = scmp.ne.s32.totalorder %s120, %s122
    %p129 = scmp.eq.s32.totalorder %s23, 1
    %p130 = por %p128, %p129
    %p131 = scmp.ne.s32.totalorder %s122, %s123
    %p132 = scmp.eq.s32.totalorder %s23, 0
    %p133 = por %p131, %p132
    %p134 = scmp.ne.s32.totalorder %s122, %s123
    %p135 = scmp.eq.s32.totalorder %s24, 1
    %p136 = por %p134, %p135
    %p138 = scmp.ne.s32.totalorder %s123, %s137
    %p139 = scmp.eq.s32.totalorder %s24, 0
    %p140 = por %p138, %p139
    %s142 = sadd.s32 %s141, 1
    %p145 = scmp.eq.s32.totalorder %s18, 1
    %p146 = scmp.ne.s32.totalorder %s141, %s143
    %p147 = scmp.eq.s32.totalorder %s18, 0
    %p148 = por %p146, %p147
    %p149 = scmp.ne.s32.totalorder %s141, %s143
    %p150 = scmp.eq.s32.totalorder %s23, 1
    %p151 = por %p149, %p150
    %p152 = scmp.ne.s32.totalorder %s143, %s144
    %p153 = scmp.eq.s32.totalorder %s23, 0
    %p154 = por %p152, %p153
    %p155 = scmp.ne.s32.totalorder %s143, %s144
    %p156 = scmp.eq.s32.totalorder %s24, 1
    %p157 = por %p155, %p156
    %p159 = scmp.ne.s32.totalorder %s144, %s158
    %p160 = scmp.eq.s32.totalorder %s24, 0
    %p161 = por %p159, %p160
    %s163 = sadd.s32 %s162, 1
    %p166 = scmp.eq.s32.totalorder %s18, 1
    %p167 = scmp.ne.s32.totalorder %s162, %s164
    %p168 = scmp.eq.s32.totalorder %s18, 0
    %p169 = por %p167, %p168
    %p170 = scmp.ne.s32.totalorder %s162, %s164
    %p171 = scmp.eq.s32.totalorder %s23, 1
    %p172 = por %p170, %p171
    %p173 = scmp.ne.s32.totalorder %s164, %s165
    %p174 = scmp.eq.s32.totalorder %s23, 0
    %p175 = por %p173, %p174
    %p176 = scmp.ne.s32.totalorder %s164, %s165
    %p177 = scmp.eq.s32.totalorder %s24, 1
    %p178 = por %p176, %p177
    %p180 = scmp.ne.s32.totalorder %s165, %s179
    %p181 = scmp.eq.s32.totalorder %s24, 0
    %p182 = por %p180, %p181
    %s184 = sadd.s32 %s183, 1
    %p187 = scmp.eq.s32.totalorder %s18, 1
    %p188 = scmp.ne.s32.totalorder %s183, %s185
    %p189 = scmp.eq.s32.totalorder %s18, 0
    %p190 = por %p188, %p189
    %p191 = scmp.ne.s32.totalorder %s183, %s185
    %p192 = scmp.eq.s32.totalorder %s23, 1
    %p193 = por %p191, %p192
    %p194 = scmp.ne.s32.totalorder %s185, %s186
    %p195 = scmp.eq.s32.totalorder %s23, 0
    %p196 = por %p194, %p195
    %p197 = scmp.ne.s32.totalorder %s185, %s186
    %p198 = scmp.eq.s32.totalorder %s24, 1
    %p199 = por %p197, %p198
    %p201 = scmp.ne.s32.totalorder %s186, %s200
    %p202 = scmp.eq.s32.totalorder %s24, 0
    %p203 = por %p201, %p202
    %s205 = sadd.s32 %s204, 1
    %p208 = scmp.eq.s32.totalorder %s18, 1
    %p209 = scmp.ne.s32.totalorder %s204, %s206
    %p210 = scmp.eq.s32.totalorder %s18, 0
    %p211 = por %p209, %p210
    %p212 = scmp.ne.s32.totalorder %s204, %s206
    %p213 = scmp.eq.s32.totalorder %s23, 1
    %p214 = por %p212, %p213
    %p215 = scmp.ne.s32.totalorder %s206, %s207
    %p216 = scmp.eq.s32.totalorder %s23, 0
    %p217 = por %p215, %p216
    %p218 = scmp.ne.s32.totalorder %s206, %s207
    %p219 = scmp.eq.s32.totalorder %s24, 1
    %p220 = por %p218, %p219
    %p222 = scmp.ne.s32.totalorder %s207, %s221
    %p223 = scmp.eq.s32.totalorder %s24, 0
    %p224 = por %p222, %p223
    %s226 = sadd.s32 %s225, 1
    %p229 = scmp.eq.s32.totalorder %s18, 1
    %p230 = scmp.ne.s32.totalorder %s225, %s227
    %p231 = scmp.eq.s32.totalorder %s18, 0
    %p232 = por %p230, %p231
    %p233 = scmp.ne.s32.totalorder %s225, %s227
    %p234 = scmp.eq.s32.totalorder %s23, 1
    %p235 = por %p233, %p234
    %p236 = scmp.ne.s32.totalorder %s227, %s228
    %p237 = scmp.eq.s32.totalorder %s23, 0
    %p238 = por %p236, %p237
    %p239 = scmp.ne.s32.totalorder %s227, %s228
    %p240 = scmp.eq.s32.totalorder %s24, 1
    %p241 = por %p239, %p240
    %p243 = scmp.ne.s32.totalorder %s228, %s242
    %p244 = scmp.eq.s32.totalorder %s24, 0
    %p245 = por %p243, %p244
    %s247 = sadd.s32 %s246, 1
    %p250 = scmp.eq.s32.totalorder %s18, 1
    %p251 = scmp.ne.s32.totalorder %s246, %s248
    %p252 = scmp.eq.s32.totalorder %s18, 0
    %p253 = por %p251, %p252
    %p254 = scmp.ne.s32.totalorder %s246, %s248
    %p255 = scmp.eq.s32.totalorder %s23, 1
    %p256 = por %p254, %p255
    %p257 = scmp.ne.s32.totalorder %s248, %s249
    %p258 = scmp.eq.s32.totalorder %s23, 0
    %p259 = por %p257, %p258
    %p260 = scmp.ne.s32.totalorder %s248, %s249
    %p261 = scmp.eq.s32.totalorder %s24, 1
    %p262 = por %p260, %p261
    %p264 = scmp.ne.s32.totalorder %s249, %s263
    %p265 = scmp.eq.s32.totalorder %s24, 0
    %p266 = por %p264, %p265
    %s268 = sadd.s32 %s267, 1
    %p271 = scmp.eq.s32.totalorder %s18, 1
    %p272 = scmp.ne.s32.totalorder %s267, %s269
    %p273 = scmp.eq.s32.totalorder %s18, 0
    %p274 = por %p272, %p273
    %p275 = scmp.ne.s32.totalorder %s267, %s269
    %p276 = scmp.eq.s32.totalorder %s23, 1
    %p277 = por %p275, %p276
    %p278 = scmp.ne.s32.totalorder %s269, %s270
    %p279 = scmp.eq.s32.totalorder %s23, 0
    %p280 = por %p278, %p279
    %p281 = scmp.ne.s32.totalorder %s269, %s270
    %p282 = scmp.eq.s32.totalorder %s24, 1
    %p283 = por %p281, %p282
    %p285 = scmp.ne.s32.totalorder %s270, %s284
    %p286 = scmp.eq.s32.totalorder %s24, 0
    %p287 = por %p285, %p286
    %s288 = ssub.s32 %s18, %s25
    %p289 = scmp.eq.s32.totalorder %s288, 0
    %s291 = sadd.s32 %s290, 1
    %s292 = scalar_select %p289, %s290, %s291
    %p295 = pneg %p289
    %p296 = scmp.eq.s32.totalorder %s18, 1
    %p297 = por %p295, %p296
    %p298 = scmp.ne.s32.totalorder %s290, %s293
    %p299 = scmp.eq.s32.totalorder %s18, 0
    %p300 = por %p298, %p299
    %p301 = scmp.ne.s32.totalorder %s290, %s293
    %p302 = scmp.eq.s32.totalorder %s23, 1
    %p303 = por %p301, %p302
    %p304 = scmp.ne.s32.totalorder %s293, %s294
    %p305 = scmp.eq.s32.totalorder %s23, 0
    %p306 = por %p304, %p305
    %p307 = scmp.ne.s32.totalorder %s293, %s294
    %p308 = scmp.eq.s32.totalorder %s24, 1
    %p309 = por %p307, %p308
    %p311 = scmp.ne.s32.totalorder %s294, %s310
    %p312 = scmp.eq.s32.totalorder %s24, 0
    %p313 = por %p311, %p312
    %p314 = scmp.le.s32.totalorder 1, %s18
    %p315 = scmp.lt.s32.totalorder %s18, 3
    %p316 = pnand %p314, %p315
    %p317 = pneg %p316
    // Predicated region
    $region9: #{mid_block_forward.2} parent=5 // pred_check
      _
    $region10: #{mid_block_forward.2} parent=5 // pred_check_branch
      %319 = sbr.rel (%p316) target = $region12
    $region11: #{mid_block_forward.2} parent=5 // pred_region
      %s320 = ssub.s32 %s18, 1
      // Predicated region
      $region13: #{mid_block_forward.2} parent=11 // pred_check
        %p321 = pneg %p91
      $region14: #{mid_block_forward.2} parent=11 // pred_check_branch
        %323 = sbr.rel (%p321) target = $region16
      $region15: #{mid_block_forward.2} parent=11 // pred_region
        _
      $region16: #{mid_block_forward.2} parent=11 // pred_fallthru
        _
      // Predicated region
      $region17: #{mid_block_forward.2} parent=11 // pred_check
        %p324 = pneg %p112
      $region18: #{mid_block_forward.2} parent=11 // pred_check_branch
        %326 = sbr.rel (%p324) target = $region20
      $region19: #{mid_block_forward.2} parent=11 // pred_region
        _
      $region20: #{mid_block_forward.2} parent=11 // pred_fallthru
        _
      // Predicated region
      $region21: #{mid_block_forward.2} parent=11 // pred_check
        %p327 = pneg %p133
      $region22: #{mid_block_forward.2} parent=11 // pred_check_branch
        %329 = sbr.rel (%p327) target = $region24
      $region23: #{mid_block_forward.2} parent=11 // pred_region
        _
      $region24: #{mid_block_forward.2} parent=11 // pred_fallthru
        _
      // Predicated region
      $region25: #{mid_block_forward.2} parent=11 // pred_check
        %p330 = pneg %p154
      $region26: #{mid_block_forward.2} parent=11 // pred_check_branch
        %332 = sbr.rel (%p330) target = $region28
      $region27: #{mid_block_forward.2} parent=11 // pred_region
        _
      $region28: #{mid_block_forward.2} parent=11 // pred_fallthru
        _
      // Predicated region
      $region29: #{mid_block_forward.2} parent=11 // pred_check
        %p333 = pneg %p175
      $region30: #{mid_block_forward.2} parent=11 // pred_check_branch
        %335 = sbr.rel (%p333) target = $region32
      $region31: #{mid_block_forward.2} parent=11 // pred_region
        _
      $region32: #{mid_block_forward.2} parent=11 // pred_fallthru
        _
      // Predicated region
      $region33: #{mid_block_forward.2} parent=11 // pred_check
        %p336 = pneg %p196
      $region34: #{mid_block_forward.2} parent=11 // pred_check_branch
        %338 = sbr.rel (%p336) target = $region36
      $region35: #{mid_block_forward.2} parent=11 // pred_region
        _
      $region36: #{mid_block_forward.2} parent=11 // pred_fallthru
        _
      // Predicated region
      $region37: #{mid_block_forward.2} parent=11 // pred_check
        %p339 = pneg %p217
      $region38: #{mid_block_forward.2} parent=11 // pred_check_branch
        %341 = sbr.rel (%p339) target = $region40
      $region39: #{mid_block_forward.2} parent=11 // pred_region
        _
      $region40: #{mid_block_forward.2} parent=11 // pred_fallthru
        _
      // Predicated region
      $region41: #{mid_block_forward.2} parent=11 // pred_check
        %p342 = pneg %p238
      $region42: #{mid_block_forward.2} parent=11 // pred_check_branch
        %344 = sbr.rel (%p342) target = $region44
      $region43: #{mid_block_forward.2} parent=11 // pred_region
        _
      $region44: #{mid_block_forward.2} parent=11 // pred_fallthru
        _
      // Predicated region
      $region45: #{mid_block_forward.2} parent=11 // pred_check
        %p345 = pneg %p259
      $region46: #{mid_block_forward.2} parent=11 // pred_check_branch
        %347 = sbr.rel (%p345) target = $region48
      $region47: #{mid_block_forward.2} parent=11 // pred_region
        _
      $region48: #{mid_block_forward.2} parent=11 // pred_fallthru
        _
      // Predicated region
      $region49: #{mid_block_forward.2} parent=11 // pred_check
        %p348 = pneg %p280
      $region50: #{mid_block_forward.2} parent=11 // pred_check_branch
        %350 = sbr.rel (%p348) target = $region52
      $region51: #{mid_block_forward.2} parent=11 // pred_region
        _
      $region52: #{mid_block_forward.2} parent=11 // pred_fallthru
        _
    $region12: #{mid_block_forward.2} parent=5 // pred_fallthru
      _
    %p351 = scmp.lt.s32.totalorder %s18, 2
    // Predicated region
    $region53: #{mid_block_forward.2} parent=5 // pred_check
      %p352 = pneg %p351
    $region54: #{mid_block_forward.2} parent=5 // pred_check_branch
      %354 = sbr.rel (%p352) target = $region56
    $region55: #{mid_block_forward.2} parent=5 // pred_region
      // Predicated region
      $region57: #{mid_block_forward.2} parent=55 // pred_check
        %p355 = pneg %p38
      $region58: #{mid_block_forward.2} parent=55 // pred_check_branch
        %357 = sbr.rel (%p355) target = $region60
      $region59: #{mid_block_forward.2} parent=55 // pred_region
        %p358 = scmp.lt.s32.totalorder %s18, 1
        %s359 = scalar_select %p358, %s18, 1
        %s360 = smul.addr %s359, 8
        %s361 = smul.addr %s360, 8
        %s362 = scalar_lea.vmem %s0, %s361
      $region60: #{mid_block_forward.2} parent=55 // pred_fallthru
        _
      // Predicated region
      $region61: #{mid_block_forward.2} parent=55 // pred_check
        %p363 = pneg %p64
      $region62: #{mid_block_forward.2} parent=55 // pred_check_branch
        %365 = sbr.rel (%p363) target = $region64
      $region63: #{mid_block_forward.2} parent=55 // pred_region
        %p366 = scmp.lt.s32.totalorder %s18, 1
        %s367 = scalar_select %p366, %s18, 1
        %s368 = scalar_lea.vmem %s1, %s367
      $region64: #{mid_block_forward.2} parent=55 // pred_fallthru
        _
    $region56: #{mid_block_forward.2} parent=5 // pred_fallthru
      _
    %p369 = scmp.le.s32.totalorder 1, %s18
    %p370 = scmp.lt.s32.totalorder %s18, 3
    %p371 = pnand %p369, %p370
    %p372 = pneg %p371
    // Predicated region
    $region65: #{mid_block_forward.2} parent=5 // pred_check
      _
    $region66: #{mid_block_forward.2} parent=5 // pred_check_branch
      %374 = sbr.rel (%p371) target = $region68
    $region67: #{mid_block_forward.2} parent=5 // pred_region
      %s375 = ssub.s32 %s18, 1
      %p376 = scmp.lt.s32.totalorder %s23, 1
      %s377 = scalar_select %p376, %s23, 1
      %s378 = smul.addr %s377, 8
      %s379 = smul.addr %s378, 8
      %s380 = scalar_lea.vmem %s0, %s379
      %p381 = pneg %p44
      %p382 = pneg %p41
      %p383 = scmp.lt.s32.totalorder %s23, 1
      %s384 = scalar_select %p383, %s23, 1
      %s385 = scalar_lea.vmem %s1, %s384
      %p386 = pneg %p70
      %p387 = pneg %p67
      %p388 = pneg %p91
      %p389 = pneg %p88
      %p390 = pneg %p112
      %p391 = pneg %p109
      %p392 = pneg %p133
      %p393 = pneg %p130
      %p394 = pneg %p154
      %p395 = pneg %p151
      %p396 = pneg %p175
      %p397 = pneg %p172
      %p398 = pneg %p196
      %p399 = pneg %p193
      %p400 = pneg %p217
      %p401 = pneg %p214
      %p402 = pneg %p238
      %p403 = pneg %p235
      %p404 = pneg %p259
      %p405 = pneg %p256
      %p406 = pneg %p280
      %p407 = pneg %p277
      %p408 = pneg %p306
      %p409 = pneg %p303
      %p410 = scmp.lt.s32.totalorder %s23, 1
      %s411 = scalar_select %p410, %s23, 1
      %s412 = smul.addr %s411, 8
      %s413 = smul.addr %s412, 8
      %s414 = scalar_lea.vmem %s12, %s413
      %p415 = scmp.lt.s32.totalorder %s23, 1
      %s416 = scalar_select %p415, %s23, 1
      %s417 = smul.addr %s416, 8
      %s418 = smul.addr %s417, 8
      %s419 = scalar_lea.vmem %s0, %s418
      %p420 = scmp.lt.s32.totalorder %s23, 1
      %s421 = scalar_select %p420, %s23, 1
      %s422 = scalar_lea.vmem %s1, %s421
      %p423 = scmp.lt.s32.totalorder %s23, 1
      %s424 = scalar_select %p423, %s23, 1
      %s425 = smul.addr %s424, 8
      %s426 = smul.addr %s425, 8
      %s427 = scalar_lea.vmem %s12, %s426
      %v429 = vld [vmem:[%s419] sm:$0xff]
      %v430 = vld [vmem:[%s419 + $0x8] sm:$0xff]
      %v431 = vld [vmem:[%s419 + $0x10] sm:$0xff]
      %v432 = vld [vmem:[%s419 + $0x18] sm:$0xff]
      %v433 = vld [vmem:[%s419 + $0x20] sm:$0xff]
      %v434 = vld [vmem:[%s419 + $0x28] sm:$0xff]
      %v435 = vld [vmem:[%s419 + $0x30] sm:$0xff]
      %v436 = vld [vmem:[%s419 + $0x38] sm:$0xff]
      %v437 = vld [vmem:[%s422] sm:$0x1]
      %v438 = vld [vmem:[%s2] sm:$0x1]
      %v439 = vld [vmem:[%s3] sm:$0x1]
      %v440 = vld [vmem:[%s4] sm:$0xf]
      %v441 = vld [vmem:[%s4 + $0x4] sm:$0xf]
      %v442 = vld [vmem:[%s4 + $0x8] sm:$0xf]
      %v443 = vld [vmem:[%s4 + $0xc] sm:$0xf]
      %v444 = vld [vmem:[%s4 + $0x10] sm:$0xf]
      %v445 = vld [vmem:[%s4 + $0x14] sm:$0xf]
      %v446 = vld [vmem:[%s4 + $0x18] sm:$0xf]
      %v447 = vld [vmem:[%s4 + $0x1c] sm:$0xf]
      %v448 = vld [vmem:[%s4 + $0x20] sm:$0xf]
      %v449 = vld [vmem:[%s4 + $0x24] sm:$0xf]
      %v450 = vld [vmem:[%s4 + $0x28] sm:$0xf]
      %v451 = vld [vmem:[%s4 + $0x2c] sm:$0xf]
      %v452 = vld [vmem:[%s4 + $0x30] sm:$0xf]
      %v453 = vld [vmem:[%s4 + $0x34] sm:$0xf]
      %v454 = vld [vmem:[%s4 + $0x38] sm:$0xf]
      %v455 = vld [vmem:[%s4 + $0x3c] sm:$0xf]
      %v456 = vld [vmem:[%s4 + $0x40] sm:$0xf]
      %v457 = vld [vmem:[%s4 + $0x44] sm:$0xf]
      %v458 = vld [vmem:[%s5] sm:$0x1]
      %v459 = vld [vmem:[%s6] sm:$0x1]
      %v460 = vld [vmem:[%s7] sm:$0x1]
      %v461 = vld [vmem:[%s8] sm:$0xf]
      %v462 = vld [vmem:[%s8 + $0x4] sm:$0xf]
      %v463 = vld [vmem:[%s8 + $0x8] sm:$0xf]
      %v464 = vld [vmem:[%s8 + $0xc] sm:$0xf]
      %v465 = vld [vmem:[%s8 + $0x10] sm:$0xf]
      %v466 = vld [vmem:[%s8 + $0x14] sm:$0xf]
      %v467 = vld [vmem:[%s8 + $0x18] sm:$0xf]
      %v468 = vld [vmem:[%s8 + $0x1c] sm:$0xf]
      %v469 = vld [vmem:[%s8 + $0x20] sm:$0xf]
      %v470 = vld [vmem:[%s8 + $0x24] sm:$0xf]
      %v471 = vld [vmem:[%s8 + $0x28] sm:$0xf]
      %v472 = vld [vmem:[%s8 + $0x2c] sm:$0xf]
      %v473 = vld [vmem:[%s8 + $0x30] sm:$0xf]
      %v474 = vld [vmem:[%s8 + $0x34] sm:$0xf]
      %v475 = vld [vmem:[%s8 + $0x38] sm:$0xf]
      %v476 = vld [vmem:[%s8 + $0x3c] sm:$0xf]
      %v477 = vld [vmem:[%s8 + $0x40] sm:$0xf]
      %v478 = vld [vmem:[%s8 + $0x44] sm:$0xf]
      %v479 = vld [vmem:[%s8 + $0x48] sm:$0xf]
      %v480 = vld [vmem:[%s8 + $0x4c] sm:$0xf]
      %v481 = vld [vmem:[%s8 + $0x50] sm:$0xf]
      %v482 = vld [vmem:[%s8 + $0x54] sm:$0xf]
      %v483 = vld [vmem:[%s8 + $0x58] sm:$0xf]
      %v484 = vld [vmem:[%s8 + $0x5c] sm:$0xf]
      %v485 = vld [vmem:[%s8 + $0x60] sm:$0xf]
      %v486 = vld [vmem:[%s8 + $0x64] sm:$0xf]
      %v487 = vld [vmem:[%s8 + $0x68] sm:$0xf]
      %v488 = vld [vmem:[%s8 + $0x6c] sm:$0xf]
      %v489 = vld [vmem:[%s8 + $0x70] sm:$0xf]
      %v490 = vld [vmem:[%s8 + $0x74] sm:$0xf]
      %v491 = vld [vmem:[%s8 + $0x78] sm:$0xf]
      %v492 = vld [vmem:[%s8 + $0x7c] sm:$0xf]
      %v493 = vld [vmem:[%s8 + $0x80] sm:$0xf]
      %v494 = vld [vmem:[%s8 + $0x84] sm:$0xf]
      %v495 = vld [vmem:[%s8 + $0x88] sm:$0xf]
      %v496 = vld [vmem:[%s8 + $0x8c] sm:$0xf]
      %v497 = vld [vmem:[%s9] sm:$0x1]
      %v498 = vld [vmem:[%s10] sm:$0xf]
      %v499 = vld [vmem:[%s10 + $0x4] sm:$0xf]
      %v500 = vld [vmem:[%s11] sm:$0x1]
      %v501 = vlaneseq
      %v502 = vshrl.u32 %v501, 7
      %v503 = vlaneseq
      %v504 = vand.u32 %v503, 127
      %v505 = vmul.u32 %v502, 2
      %vm506 = vcmp.ge.s32.totalorder %v504, %v505
      %v507 = vadd.s32 %v502, 1
      %v508 = vmul.u32 %v507, 2
      %vm509 = vcmp.lt.s32.totalorder %v504, %v508
      %vm510 = vmand %vm506, %vm509
      %v511 = vsel %vm510, 1, 0
      %v512 = vcvt.s32.f32 %v511
      %vm513 = vcmask 130048
      %v514 = vsel %vm513, %v429, 0.0
      %v515 = vsel %vm513, %v430, 0.0
      %v516 = vadd.f32 %v514, %v515
      %v517 = vsel %vm513, %v431, 0.0
      %v518 = vadd.f32 %v516, %v517
      %v519 = vsel %vm513, %v432, 0.0
      %v520 = vadd.f32 %v518, %v519
      %v521 = vsel %vm513, %v433, 0.0
      %v522 = vadd.f32 %v520, %v521
      %v523 = vsel %vm513, %v434, 0.0
      %v524 = vadd.f32 %v522, %v523
      %v525 = vsel %vm513, %v435, 0.0
      %v526 = vadd.f32 %v524, %v525
      %v527 = vsel %vm513, %v436, 0.0
      %v528 = vadd.f32 %v526, %v527
      %v529 = vrot.slane %v528, 4
      %v530 = vadd.f32 %v528, %v529
      %v531 = vrot.slane %v530, 2
      %v532 = vadd.f32 %v530, %v531
      %v533 = vrot.slane %v532, 1
      %v534 = vadd.f32 %v532, %v533
      %v535 = vmul.f32 %v429, %v429
      %v536 = vmul.f32 %v430, %v430
      %v537 = vmul.f32 %v431, %v431
      %v538 = vmul.f32 %v432, %v432
      %v539 = vmul.f32 %v433, %v433
      %v540 = vmul.f32 %v434, %v434
      %v541 = vmul.f32 %v435, %v435
      %v542 = vmul.f32 %v436, %v436
      %v543 = vsel %vm513, %v535, 0.0
      %v544 = vsel %vm513, %v536, 0.0
      %v545 = vadd.f32 %v543, %v544
      %v546 = vsel %vm513, %v537, 0.0
      %v547 = vadd.f32 %v545, %v546
      %v548 = vsel %vm513, %v538, 0.0
      %v549 = vadd.f32 %v547, %v548
      %v550 = vsel %vm513, %v539, 0.0
      %v551 = vadd.f32 %v549, %v550
      %v552 = vsel %vm513, %v540, 0.0
      %v553 = vadd.f32 %v551, %v552
      %v554 = vsel %vm513, %v541, 0.0
      %v555 = vadd.f32 %v553, %v554
      %v556 = vsel %vm513, %v542, 0.0
      %v557 = vadd.f32 %v555, %v556
      %v558 = vrot.slane %v557, 4
      %v559 = vadd.f32 %v557, %v558
      %v560 = vrot.slane %v559, 2
      %v561 = vadd.f32 %v559, %v560
      %v562 = vrot.slane %v561, 1
      %v563 = vadd.f32 %v561, %v562
      %v564 = vmul.f32 %v512, %v534
      %v565 = vsel %vm513, %v564, 0.0
      %566 = vadd.xlane.f32.xlu0 %v565
      %v567 = vpop.xlane.xlu0 %566
      %v568 = vmul.f32 %v512, %v563
      %v569 = vsel %vm513, %v568, 0.0
      %570 = vadd.xlane.f32.xlu0 %v569
      %v571 = vpop.xlane.xlu0 %570
      %v572 = vrcp.pop 128.0
      %v573 = vmul.f32 %v567, %v572
      %v574 = vmul.f32 %v571, %v572
      %v575 = vmul.f32 %v573, %v573
      %v576 = vsub.f32 %v574, %v575
      %v577 = vadd.f32 %v576, 1e-05
      %v578 = vrsqrt.pop %v577
      %v579 = vmul.f32 %v512, %v573
      %v580 = vsel %vm513, %v579, 0.0
      %v581 = vrot.slane %v580, 4
      %v582 = vadd.f32 %v580, %v581
      %v583 = vrot.slane %v582, 2
      %v584 = vadd.f32 %v582, %v583
      %v585 = vrot.slane %v584, 1
      %v586 = vadd.f32 %v584, %v585
      %v587 = vmul.f32 %v512, %v578
      %v588 = vsel %vm513, %v587, 0.0
      %v589 = vrot.slane %v588, 4
      %v590 = vadd.f32 %v588, %v589
      %v591 = vrot.slane %v590, 2
      %v592 = vadd.f32 %v590, %v591
      %v593 = vrot.slane %v592, 1
      %v594 = vadd.f32 %v592, %v593
      %v595 = vsub.f32 %v429, %v586
      %v596 = vsub.f32 %v430, %v586
      %v597 = vsub.f32 %v431, %v586
      %v598 = vsub.f32 %v432, %v586
      %v599 = vsub.f32 %v433, %v586
      %v600 = vsub.f32 %v434, %v586
      %v601 = vsub.f32 %v435, %v586
      %v602 = vsub.f32 %v436, %v586
      %v603 = vmul.f32 %v595, %v594
      %v604 = vmul.f32 %v596, %v594
      %v605 = vmul.f32 %v597, %v594
      %v606 = vmul.f32 %v598, %v594
      %v607 = vmul.f32 %v599, %v594
      %v608 = vmul.f32 %v600, %v594
      %v609 = vmul.f32 %v601, %v594
      %v610 = vmul.f32 %v602, %v594
      %v612 = vlaneseq
      %v613 = vshrl.u32 %v612, 7
      %v614 = vsub.s32 0, %v613
      %v615 = vrot.slane %v438, %v614
      %v617 = vmul.f32 %v603, %v615
      %v618 = vmul.f32 %v604, %v615
      %v619 = vmul.f32 %v605, %v615
      %v620 = vmul.f32 %v606, %v615
      %v621 = vmul.f32 %v607, %v615
      %v622 = vmul.f32 %v608, %v615
      %v623 = vmul.f32 %v609, %v615
      %v624 = vmul.f32 %v610, %v615
      %v626 = vlaneseq
      %v627 = vshrl.u32 %v626, 7
      %v628 = vsub.s32 0, %v627
      %v629 = vrot.slane %v439, %v628
      %v631 = vadd.f32 %v617, %v629
      %v632 = vadd.f32 %v618, %v629
      %v633 = vadd.f32 %v619, %v629
      %v634 = vadd.f32 %v620, %v629
      %v635 = vadd.f32 %v621, %v629
      %v636 = vadd.f32 %v622, %v629
      %v637 = vadd.f32 %v623, %v629
      %v638 = vadd.f32 %v624, %v629
      %v639 = vxor.u32 %v631, 2147483648
      %v640 = vxor.u32 %v632, 2147483648
      %v641 = vxor.u32 %v633, 2147483648
      %v642 = vxor.u32 %v634, 2147483648
      %v643 = vxor.u32 %v635, 2147483648
      %v644 = vxor.u32 %v636, 2147483648
      %v645 = vxor.u32 %v637, 2147483648
      %v646 = vxor.u32 %v638, 2147483648
      %v647 = vmul.f32 %v639, 1.442695
      %v648 = vpow.pop %v647
      %v649 = vmul.f32 %v640, 1.442695
      %v650 = vpow.pop %v649
      %v651 = vmul.f32 %v641, 1.442695
      %v652 = vpow.pop %v651
      %v653 = vmul.f32 %v642, 1.442695
      %v654 = vpow.pop %v653
      %v655 = vmul.f32 %v643, 1.442695
      %v656 = vpow.pop %v655
      %v657 = vmul.f32 %v644, 1.442695
      %v658 = vpow.pop %v657
      %v659 = vmul.f32 %v645, 1.442695
      %v660 = vpow.pop %v659
      %v661 = vmul.f32 %v646, 1.442695
      %v662 = vpow.pop %v661
      %v663 = vadd.f32 %v648, 1.0
      %v664 = vadd.f32 %v650, 1.0
      %v665 = vadd.f32 %v652, 1.0
      %v666 = vadd.f32 %v654, 1.0
      %v667 = vadd.f32 %v656, 1.0
      %v668 = vadd.f32 %v658, 1.0
      %v669 = vadd.f32 %v660, 1.0
      %v670 = vadd.f32 %v662, 1.0
      %v671 = vrcp.pop %v663
      %v672 = vmul.f32 1.0, %v671
      %v673 = vrcp.pop %v664
      %v674 = vmul.f32 1.0, %v673
      %v675 = vrcp.pop %v665
      %v676 = vmul.f32 1.0, %v675
      %v677 = vrcp.pop %v666
      %v678 = vmul.f32 1.0, %v677
      %v679 = vrcp.pop %v667
      %v680 = vmul.f32 1.0, %v679
      %v681 = vrcp.pop %v668
      %v682 = vmul.f32 1.0, %v681
      %v683 = vrcp.pop %v669
      %v684 = vmul.f32 1.0, %v683
      %v685 = vrcp.pop %v670
      %v686 = vmul.f32 1.0, %v685
      %v687 = vmul.f32 %v631, %v672
      %v688 = vmul.f32 %v632, %v674
      %v689 = vmul.f32 %v633, %v676
      %v690 = vmul.f32 %v634, %v678
      %v691 = vmul.f32 %v635, %v680
      %v692 = vmul.f32 %v636, %v682
      %v693 = vmul.f32 %v637, %v684
      %v694 = vmul.f32 %v638, %v686
      %v695 = vpack.c.bf16 %v688, %v687
      %v696 = vpack.c.bf16 %v690, %v689
      %v697 = vpack.c.bf16 %v692, %v691
      %v698 = vpack.c.bf16 %v694, %v693
      %v703 = vunpack.c.l.b16 %v695
      %v704 = vunpack.c.h.b16 %v695
      %v705 = vunpack.c.l.b16 %v696
      %v706 = vunpack.c.h.b16 %v696
      %v707 = vunpack.c.l.b16 %v697
      %v708 = vunpack.c.h.b16 %v697
      %v709 = vunpack.c.l.b16 %v698
      %v710 = vunpack.c.h.b16 %v698
      %v711 = vpack.c.b16 %v703, %v703
      %v712 = vpack.c.b16 %v704, %v704
      %v713 = vpack.c.b16 %v705, %v705
      %v714 = vpack.c.b16 %v706, %v706
      %v715 = vpack.c.b16 %v707, %v707
      %v716 = vpack.c.b16 %v708, %v708
      %v717 = vpack.c.b16 %v709, %v709
      %v718 = vpack.c.b16 %v710, %v710
      %v720 = vshrl.u32 %v711, 16
      %v722 = vrot.slane %v720, 7
      %v723 = vshll.u32 %v711, 16
      %v725 = vor.u32 %v722, %v723
      %v727 = vshrl.u32 %v712, 16
      %v729 = vrot.slane %v727, 7
      %v730 = vshll.u32 %v712, 16
      %v732 = vor.u32 %v729, %v730
      %v734 = vshrl.u32 %v713, 16
      %v736 = vrot.slane %v734, 7
      %v737 = vshll.u32 %v713, 16
      %v739 = vor.u32 %v736, %v737
      %v741 = vshrl.u32 %v714, 16
      %v743 = vrot.slane %v741, 7
      %v744 = vshll.u32 %v714, 16
      %v746 = vor.u32 %v743, %v744
      %v748 = vshrl.u32 %v715, 16
      %v750 = vrot.slane %v748, 7
      %v751 = vshll.u32 %v715, 16
      %v753 = vor.u32 %v750, %v751
      %v755 = vshrl.u32 %v716, 16
      %v757 = vrot.slane %v755, 7
      %v758 = vshll.u32 %v716, 16
      %v760 = vor.u32 %v757, %v758
      %v762 = vshrl.u32 %v717, 16
      %v764 = vrot.slane %v762, 7
      %v765 = vshll.u32 %v717, 16
      %v767 = vor.u32 %v764, %v765
      %v769 = vshrl.u32 %v718, 16
      %v771 = vrot.slane %v769, 7
      %v772 = vshll.u32 %v718, 16
      %v774 = vor.u32 %v771, %v772
      %vm783 = vcmask 1040384
      %vm784 = vsmask.f32 256
      %vm785 = vmand %vm783, %vm784
      %v786 = vsel %vm785, 0, %v725
      %v787 = vsel %vm785, 0, %v732
      %v788 = vsel %vm785, 0, %v739
      %v789 = vsel %vm785, 0, %v746
      %v790 = vsel %vm785, 0, %v753
      %v791 = vsel %vm785, 0, %v760
      %v792 = vsel %vm785, 0, %v767
      %v793 = vsel %vm785, 0, %v774
      %vm794 = vcmask 1044480
      %vm795 = vsmask.f32 4352
      %vm796 = vmand %vm794, %vm795
      %v797 = vsel %vm796, %v786, 0
      %v798 = vsel %vm796, %v787, 0
      %v799 = vsel %vm796, %v788, 0
      %v800 = vsel %vm796, %v789, 0
      %v801 = vsel %vm796, %v790, 0
      %v802 = vsel %vm796, %v791, 0
      %v803 = vsel %vm796, %v792, 0
      %v804 = vsel %vm796, %v793, 0
      %v806 = vshrl.u32 0, 16
      %v808 = vshll.u32 0, 16
      %v810 = vrot.slane %v808, 1
      %v811 = vor.u32 %v806, %v810
      %v813 = vshrl.u32 %v797, 16
      %v815 = vshll.u32 %v797, 16
      %v817 = vrot.slane %v815, 1
      %v818 = vor.u32 %v813, %v817
      %v820 = vshrl.u32 %v798, 16
      %v822 = vshll.u32 %v798, 16
      %v824 = vrot.slane %v822, 1
      %v825 = vor.u32 %v820, %v824
      %v827 = vshrl.u32 %v799, 16
      %v829 = vshll.u32 %v799, 16
      %v831 = vrot.slane %v829, 1
      %v832 = vor.u32 %v827, %v831
      %v834 = vshrl.u32 %v800, 16
      %v836 = vshll.u32 %v800, 16
      %v838 = vrot.slane %v836, 1
      %v839 = vor.u32 %v834, %v838
      %v841 = vshrl.u32 %v801, 16
      %v843 = vshll.u32 %v801, 16
      %v845 = vrot.slane %v843, 1
      %v846 = vor.u32 %v841, %v845
      %v848 = vshrl.u32 %v802, 16
      %v850 = vshll.u32 %v802, 16
      %v852 = vrot.slane %v850, 1
      %v853 = vor.u32 %v848, %v852
      %v855 = vshrl.u32 %v803, 16
      %v857 = vshll.u32 %v803, 16
      %v859 = vrot.slane %v857, 1
      %v860 = vor.u32 %v855, %v859
      %861 = vrot.lane.b32.xlu0 %v811, 16
      %v862 = vpop.permute.xlu0 %861
      %863 = vrot.lane.b32.xlu0 %v818, 16
      %v864 = vpop.permute.xlu0 %863
      %865 = vrot.lane.b32.xlu0 %v825, 16
      %v866 = vpop.permute.xlu0 %865
      %867 = vrot.lane.b32.xlu0 %v832, 16
      %v868 = vpop.permute.xlu0 %867
      %869 = vrot.lane.b32.xlu0 %v839, 16
      %v870 = vpop.permute.xlu0 %869
      %871 = vrot.lane.b32.xlu0 %v846, 16
      %v872 = vpop.permute.xlu0 %871
      %873 = vrot.lane.b32.xlu0 %v853, 16
      %v874 = vpop.permute.xlu0 %873
      %875 = vrot.lane.b32.xlu0 %v860, 16
      %v876 = vpop.permute.xlu0 %875
      %v885 = vrot.slane 0, 1
      %v886 = vrot.slane %v797, 1
      %v887 = vrot.slane %v798, 1
      %v888 = vrot.slane %v799, 1
      %v889 = vrot.slane %v800, 1
      %v890 = vrot.slane %v801, 1
      %v891 = vrot.slane %v802, 1
      %v892 = vrot.slane %v803, 1
      %893 = vrot.lane.b32.xlu0 %v885, 32
      %v894 = vpop.permute.xlu0 %893
      %895 = vrot.lane.b32.xlu0 %v886, 32
      %v896 = vpop.permute.xlu0 %895
      %897 = vrot.lane.b32.xlu0 %v887, 32
      %v898 = vpop.permute.xlu0 %897
      %899 = vrot.lane.b32.xlu0 %v888, 32
      %v900 = vpop.permute.xlu0 %899
      %901 = vrot.lane.b32.xlu0 %v889, 32
      %v902 = vpop.permute.xlu0 %901
      %903 = vrot.lane.b32.xlu0 %v890, 32
      %v904 = vpop.permute.xlu0 %903
      %905 = vrot.lane.b32.xlu0 %v891, 32
      %v906 = vpop.permute.xlu0 %905
      %907 = vrot.lane.b32.xlu0 %v892, 32
      %v908 = vpop.permute.xlu0 %907
      %910 = vrot.lane.b32.xlu0 %v797, 48
      %v911 = vpop.permute.xlu0 %910
      %912 = vrot.lane.b32.xlu0 %v798, 48
      %v913 = vpop.permute.xlu0 %912
      %914 = vrot.lane.b32.xlu0 %v799, 48
      %v915 = vpop.permute.xlu0 %914
      %916 = vrot.lane.b32.xlu0 %v800, 48
      %v917 = vpop.permute.xlu0 %916
      %918 = vrot.lane.b32.xlu0 %v801, 48
      %v919 = vpop.permute.xlu0 %918
      %920 = vrot.lane.b32.xlu0 %v802, 48
      %v921 = vpop.permute.xlu0 %920
      %922 = vrot.lane.b32.xlu0 %v803, 48
      %v923 = vpop.permute.xlu0 %922
      %924 = vrot.lane.b32.xlu0 %v804, 48
      %v925 = vpop.permute.xlu0 %924
      %v927 = vshrl.u32 %v804, 16
      %v929 = vshll.u32 %v804, 16
      %v931 = vrot.slane %v929, 1
      %v932 = vor.u32 %v927, %v931
      %933 = vrot.lane.b32.xlu0 %v818, 64
      %v934 = vpop.permute.xlu0 %933
      %935 = vrot.lane.b32.xlu0 %v825, 64
      %v936 = vpop.permute.xlu0 %935
      %937 = vrot.lane.b32.xlu0 %v832, 64
      %v938 = vpop.permute.xlu0 %937
      %939 = vrot.lane.b32.xlu0 %v839, 64
      %v940 = vpop.permute.xlu0 %939
      %941 = vrot.lane.b32.xlu0 %v846, 64
      %v942 = vpop.permute.xlu0 %941
      %943 = vrot.lane.b32.xlu0 %v853, 64
      %v944 = vpop.permute.xlu0 %943
      %945 = vrot.lane.b32.xlu0 %v860, 64
      %v946 = vpop.permute.xlu0 %945
      %947 = vrot.lane.b32.xlu0 %v932, 64
      %v948 = vpop.permute.xlu0 %947
      %v949 = vrot.slane %v804, 1
      %950 = vrot.lane.b32.xlu0 %v886, 80
      %v951 = vpop.permute.xlu0 %950
      %952 = vrot.lane.b32.xlu0 %v887, 80
      %v953 = vpop.permute.xlu0 %952
      %954 = vrot.lane.b32.xlu0 %v888, 80
      %v955 = vpop.permute.xlu0 %954
      %956 = vrot.lane.b32.xlu0 %v889, 80
      %v957 = vpop.permute.xlu0 %956
      %958 = vrot.lane.b32.xlu0 %v890, 80
      %v959 = vpop.permute.xlu0 %958
      %960 = vrot.lane.b32.xlu0 %v891, 80
      %v961 = vpop.permute.xlu0 %960
      %962 = vrot.lane.b32.xlu0 %v892, 80
      %v963 = vpop.permute.xlu0 %962
      %964 = vrot.lane.b32.xlu0 %v949, 80
      %v965 = vpop.permute.xlu0 %964
      %966 = vrot.lane.b32.xlu0 %v798, 96
      %v967 = vpop.permute.xlu0 %966
      %968 = vrot.lane.b32.xlu0 %v799, 96
      %v969 = vpop.permute.xlu0 %968
      %970 = vrot.lane.b32.xlu0 %v800, 96
      %v971 = vpop.permute.xlu0 %970
      %972 = vrot.lane.b32.xlu0 %v801, 96
      %v973 = vpop.permute.xlu0 %972
      %974 = vrot.lane.b32.xlu0 %v802, 96
      %v975 = vpop.permute.xlu0 %974
      %976 = vrot.lane.b32.xlu0 %v803, 96
      %v977 = vpop.permute.xlu0 %976
      %978 = vrot.lane.b32.xlu0 %v804, 96
      %v979 = vpop.permute.xlu0 %978
      %980 = vrot.lane.b32.xlu0 0, 96
      %v981 = vpop.permute.xlu0 %980
      %982 = vrot.lane.b32.xlu0 %v825, 112
      %v983 = vpop.permute.xlu0 %982
      %984 = vrot.lane.b32.xlu0 %v832, 112
      %v985 = vpop.permute.xlu0 %984
      %986 = vrot.lane.b32.xlu0 %v839, 112
      %v987 = vpop.permute.xlu0 %986
      %988 = vrot.lane.b32.xlu0 %v846, 112
      %v989 = vpop.permute.xlu0 %988
      %990 = vrot.lane.b32.xlu0 %v853, 112
      %v991 = vpop.permute.xlu0 %990
      %992 = vrot.lane.b32.xlu0 %v860, 112
      %v993 = vpop.permute.xlu0 %992
      %994 = vrot.lane.b32.xlu0 %v932, 112
      %v995 = vpop.permute.xlu0 %994
      %996 = vrot.lane.b32.xlu0 %v811, 112
      %v997 = vpop.permute.xlu0 %996
      %v999 = vsel %vm513, 0, %v862
      %v1001 = vsel %vm513, %v797, %v864
      %v1003 = vsel %vm513, %v798, %v866
      %v1005 = vsel %vm513, %v799, %v868
      %v1007 = vsel %vm513, %v800, %v870
      %v1009 = vsel %vm513, %v801, %v872
      %v1011 = vsel %vm513, %v802, %v874
      %v1013 = vsel %vm513, %v803, %v876
      %vm1014 = vcmask 261120
      %v1016 = vsel %vm1014, %v999, %v894
      %v1018 = vsel %vm1014, %v1001, %v896
      %v1020 = vsel %vm1014, %v1003, %v898
      %v1022 = vsel %vm1014, %v1005, %v900
      %v1024 = vsel %vm1014, %v1007, %v902
      %v1026 = vsel %vm1014, %v1009, %v904
      %v1028 = vsel %vm1014, %v1011, %v906
      %v1030 = vsel %vm1014, %v1013, %v908
      %vm1031 = vcmask 392192
      %v1033 = vsel %vm1031, %v1016, %v911
      %v1035 = vsel %vm1031, %v1018, %v913
      %v1037 = vsel %vm1031, %v1020, %v915
      %v1039 = vsel %vm1031, %v1022, %v917
      %v1041 = vsel %vm1031, %v1024, %v919
      %v1043 = vsel %vm1031, %v1026, %v921
      %v1045 = vsel %vm1031, %v1028, %v923
      %v1047 = vsel %vm1031, %v1030, %v925
      %vm1048 = vcmask 523264
      %v1050 = vsel %vm1048, %v1033, %v934
      %v1052 = vsel %vm1048, %v1035, %v936
      %v1054 = vsel %vm1048, %v1037, %v938
      %v1056 = vsel %vm1048, %v1039, %v940
      %v1058 = vsel %vm1048, %v1041, %v942
      %v1060 = vsel %vm1048, %v1043, %v944
      %v1062 = vsel %vm1048, %v1045, %v946
      %v1064 = vsel %vm1048, %v1047, %v948
      %vm1065 = vcmask 654336
      %v1067 = vsel %vm1065, %v1050, %v951
      %v1069 = vsel %vm1065, %v1052, %v953
      %v1071 = vsel %vm1065, %v1054, %v955
      %v1073 = vsel %vm1065, %v1056, %v957
      %v1075 = vsel %vm1065, %v1058, %v959
      %v1077 = vsel %vm1065, %v1060, %v961
      %v1079 = vsel %vm1065, %v1062, %v963
      %v1081 = vsel %vm1065, %v1064, %v965
      %vm1082 = vcmask 785408
      %v1084 = vsel %vm1082, %v1067, %v967
      %v1086 = vsel %vm1082, %v1069, %v969
      %v1088 = vsel %vm1082, %v1071, %v971
      %v1090 = vsel %vm1082, %v1073, %v973
      %v1092 = vsel %vm1082, %v1075, %v975
      %v1094 = vsel %vm1082, %v1077, %v977
      %v1096 = vsel %vm1082, %v1079, %v979
      %v1098 = vsel %vm1082, %v1081, %v981
      %vm1099 = vcmask 916480
      %v1101 = vsel %vm1099, %v1084, %v983
      %v1103 = vsel %vm1099, %v1086, %v985
      %v1105 = vsel %vm1099, %v1088, %v987
      %v1107 = vsel %vm1099, %v1090, %v989
      %v1109 = vsel %vm1099, %v1092, %v991
      %v1111 = vsel %vm1099, %v1094, %v993
      %v1113 = vsel %vm1099, %v1096, %v995
      %v1115 = vsel %vm1099, %v1098, %v997
      %v1124 = vunpack.c.l.b16 %v1101
      %v1125 = vunpack.c.l.b16 %v887
      %v1126 = vunpack.c.l.b16 %v1103
      %v1127 = vunpack.c.l.b16 %v888
      %v1128 = vunpack.c.l.b16 %v1105
      %v1129 = vunpack.c.l.b16 %v889
      %v1130 = vunpack.c.l.b16 %v1107
      %v1131 = vunpack.c.l.b16 %v890
      %v1132 = vunpack.c.l.b16 %v1109
      %v1133 = vunpack.c.l.b16 %v891
      %v1134 = vunpack.c.l.b16 %v1111
      %v1135 = vunpack.c.l.b16 %v892
      %v1136 = vunpack.c.l.b16 %v1113
      %v1137 = vunpack.c.l.b16 %v949
      %v1138 = vunpack.c.l.b16 %v1115
      %v1139 = vunpack.c.l.b16 %v885
      %v1141 = vlaneseq
      %v1142 = vshrl.u32 %v1141, 7
      %v1143 = vsub.s32 0, %v1142
      %v1144 = vrot.slane %v458, %v1143
      %v1146 = vpack.c.b16 %v1126, %v1124
      %v1147 = vpack.c.b16 %v1127, %v1125
      %v1148 = vpack.c.b16 %v1130, %v1128
      %v1149 = vpack.c.b16 %v1131, %v1129
      %v1150 = vpack.c.b16 %v1134, %v1132
      %v1151 = vpack.c.b16 %v1135, %v1133
      %v1152 = vpack.c.b16 %v1138, %v1136
      %v1153 = vpack.c.b16 %v1139, %v1137
      %v1176 = vunpack.c.l.b16 %v440
      %v1177 = vunpack.c.l.b16 %v441
      %v1178 = vunpack.c.l.b16 %v442
      %v1179 = vunpack.c.l.b16 %v443
      %v1180 = vunpack.c.l.b16 %v444
      %v1181 = vunpack.c.l.b16 %v445
      %v1182 = vunpack.c.l.b16 %v446
      %v1183 = vunpack.c.l.b16 %v447
      %v1184 = vunpack.c.l.b16 %v448
      %v1185 = vunpack.c.l.b16 %v449
      %v1186 = vunpack.c.l.b16 %v450
      %v1187 = vunpack.c.l.b16 %v451
      %v1188 = vunpack.c.l.b16 %v452
      %v1189 = vunpack.c.l.b16 %v453
      %v1190 = vunpack.c.l.b16 %v454
      %v1191 = vunpack.c.l.b16 %v455
      %v1192 = vunpack.c.l.b16 %v456
      %v1193 = vunpack.c.l.b16 %v457
      %v1194 = vpack.c.b16 %v1177, %v1176
      %v1195 = vpack.c.b16 %v1179, %v1178
      %v1196 = vpack.c.b16 %v1181, %v1180
      %v1197 = vpack.c.b16 %v1183, %v1182
      %v1198 = vpack.c.b16 %v1185, %v1184
      %v1199 = vpack.c.b16 %v1187, %v1186
      %v1200 = vpack.c.b16 %v1189, %v1188
      %v1201 = vpack.c.b16 %v1191, %v1190
      %v1202 = vpack.c.b16 %v1193, %v1192
      %v1213 = vsel %vm513, %v1147, 0
      %v1216 = vsel %vm513, %v1149, 0
      %v1219 = vsel %vm513, %v1151, 0
      %v1222 = vsel %vm513, %v1153, 0
      %1224 = vmatprep.subr.bf16.mxu0 0
      %1225 = vmatpush1.bf16.msra.mxu0 %v1194
      %1226 = vmatprep.subr.bf16.mxu0 0
      %1227 = vmatpush1.bf16.msra.mxu0 %v1195
      %1228 = vmatprep.subr.bf16.mxu0 0
      %1229 = vmatpush1.bf16.msra.mxu0 %v1196
      %1230 = vmatprep.subr.bf16.mxu0 0
      %1231 = vmatpush1.bf16.msra.mxu0 %v1197
      %1232 = vmatprep.subr.bf16.mxu0 0
      %1233 = vmatpush1.bf16.msra.mxu0 %v1198
      %1234 = vmatprep.subr.bf16.mxu0 0
      %1235 = vmatpush1.bf16.msra.mxu0 %v1199
      %1236 = vmatprep.subr.bf16.mxu0 0
      %1237 = vmatpush1.bf16.msra.mxu0 %v1200
      %1238 = vmatprep.subr.bf16.mxu0 0
      %1239 = vmatpush1.bf16.msra.mxu0 %v1201
      %1240 = vmatprep.subr.bf16.mxu0 0
      %1241 = vmatpush1.bf16.msra.mxu0 %v1202
      %1242 = vmatprep.subr.bf16.mxu0 0
      %1243 = vmatpush1.bf16.msra.mxu0 0
      %1244 = vmatprep.subr.bf16.mxu0 0
      %1245 = vmatpush1.bf16.msra.mxu0 0
      %1246 = vmatprep.subr.bf16.mxu0 0
      %1247 = vmatpush1.bf16.msra.mxu0 0
      %1248 = vmatprep.subr.bf16.mxu0 0
      %1249 = vmatpush1.bf16.msra.mxu0 0
      %1250 = vmatprep.subr.bf16.mxu0 0
      %1251 = vmatpush1.bf16.msra.mxu0 0
      %1252 = vmatprep.subr.bf16.mxu0 0
      %1253 = vmatpush1.bf16.msra.mxu0 0
      %1254 = vmatprep.subr.bf16.mxu0 0
      %1255 = vmatpush1.bf16.msra.mxu0 0
      %1256 = vmatprep.mubr.bf16.mxu0 %v1213
      %1257 = vmatmul.mubr.bf16.gmra.mrb[0].mxu0 %v1146
      %v1258 = vpop.f32.mrb[0].mxu0
      %v1259 = vadd.f32 %v1144, %v1258
      %v1260 = vpop.f32.mrb[0].mxu0
      %v1261 = vpop.f32.mrb[0].mxu0
      %v1262 = vadd.f32 %v1144, %v1261
      %v1263 = vpop.f32.mrb[0].mxu0
      %1264 = vmatprep.mubr.bf16.mxu0 %v1216
      %1265 = vmatmul.mubr.bf16.gmra.mrb[0].mxu0 %v1148
      %v1266 = vpop.f32.mrb[0].mxu0
      %v1267 = vadd.f32 %v1144, %v1266
      %v1268 = vpop.f32.mrb[0].mxu0
      %v1269 = vpop.f32.mrb[0].mxu0
      %v1270 = vadd.f32 %v1144, %v1269
      %v1271 = vpop.f32.mrb[0].mxu0
      %1272 = vmatprep.mubr.bf16.mxu0 %v1219
      %1273 = vmatmul.mubr.bf16.gmra.mrb[0].mxu0 %v1150
      %v1274 = vpop.f32.mrb[0].mxu0
      %v1275 = vadd.f32 %v1144, %v1274
      %v1276 = vpop.f32.mrb[0].mxu0
      %v1277 = vpop.f32.mrb[0].mxu0
      %v1278 = vadd.f32 %v1144, %v1277
      %v1279 = vpop.f32.mrb[0].mxu0
      %1280 = vmatprep.mubr.bf16.mxu0 %v1222
      %1281 = vmatmul.mubr.bf16.gmra.mrb[0].mxu0 %v1152
      %v1282 = vpop.f32.mrb[0].mxu0
      %v1283 = vadd.f32 %v1144, %v1282
      %v1284 = vpop.f32.mrb[0].mxu0
      %v1285 = vpop.f32.mrb[0].mxu0
      %v1286 = vadd.f32 %v1144, %v1285
      %v1287 = vpop.f32.mrb[0].mxu0
      %1288 = vdwg.mxu0
      %v1290 = vlaneseq
      %v1291 = vshrl.u32 %v1290, 7
      %v1292 = vsub.s32 0, %v1291
      %v1293 = vrot.slane %v437, %v1292
      %v1295 = vadd.f32 %v1259, %v1293
      %v1296 = vadd.f32 %v1262, %v1293
      %v1297 = vadd.f32 %v1267, %v1293
      %v1298 = vadd.f32 %v1270, %v1293
      %v1299 = vadd.f32 %v1275, %v1293
      %v1300 = vadd.f32 %v1278, %v1293
      %v1301 = vadd.f32 %v1283, %v1293
      %v1302 = vadd.f32 %v1286, %v1293
      %v1303 = vmul.u32 %v502, 4
      %vm1304 = vcmp.ge.s32.totalorder %v504, %v1303
      %v1305 = vmul.u32 %v507, 4
      %vm1306 = vcmp.lt.s32.totalorder %v504, %v1305
      %vm1307 = vmand %vm1304, %vm1306
      %v1308 = vsel %vm1307, 1, 0
      %v1309 = vcvt.s32.f32 %v1308
      %v1310 = vsel %vm1014, %v1295, 0.0
      %v1311 = vsel %vm1014, %v1296, 0.0
      %v1312 = vadd.f32 %v1310, %v1311
      %v1313 = vsel %vm1014, %v1297, 0.0
      %v1314 = vadd.f32 %v1312, %v1313
      %v1315 = vsel %vm1014, %v1298, 0.0
      %v1316 = vadd.f32 %v1314, %v1315
      %v1317 = vsel %vm1014, %v1299, 0.0
      %v1318 = vadd.f32 %v1316, %v1317
      %v1319 = vsel %vm1014, %v1300, 0.0
      %v1320 = vadd.f32 %v1318, %v1319
      %v1321 = vsel %vm1014, %v1301, 0.0
      %v1322 = vadd.f32 %v1320, %v1321
      %v1323 = vsel %vm1014, %v1302, 0.0
      %v1324 = vadd.f32 %v1322, %v1323
      %v1325 = vrot.slane %v1324, 4
      %v1326 = vadd.f32 %v1324, %v1325
      %v1327 = vrot.slane %v1326, 2
      %v1328 = vadd.f32 %v1326, %v1327
      %v1329 = vrot.slane %v1328, 1
      %v1330 = vadd.f32 %v1328, %v1329
      %v1331 = vmul.f32 %v1295, %v1295
      %v1332 = vmul.f32 %v1296, %v1296
      %v1333 = vmul.f32 %v1297, %v1297
      %v1334 = vmul.f32 %v1298, %v1298
      %v1335 = vmul.f32 %v1299, %v1299
      %v1336 = vmul.f32 %v1300, %v1300
      %v1337 = vmul.f32 %v1301, %v1301
      %v1338 = vmul.f32 %v1302, %v1302
      %v1339 = vsel %vm1014, %v1331, 0.0
      %v1340 = vsel %vm1014, %v1332, 0.0
      %v1341 = vadd.f32 %v1339, %v1340
      %v1342 = vsel %vm1014, %v1333, 0.0
      %v1343 = vadd.f32 %v1341, %v1342
      %v1344 = vsel %vm1014, %v1334, 0.0
      %v1345 = vadd.f32 %v1343, %v1344
      %v1346 = vsel %vm1014, %v1335, 0.0
      %v1347 = vadd.f32 %v1345, %v1346
      %v1348 = vsel %vm1014, %v1336, 0.0
      %v1349 = vadd.f32 %v1347, %v1348
      %v1350 = vsel %vm1014, %v1337, 0.0
      %v1351 = vadd.f32 %v1349, %v1350
      %v1352 = vsel %vm1014, %v1338, 0.0
      %v1353 = vadd.f32 %v1351, %v1352
      %v1354 = vrot.slane %v1353, 4
      %v1355 = vadd.f32 %v1353, %v1354
      %v1356 = vrot.slane %v1355, 2
      %v1357 = vadd.f32 %v1355, %v1356
      %v1358 = vrot.slane %v1357, 1
      %v1359 = vadd.f32 %v1357, %v1358
      %v1360 = vmul.f32 %v1309, %v1330
      %v1361 = vsel %vm1014, %v1360, 0.0
      %1362 = vadd.xlane.f32.xlu0 %v1361
      %v1363 = vpop.xlane.xlu0 %1362
      %v1364 = vmul.f32 %v1309, %v1359
      %v1365 = vsel %vm1014, %v1364, 0.0
      %1366 = vadd.xlane.f32.xlu0 %v1365
      %v1367 = vpop.xlane.xlu0 %1366
      %v1368 = vrcp.pop 256.0
      %v1369 = vmul.f32 %v1363, %v1368
      %v1370 = vmul.f32 %v1367, %v1368
      %v1371 = vmul.f32 %v1369, %v1369
      %v1372 = vsub.f32 %v1370, %v1371
      %v1373 = vadd.f32 %v1372, 1e-05
      %v1374 = vrsqrt.pop %v1373
      %v1375 = vmul.f32 %v1309, %v1369
      %v1376 = vsel %vm1014, %v1375, 0.0
      %v1377 = vrot.slane %v1376, 4
      %v1378 = vadd.f32 %v1376, %v1377
      %v1379 = vrot.slane %v1378, 2
      %v1380 = vadd.f32 %v1378, %v1379
      %v1381 = vrot.slane %v1380, 1
      %v1382 = vadd.f32 %v1380, %v1381
      %v1383 = vmul.f32 %v1309, %v1374
      %v1384 = vsel %vm1014, %v1383, 0.0
      %v1385 = vrot.slane %v1384, 4
      %v1386 = vadd.f32 %v1384, %v1385
      %v1387 = vrot.slane %v1386, 2
      %v1388 = vadd.f32 %v1386, %v1387
      %v1389 = vrot.slane %v1388, 1
      %v1390 = vadd.f32 %v1388, %v1389
      %v1391 = vsub.f32 %v1295, %v1382
      %v1392 = vsub.f32 %v1296, %v1382
      %v1393 = vsub.f32 %v1297, %v1382
      %v1394 = vsub.f32 %v1298, %v1382
      %v1395 = vsub.f32 %v1299, %v1382
      %v1396 = vsub.f32 %v1300, %v1382
      %v1397 = vsub.f32 %v1301, %v1382
      %v1398 = vsub.f32 %v1302, %v1382
      %v1399 = vmul.f32 %v1391, %v1390
      %v1400 = vmul.f32 %v1392, %v1390
      %v1401 = vmul.f32 %v1393, %v1390
      %v1402 = vmul.f32 %v1394, %v1390
      %v1403 = vmul.f32 %v1395, %v1390
      %v1404 = vmul.f32 %v1396, %v1390
      %v1405 = vmul.f32 %v1397, %v1390
      %v1406 = vmul.f32 %v1398, %v1390
      %v1408 = vlaneseq
      %v1409 = vshrl.u32 %v1408, 7
      %v1410 = vsub.s32 0, %v1409
      %v1411 = vrot.slane %v459, %v1410
      %v1413 = vmul.f32 %v1399, %v1411
      %v1414 = vmul.f32 %v1400, %v1411
      %v1415 = vmul.f32 %v1401, %v1411
      %v1416 = vmul.f32 %v1402, %v1411
      %v1417 = vmul.f32 %v1403, %v1411
      %v1418 = vmul.f32 %v1404, %v1411
      %v1419 = vmul.f32 %v1405, %v1411
      %v1420 = vmul.f32 %v1406, %v1411
      %v1422 = vlaneseq
      %v1423 = vshrl.u32 %v1422, 7
      %v1424 = vsub.s32 0, %v1423
      %v1425 = vrot.slane %v460, %v1424
      %v1427 = vadd.f32 %v1413, %v1425
      %v1428 = vadd.f32 %v1414, %v1425
      %v1429 = vadd.f32 %v1415, %v1425
      %v1430 = vadd.f32 %v1416, %v1425
      %v1431 = vadd.f32 %v1417, %v1425
      %v1432 = vadd.f32 %v1418, %v1425
      %v1433 = vadd.f32 %v1419, %v1425
      %v1434 = vadd.f32 %v1420, %v1425
      %v1435 = vxor.u32 %v1427, 2147483648
      %v1436 = vxor.u32 %v1428, 2147483648
      %v1437 = vxor.u32 %v1429, 2147483648
      %v1438 = vxor.u32 %v1430, 2147483648
      %v1439 = vxor.u32 %v1431, 2147483648
      %v1440 = vxor.u32 %v1432, 2147483648
      %v1441 = vxor.u32 %v1433, 2147483648
      %v1442 = vxor.u32 %v1434, 2147483648
      %v1443 = vmul.f32 %v1435, 1.442695
      %v1444 = vpow.pop %v1443
      %v1445 = vmul.f32 %v1436, 1.442695
      %v1446 = vpow.pop %v1445
      %v1447 = vmul.f32 %v1437, 1.442695
      %v1448 = vpow.pop %v1447
      %v1449 = vmul.f32 %v1438, 1.442695
      %v1450 = vpow.pop %v1449
      %v1451 = vmul.f32 %v1439, 1.442695
      %v1452 = vpow.pop %v1451
      %v1453 = vmul.f32 %v1440, 1.442695
      %v1454 = vpow.pop %v1453
      %v1455 = vmul.f32 %v1441, 1.442695
      %v1456 = vpow.pop %v1455
      %v1457 = vmul.f32 %v1442, 1.442695
      %v1458 = vpow.pop %v1457
      %v1459 = vadd.f32 %v1444, 1.0
      %v1460 = vadd.f32 %v1446, 1.0
      %v1461 = vadd.f32 %v1448, 1.0
      %v1462 = vadd.f32 %v1450, 1.0
      %v1463 = vadd.f32 %v1452, 1.0
      %v1464 = vadd.f32 %v1454, 1.0
      %v1465 = vadd.f32 %v1456, 1.0
      %v1466 = vadd.f32 %v1458, 1.0
      %v1467 = vrcp.pop %v1459
      %v1468 = vmul.f32 1.0, %v1467
      %v1469 = vrcp.pop %v1460
      %v1470 = vmul.f32 1.0, %v1469
      %v1471 = vrcp.pop %v1461
      %v1472 = vmul.f32 1.0, %v1471
      %v1473 = vrcp.pop %v1462
      %v1474 = vmul.f32 1.0, %v1473
      %v1475 = vrcp.pop %v1463
      %v1476 = vmul.f32 1.0, %v1475
      %v1477 = vrcp.pop %v1464
      %v1478 = vmul.f32 1.0, %v1477
      %v1479 = vrcp.pop %v1465
      %v1480 = vmul.f32 1.0, %v1479
      %v1481 = vrcp.pop %v1466
      %v1482 = vmul.f32 1.0, %v1481
      %v1483 = vmul.f32 %v1427, %v1468
      %v1484 = vmul.f32 %v1428, %v1470
      %v1485 = vmul.f32 %v1429, %v1472
      %v1486 = vmul.f32 %v1430, %v1474
      %v1487 = vmul.f32 %v1431, %v1476
      %v1488 = vmul.f32 %v1432, %v1478
      %v1489 = vmul.f32 %v1433, %v1480
      %v1490 = vmul.f32 %v1434, %v1482
      %v1491 = vpack.c.bf16 %v1484, %v1483
      %v1492 = vpack.c.bf16 %v1486, %v1485
      %v1493 = vpack.c.bf16 %v1488, %v1487
      %v1494 = vpack.c.bf16 %v1490, %v1489
      %v1499 = vunpack.c.l.b16 %v1491
      %v1500 = vunpack.c.h.b16 %v1491
      %v1501 = vunpack.c.l.b16 %v1492
      %v1502 = vunpack.c.h.b16 %v1492
      %v1503 = vunpack.c.l.b16 %v1493
      %v1504 = vunpack.c.h.b16 %v1493
      %v1505 = vunpack.c.l.b16 %v1494
      %v1506 = vunpack.c.h.b16 %v1494
      %v1507 = vpack.c.b16 %v1499, %v1499
      %v1508 = vpack.c.b16 %v1500, %v1500
      %v1509 = vpack.c.b16 %v1501, %v1501
      %v1510 = vpack.c.b16 %v1502, %v1502
      %v1511 = vpack.c.b16 %v1503, %v1503
      %v1512 = vpack.c.b16 %v1504, %v1504
      %v1513 = vpack.c.b16 %v1505, %v1505
      %v1514 = vpack.c.b16 %v1506, %v1506
      %v1516 = vshrl.u32 %v1507, 16
      %v1518 = vrot.slane %v1516, 7
      %v1519 = vshll.u32 %v1507, 16
      %v1521 = vor.u32 %v1518, %v1519
      %v1523 = vshrl.u32 %v1508, 16
      %v1525 = vrot.slane %v1523, 7
      %v1526 = vshll.u32 %v1508, 16
      %v1528 = vor.u32 %v1525, %v1526
      %v1530 = vshrl.u32 %v1509, 16
      %v1532 = vrot.slane %v1530, 7
      %v1533 = vshll.u32 %v1509, 16
      %v1535 = vor.u32 %v1532, %v1533
      %v1537 = vshrl.u32 %v1510, 16
      %v1539 = vrot.slane %v1537, 7
      %v1540 = vshll.u32 %v1510, 16
      %v1542 = vor.u32 %v1539, %v1540
      %v1544 = vshrl.u32 %v1511, 16
      %v1546 = vrot.slane %v1544, 7
      %v1547 = vshll.u32 %v1511, 16
      %v1549 = vor.u32 %v1546, %v1547
      %v1551 = vshrl.u32 %v1512, 16
      %v1553 = vrot.slane %v1551, 7
      %v1554 = vshll.u32 %v1512, 16
      %v1556 = vor.u32 %v1553, %v1554
      %v1558 = vshrl.u32 %v1513, 16
      %v1560 = vrot.slane %v1558, 7
      %v1561 = vshll.u32 %v1513, 16
      %v1563 = vor.u32 %v1560, %v1561
      %v1565 = vshrl.u32 %v1514, 16
      %v1567 = vrot.slane %v1565, 7
      %v1568 = vshll.u32 %v1514, 16
      %v1570 = vor.u32 %v1567, %v1568
      %v1579 = vsel %vm785, 0, %v1521
      %v1580 = vsel %vm785, 0, %v1528
      %v1581 = vsel %vm785, 0, %v1535
      %v1582 = vsel %vm785, 0, %v1542
      %v1583 = vsel %vm785, 0, %v1549
      %v1584 = vsel %vm785, 0, %v1556
      %v1585 = vsel %vm785, 0, %v1563
      %v1586 = vsel %vm785, 0, %v1570
      %v1587 = vsel %vm796, %v1579, 0
      %v1588 = vsel %vm796, %v1580, 0
      %v1589 = vsel %vm796, %v1581, 0
      %v1590 = vsel %vm796, %v1582, 0
      %v1591 = vsel %vm796, %v1583, 0
      %v1592 = vsel %vm796, %v1584, 0
      %v1593 = vsel %vm796, %v1585, 0
      %v1594 = vsel %vm796, %v1586, 0
      %v1596 = vshrl.u32 %v1587, 16
      %v1598 = vshll.u32 %v1587, 16
      %v1600 = vrot.slane %v1598, 1
      %v1601 = vor.u32 %v1596, %v1600
      %v1603 = vshrl.u32 %v1588, 16
      %v1605 = vshll.u32 %v1588, 16
      %v1607 = vrot.slane %v1605, 1
      %v1608 = vor.u32 %v1603, %v1607
      %v1610 = vshrl.u32 %v1589, 16
      %v1612 = vshll.u32 %v1589, 16
      %v1614 = vrot.slane %v1612, 1
      %v1615 = vor.u32 %v1610, %v1614
      %v1617 = vshrl.u32 %v1590, 16
      %v1619 = vshll.u32 %v1590, 16
      %v1621 = vrot.slane %v1619, 1
      %v1622 = vor.u32 %v1617, %v1621
      %v1624 = vshrl.u32 %v1591, 16
      %v1626 = vshll.u32 %v1591, 16
      %v1628 = vrot.slane %v1626, 1
      %v1629 = vor.u32 %v1624, %v1628
      %v1631 = vshrl.u32 %v1592, 16
      %v1633 = vshll.u32 %v1592, 16
      %v1635 = vrot.slane %v1633, 1
      %v1636 = vor.u32 %v1631, %v1635
      %v1638 = vshrl.u32 %v1593, 16
      %v1640 = vshll.u32 %v1593, 16
      %v1642 = vrot.slane %v1640, 1
      %v1643 = vor.u32 %v1638, %v1642
      %1644 = vrot.lane.b32.xlu0 %v811, 32
      %v1645 = vpop.permute.xlu0 %1644
      %1646 = vrot.lane.b32.xlu0 %v1601, 32
      %v1647 = vpop.permute.xlu0 %1646
      %1648 = vrot.lane.b32.xlu0 %v1608, 32
      %v1649 = vpop.permute.xlu0 %1648
      %1650 = vrot.lane.b32.xlu0 %v1615, 32
      %v1651 = vpop.permute.xlu0 %1650
      %1652 = vrot.lane.b32.xlu0 %v1622, 32
      %v1653 = vpop.permute.xlu0 %1652
      %1654 = vrot.lane.b32.xlu0 %v1629, 32
      %v1655 = vpop.permute.xlu0 %1654
      %1656 = vrot.lane.b32.xlu0 %v1636, 32
      %v1657 = vpop.permute.xlu0 %1656
      %1658 = vrot.lane.b32.xlu0 %v1643, 32
      %v1659 = vpop.permute.xlu0 %1658
      %v1667 = vrot.slane %v1587, 1
      %v1668 = vrot.slane %v1588, 1
      %v1669 = vrot.slane %v1589, 1
      %v1670 = vrot.slane %v1590, 1
      %v1671 = vrot.slane %v1591, 1
      %v1672 = vrot.slane %v1592, 1
      %v1673 = vrot.slane %v1593, 1
      %1674 = vrot.lane.b32.xlu0 %v885, 64
      %v1675 = vpop.permute.xlu0 %1674
      %1676 = vrot.lane.b32.xlu0 %v1667, 64
      %v1677 = vpop.permute.xlu0 %1676
      %1678 = vrot.lane.b32.xlu0 %v1668, 64
      %v1679 = vpop.permute.xlu0 %1678
      %1680 = vrot.lane.b32.xlu0 %v1669, 64
      %v1681 = vpop.permute.xlu0 %1680
      %1682 = vrot.lane.b32.xlu0 %v1670, 64
      %v1683 = vpop.permute.xlu0 %1682
      %1684 = vrot.lane.b32.xlu0 %v1671, 64
      %v1685 = vpop.permute.xlu0 %1684
      %1686 = vrot.lane.b32.xlu0 %v1672, 64
      %v1687 = vpop.permute.xlu0 %1686
      %1688 = vrot.lane.b32.xlu0 %v1673, 64
      %v1689 = vpop.permute.xlu0 %1688
      %1691 = vrot.lane.b32.xlu0 %v1587, 96
      %v1692 = vpop.permute.xlu0 %1691
      %1693 = vrot.lane.b32.xlu0 %v1588, 96
      %v1694 = vpop.permute.xlu0 %1693
      %1695 = vrot.lane.b32.xlu0 %v1589, 96
      %v1696 = vpop.permute.xlu0 %1695
      %1697 = vrot.lane.b32.xlu0 %v1590, 96
      %v1698 = vpop.permute.xlu0 %1697
      %1699 = vrot.lane.b32.xlu0 %v1591, 96
      %v1700 = vpop.permute.xlu0 %1699
      %1701 = vrot.lane.b32.xlu0 %v1592, 96
      %v1702 = vpop.permute.xlu0 %1701
      %1703 = vrot.lane.b32.xlu0 %v1593, 96
      %v1704 = vpop.permute.xlu0 %1703
      %1705 = vrot.lane.b32.xlu0 %v1594, 96
      %v1706 = vpop.permute.xlu0 %1705
      %v1708 = vshrl.u32 %v1594, 16
      %v1710 = vshll.u32 %v1594, 16
      %v1712 = vrot.slane %v1710, 1
      %v1713 = vor.u32 %v1708, %v1712
      %v1714 = vrot.slane %v1594, 1
      %1715 = vrot.lane.b32.xlu0 %v1667, 32
      %v1716 = vpop.permute.xlu0 %1715
      %1717 = vrot.lane.b32.xlu0 %v1668, 32
      %v1718 = vpop.permute.xlu0 %1717
      %1719 = vrot.lane.b32.xlu0 %v1669, 32
      %v1720 = vpop.permute.xlu0 %1719
      %1721 = vrot.lane.b32.xlu0 %v1670, 32
      %v1722 = vpop.permute.xlu0 %1721
      %1723 = vrot.lane.b32.xlu0 %v1671, 32
      %v1724 = vpop.permute.xlu0 %1723
      %1725 = vrot.lane.b32.xlu0 %v1672, 32
      %v1726 = vpop.permute.xlu0 %1725
      %1727 = vrot.lane.b32.xlu0 %v1673, 32
      %v1728 = vpop.permute.xlu0 %1727
      %1729 = vrot.lane.b32.xlu0 %v1714, 32
      %v1730 = vpop.permute.xlu0 %1729
      %1731 = vrot.lane.b32.xlu0 %v1588, 64
      %v1732 = vpop.permute.xlu0 %1731
      %1733 = vrot.lane.b32.xlu0 %v1589, 64
      %v1734 = vpop.permute.xlu0 %1733
      %1735 = vrot.lane.b32.xlu0 %v1590, 64
      %v1736 = vpop.permute.xlu0 %1735
      %1737 = vrot.lane.b32.xlu0 %v1591, 64
      %v1738 = vpop.permute.xlu0 %1737
      %1739 = vrot.lane.b32.xlu0 %v1592, 64
      %v1740 = vpop.permute.xlu0 %1739
      %1741 = vrot.lane.b32.xlu0 %v1593, 64
      %v1742 = vpop.permute.xlu0 %1741
      %1743 = vrot.lane.b32.xlu0 %v1594, 64
      %v1744 = vpop.permute.xlu0 %1743
      %1745 = vrot.lane.b32.xlu0 0, 64
      %v1746 = vpop.permute.xlu0 %1745
      %1747 = vrot.lane.b32.xlu0 %v1608, 96
      %v1748 = vpop.permute.xlu0 %1747
      %1749 = vrot.lane.b32.xlu0 %v1615, 96
      %v1750 = vpop.permute.xlu0 %1749
      %1751 = vrot.lane.b32.xlu0 %v1622, 96
      %v1752 = vpop.permute.xlu0 %1751
      %1753 = vrot.lane.b32.xlu0 %v1629, 96
      %v1754 = vpop.permute.xlu0 %1753
      %1755 = vrot.lane.b32.xlu0 %v1636, 96
      %v1756 = vpop.permute.xlu0 %1755
      %1757 = vrot.lane.b32.xlu0 %v1643, 96
      %v1758 = vpop.permute.xlu0 %1757
      %1759 = vrot.lane.b32.xlu0 %v1713, 96
      %v1760 = vpop.permute.xlu0 %1759
      %1761 = vrot.lane.b32.xlu0 %v811, 96
      %v1762 = vpop.permute.xlu0 %1761
      %v1764 = vsel %vm1014, 0, %v1645
      %v1766 = vsel %vm1014, %v1587, %v1647
      %v1768 = vsel %vm1014, %v1588, %v1649
      %v1770 = vsel %vm1014, %v1589, %v1651
      %v1772 = vsel %vm1014, %v1590, %v1653
      %v1774 = vsel %vm1014, %v1591, %v1655
      %v1776 = vsel %vm1014, %v1592, %v1657
      %v1778 = vsel %vm1014, %v1593, %v1659
      %v1780 = vsel %vm1048, %v1764, %v1675
      %v1782 = vsel %vm1048, %v1766, %v1677
      %v1784 = vsel %vm1048, %v1768, %v1679
      %v1786 = vsel %vm1048, %v1770, %v1681
      %v1788 = vsel %vm1048, %v1772, %v1683
      %v1790 = vsel %vm1048, %v1774, %v1685
      %v1792 = vsel %vm1048, %v1776, %v1687
      %v1794 = vsel %vm1048, %v1778, %v1689
      %v1796 = vsel %vm1082, %v1780, %v1692
      %v1798 = vsel %vm1082, %v1782, %v1694
      %v1800 = vsel %vm1082, %v1784, %v1696
      %v1802 = vsel %vm1082, %v1786, %v1698
      %v1804 = vsel %vm1082, %v1788, %v1700
      %v1806 = vsel %vm1082, %v1790, %v1702
      %v1808 = vsel %vm1082, %v1792, %v1704
      %v1810 = vsel %vm1082, %v1794, %v1706
      %v1813 = vsel %vm1014, %v1601, %v1716
      %v1816 = vsel %vm1014, %v1608, %v1718
      %v1819 = vsel %vm1014, %v1615, %v1720
      %v1822 = vsel %vm1014, %v1622, %v1722
      %v1825 = vsel %vm1014, %v1629, %v1724
      %v1828 = vsel %vm1014, %v1636, %v1726
      %v1831 = vsel %vm1014, %v1643, %v1728
      %v1834 = vsel %vm1014, %v1713, %v1730
      %v1836 = vsel %vm1048, %v1813, %v1732
      %v1838 = vsel %vm1048, %v1816, %v1734
      %v1840 = vsel %vm1048, %v1819, %v1736
      %v1842 = vsel %vm1048, %v1822, %v1738
      %v1844 = vsel %vm1048, %v1825, %v1740
      %v1846 = vsel %vm1048, %v1828, %v1742
      %v1848 = vsel %vm1048, %v1831, %v1744
      %v1850 = vsel %vm1048, %v1834, %v1746
      %v1852 = vsel %vm1082, %v1836, %v1748
      %v1854 = vsel %vm1082, %v1838, %v1750
      %v1856 = vsel %vm1082, %v1840, %v1752
      %v1858 = vsel %vm1082, %v1842, %v1754
      %v1860 = vsel %vm1082, %v1844, %v1756
      %v1862 = vsel %vm1082, %v1846, %v1758
      %v1864 = vsel %vm1082, %v1848, %v1760
      %v1866 = vsel %vm1082, %v1850, %v1762
      %v1883 = vunpack.c.l.b16 %v1796
      %v1884 = vunpack.c.l.b16 %v1852
      %v1885 = vunpack.c.l.b16 %v1668
      %v1886 = vunpack.c.l.b16 %v1798
      %v1887 = vunpack.c.l.b16 %v1854
      %v1888 = vunpack.c.l.b16 %v1669
      %v1889 = vunpack.c.l.b16 %v1800
      %v1890 = vunpack.c.l.b16 %v1856
      %v1891 = vunpack.c.l.b16 %v1670
      %v1892 = vunpack.c.l.b16 %v1802
      %v1893 = vunpack.c.l.b16 %v1858
      %v1894 = vunpack.c.l.b16 %v1671
      %v1895 = vunpack.c.l.b16 %v1804
      %v1896 = vunpack.c.l.b16 %v1860
      %v1897 = vunpack.c.l.b16 %v1672
      %v1898 = vunpack.c.l.b16 %v1806
      %v1899 = vunpack.c.l.b16 %v1862
      %v1900 = vunpack.c.l.b16 %v1673
      %v1901 = vunpack.c.l.b16 %v1808
      %v1902 = vunpack.c.l.b16 %v1864
      %v1903 = vunpack.c.l.b16 %v1714
      %v1904 = vunpack.c.l.b16 %v1810
      %v1905 = vunpack.c.l.b16 %v1866
      %v1907 = vlaneseq
      %v1908 = vshrl.u32 %v1907, 7
      %v1909 = vsub.s32 0, %v1908
      %v1910 = vrot.slane %v497, %v1909
      %v1912 = vpack.c.b16 %v1886, %v1883
      %v1913 = vpack.c.b16 %v1887, %v1884
      %v1914 = vpack.c.b16 %v1888, %v1885
      %v1915 = vpack.c.b16 %v1892, %v1889
      %v1916 = vpack.c.b16 %v1893, %v1890
      %v1917 = vpack.c.b16 %v1894, %v1891
      %v1918 = vpack.c.b16 %v1898, %v1895
      %v1919 = vpack.c.b16 %v1899, %v1896
      %v1920 = vpack.c.b16 %v1900, %v1897
      %v1921 = vpack.c.b16 %v1904, %v1901
      %v1922 = vpack.c.b16 %v1905, %v1902
      %v1923 = vpack.c.b16 %v1139, %v1903
      %v1968 = vunpack.c.l.b16 %v461
      %v1969 = vunpack.c.l.b16 %v462
      %v1970 = vunpack.c.l.b16 %v463
      %v1971 = vunpack.c.l.b16 %v464
      %v1972 = vunpack.c.l.b16 %v465
      %v1973 = vunpack.c.l.b16 %v466
      %v1974 = vunpack.c.l.b16 %v467
      %v1975 = vunpack.c.l.b16 %v468
      %v1976 = vunpack.c.l.b16 %v469
      %v1977 = vunpack.c.l.b16 %v470
      %v1978 = vunpack.c.l.b16 %v471
      %v1979 = vunpack.c.l.b16 %v472
      %v1980 = vunpack.c.l.b16 %v473
      %v1981 = vunpack.c.l.b16 %v474
      %v1982 = vunpack.c.l.b16 %v475
      %v1983 = vunpack.c.l.b16 %v476
      %v1984 = vunpack.c.l.b16 %v477
      %v1985 = vunpack.c.l.b16 %v478
      %v1986 = vunpack.c.l.b16 %v479
      %v1987 = vunpack.c.l.b16 %v480
      %v1988 = vunpack.c.l.b16 %v481
      %v1989 = vunpack.c.l.b16 %v482
      %v1990 = vunpack.c.l.b16 %v483
      %v1991 = vunpack.c.l.b16 %v484
      %v1992 = vunpack.c.l.b16 %v485
      %v1993 = vunpack.c.l.b16 %v486
      %v1994 = vunpack.c.l.b16 %v487
      %v1995 = vunpack.c.l.b16 %v488
      %v1996 = vunpack.c.l.b16 %v489
      %v1997 = vunpack.c.l.b16 %v490
      %v1998 = vunpack.c.l.b16 %v491
      %v1999 = vunpack.c.l.b16 %v492
      %v2000 = vunpack.c.l.b16 %v493
      %v2001 = vunpack.c.l.b16 %v494
      %v2002 = vunpack.c.l.b16 %v495
      %v2003 = vunpack.c.l.b16 %v496
      %v2004 = vpack.c.b16 %v1969, %v1968
      %v2005 = vpack.c.b16 %v1971, %v1970
      %v2006 = vpack.c.b16 %v1973, %v1972
      %v2007 = vpack.c.b16 %v1975, %v1974
      %v2008 = vpack.c.b16 %v1977, %v1976
      %v2009 = vpack.c.b16 %v1979, %v1978
      %v2010 = vpack.c.b16 %v1981, %v1980
      %v2011 = vpack.c.b16 %v1983, %v1982
      %v2012 = vpack.c.b16 %v1985, %v1984
      %v2013 = vpack.c.b16 %v1987, %v1986
      %v2014 = vpack.c.b16 %v1989, %v1988
      %v2015 = vpack.c.b16 %v1991, %v1990
      %v2016 = vpack.c.b16 %v1993, %v1992
      %v2017 = vpack.c.b16 %v1995, %v1994
      %v2018 = vpack.c.b16 %v1997, %v1996
      %v2019 = vpack.c.b16 %v1999, %v1998
      %v2020 = vpack.c.b16 %v2001, %v2000
      %v2021 = vpack.c.b16 %v2003, %v2002
      %v2041 = vsel %vm1014, %v1914, 0
      %v2044 = vsel %vm1014, %v1917, 0
      %v2047 = vsel %vm1014, %v1920, 0
      %v2050 = vsel %vm1014, %v1923, 0
      %2052 = vmatprep.subr.bf16.mxu0 0
      %2053 = vmatpush1.bf16.msra.mxu0 %v2004
      %2054 = vmatprep.subr.bf16.mxu0 0
      %2055 = vmatpush1.bf16.msra.mxu0 %v2005
      %2056 = vmatprep.subr.bf16.mxu0 0
      %2057 = vmatpush1.bf16.msra.mxu0 %v2006
      %2058 = vmatprep.subr.bf16.mxu0 0
      %2059 = vmatpush1.bf16.msra.mxu0 %v2007
      %2060 = vmatprep.subr.bf16.mxu0 0
      %2061 = vmatpush1.bf16.msra.mxu0 %v2008
      %2062 = vmatprep.subr.bf16.mxu0 0
      %2063 = vmatpush1.bf16.msra.mxu0 %v2009
      %2064 = vmatprep.subr.bf16.mxu0 0
      %2065 = vmatpush1.bf16.msra.mxu0 %v2010
      %2066 = vmatprep.subr.bf16.mxu0 0
      %2067 = vmatpush1.bf16.msra.mxu0 %v2011
      %2068 = vmatprep.subr.bf16.mxu0 0
      %2069 = vmatpush1.bf16.msra.mxu0 %v2012
      %2070 = vmatprep.subr.bf16.mxu0 0
      %2071 = vmatpush1.bf16.msra.mxu0 %v2013
      %2072 = vmatprep.subr.bf16.mxu0 0
      %2073 = vmatpush1.bf16.msra.mxu0 %v2014
      %2074 = vmatprep.subr.bf16.mxu0 0
      %2075 = vmatpush1.bf16.msra.mxu0 %v2015
      %2076 = vmatprep.subr.bf16.mxu0 0
      %2077 = vmatpush1.bf16.msra.mxu0 %v2016
      %2078 = vmatprep.subr.bf16.mxu0 0
      %2079 = vmatpush1.bf16.msra.mxu0 %v2017
      %2080 = vmatprep.subr.bf16.mxu0 0
      %2081 = vmatpush1.bf16.msra.mxu0 %v2018
      %2082 = vmatprep.subr.bf16.mxu0 0
      %2083 = vmatpush1.bf16.msra.mxu0 %v2019
      %2084 = vmatprep.mubr.bf16.mxu0 %v1913
      %2085 = vmatmul.mubr.bf16.gmra.mrb[0].mxu0 %v1912
      %v2086 = vpop.f32.mrb[0].mxu0
      %v2087 = vadd.f32 %v1910, %v2086
      %v2088 = vpop.f32.mrb[0].mxu0
      %v2089 = vpop.f32.mrb[0].mxu0
      %v2090 = vadd.f32 %v1910, %v2089
      %v2091 = vpop.f32.mrb[0].mxu0
      %2092 = vmatprep.mubr.bf16.mxu0 %v1916
      %2093 = vmatmul.mubr.bf16.gmra.mrb[0].mxu0 %v1915
      %v2094 = vpop.f32.mrb[0].mxu0
      %v2095 = vadd.f32 %v1910, %v2094
      %v2096 = vpop.f32.mrb[0].mxu0
      %v2097 = vpop.f32.mrb[0].mxu0
      %v2098 = vadd.f32 %v1910, %v2097
      %v2099 = vpop.f32.mrb[0].mxu0
      %2100 = vmatprep.mubr.bf16.mxu0 %v1919
      %2101 = vmatmul.mubr.bf16.gmra.mrb[0].mxu0 %v1918
      %v2102 = vpop.f32.mrb[0].mxu0
      %v2103 = vadd.f32 %v1910, %v2102
      %v2104 = vpop.f32.mrb[0].mxu0
      %v2105 = vpop.f32.mrb[0].mxu0
      %v2106 = vadd.f32 %v1910, %v2105
      %v2107 = vpop.f32.mrb[0].mxu0
      %2108 = vmatprep.mubr.bf16.mxu0 %v1922
      %2109 = vmatmul.mubr.bf16.gmra.mrb[0].mxu0 %v1921
      %v2110 = vpop.f32.mrb[0].mxu0
      %v2111 = vadd.f32 %v1910, %v2110
      %v2112 = vpop.f32.mrb[0].mxu0
      %v2113 = vpop.f32.mrb[0].mxu0
      %v2114 = vadd.f32 %v1910, %v2113
      %v2115 = vpop.f32.mrb[0].mxu0
      %2116 = vdwg.mxu0
      %2117 = vmatprep.subr.bf16.mxu0 0
      %2118 = vmatpush1.bf16.msra.mxu0 %v2020
      %2119 = vmatprep.subr.bf16.mxu0 0
      %2120 = vmatpush1.bf16.msra.mxu0 %v2021
      %2121 = vmatprep.subr.bf16.mxu0 0
      %2122 = vmatpush1.bf16.msra.mxu0 0
      %2123 = vmatprep.subr.bf16.mxu0 0
      %2124 = vmatpush1.bf16.msra.mxu0 0
      %2125 = vmatprep.subr.bf16.mxu0 0
      %2126 = vmatpush1.bf16.msra.mxu0 0
      %2127 = vmatprep.subr.bf16.mxu0 0
      %2128 = vmatpush1.bf16.msra.mxu0 0
      %2129 = vmatprep.subr.bf16.mxu0 0
      %2130 = vmatpush1.bf16.msra.mxu0 0
      %2131 = vmatprep.subr.bf16.mxu0 0
      %2132 = vmatpush1.bf16.msra.mxu0 0
      %2133 = vmatprep.subr.bf16.mxu0 0
      %2134 = vmatpush1.bf16.msra.mxu0 0
      %2135 = vmatprep.subr.bf16.mxu0 0
      %2136 = vmatpush1.bf16.msra.mxu0 0
      %2137 = vmatprep.subr.bf16.mxu0 0
      %2138 = vmatpush1.bf16.msra.mxu0 0
      %2139 = vmatprep.subr.bf16.mxu0 0
      %2140 = vmatpush1.bf16.msra.mxu0 0
      %2141 = vmatprep.subr.bf16.mxu0 0
      %2142 = vmatpush1.bf16.msra.mxu0 0
      %2143 = vmatprep.subr.bf16.mxu0 0
      %2144 = vmatpush1.bf16.msra.mxu0 0
      %2145 = vmatprep.subr.bf16.mxu0 0
      %2146 = vmatpush1.bf16.msra.mxu0 0
      %2147 = vmatprep.subr.bf16.mxu0 0
      %2148 = vmatpush1.bf16.msra.mxu0 0
      %2149 = vmatprep.mubr.bf16.mxu0 0
      %2150 = vmatmul.mubr.bf16.gmra.mrb[0].mxu0 %v2041
      %v2151 = vpop.f32.mrb[0].mxu0
      %v2152 = vadd.f32 %v2087, %v2151
      %v2153 = vpop.f32.mrb[0].mxu0
      %v2154 = vpop.f32.mrb[0].mxu0
      %v2155 = vadd.f32 %v2090, %v2154
      %v2156 = vpop.f32.mrb[0].mxu0
      %2157 = vmatprep.mubr.bf16.mxu0 0
      %2158 = vmatmul.mubr.bf16.gmra.mrb[0].mxu0 %v2044
      %v2159 = vpop.f32.mrb[0].mxu0
      %v2160 = vadd.f32 %v2095, %v2159
      %v2161 = vpop.f32.mrb[0].mxu0
      %v2162 = vpop.f32.mrb[0].mxu0
      %v2163 = vadd.f32 %v2098, %v2162
      %v2164 = vpop.f32.mrb[0].mxu0
      %2165 = vmatprep.mubr.bf16.mxu0 0
      %2166 = vmatmul.mubr.bf16.gmra.mrb[0].mxu0 %v2047
      %v2167 = vpop.f32.mrb[0].mxu0
      %v2168 = vadd.f32 %v2103, %v2167
      %v2169 = vpop.f32.mrb[0].mxu0
      %v2170 = vpop.f32.mrb[0].mxu0
      %v2171 = vadd.f32 %v2106, %v2170
      %v2172 = vpop.f32.mrb[0].mxu0
      %2173 = vmatprep.mubr.bf16.mxu0 0
      %2174 = vmatmul.mubr.bf16.gmra.mrb[0].mxu0 %v2050
      %v2175 = vpop.f32.mrb[0].mxu0
      %v2176 = vadd.f32 %v2111, %v2175
      %v2177 = vpop.f32.mrb[0].mxu0
      %v2178 = vpop.f32.mrb[0].mxu0
      %v2179 = vadd.f32 %v2114, %v2178
      %v2180 = vpop.f32.mrb[0].mxu0
      %2181 = vdwg.mxu0
      %v2182 = vpack.c.bf16 %v430, %v429
      %v2183 = vpack.c.bf16 %v432, %v431
      %v2184 = vpack.c.bf16 %v434, %v433
      %v2185 = vpack.c.bf16 %v436, %v435
      %v2187 = vlaneseq
      %v2188 = vshrl.u32 %v2187, 7
      %v2189 = vsub.s32 0, %v2188
      %v2190 = vrot.slane %v500, %v2189
      %v2194 = vunpack.c.l.b16 %v498
      %v2195 = vunpack.c.l.b16 %v499
      %v2196 = vpack.c.b16 %v2195, %v2194
      %v2199 = vsel %vm513, %v2182, 0
      %v2202 = vsel %vm513, %v2183, 0
      %v2205 = vsel %vm513, %v2184, 0
      %v2208 = vsel %vm513, %v2185, 0
      %2210 = vmatprep.subr.bf16.mxu0 0
      %2211 = vmatpush1.bf16.msra.mxu0 %v2196
      %2212 = vmatprep.subr.bf16.mxu0 0
      %2213 = vmatpush1.bf16.msra.mxu0 0
      %2214 = vmatprep.subr.bf16.mxu0 0
      %2215 = vmatpush1.bf16.msra.mxu0 0
      %2216 = vmatprep.subr.bf16.mxu0 0
      %2217 = vmatpush1.bf16.msra.mxu0 0
      %2218 = vmatprep.subr.bf16.mxu0 0
      %2219 = vmatpush1.bf16.msra.mxu0 0
      %2220 = vmatprep.subr.bf16.mxu0 0
      %2221 = vmatpush1.bf16.msra.mxu0 0
      %2222 = vmatprep.subr.bf16.mxu0 0
      %2223 = vmatpush1.bf16.msra.mxu0 0
      %2224 = vmatprep.subr.bf16.mxu0 0
      %2225 = vmatpush1.bf16.msra.mxu0 0
      %2226 = vmatprep.subr.bf16.mxu0 0
      %2227 = vmatpush1.bf16.msra.mxu0 0
      %2228 = vmatprep.subr.bf16.mxu0 0
      %2229 = vmatpush1.bf16.msra.mxu0 0
      %2230 = vmatprep.subr.bf16.mxu0 0
      %2231 = vmatpush1.bf16.msra.mxu0 0
      %2232 = vmatprep.subr.bf16.mxu0 0
      %2233 = vmatpush1.bf16.msra.mxu0 0
      %2234 = vmatprep.subr.bf16.mxu0 0
      %2235 = vmatpush1.bf16.msra.mxu0 0
      %2236 = vmatprep.subr.bf16.mxu0 0
      %2237 = vmatpush1.bf16.msra.mxu0 0
      %2238 = vmatprep.subr.bf16.mxu0 0
      %2239 = vmatpush1.bf16.msra.mxu0 0
      %2240 = vmatprep.subr.bf16.mxu0 0
      %2241 = vmatpush1.bf16.msra.mxu0 0
      %2242 = vmatprep.mubr.bf16.mxu0 0
      %2243 = vmatmul.mubr.bf16.gmra.mrb[0].mxu0 %v2199
      %v2244 = vpop.f32.mrb[0].mxu0
      %v2245 = vadd.f32 %v2190, %v2244
      %v2246 = vpop.f32.mrb[0].mxu0
      %v2247 = vpop.f32.mrb[0].mxu0
      %v2248 = vadd.f32 %v2190, %v2247
      %v2249 = vpop.f32.mrb[0].mxu0
      %2250 = vmatprep.mubr.bf16.mxu0 0
      %2251 = vmatmul.mubr.bf16.gmra.mrb[0].mxu0 %v2202
      %v2252 = vpop.f32.mrb[0].mxu0
      %v2253 = vadd.f32 %v2190, %v2252
      %v2254 = vpop.f32.mrb[0].mxu0
      %v2255 = vpop.f32.mrb[0].mxu0
      %v2256 = vadd.f32 %v2190, %v2255
      %v2257 = vpop.f32.mrb[0].mxu0
      %2258 = vmatprep.mubr.bf16.mxu0 0
      %2259 = vmatmul.mubr.bf16.gmra.mrb[0].mxu0 %v2205
      %v2260 = vpop.f32.mrb[0].mxu0
      %v2261 = vadd.f32 %v2190, %v2260
      %v2262 = vpop.f32.mrb[0].mxu0
      %v2263 = vpop.f32.mrb[0].mxu0
      %v2264 = vadd.f32 %v2190, %v2263
      %v2265 = vpop.f32.mrb[0].mxu0
      %2266 = vmatprep.mubr.bf16.mxu0 0
      %2267 = vmatmul.mubr.bf16.gmra.mrb[0].mxu0 %v2208
      %v2268 = vpop.f32.mrb[0].mxu0
      %v2269 = vadd.f32 %v2190, %v2268
      %v2270 = vpop.f32.mrb[0].mxu0
      %v2271 = vpop.f32.mrb[0].mxu0
      %v2272 = vadd.f32 %v2190, %v2271
      %v2273 = vpop.f32.mrb[0].mxu0
      %2274 = vdwg.mxu0
      %v2275 = vadd.f32 %v2152, %v2245
      %v2276 = vadd.f32 %v2155, %v2248
      %v2277 = vadd.f32 %v2160, %v2253
      %v2278 = vadd.f32 %v2163, %v2256
      %v2279 = vadd.f32 %v2168, %v2261
      %v2280 = vadd.f32 %v2171, %v2264
      %v2281 = vadd.f32 %v2176, %v2269
      %v2282 = vadd.f32 %v2179, %v2272
      %2283 = vst.msk [vmem:[%s427] sm:$0xff] %vm1014, %v2275
      %2284 = vst.msk [vmem:[%s427 + $0x8] sm:$0xff] %vm1014, %v2276
      %2285 = vst.msk [vmem:[%s427 + $0x10] sm:$0xff] %vm1014, %v2277
      %2286 = vst.msk [vmem:[%s427 + $0x18] sm:$0xff] %vm1014, %v2278
      %2287 = vst.msk [vmem:[%s427 + $0x20] sm:$0xff] %vm1014, %v2279
      %2288 = vst.msk [vmem:[%s427 + $0x28] sm:$0xff] %vm1014, %v2280
      %2289 = vst.msk [vmem:[%s427 + $0x30] sm:$0xff] %vm1014, %v2281
      %2290 = vst.msk [vmem:[%s427 + $0x38] sm:$0xff] %vm1014, %v2282
      %p2291 = scmp.lt.s32.totalorder %s23, 1
      %s2292 = scalar_select %p2291, %s23, 1
      %s2293 = smul.addr %s2292, 8
      %s2294 = smul.addr %s2293, 8
      %s2295 = scalar_lea.vmem %s12, %s2294
      // Predicated region
      $region69: #{mid_block_forward.2} parent=67 // pred_check
        %p2296 = pneg %p303
      $region70: #{mid_block_forward.2} parent=67 // pred_check_branch
        %2298 = sbr.rel (%p2296) target = $region72
      $region71: #{mid_block_forward.2} parent=67 // pred_region
        _
      $region72: #{mid_block_forward.2} parent=67 // pred_fallthru
        _
    $region68: #{mid_block_forward.2} parent=5 // pred_fallthru
      _
    %p2299 = scmp.le.s32.totalorder 2, %s18
    // Predicated region
    $region73: #{mid_block_forward.2} parent=5 // pred_check
      %p2300 = pneg %p2299
    $region74: #{mid_block_forward.2} parent=5 // pred_check_branch
      %2302 = sbr.rel (%p2300) target = $region76
    $region75: #{mid_block_forward.2} parent=5 // pred_region
      %s2303 = ssub.s32 %s18, 2
      // Predicated region
      $region77: #{mid_block_forward.2} parent=75 // pred_check
        %p2304 = pneg %p309
      $region78: #{mid_block_forward.2} parent=75 // pred_check_branch
        %2306 = sbr.rel (%p2304) target = $region80
      $region79: #{mid_block_forward.2} parent=75 // pred_region
        %p2307 = scmp.lt.s32.totalorder %s24, 1
        %s2308 = scalar_select %p2307, %s24, 1
        %s2309 = smul.addr %s2308, 8
        %s2310 = smul.addr %s2309, 8
        %s2311 = scalar_lea.vmem %s12, %s2310
      $region80: #{mid_block_forward.2} parent=75 // pred_fallthru
        _
    $region76: #{mid_block_forward.2} parent=5 // pred_fallthru
      _
  $region6: #{mid_block_forward.2} parent=0 // loop_footer
    %s22 = sadd.s32 1, %s18
  $region7: #{mid_block_forward.2} parent=0 // loop_footer_branch
    %17 = sbr.rel target = $region3
  $region8: #{mid_block_forward.2} parent=0 // loop_exit
    _

// kernel: mid_block_forward.3
$region0: #{mid_block_forward.3}
  #allocation0 [shape = 'u32[]', space=smem, size = 0x4, offset = 0x4, fixed_abs, tag = 'smem constant byte address 0x4 - core index']
  #allocation1 [shape = 'u32[144,128]{1,0:T(1,128)}', space=vmem, size = 0x12000, scoped, tag = 'internal scratch']
  %s0 = inlined_call_operand.vmem [shape: f32[2,64,32], index: 0, kind: input, shape index: {}]
  %s1 = inlined_call_operand.vmem [shape: f32[2,1,32], index: 1, kind: input, shape index: {}]
  %s2 = inlined_call_operand.vmem [shape: f32[1,32], index: 2, kind: input, shape index: {}]
  %s3 = inlined_call_operand.vmem [shape: f32[1,32], index: 3, kind: input, shape index: {}]
  %s4 = inlined_call_operand.vmem [shape: bf16[32,96], index: 4, kind: input, shape index: {}]
  %s5 = inlined_call_operand.vmem [shape: f32[1,96], index: 5, kind: input, shape index: {}]
  %s6 = inlined_call_operand.vmem [shape: bf16[4,8,32], index: 6, kind: input, shape index: {}]
  %s7 = inlined_call_operand.vmem [shape: f32[1,32], index: 7, kind: input, shape index: {}]
  %s8 = inlined_call_operand.vmem [shape: f32[1,32], index: 8, kind: input, shape index: {}]
  %s9 = inlined_call_operand.vmem [shape: f32[1,32], index: 9, kind: input, shape index: {}]
  %s10 = inlined_call_operand.vmem [shape: bf16[288,32], index: 10, kind: input, shape index: {}]
  %s11 = inlined_call_operand.vmem [shape: f32[1,32], index: 11, kind: input, shape index: {}]
  %s12 = inlined_call_operand.vmem [shape: f32[1,32], index: 12, kind: input, shape index: {}]
  %s13 = inlined_call_operand.vmem [shape: f32[1,32], index: 13, kind: input, shape index: {}]
  %s14 = inlined_call_operand.vmem [shape: bf16[288,32], index: 14, kind: input, shape index: {}]
  %s15 = inlined_call_operand.vmem [shape: f32[1,32], index: 15, kind: input, shape index: {}]
  %s16 = inlined_call_operand.vmem [shape: bf16[32,32], index: 16, kind: input, shape index: {}]
  %s17 = inlined_call_operand.vmem [shape: f32[1,32], index: 17, kind: input, shape index: {}]
  %s18 = inlined_call_operand.hbm [shape: f32[2,64,32], index: 18, kind: output, shape index: {}]
  %s19 = sld [smem:[#allocation0]]
  $region105: #{mid_block_forward.3} parent=0
    _
  %s21 = ssub.s32 1, %s19
  %s22 = scalar_select 0, %s21, %s19
  $region1: #{mid_block_forward.3} parent=0
    #allocation2 [shape = 'u8[65536]{0}', space=vmem, size = 0x10000, scoped, tag = 'output window, operand 0']
    #allocation3 [shape = 's32[2]{0}', space=sflag, size = 0x8, scoped, tag = 'scoped memory for mid_block_forward.3']
    %23 = vsyncpa [#allocation3], 0
    %s24 = scalar_lea.sflag [#allocation3], 1
    %25 = vsyncpa %s24, 0
    loop: start=0, step=1, limit=4
    $region2: #{mid_block_forward.3} parent=1 // loop_pre_header
      _
    $region3: #{mid_block_forward.3} parent=1 // loop_header
      %s27 = sphi 0, %s31
      %p28 = scmp.ge.s32.totalorder %s27, 4
      %s37 = sphi 0, %s39
      %s40 = sphi 0, %s37
      %s41 = sphi 0, %s40
      %s57 = sphi 0, %s41
      %s63 = sphi 0, %s65
      %s66 = sphi 0, %s63
      %s67 = sphi 0, %s66
      %s83 = sphi 0, %s67
      %s87 = sphi 0, %s87
      %s89 = sphi 0, %s87
      %s90 = sphi 0, %s89
      %s104 = sphi 0, %s90
      %s108 = sphi 0, %s108
      %s110 = sphi 0, %s108
      %s111 = sphi 0, %s110
      %s125 = sphi 0, %s111
      %s129 = sphi 0, %s129
      %s131 = sphi 0, %s129
      %s132 = sphi 0, %s131
      %s146 = sphi 0, %s132
      %s150 = sphi 0, %s150
      %s152 = sphi 0, %s150
      %s153 = sphi 0, %s152
      %s167 = sphi 0, %s153
      %s171 = sphi 0, %s171
      %s173 = sphi 0, %s171
      %s174 = sphi 0, %s173
      %s188 = sphi 0, %s174
      %s192 = sphi 0, %s192
      %s194 = sphi 0, %s192
      %s195 = sphi 0, %s194
      %s209 = sphi 0, %s195
      %s213 = sphi 0, %s213
      %s215 = sphi 0, %s213
      %s216 = sphi 0, %s215
      %s230 = sphi 0, %s216
      %s234 = sphi 0, %s234
      %s236 = sphi 0, %s234
      %s237 = sphi 0, %s236
      %s251 = sphi 0, %s237
      %s255 = sphi 0, %s255
      %s257 = sphi 0, %s255
      %s258 = sphi 0, %s257
      %s272 = sphi 0, %s258
      %s276 = sphi 0, %s276
      %s278 = sphi 0, %s276
      %s279 = sphi 0, %s278
      %s293 = sphi 0, %s279
      %s297 = sphi 0, %s297
      %s299 = sphi 0, %s297
      %s300 = sphi 0, %s299
      %s314 = sphi 0, %s300
      %s318 = sphi 0, %s318
      %s320 = sphi 0, %s318
      %s321 = sphi 0, %s320
      %s335 = sphi 0, %s321
      %s339 = sphi 0, %s339
      %s341 = sphi 0, %s339
      %s342 = sphi 0, %s341
      %s356 = sphi 0, %s342
      %s360 = sphi 0, %s360
      %s362 = sphi 0, %s360
      %s363 = sphi 0, %s362
      %s377 = sphi 0, %s363
      %s381 = sphi 0, %s381
      %s383 = sphi 0, %s381
      %s384 = sphi 0, %s383
      %s398 = sphi 0, %s384
      %s402 = sphi 0, %s402
      %s404 = sphi 0, %s402
      %s405 = sphi 0, %s404
      %s419 = sphi 0, %s405
      %s425 = sphi 0, %s427
      %s428 = sphi 0, %s425
      %s429 = sphi 0, %s428
      %s445 = sphi 0, %s429
    $region4: #{mid_block_forward.3} parent=1 // loop_header_branch
      %30 = sbr.rel (%p28) target = $region8
    $region5: #{mid_block_forward.3} parent=1 // loop_body
      %s32 = ssub.s32 %s27, 1
      %s33 = ssub.s32 %s27, 2
      %s34 = sadd.s32 %s27, 1
      %s35 = ssub.s32 %s27, %s34
      %p36 = scmp.eq.s32.totalorder %s35, 0
      %s38 = sadd.s32 %s37, 1
      %s39 = scalar_select %p36, %s37, %s38
      %p42 = pneg %p36
      %p43 = scmp.eq.s32.totalorder %s27, 1
      %p44 = por %p42, %p43
      %p45 = scmp.ne.s32.totalorder %s37, %s40
      %p46 = scmp.eq.s32.totalorder %s27, 0
      %p47 = por %p45, %p46
      %p48 = scmp.ne.s32.totalorder %s37, %s40
      %p49 = scmp.eq.s32.totalorder %s32, 1
      %p50 = por %p48, %p49
      %p51 = scmp.ne.s32.totalorder %s40, %s41
      %p52 = scmp.eq.s32.totalorder %s32, 0
      %p53 = por %p51, %p52
      %p54 = scmp.ne.s32.totalorder %s40, %s41
      %p55 = scmp.eq.s32.totalorder %s33, 1
      %p56 = por %p54, %p55
      %p58 = scmp.ne.s32.totalorder %s41, %s57
      %p59 = scmp.eq.s32.totalorder %s33, 0
      %p60 = por %p58, %p59
      %s61 = ssub.s32 %s27, %s34
      %p62 = scmp.eq.s32.totalorder %s61, 0
      %s64 = sadd.s32 %s63, 1
      %s65 = scalar_select %p62, %s63, %s64
      %p68 = pneg %p62
      %p69 = scmp.eq.s32.totalorder %s27, 1
      %p70 = por %p68, %p69
      %p71 = scmp.ne.s32.totalorder %s63, %s66
      %p72 = scmp.eq.s32.totalorder %s27, 0
      %p73 = por %p71, %p72
      %p74 = scmp.ne.s32.totalorder %s63, %s66
      %p75 = scmp.eq.s32.totalorder %s32, 1
      %p76 = por %p74, %p75
      %p77 = scmp.ne.s32.totalorder %s66, %s67
      %p78 = scmp.eq.s32.totalorder %s32, 0
      %p79 = por %p77, %p78
      %p80 = scmp.ne.s32.totalorder %s66, %s67
      %p81 = scmp.eq.s32.totalorder %s33, 1
      %p82 = por %p80, %p81
      %p84 = scmp.ne.s32.totalorder %s67, %s83
      %p85 = scmp.eq.s32.totalorder %s33, 0
      %p86 = por %p84, %p85
      %s88 = sadd.s32 %s87, 1
      %p91 = scmp.eq.s32.totalorder %s27, 1
      %p92 = scmp.ne.s32.totalorder %s87, %s89
      %p93 = scmp.eq.s32.totalorder %s27, 0
      %p94 = por %p92, %p93
      %p95 = scmp.ne.s32.totalorder %s87, %s89
      %p96 = scmp.eq.s32.totalorder %s32, 1
      %p97 = por %p95, %p96
      %p98 = scmp.ne.s32.totalorder %s89, %s90
      %p99 = scmp.eq.s32.totalorder %s32, 0
      %p100 = por %p98, %p99
      %p101 = scmp.ne.s32.totalorder %s89, %s90
      %p102 = scmp.eq.s32.totalorder %s33, 1
      %p103 = por %p101, %p102
      %p105 = scmp.ne.s32.totalorder %s90, %s104
      %p106 = scmp.eq.s32.totalorder %s33, 0
      %p107 = por %p105, %p106
      %s109 = sadd.s32 %s108, 1
      %p112 = scmp.eq.s32.totalorder %s27, 1
      %p113 = scmp.ne.s32.totalorder %s108, %s110
      %p114 = scmp.eq.s32.totalorder %s27, 0
      %p115 = por %p113, %p114
      %p116 = scmp.ne.s32.totalorder %s108, %s110
      %p117 = scmp.eq.s32.totalorder %s32, 1
      %p118 = por %p116, %p117
      %p119 = scmp.ne.s32.totalorder %s110, %s111
      %p120 = scmp.eq.s32.totalorder %s32, 0
      %p121 = por %p119, %p120
      %p122 = scmp.ne.s32.totalorder %s110, %s111
      %p123 = scmp.eq.s32.totalorder %s33, 1
      %p124 = por %p122, %p123
      %p126 = scmp.ne.s32.totalorder %s111, %s125
      %p127 = scmp.eq.s32.totalorder %s33, 0
      %p128 = por %p126, %p127
      %s130 = sadd.s32 %s129, 1
      %p133 = scmp.eq.s32.totalorder %s27, 1
      %p134 = scmp.ne.s32.totalorder %s129, %s131
      %p135 = scmp.eq.s32.totalorder %s27, 0
      %p136 = por %p134, %p135
      %p137 = scmp.ne.s32.totalorder %s129, %s131
      %p138 = scmp.eq.s32.totalorder %s32, 1
      %p139 = por %p137, %p138
      %p140 = scmp.ne.s32.totalorder %s131, %s132
      %p141 = scmp.eq.s32.totalorder %s32, 0
      %p142 = por %p140, %p141
      %p143 = scmp.ne.s32.totalorder %s131, %s132
      %p144 = scmp.eq.s32.totalorder %s33, 1
      %p145 = por %p143, %p144
      %p147 = scmp.ne.s32.totalorder %s132, %s146
      %p148 = scmp.eq.s32.totalorder %s33, 0
      %p149 = por %p147, %p148
      %s151 = sadd.s32 %s150, 1
      %p154 = scmp.eq.s32.totalorder %s27, 1
      %p155 = scmp.ne.s32.totalorder %s150, %s152
      %p156 = scmp.eq.s32.totalorder %s27, 0
      %p157 = por %p155, %p156
      %p158 = scmp.ne.s32.totalorder %s150, %s152
      %p159 = scmp.eq.s32.totalorder %s32, 1
      %p160 = por %p158, %p159
      %p161 = scmp.ne.s32.totalorder %s152, %s153
      %p162 = scmp.eq.s32.totalorder %s32, 0
      %p163 = por %p161, %p162
      %p164 = scmp.ne.s32.totalorder %s152, %s153
      %p165 = scmp.eq.s32.totalorder %s33, 1
      %p166 = por %p164, %p165
      %p168 = scmp.ne.s32.totalorder %s153, %s167
      %p169 = scmp.eq.s32.totalorder %s33, 0
      %p170 = por %p168, %p169
      %s172 = sadd.s32 %s171, 1
      %p175 = scmp.eq.s32.totalorder %s27, 1
      %p176 = scmp.ne.s32.totalorder %s171, %s173
      %p177 = scmp.eq.s32.totalorder %s27, 0
      %p178 = por %p176, %p177
      %p179 = scmp.ne.s32.totalorder %s171, %s173
      %p180 = scmp.eq.s32.totalorder %s32, 1
      %p181 = por %p179, %p180
      %p182 = scmp.ne.s32.totalorder %s173, %s174
      %p183 = scmp.eq.s32.totalorder %s32, 0
      %p184 = por %p182, %p183
      %p185 = scmp.ne.s32.totalorder %s173, %s174
      %p186 = scmp.eq.s32.totalorder %s33, 1
      %p187 = por %p185, %p186
      %p189 = scmp.ne.s32.totalorder %s174, %s188
      %p190 = scmp.eq.s32.totalorder %s33, 0
      %p191 = por %p189, %p190
      %s193 = sadd.s32 %s192, 1
      %p196 = scmp.eq.s32.totalorder %s27, 1
      %p197 = scmp.ne.s32.totalorder %s192, %s194
      %p198 = scmp.eq.s32.totalorder %s27, 0
      %p199 = por %p197, %p198
      %p200 = scmp.ne.s32.totalorder %s192, %s194
      %p201 = scmp.eq.s32.totalorder %s32, 1
      %p202 = por %p200, %p201
      %p203 = scmp.ne.s32.totalorder %s194, %s195
      %p204 = scmp.eq.s32.totalorder %s32, 0
      %p205 = por %p203, %p204
      %p206 = scmp.ne.s32.totalorder %s194, %s195
      %p207 = scmp.eq.s32.totalorder %s33, 1
      %p208 = por %p206, %p207
      %p210 = scmp.ne.s32.totalorder %s195, %s209
      %p211 = scmp.eq.s32.totalorder %s33, 0
      %p212 = por %p210, %p211
      %s214 = sadd.s32 %s213, 1
      %p217 = scmp.eq.s32.totalorder %s27, 1
      %p218 = scmp.ne.s32.totalorder %s213, %s215
      %p219 = scmp.eq.s32.totalorder %s27, 0
      %p220 = por %p218, %p219
      %p221 = scmp.ne.s32.totalorder %s213, %s215
      %p222 = scmp.eq.s32.totalorder %s32, 1
      %p223 = por %p221, %p222
      %p224 = scmp.ne.s32.totalorder %s215, %s216
      %p225 = scmp.eq.s32.totalorder %s32, 0
      %p226 = por %p224, %p225
      %p227 = scmp.ne.s32.totalorder %s215, %s216
      %p228 = scmp.eq.s32.totalorder %s33, 1
      %p229 = por %p227, %p228
      %p231 = scmp.ne.s32.totalorder %s216, %s230
      %p232 = scmp.eq.s32.totalorder %s33, 0
      %p233 = por %p231, %p232
      %s235 = sadd.s32 %s234, 1
      %p238 = scmp.eq.s32.totalorder %s27, 1
      %p239 = scmp.ne.s32.totalorder %s234, %s236
      %p240 = scmp.eq.s32.totalorder %s27, 0
      %p241 = por %p239, %p240
      %p242 = scmp.ne.s32.totalorder %s234, %s236
      %p243 = scmp.eq.s32.totalorder %s32, 1
      %p244 = por %p242, %p243
      %p245 = scmp.ne.s32.totalorder %s236, %s237
      %p246 = scmp.eq.s32.totalorder %s32, 0
      %p247 = por %p245, %p246
      %p248 = scmp.ne.s32.totalorder %s236, %s237
      %p249 = scmp.eq.s32.totalorder %s33, 1
      %p250 = por %p248, %p249
      %p252 = scmp.ne.s32.totalorder %s237, %s251
      %p253 = scmp.eq.s32.totalorder %s33, 0
      %p254 = por %p252, %p253
      %s256 = sadd.s32 %s255, 1
      %p259 = scmp.eq.s32.totalorder %s27, 1
      %p260 = scmp.ne.s32.totalorder %s255, %s257
      %p261 = scmp.eq.s32.totalorder %s27, 0
      %p262 = por %p260, %p261
      %p263 = scmp.ne.s32.totalorder %s255, %s257
      %p264 = scmp.eq.s32.totalorder %s32, 1
      %p265 = por %p263, %p264
      %p266 = scmp.ne.s32.totalorder %s257, %s258
      %p267 = scmp.eq.s32.totalorder %s32, 0
      %p268 = por %p266, %p267
      %p269 = scmp.ne.s32.totalorder %s257, %s258
      %p270 = scmp.eq.s32.totalorder %s33, 1
      %p271 = por %p269, %p270
      %p273 = scmp.ne.s32.totalorder %s258, %s272
      %p274 = scmp.eq.s32.totalorder %s33, 0
      %p275 = por %p273, %p274
      %s277 = sadd.s32 %s276, 1
      %p280 = scmp.eq.s32.totalorder %s27, 1
      %p281 = scmp.ne.s32.totalorder %s276, %s278
      %p282 = scmp.eq.s32.totalorder %s27, 0
      %p283 = por %p281, %p282
      %p284 = scmp.ne.s32.totalorder %s276, %s278
      %p285 = scmp.eq.s32.totalorder %s32, 1
      %p286 = por %p284, %p285
      %p287 = scmp.ne.s32.totalorder %s278, %s279
      %p288 = scmp.eq.s32.totalorder %s32, 0
      %p289 = por %p287, %p288
      %p290 = scmp.ne.s32.totalorder %s278, %s279
      %p291 = scmp.eq.s32.totalorder %s33, 1
      %p292 = por %p290, %p291
      %p294 = scmp.ne.s32.totalorder %s279, %s293
      %p295 = scmp.eq.s32.totalorder %s33, 0
      %p296 = por %p294, %p295
      %s298 = sadd.s32 %s297, 1
      %p301 = scmp.eq.s32.totalorder %s27, 1
      %p302 = scmp.ne.s32.totalorder %s297, %s299
      %p303 = scmp.eq.s32.totalorder %s27, 0
      %p304 = por %p302, %p303
      %p305 = scmp.ne.s32.totalorder %s297, %s299
      %p306 = scmp.eq.s32.totalorder %s32, 1
      %p307 = por %p305, %p306
      %p308 = scmp.ne.s32.totalorder %s299, %s300
      %p309 = scmp.eq.s32.totalorder %s32, 0
      %p310 = por %p308, %p309
      %p311 = scmp.ne.s32.totalorder %s299, %s300
      %p312 = scmp.eq.s32.totalorder %s33, 1
      %p313 = por %p311, %p312
      %p315 = scmp.ne.s32.totalorder %s300, %s314
      %p316 = scmp.eq.s32.totalorder %s33, 0
      %p317 = por %p315, %p316
      %s319 = sadd.s32 %s318, 1
      %p322 = scmp.eq.s32.totalorder %s27, 1
      %p323 = scmp.ne.s32.totalorder %s318, %s320
      %p324 = scmp.eq.s32.totalorder %s27, 0
      %p325 = por %p323, %p324
      %p326 = scmp.ne.s32.totalorder %s318, %s320
      %p327 = scmp.eq.s32.totalorder %s32, 1
      %p328 = por %p326, %p327
      %p329 = scmp.ne.s32.totalorder %s320, %s321
      %p330 = scmp.eq.s32.totalorder %s32, 0
      %p331 = por %p329, %p330
      %p332 = scmp.ne.s32.totalorder %s320, %s321
      %p333 = scmp.eq.s32.totalorder %s33, 1
      %p334 = por %p332, %p333
      %p336 = scmp.ne.s32.totalorder %s321, %s335
      %p337 = scmp.eq.s32.totalorder %s33, 0
      %p338 = por %p336, %p337
      %s340 = sadd.s32 %s339, 1
      %p343 = scmp.eq.s32.totalorder %s27, 1
      %p344 = scmp.ne.s32.totalorder %s339, %s341
      %p345 = scmp.eq.s32.totalorder %s27, 0
      %p346 = por %p344, %p345
      %p347 = scmp.ne.s32.totalorder %s339, %s341
      %p348 = scmp.eq.s32.totalorder %s32, 1
      %p349 = por %p347, %p348
      %p350 = scmp.ne.s32.totalorder %s341, %s342
      %p351 = scmp.eq.s32.totalorder %s32, 0
      %p352 = por %p350, %p351
      %p353 = scmp.ne.s32.totalorder %s341, %s342
      %p354 = scmp.eq.s32.totalorder %s33, 1
      %p355 = por %p353, %p354
      %p357 = scmp.ne.s32.totalorder %s342, %s356
      %p358 = scmp.eq.s32.totalorder %s33, 0
      %p359 = por %p357, %p358
      %s361 = sadd.s32 %s360, 1
      %p364 = scmp.eq.s32.totalorder %s27, 1
      %p365 = scmp.ne.s32.totalorder %s360, %s362
      %p366 = scmp.eq.s32.totalorder %s27, 0
      %p367 = por %p365, %p366
      %p368 = scmp.ne.s32.totalorder %s360, %s362
      %p369 = scmp.eq.s32.totalorder %s32, 1
      %p370 = por %p368, %p369
      %p371 = scmp.ne.s32.totalorder %s362, %s363
      %p372 = scmp.eq.s32.totalorder %s32, 0
      %p373 = por %p371, %p372
      %p374 = scmp.ne.s32.totalorder %s362, %s363
      %p375 = scmp.eq.s32.totalorder %s33, 1
      %p376 = por %p374, %p375
      %p378 = scmp.ne.s32.totalorder %s363, %s377
      %p379 = scmp.eq.s32.totalorder %s33, 0
      %p380 = por %p378, %p379
      %s382 = sadd.s32 %s381, 1
      %p385 = scmp.eq.s32.totalorder %s27, 1
      %p386 = scmp.ne.s32.totalorder %s381, %s383
      %p387 = scmp.eq.s32.totalorder %s27, 0
      %p388 = por %p386, %p387
      %p389 = scmp.ne.s32.totalorder %s381, %s383
      %p390 = scmp.eq.s32.totalorder %s32, 1
      %p391 = por %p389, %p390
      %p392 = scmp.ne.s32.totalorder %s383, %s384
      %p393 = scmp.eq.s32.totalorder %s32, 0
      %p394 = por %p392, %p393
      %p395 = scmp.ne.s32.totalorder %s383, %s384
      %p396 = scmp.eq.s32.totalorder %s33, 1
      %p397 = por %p395, %p396
      %p399 = scmp.ne.s32.totalorder %s384, %s398
      %p400 = scmp.eq.s32.totalorder %s33, 0
      %p401 = por %p399, %p400
      %s403 = sadd.s32 %s402, 1
      %p406 = scmp.eq.s32.totalorder %s27, 1
      %p407 = scmp.ne.s32.totalorder %s402, %s404
      %p408 = scmp.eq.s32.totalorder %s27, 0
      %p409 = por %p407, %p408
      %p410 = scmp.ne.s32.totalorder %s402, %s404
      %p411 = scmp.eq.s32.totalorder %s32, 1
      %p412 = por %p410, %p411
      %p413 = scmp.ne.s32.totalorder %s404, %s405
      %p414 = scmp.eq.s32.totalorder %s32, 0
      %p415 = por %p413, %p414
      %p416 = scmp.ne.s32.totalorder %s404, %s405
      %p417 = scmp.eq.s32.totalorder %s33, 1
      %p418 = por %p416, %p417
      %p420 = scmp.ne.s32.totalorder %s405, %s419
      %p421 = scmp.eq.s32.totalorder %s33, 0
      %p422 = por %p420, %p421
      %s423 = ssub.s32 %s27, %s34
      %p424 = scmp.eq.s32.totalorder %s423, 0
      %s426 = sadd.s32 %s425, 1
      %s427 = scalar_select %p424, %s425, %s426
      %p430 = pneg %p424
      %p431 = scmp.eq.s32.totalorder %s27, 1
      %p432 = por %p430, %p431
      %p433 = scmp.ne.s32.totalorder %s425, %s428
      %p434 = scmp.eq.s32.totalorder %s27, 0
      %p435 = por %p433, %p434
      %p436 = scmp.ne.s32.totalorder %s425, %s428
      %p437 = scmp.eq.s32.totalorder %s32, 1
      %p438 = por %p436, %p437
      %p439 = scmp.ne.s32.totalorder %s428, %s429
      %p440 = scmp.eq.s32.totalorder %s32, 0
      %p441 = por %p439, %p440
      %p442 = scmp.ne.s32.totalorder %s428, %s429
      %p443 = scmp.eq.s32.totalorder %s33, 1
      %p444 = por %p442, %p443
      %p446 = scmp.ne.s32.totalorder %s429, %s445
      %p447 = scmp.eq.s32.totalorder %s33, 0
      %p448 = por %p446, %p447
      %p449 = scmp.le.s32.totalorder 1, %s27
      %p450 = scmp.lt.s32.totalorder %s27, 3
      %p451 = pnand %p449, %p450
      %p452 = pneg %p451
      // Predicated region
      $region9: #{mid_block_forward.3} parent=5 // pred_check
        _
      $region10: #{mid_block_forward.3} parent=5 // pred_check_branch
        %454 = sbr.rel (%p451) target = $region12
      $region11: #{mid_block_forward.3} parent=5 // pred_region
        %s455 = ssub.s32 %s27, 1
        // Predicated region
        $region13: #{mid_block_forward.3} parent=11 // pred_check
          %p456 = pneg %p100
        $region14: #{mid_block_forward.3} parent=11 // pred_check_branch
          %458 = sbr.rel (%p456) target = $region16
        $region15: #{mid_block_forward.3} parent=11 // pred_region
          _
        $region16: #{mid_block_forward.3} parent=11 // pred_fallthru
          _
        // Predicated region
        $region17: #{mid_block_forward.3} parent=11 // pred_check
          %p459 = pneg %p121
        $region18: #{mid_block_forward.3} parent=11 // pred_check_branch
          %461 = sbr.rel (%p459) target = $region20
        $region19: #{mid_block_forward.3} parent=11 // pred_region
          _
        $region20: #{mid_block_forward.3} parent=11 // pred_fallthru
          _
        // Predicated region
        $region21: #{mid_block_forward.3} parent=11 // pred_check
          %p462 = pneg %p142
        $region22: #{mid_block_forward.3} parent=11 // pred_check_branch
          %464 = sbr.rel (%p462) target = $region24
        $region23: #{mid_block_forward.3} parent=11 // pred_region
          _
        $region24: #{mid_block_forward.3} parent=11 // pred_fallthru
          _
        // Predicated region
        $region25: #{mid_block_forward.3} parent=11 // pred_check
          %p465 = pneg %p163
        $region26: #{mid_block_forward.3} parent=11 // pred_check_branch
          %467 = sbr.rel (%p465) target = $region28
        $region27: #{mid_block_forward.3} parent=11 // pred_region
          _
        $region28: #{mid_block_forward.3} parent=11 // pred_fallthru
          _
        // Predicated region
        $region29: #{mid_block_forward.3} parent=11 // pred_check
          %p468 = pneg %p184
        $region30: #{mid_block_forward.3} parent=11 // pred_check_branch
          %470 = sbr.rel (%p468) target = $region32
        $region31: #{mid_block_forward.3} parent=11 // pred_region
          _
        $region32: #{mid_block_forward.3} parent=11 // pred_fallthru
          _
        // Predicated region
        $region33: #{mid_block_forward.3} parent=11 // pred_check
          %p471 = pneg %p205
        $region34: #{mid_block_forward.3} parent=11 // pred_check_branch
          %473 = sbr.rel (%p471) target = $region36
        $region35: #{mid_block_forward.3} parent=11 // pred_region
          _
        $region36: #{mid_block_forward.3} parent=11 // pred_fallthru
          _
        // Predicated region
        $region37: #{mid_block_forward.3} parent=11 // pred_check
          %p474 = pneg %p226
        $region38: #{mid_block_forward.3} parent=11 // pred_check_branch
          %476 = sbr.rel (%p474) target = $region40
        $region39: #{mid_block_forward.3} parent=11 // pred_region
          _
        $region40: #{mid_block_forward.3} parent=11 // pred_fallthru
          _
        // Predicated region
        $region41: #{mid_block_forward.3} parent=11 // pred_check
          %p477 = pneg %p247
        $region42: #{mid_block_forward.3} parent=11 // pred_check_branch
          %479 = sbr.rel (%p477) target = $region44
        $region43: #{mid_block_forward.3} parent=11 // pred_region
          _
        $region44: #{mid_block_forward.3} parent=11 // pred_fallthru
          _
        // Predicated region
        $region45: #{mid_block_forward.3} parent=11 // pred_check
          %p480 = pneg %p268
        $region46: #{mid_block_forward.3} parent=11 // pred_check_branch
          %482 = sbr.rel (%p480) target = $region48
        $region47: #{mid_block_forward.3} parent=11 // pred_region
          _
        $region48: #{mid_block_forward.3} parent=11 // pred_fallthru
          _
        // Predicated region
        $region49: #{mid_block_forward.3} parent=11 // pred_check
          %p483 = pneg %p289
        $region50: #{mid_block_forward.3} parent=11 // pred_check_branch
          %485 = sbr.rel (%p483) target = $region52
        $region51: #{mid_block_forward.3} parent=11 // pred_region
          _
        $region52: #{mid_block_forward.3} parent=11 // pred_fallthru
          _
        // Predicated region
        $region53: #{mid_block_forward.3} parent=11 // pred_check
          %p486 = pneg %p310
        $region54: #{mid_block_forward.3} parent=11 // pred_check_branch
          %488 = sbr.rel (%p486) target = $region56
        $region55: #{mid_block_forward.3} parent=11 // pred_region
          _
        $region56: #{mid_block_forward.3} parent=11 // pred_fallthru
          _
        // Predicated region
        $region57: #{mid_block_forward.3} parent=11 // pred_check
          %p489 = pneg %p331
        $region58: #{mid_block_forward.3} parent=11 // pred_check_branch
          %491 = sbr.rel (%p489) target = $region60
        $region59: #{mid_block_forward.3} parent=11 // pred_region
          _
        $region60: #{mid_block_forward.3} parent=11 // pred_fallthru
          _
        // Predicated region
        $region61: #{mid_block_forward.3} parent=11 // pred_check
          %p492 = pneg %p352
        $region62: #{mid_block_forward.3} parent=11 // pred_check_branch
          %494 = sbr.rel (%p492) target = $region64
        $region63: #{mid_block_forward.3} parent=11 // pred_region
          _
        $region64: #{mid_block_forward.3} parent=11 // pred_fallthru
          _
        // Predicated region
        $region65: #{mid_block_forward.3} parent=11 // pred_check
          %p495 = pneg %p373
        $region66: #{mid_block_forward.3} parent=11 // pred_check_branch
          %497 = sbr.rel (%p495) target = $region68
        $region67: #{mid_block_forward.3} parent=11 // pred_region
          _
        $region68: #{mid_block_forward.3} parent=11 // pred_fallthru
          _
        // Predicated region
        $region69: #{mid_block_forward.3} parent=11 // pred_check
          %p498 = pneg %p394
        $region70: #{mid_block_forward.3} parent=11 // pred_check_branch
          %500 = sbr.rel (%p498) target = $region72
        $region71: #{mid_block_forward.3} parent=11 // pred_region
          _
        $region72: #{mid_block_forward.3} parent=11 // pred_fallthru
          _
        // Predicated region
        $region73: #{mid_block_forward.3} parent=11 // pred_check
          %p501 = pneg %p415
        $region74: #{mid_block_forward.3} parent=11 // pred_check_branch
          %503 = sbr.rel (%p501) target = $region76
        $region75: #{mid_block_forward.3} parent=11 // pred_region
          _
        $region76: #{mid_block_forward.3} parent=11 // pred_fallthru
          _
      $region12: #{mid_block_forward.3} parent=5 // pred_fallthru
        _
      %p504 = scmp.lt.s32.totalorder %s27, 2
      // Predicated region
      $region77: #{mid_block_forward.3} parent=5 // pred_check
        %p505 = pneg %p504
      $region78: #{mid_block_forward.3} parent=5 // pred_check_branch
        %507 = sbr.rel (%p505) target = $region80
      $region79: #{mid_block_forward.3} parent=5 // pred_region
        // Predicated region
        $region81: #{mid_block_forward.3} parent=79 // pred_check
          %p508 = pneg %p47
        $region82: #{mid_block_forward.3} parent=79 // pred_check_branch
          %510 = sbr.rel (%p508) target = $region84
        $region83: #{mid_block_forward.3} parent=79 // pred_region
          %p511 = scmp.lt.s32.totalorder %s27, 1
          %s512 = scalar_select %p511, %s27, 1
          %s513 = smul.addr %s512, 8
          %s514 = smul.addr %s513, 8
          %s515 = scalar_lea.vmem %s0, %s514
        $region84: #{mid_block_forward.3} parent=79 // pred_fallthru
          _
        // Predicated region
        $region85: #{mid_block_forward.3} parent=79 // pred_check
          %p516 = pneg %p73
        $region86: #{mid_block_forward.3} parent=79 // pred_check_branch
          %518 = sbr.rel (%p516) target = $region88
        $region87: #{mid_block_forward.3} parent=79 // pred_region
          %p519 = scmp.lt.s32.totalorder %s27, 1
          %s520 = scalar_select %p519, %s27, 1
          %s521 = scalar_lea.vmem %s1, %s520
        $region88: #{mid_block_forward.3} parent=79 // pred_fallthru
          _
      $region80: #{mid_block_forward.3} parent=5 // pred_fallthru
        _
      %p522 = scmp.le.s32.totalorder 1, %s27
      %p523 = scmp.lt.s32.totalorder %s27, 3
      %p524 = pnand %p522, %p523
      %p525 = pneg %p524
      // Predicated region
      $region89: #{mid_block_forward.3} parent=5 // pred_check
        _
      $region90: #{mid_block_forward.3} parent=5 // pred_check_branch
        %527 = sbr.rel (%p524) target = $region92
      $region91: #{mid_block_forward.3} parent=5 // pred_region
        %s528 = ssub.s32 %s27, 1
        %p529 = scmp.lt.s32.totalorder %s32, 1
        %s530 = scalar_select %p529, %s32, 1
        %s531 = smul.addr %s530, 8
        %s532 = smul.addr %s531, 8
        %s533 = scalar_lea.vmem %s0, %s532
        %p534 = pneg %p53
        %p535 = pneg %p50
        %p536 = scmp.lt.s32.totalorder %s32, 1
        %s537 = scalar_select %p536, %s32, 1
        %s538 = scalar_lea.vmem %s1, %s537
        %p539 = pneg %p79
        %p540 = pneg %p76
        %p541 = pneg %p100
        %p542 = pneg %p97
        %p543 = pneg %p121
        %p544 = pneg %p118
        %p545 = pneg %p142
        %p546 = pneg %p139
        %p547 = pneg %p163
        %p548 = pneg %p160
        %p549 = pneg %p184
        %p550 = pneg %p181
        %p551 = pneg %p205
        %p552 = pneg %p202
        %p553 = pneg %p226
        %p554 = pneg %p223
        %p555 = pneg %p247
        %p556 = pneg %p244
        %p557 = pneg %p268
        %p558 = pneg %p265
        %p559 = pneg %p289
        %p560 = pneg %p286
        %p561 = pneg %p310
        %p562 = pneg %p307
        %p563 = pneg %p331
        %p564 = pneg %p328
        %p565 = pneg %p352
        %p566 = pneg %p349
        %p567 = pneg %p373
        %p568 = pneg %p370
        %p569 = pneg %p394
        %p570 = pneg %p391
        %p571 = pneg %p415
        %p572 = pneg %p412
        %p573 = pneg %p441
        %p574 = pneg %p438
        %s575 = sand.u32 %s428, 1
        %s576 = scalar_lea.sflag [#allocation3], %s575
        %s577 = sand.u32 %s428, 1
        %s578 = smul.addr %s577, 64
        %s579 = scalar_lea.vmem [#allocation2], %s578
        %p580 = scmp.lt.s32.totalorder %s32, 1
        %s581 = scalar_select %p580, %s32, 1
        %s582 = smul.addr %s581, 8
        %s583 = smul.addr %s582, 8
        %s584 = scalar_lea.vmem %s0, %s583
        %p585 = scmp.lt.s32.totalorder %s32, 1
        %s586 = scalar_select %p585, %s32, 1
        %s587 = scalar_lea.vmem %s1, %s586
        %v589 = vld [vmem:[%s584] sm:$0xff]
        %v590 = vld [vmem:[%s584 + $0x8] sm:$0xff]
        %v591 = vld [vmem:[%s584 + $0x10] sm:$0xff]
        %v592 = vld [vmem:[%s584 + $0x18] sm:$0xff]
        %v593 = vld [vmem:[%s584 + $0x20] sm:$0xff]
        %v594 = vld [vmem:[%s584 + $0x28] sm:$0xff]
        %v595 = vld [vmem:[%s584 + $0x30] sm:$0xff]
        %v596 = vld [vmem:[%s584 + $0x38] sm:$0xff]
        %v597 = vld [vmem:[%s2] sm:$0x1]
        %v598 = vld [vmem:[%s3] sm:$0x1]
        %v599 = vld [vmem:[%s4] sm:$0xf]
        %v600 = vld [vmem:[%s4 + $0x4] sm:$0xf]
        %v601 = vld [vmem:[%s4 + $0x8] sm:$0xf]
        %v602 = vld [vmem:[%s4 + $0xc] sm:$0xf]
        %v603 = vld [vmem:[%s5] sm:$0x1]
        %v604 = vld [vmem:[%s6] sm:$0xf]
        %v605 = vld [vmem:[%s6 + $0x4] sm:$0xf]
        %v606 = vld [vmem:[%s6 + $0x8] sm:$0xf]
        %v607 = vld [vmem:[%s6 + $0xc] sm:$0xf]
        %v608 = vld [vmem:[%s7] sm:$0x1]
        %v609 = vlaneseq
        %v610 = vshrl.u32 %v609, 7
        %v611 = vlaneseq
        %v612 = vand.u32 %v611, 127
        %v613 = vmul.u32 %v610, 4
        %vm614 = vcmp.ge.s32.totalorder %v612, %v613
        %v615 = vadd.s32 %v610, 1
        %v616 = vmul.u32 %v615, 4
        %vm617 = vcmp.lt.s32.totalorder %v612, %v616
        %vm618 = vmand %vm614, %vm617
        %v619 = vsel %vm618, 1, 0
        %v620 = vcvt.s32.f32 %v619
        %vm621 = vcmask 261120
        %v622 = vsel %vm621, %v589, 0.0
        %v623 = vsel %vm621, %v590, 0.0
        %v624 = vadd.f32 %v622, %v623
        %v625 = vsel %vm621, %v591, 0.0
        %v626 = vadd.f32 %v624, %v625
        %v627 = vsel %vm621, %v592, 0.0
        %v628 = vadd.f32 %v626, %v627
        %v629 = vsel %vm621, %v593, 0.0
        %v630 = vadd.f32 %v628, %v629
        %v631 = vsel %vm621, %v594, 0.0
        %v632 = vadd.f32 %v630, %v631
        %v633 = vsel %vm621, %v595, 0.0
        %v634 = vadd.f32 %v632, %v633
        %v635 = vsel %vm621, %v596, 0.0
        %v636 = vadd.f32 %v634, %v635
        %v637 = vrot.slane %v636, 4
        %v638 = vadd.f32 %v636, %v637
        %v639 = vrot.slane %v638, 2
        %v640 = vadd.f32 %v638, %v639
        %v641 = vrot.slane %v640, 1
        %v642 = vadd.f32 %v640, %v641
        %v643 = vmul.f32 %v589, %v589
        %v644 = vmul.f32 %v590, %v590
        %v645 = vmul.f32 %v591, %v591
        %v646 = vmul.f32 %v592, %v592
        %v647 = vmul.f32 %v593, %v593
        %v648 = vmul.f32 %v594, %v594
        %v649 = vmul.f32 %v595, %v595
        %v650 = vmul.f32 %v596, %v596
        %v651 = vsel %vm621, %v643, 0.0
        %v652 = vsel %vm621, %v644, 0.0
        %v653 = vadd.f32 %v651, %v652
        %v654 = vsel %vm621, %v645, 0.0
        %v655 = vadd.f32 %v653, %v654
        %v656 = vsel %vm621, %v646, 0.0
        %v657 = vadd.f32 %v655, %v656
        %v658 = vsel %vm621, %v647, 0.0
        %v659 = vadd.f32 %v657, %v658
        %v660 = vsel %vm621, %v648, 0.0
        %v661 = vadd.f32 %v659, %v660
        %v662 = vsel %vm621, %v649, 0.0
        %v663 = vadd.f32 %v661, %v662
        %v664 = vsel %vm621, %v650, 0.0
        %v665 = vadd.f32 %v663, %v664
        %v666 = vrot.slane %v665, 4
        %v667 = vadd.f32 %v665, %v666
        %v668 = vrot.slane %v667, 2
        %v669 = vadd.f32 %v667, %v668
        %v670 = vrot.slane %v669, 1
        %v671 = vadd.f32 %v669, %v670
        %v672 = vmul.f32 %v620, %v642
        %v673 = vsel %vm621, %v672, 0.0
        %674 = vadd.xlane.f32.xlu0 %v673
        %v675 = vpop.xlane.xlu0 %674
        %v676 = vmul.f32 %v620, %v671
        %v677 = vsel %vm621, %v676, 0.0
        %678 = vadd.xlane.f32.xlu0 %v677
        %v679 = vpop.xlane.xlu0 %678
        %v680 = vrcp.pop 256.0
        %v681 = vmul.f32 %v675, %v680
        %v682 = vmul.f32 %v679, %v680
        %v683 = vmul.f32 %v681, %v681
        %v684 = vsub.f32 %v682, %v683
        %v685 = vadd.f32 %v684, 1e-05
        %v686 = vrsqrt.pop %v685
        %v687 = vmul.f32 %v620, %v681
        %v688 = vsel %vm621, %v687, 0.0
        %v689 = vrot.slane %v688, 4
        %v690 = vadd.f32 %v688, %v689
        %v691 = vrot.slane %v690, 2
        %v692 = vadd.f32 %v690, %v691
        %v693 = vrot.slane %v692, 1
        %v694 = vadd.f32 %v692, %v693
        %v695 = vmul.f32 %v620, %v686
        %v696 = vsel %vm621, %v695, 0.0
        %v697 = vrot.slane %v696, 4
        %v698 = vadd.f32 %v696, %v697
        %v699 = vrot.slane %v698, 2
        %v700 = vadd.f32 %v698, %v699
        %v701 = vrot.slane %v700, 1
        %v702 = vadd.f32 %v700, %v701
        %v703 = vsub.f32 %v589, %v694
        %v704 = vsub.f32 %v590, %v694
        %v705 = vsub.f32 %v591, %v694
        %v706 = vsub.f32 %v592, %v694
        %v707 = vsub.f32 %v593, %v694
        %v708 = vsub.f32 %v594, %v694
        %v709 = vsub.f32 %v595, %v694
        %v710 = vsub.f32 %v596, %v694
        %v711 = vmul.f32 %v703, %v702
        %v712 = vmul.f32 %v704, %v702
        %v713 = vmul.f32 %v705, %v702
        %v714 = vmul.f32 %v706, %v702
        %v715 = vmul.f32 %v707, %v702
        %v716 = vmul.f32 %v708, %v702
        %v717 = vmul.f32 %v709, %v702
        %v718 = vmul.f32 %v710, %v702
        %v720 = vlaneseq
        %v721 = vshrl.u32 %v720, 7
        %v722 = vsub.s32 0, %v721
        %v723 = vrot.slane %v597, %v722
        %v725 = vmul.f32 %v711, %v723
        %v726 = vmul.f32 %v712, %v723
        %v727 = vmul.f32 %v713, %v723
        %v728 = vmul.f32 %v714, %v723
        %v729 = vmul.f32 %v715, %v723
        %v730 = vmul.f32 %v716, %v723
        %v731 = vmul.f32 %v717, %v723
        %v732 = vmul.f32 %v718, %v723
        %v734 = vlaneseq
        %v735 = vshrl.u32 %v734, 7
        %v736 = vsub.s32 0, %v735
        %v737 = vrot.slane %v598, %v736
        %v739 = vadd.f32 %v725, %v737
        %v740 = vadd.f32 %v726, %v737
        %v741 = vadd.f32 %v727, %v737
        %v742 = vadd.f32 %v728, %v737
        %v743 = vadd.f32 %v729, %v737
        %v744 = vadd.f32 %v730, %v737
        %v745 = vadd.f32 %v731, %v737
        %v746 = vadd.f32 %v732, %v737
        %v747 = vpack.c.bf16 %v740, %v739
        %v748 = vpack.c.bf16 %v742, %v741
        %v749 = vpack.c.bf16 %v744, %v743
        %v750 = vpack.c.bf16 %v746, %v745
        %v752 = vlaneseq
        %v753 = vshrl.u32 %v752, 7
        %v754 = vsub.s32 0, %v753
        %v755 = vrot.slane %v603, %v754
        %v761 = vunpack.c.l.b16 %v599
        %v762 = vunpack.c.l.b16 %v600
        %v763 = vunpack.c.l.b16 %v601
        %v764 = vunpack.c.l.b16 %v602
        %v765 = vpack.c.b16 %v762, %v761
        %v766 = vpack.c.b16 %v764, %v763
        %v770 = vsel %vm621, %v747, 0
        %v773 = vsel %vm621, %v748, 0
        %v776 = vsel %vm621, %v749, 0
        %v779 = vsel %vm621, %v750, 0
        %781 = vmatprep.subr.bf16.mxu0 0
        %782 = vmatpush1.bf16.msra.mxu0 %v765
        %783 = vmatprep.subr.bf16.mxu0 0
        %784 = vmatpush1.bf16.msra.mxu0 %v766
        %785 = vmatprep.subr.bf16.mxu0 0
        %786 = vmatpush1.bf16.msra.mxu0 0
        %787 = vmatprep.subr.bf16.mxu0 0
        %788 = vmatpush1.bf16.msra.mxu0 0
        %789 = vmatprep.subr.bf16.mxu0 0
        %790 = vmatpush1.bf16.msra.mxu0 0
        %791 = vmatprep.subr.bf16.mxu0 0
        %792 = vmatpush1.bf16.msra.mxu0 0
        %793 = vmatprep.subr.bf16.mxu0 0
        %794 = vmatpush1.bf16.msra.mxu0 0
        %795 = vmatprep.subr.bf16.mxu0 0
        %796 = vmatpush1.bf16.msra.mxu0 0
        %797 = vmatprep.subr.bf16.mxu0 0
        %798 = vmatpush1.bf16.msra.mxu0 0
        %799 = vmatprep.subr.bf16.mxu0 0
        %800 = vmatpush1.bf16.msra.mxu0 0
        %801 = vmatprep.subr.bf16.mxu0 0
        %802 = vmatpush1.bf16.msra.mxu0 0
        %803 = vmatprep.subr.bf16.mxu0 0
        %804 = vmatpush1.bf16.msra.mxu0 0
        %805 = vmatprep.subr.bf16.mxu0 0
        %806 = vmatpush1.bf16.msra.mxu0 0
        %807 = vmatprep.subr.bf16.mxu0 0
        %808 = vmatpush1.bf16.msra.mxu0 0
        %809 = vmatprep.subr.bf16.mxu0 0
        %810 = vmatpush1.bf16.msra.mxu0 0
        %811 = vmatprep.subr.bf16.mxu0 0
        %812 = vmatpush1.bf16.msra.mxu0 0
        %813 = vmatprep.mubr.bf16.mxu0 0
        %814 = vmatmul.mubr.bf16.gmra.mrb[0].mxu0 %v770
        %v815 = vpop.f32.mrb[0].mxu0
        %v816 = vadd.f32 %v755, %v815
        %v817 = vpop.f32.mrb[0].mxu0
        %v818 = vpop.f32.mrb[0].mxu0
        %v819 = vadd.f32 %v755, %v818
        %v820 = vpop.f32.mrb[0].mxu0
        %821 = vmatprep.mubr.bf16.mxu0 0
        %822 = vmatmul.mubr.bf16.gmra.mrb[0].mxu0 %v773
        %v823 = vpop.f32.mrb[0].mxu0
        %v824 = vadd.f32 %v755, %v823
        %v825 = vpop.f32.mrb[0].mxu0
        %v826 = vpop.f32.mrb[0].mxu0
        %v827 = vadd.f32 %v755, %v826
        %v828 = vpop.f32.mrb[0].mxu0
        %829 = vmatprep.mubr.bf16.mxu0 0
        %830 = vmatmul.mubr.bf16.gmra.mrb[0].mxu0 %v776
        %v831 = vpop.f32.mrb[0].mxu0
        %v832 = vadd.f32 %v755, %v831
        %v833 = vpop.f32.mrb[0].mxu0
        %v834 = vpop.f32.mrb[0].mxu0
        %v835 = vadd.f32 %v755, %v834
        %v836 = vpop.f32.mrb[0].mxu0
        %837 = vmatprep.mubr.bf16.mxu0 0
        %838 = vmatmul.mubr.bf16.gmra.mrb[0].mxu0 %v779
        %v839 = vpop.f32.mrb[0].mxu0
        %v840 = vadd.f32 %v755, %v839
        %v841 = vpop.f32.mrb[0].mxu0
        %v842 = vpop.f32.mrb[0].mxu0
        %v843 = vadd.f32 %v755, %v842
        %v844 = vpop.f32.mrb[0].mxu0
        %845 = vdwg.mxu0
        %v846 = vpack.c.bf16 %v819, %v816
        %v847 = vpack.c.bf16 %v827, %v824
        %v848 = vpack.c.bf16 %v835, %v832
        %v849 = vpack.c.bf16 %v843, %v840
        %854 = vrot.lane.b32.xlu0 %v846, 120
        %v855 = vpop.permute.xlu0 %854
        %856 = vrot.lane.b32.xlu0 %v847, 120
        %v857 = vpop.permute.xlu0 %856
        %858 = vrot.lane.b32.xlu0 %v848, 120
        %v859 = vpop.permute.xlu0 %858
        %860 = vrot.lane.b32.xlu0 %v849, 120
        %v861 = vpop.permute.xlu0 %860
        %862 = vrot.lane.b32.xlu0 %v846, 112
        %v863 = vpop.permute.xlu0 %862
        %864 = vrot.lane.b32.xlu0 %v847, 112
        %v865 = vpop.permute.xlu0 %864
        %866 = vrot.lane.b32.xlu0 %v848, 112
        %v867 = vpop.permute.xlu0 %866
        %868 = vrot.lane.b32.xlu0 %v849, 112
        %v869 = vpop.permute.xlu0 %868
        %870 = vrot.lane.b32.xlu0 %v846, 104
        %v871 = vpop.permute.xlu0 %870
        %872 = vrot.lane.b32.xlu0 %v847, 104
        %v873 = vpop.permute.xlu0 %872
        %874 = vrot.lane.b32.xlu0 %v848, 104
        %v875 = vpop.permute.xlu0 %874
        %876 = vrot.lane.b32.xlu0 %v849, 104
        %v877 = vpop.permute.xlu0 %876
        %878 = vrot.lane.b32.xlu0 %v846, 96
        %v879 = vpop.permute.xlu0 %878
        %880 = vrot.lane.b32.xlu0 %v847, 96
        %v881 = vpop.permute.xlu0 %880
        %882 = vrot.lane.b32.xlu0 %v848, 96
        %v883 = vpop.permute.xlu0 %882
        %884 = vrot.lane.b32.xlu0 %v849, 96
        %v885 = vpop.permute.xlu0 %884
        %vm886 = vcmask 64512
        %v888 = vsel %vm886, %v846, 0
        %v891 = vsel %vm886, %v847, 0
        %v894 = vsel %vm886, %v848, 0
        %v897 = vsel %vm886, %v849, 0
        %v900 = vsel %vm886, %v879, 0
        %v903 = vsel %vm886, %v881, 0
        %v906 = vsel %vm886, %v883, 0
        %v909 = vsel %vm886, %v885, 0
        %911 = vmatprep.subr.bf16.mxu0 0
        %912 = vmatpush1.bf16.xpose.msra.mxu0 %v900
        %913 = vmatprep.subr.bf16.mxu0 0
        %914 = vmatpush1.bf16.xpose.msra.mxu0 %v903
        %915 = vmatprep.subr.bf16.mxu0 0
        %916 = vmatpush1.bf16.xpose.msra.mxu0 %v906
        %917 = vmatprep.subr.bf16.mxu0 0
        %918 = vmatpush1.bf16.xpose.msra.mxu0 %v909
        %919 = vmatprep.subr.bf16.mxu0 0
        %920 = vmatpush1.bf16.xpose.msra.mxu0 0
        %921 = vmatprep.subr.bf16.mxu0 0
        %922 = vmatpush1.bf16.xpose.msra.mxu0 0
        %923 = vmatprep.subr.bf16.mxu0 0
        %924 = vmatpush1.bf16.xpose.msra.mxu0 0
        %925 = vmatprep.subr.bf16.mxu0 0
        %926 = vmatpush1.bf16.xpose.msra.mxu0 0
        %927 = vmatprep.subr.bf16.mxu0 0
        %928 = vmatpush1.bf16.xpose.msra.mxu0 0
        %929 = vmatprep.subr.bf16.mxu0 0
        %930 = vmatpush1.bf16.xpose.msra.mxu0 0
        %931 = vmatprep.subr.bf16.mxu0 0
        %932 = vmatpush1.bf16.xpose.msra.mxu0 0
        %933 = vmatprep.subr.bf16.mxu0 0
        %934 = vmatpush1.bf16.xpose.msra.mxu0 0
        %935 = vmatprep.subr.bf16.mxu0 0
        %936 = vmatpush1.bf16.xpose.msra.mxu0 0
        %937 = vmatprep.subr.bf16.mxu0 0
        %938 = vmatpush1.bf16.xpose.msra.mxu0 0
        %939 = vmatprep.subr.bf16.mxu0 0
        %940 = vmatpush1.bf16.xpose.msra.mxu0 0
        %941 = vmatprep.subr.bf16.mxu0 0
        %942 = vmatpush1.bf16.xpose.msra.mxu0 0
        %943 = vmatprep.mubr.bf16.mxu0 0
        %944 = vmatmul.mubr.bf16.gmra.mrb[0].mxu0 %v888
        %v945 = vpop.f32.mrb[0].mxu0
        %v946 = vadd.f32 0.0, %v945
        %v947 = vpop.f32.mrb[0].mxu0
        %v948 = vpop.f32.mrb[0].mxu0
        %v949 = vadd.f32 0.0, %v948
        %v950 = vpop.f32.mrb[0].mxu0
        %951 = vmatprep.mubr.bf16.mxu0 0
        %952 = vmatmul.mubr.bf16.gmra.mrb[0].mxu0 %v891
        %v953 = vpop.f32.mrb[0].mxu0
        %v954 = vadd.f32 0.0, %v953
        %v955 = vpop.f32.mrb[0].mxu0
        %v956 = vpop.f32.mrb[0].mxu0
        %v957 = vadd.f32 0.0, %v956
        %v958 = vpop.f32.mrb[0].mxu0
        %959 = vmatprep.mubr.bf16.mxu0 0
        %960 = vmatmul.mubr.bf16.gmra.mrb[0].mxu0 %v894
        %v961 = vpop.f32.mrb[0].mxu0
        %v962 = vadd.f32 0.0, %v961
        %v963 = vpop.f32.mrb[0].mxu0
        %v964 = vpop.f32.mrb[0].mxu0
        %v965 = vadd.f32 0.0, %v964
        %v966 = vpop.f32.mrb[0].mxu0
        %967 = vmatprep.mubr.bf16.mxu0 0
        %968 = vmatmul.mubr.bf16.gmra.mrb[0].mxu0 %v897
        %v969 = vpop.f32.mrb[0].mxu0
        %v970 = vadd.f32 0.0, %v969
        %v971 = vpop.f32.mrb[0].mxu0
        %v972 = vpop.f32.mrb[0].mxu0
        %v973 = vadd.f32 0.0, %v972
        %v974 = vpop.f32.mrb[0].mxu0
        %975 = vdwg.mxu0
        %976 = vrot.lane.b32.xlu0 %v855, 96
        %v977 = vpop.permute.xlu0 %976
        %978 = vrot.lane.b32.xlu0 %v857, 96
        %v979 = vpop.permute.xlu0 %978
        %980 = vrot.lane.b32.xlu0 %v859, 96
        %v981 = vpop.permute.xlu0 %980
        %982 = vrot.lane.b32.xlu0 %v861, 96
        %v983 = vpop.permute.xlu0 %982
        %v985 = vsel %vm886, %v855, 0
        %v988 = vsel %vm886, %v857, 0
        %v991 = vsel %vm886, %v859, 0
        %v994 = vsel %vm886, %v861, 0
        %v997 = vsel %vm886, %v977, 0
        %v1000 = vsel %vm886, %v979, 0
        %v1003 = vsel %vm886, %v981, 0
        %v1006 = vsel %vm886, %v983, 0
        %1008 = vmatprep.subr.bf16.mxu0 0
        %1009 = vmatpush1.bf16.xpose.msra.mxu0 %v997
        %1010 = vmatprep.subr.bf16.mxu0 0
        %1011 = vmatpush1.bf16.xpose.msra.mxu0 %v1000
        %1012 = vmatprep.subr.bf16.mxu0 0
        %1013 = vmatpush1.bf16.xpose.msra.mxu0 %v1003
        %1014 = vmatprep.subr.bf16.mxu0 0
        %1015 = vmatpush1.bf16.xpose.msra.mxu0 %v1006
        %1016 = vmatprep.subr.bf16.mxu0 0
        %1017 = vmatpush1.bf16.xpose.msra.mxu0 0
        %1018 = vmatprep.subr.bf16.mxu0 0
        %1019 = vmatpush1.bf16.xpose.msra.mxu0 0
        %1020 = vmatprep.subr.bf16.mxu0 0
        %1021 = vmatpush1.bf16.xpose.msra.mxu0 0
        %1022 = vmatprep.subr.bf16.mxu0 0
        %1023 = vmatpush1.bf16.xpose.msra.mxu0 0
        %1024 = vmatprep.subr.bf16.mxu0 0
        %1025 = vmatpush1.bf16.xpose.msra.mxu0 0
        %1026 = vmatprep.subr.bf16.mxu0 0
        %1027 = vmatpush1.bf16.xpose.msra.mxu0 0
        %1028 = vmatprep.subr.bf16.mxu0 0
        %1029 = vmatpush1.bf16.xpose.msra.mxu0 0
        %1030 = vmatprep.subr.bf16.mxu0 0
        %1031 = vmatpush1.bf16.xpose.msra.mxu0 0
        %1032 = vmatprep.subr.bf16.mxu0 0
        %1033 = vmatpush1.bf16.xpose.msra.mxu0 0
        %1034 = vmatprep.subr.bf16.mxu0 0
        %1035 = vmatpush1.bf16.xpose.msra.mxu0 0
        %1036 = vmatprep.subr.bf16.mxu0 0
        %1037 = vmatpush1.bf16.xpose.msra.mxu0 0
        %1038 = vmatprep.subr.bf16.mxu0 0
        %1039 = vmatpush1.bf16.xpose.msra.mxu0 0
        %1040 = vmatprep.mubr.bf16.mxu0 0
        %1041 = vmatmul.mubr.bf16.gmra.mrb[0].mxu0 %v985
        %v1042 = vpop.f32.mrb[0].mxu0
        %v1043 = vadd.f32 0.0, %v1042
        %v1044 = vpop.f32.mrb[0].mxu0
        %v1045 = vpop.f32.mrb[0].mxu0
        %v1046 = vadd.f32 0.0, %v1045
        %v1047 = vpop.f32.mrb[0].mxu0
        %1048 = vmatprep.mubr.bf16.mxu0 0
        %1049 = vmatmul.mubr.bf16.gmra.mrb[0].mxu0 %v988
        %v1050 = vpop.f32.mrb[0].mxu0
        %v1051 = vadd.f32 0.0, %v1050
        %v1052 = vpop.f32.mrb[0].mxu0
        %v1053 = vpop.f32.mrb[0].mxu0
        %v1054 = vadd.f32 0.0, %v1053
        %v1055 = vpop.f32.mrb[0].mxu0
        %1056 = vmatprep.mubr.bf16.mxu0 0
        %1057 = vmatmul.mubr.bf16.gmra.mrb[0].mxu0 %v991
        %v1058 = vpop.f32.mrb[0].mxu0
        %v1059 = vadd.f32 0.0, %v1058
        %v1060 = vpop.f32.mrb[0].mxu0
        %v1061 = vpop.f32.mrb[0].mxu0
        %v1062 = vadd.f32 0.0, %v1061
        %v1063 = vpop.f32.mrb[0].mxu0
        %1064 = vmatprep.mubr.bf16.mxu0 0
        %1065 = vmatmul.mubr.bf16.gmra.mrb[0].mxu0 %v994
        %v1066 = vpop.f32.mrb[0].mxu0
        %v1067 = vadd.f32 0.0, %v1066
        %v1068 = vpop.f32.mrb[0].mxu0
        %v1069 = vpop.f32.mrb[0].mxu0
        %v1070 = vadd.f32 0.0, %v1069
        %v1071 = vpop.f32.mrb[0].mxu0
        %1072 = vdwg.mxu0
        %1073 = vrot.lane.b32.xlu0 %v863, 96
        %v1074 = vpop.permute.xlu0 %1073
        %1075 = vrot.lane.b32.xlu0 %v865, 96
        %v1076 = vpop.permute.xlu0 %1075
        %1077 = vrot.lane.b32.xlu0 %v867, 96
        %v1078 = vpop.permute.xlu0 %1077
        %1079 = vrot.lane.b32.xlu0 %v869, 96
        %v1080 = vpop.permute.xlu0 %1079
        %v1082 = vsel %vm886, %v863, 0
        %v1085 = vsel %vm886, %v865, 0
        %v1088 = vsel %vm886, %v867, 0
        %v1091 = vsel %vm886, %v869, 0
        %v1094 = vsel %vm886, %v1074, 0
        %v1097 = vsel %vm886, %v1076, 0
        %v1100 = vsel %vm886, %v1078, 0
        %v1103 = vsel %vm886, %v1080, 0
        %1105 = vmatprep.subr.bf16.mxu0 0
        %1106 = vmatpush1.bf16.xpose.msra.mxu0 %v1094
        %1107 = vmatprep.subr.bf16.mxu0 0
        %1108 = vmatpush1.bf16.xpose.msra.mxu0 %v1097
        %1109 = vmatprep.subr.bf16.mxu0 0
        %1110 = vmatpush1.bf16.xpose.msra.mxu0 %v1100
        %1111 = vmatprep.subr.bf16.mxu0 0
        %1112 = vmatpush1.bf16.xpose.msra.mxu0 %v1103
        %1113 = vmatprep.subr.bf16.mxu0 0
        %1114 = vmatpush1.bf16.xpose.msra.mxu0 0
        %1115 = vmatprep.subr.bf16.mxu0 0
        %1116 = vmatpush1.bf16.xpose.msra.mxu0 0
        %1117 = vmatprep.subr.bf16.mxu0 0
        %1118 = vmatpush1.bf16.xpose.msra.mxu0 0
        %1119 = vmatprep.subr.bf16.mxu0 0
        %1120 = vmatpush1.bf16.xpose.msra.mxu0 0
        %1121 = vmatprep.subr.bf16.mxu0 0
        %1122 = vmatpush1.bf16.xpose.msra.mxu0 0
        %1123 = vmatprep.subr.bf16.mxu0 0
        %1124 = vmatpush1.bf16.xpose.msra.mxu0 0
        %1125 = vmatprep.subr.bf16.mxu0 0
        %1126 = vmatpush1.bf16.xpose.msra.mxu0 0
        %1127 = vmatprep.subr.bf16.mxu0 0
        %1128 = vmatpush1.bf16.xpose.msra.mxu0 0
        %1129 = vmatprep.subr.bf16.mxu0 0
        %1130 = vmatpush1.bf16.xpose.msra.mxu0 0
        %1131 = vmatprep.subr.bf16.mxu0 0
        %1132 = vmatpush1.bf16.xpose.msra.mxu0 0
        %1133 = vmatprep.subr.bf16.mxu0 0
        %1134 = vmatpush1.bf16.xpose.msra.mxu0 0
        %1135 = vmatprep.subr.bf16.mxu0 0
        %1136 = vmatpush1.bf16.xpose.msra.mxu0 0
        %1137 = vmatprep.mubr.bf16.mxu0 0
        %1138 = vmatmul.mubr.bf16.gmra.mrb[0].mxu0 %v1082
        %v1139 = vpop.f32.mrb[0].mxu0
        %v1140 = vadd.f32 0.0, %v1139
        %v1141 = vpop.f32.mrb[0].mxu0
        %v1142 = vpop.f32.mrb[0].mxu0
        %v1143 = vadd.f32 0.0, %v1142
        %v1144 = vpop.f32.mrb[0].mxu0
        %1145 = vmatprep.mubr.bf16.mxu0 0
        %1146 = vmatmul.mubr.bf16.gmra.mrb[0].mxu0 %v1085
        %v1147 = vpop.f32.mrb[0].mxu0
        %v1148 = vadd.f32 0.0, %v1147
        %v1149 = vpop.f32.mrb[0].mxu0
        %v1150 = vpop.f32.mrb[0].mxu0
        %v1151 = vadd.f32 0.0, %v1150
        %v1152 = vpop.f32.mrb[0].mxu0
        %1153 = vmatprep.mubr.bf16.mxu0 0
        %1154 = vmatmul.mubr.bf16.gmra.mrb[0].mxu0 %v1088
        %v1155 = vpop.f32.mrb[0].mxu0
        %v1156 = vadd.f32 0.0, %v1155
        %v1157 = vpop.f32.mrb[0].mxu0
        %v1158 = vpop.f32.mrb[0].mxu0
        %v1159 = vadd.f32 0.0, %v1158
        %v1160 = vpop.f32.mrb[0].mxu0
        %1161 = vmatprep.mubr.bf16.mxu0 0
        %1162 = vmatmul.mubr.bf16.gmra.mrb[0].mxu0 %v1091
        %v1163 = vpop.f32.mrb[0].mxu0
        %v1164 = vadd.f32 0.0, %v1163
        %v1165 = vpop.f32.mrb[0].mxu0
        %v1166 = vpop.f32.mrb[0].mxu0
        %v1167 = vadd.f32 0.0, %v1166
        %v1168 = vpop.f32.mrb[0].mxu0
        %1169 = vdwg.mxu0
        %1170 = vrot.lane.b32.xlu0 %v871, 96
        %v1171 = vpop.permute.xlu0 %1170
        %1172 = vrot.lane.b32.xlu0 %v873, 96
        %v1173 = vpop.permute.xlu0 %1172
        %1174 = vrot.lane.b32.xlu0 %v875, 96
        %v1175 = vpop.permute.xlu0 %1174
        %1176 = vrot.lane.b32.xlu0 %v877, 96
        %v1177 = vpop.permute.xlu0 %1176
        %v1179 = vsel %vm886, %v871, 0
        %v1182 = vsel %vm886, %v873, 0
        %v1185 = vsel %vm886, %v875, 0
        %v1188 = vsel %vm886, %v877, 0
        %v1191 = vsel %vm886, %v1171, 0
        %v1194 = vsel %vm886, %v1173, 0
        %v1197 = vsel %vm886, %v1175, 0
        %v1200 = vsel %vm886, %v1177, 0
        %1202 = vmatprep.subr.bf16.mxu0 0
        %1203 = vmatpush1.bf16.xpose.msra.mxu0 %v1191
        %1204 = vmatprep.subr.bf16.mxu0 0
        %1205 = vmatpush1.bf16.xpose.msra.mxu0 %v1194
        %1206 = vmatprep.subr.bf16.mxu0 0
        %1207 = vmatpush1.bf16.xpose.msra.mxu0 %v1197
        %1208 = vmatprep.subr.bf16.mxu0 0
        %1209 = vmatpush1.bf16.xpose.msra.mxu0 %v1200
        %1210 = vmatprep.subr.bf16.mxu0 0
        %1211 = vmatpush1.bf16.xpose.msra.mxu0 0
        %1212 = vmatprep.subr.bf16.mxu0 0
        %1213 = vmatpush1.bf16.xpose.msra.mxu0 0
        %1214 = vmatprep.subr.bf16.mxu0 0
        %1215 = vmatpush1.bf16.xpose.msra.mxu0 0
        %1216 = vmatprep.subr.bf16.mxu0 0
        %1217 = vmatpush1.bf16.xpose.msra.mxu0 0
        %1218 = vmatprep.subr.bf16.mxu0 0
        %1219 = vmatpush1.bf16.xpose.msra.mxu0 0
        %1220 = vmatprep.subr.bf16.mxu0 0
        %1221 = vmatpush1.bf16.xpose.msra.mxu0 0
        %1222 = vmatprep.subr.bf16.mxu0 0
        %1223 = vmatpush1.bf16.xpose.msra.mxu0 0
        %1224 = vmatprep.subr.bf16.mxu0 0
        %1225 = vmatpush1.bf16.xpose.msra.mxu0 0
        %1226 = vmatprep.subr.bf16.mxu0 0
        %1227 = vmatpush1.bf16.xpose.msra.mxu0 0
        %1228 = vmatprep.subr.bf16.mxu0 0
        %1229 = vmatpush1.bf16.xpose.msra.mxu0 0
        %1230 = vmatprep.subr.bf16.mxu0 0
        %1231 = vmatpush1.bf16.xpose.msra.mxu0 0
        %1232 = vmatprep.subr.bf16.mxu0 0
        %1233 = vmatpush1.bf16.xpose.msra.mxu0 0
        %1234 = vmatprep.mubr.bf16.mxu0 0
        %1235 = vmatmul.mubr.bf16.gmra.mrb[0].mxu0 %v1179
        %v1236 = vpop.f32.mrb[0].mxu0
        %v1237 = vadd.f32 0.0, %v1236
        %v1238 = vpop.f32.mrb[0].mxu0
        %v1239 = vpop.f32.mrb[0].mxu0
        %v1240 = vadd.f32 0.0, %v1239
        %v1241 = vpop.f32.mrb[0].mxu0
        %1242 = vmatprep.mubr.bf16.mxu0 0
        %1243 = vmatmul.mubr.bf16.gmra.mrb[0].mxu0 %v1182
        %v1244 = vpop.f32.mrb[0].mxu0
        %v1245 = vadd.f32 0.0, %v1244
        %v1246 = vpop.f32.mrb[0].mxu0
        %v1247 = vpop.f32.mrb[0].mxu0
        %v1248 = vadd.f32 0.0, %v1247
        %v1249 = vpop.f32.mrb[0].mxu0
        %1250 = vmatprep.mubr.bf16.mxu0 0
        %1251 = vmatmul.mubr.bf16.gmra.mrb[0].mxu0 %v1185
        %v1252 = vpop.f32.mrb[0].mxu0
        %v1253 = vadd.f32 0.0, %v1252
        %v1254 = vpop.f32.mrb[0].mxu0
        %v1255 = vpop.f32.mrb[0].mxu0
        %v1256 = vadd.f32 0.0, %v1255
        %v1257 = vpop.f32.mrb[0].mxu0
        %1258 = vmatprep.mubr.bf16.mxu0 0
        %1259 = vmatmul.mubr.bf16.gmra.mrb[0].mxu0 %v1188
        %v1260 = vpop.f32.mrb[0].mxu0
        %v1261 = vadd.f32 0.0, %v1260
        %v1262 = vpop.f32.mrb[0].mxu0
        %v1263 = vpop.f32.mrb[0].mxu0
        %v1264 = vadd.f32 0.0, %v1263
        %v1265 = vpop.f32.mrb[0].mxu0
        %1266 = vdwg.mxu0
        %v1267 = vmul.f32 %v946, 0.35355338
        %v1268 = vmul.f32 %v949, 0.35355338
        %v1269 = vmul.f32 %v954, 0.35355338
        %v1270 = vmul.f32 %v957, 0.35355338
        %v1271 = vmul.f32 %v962, 0.35355338
        %v1272 = vmul.f32 %v965, 0.35355338
        %v1273 = vmul.f32 %v970, 0.35355338
        %v1274 = vmul.f32 %v973, 0.35355338
        %v1275 = vmul.f32 %v1043, 0.35355338
        %v1276 = vmul.f32 %v1046, 0.35355338
        %v1277 = vmul.f32 %v1051, 0.35355338
        %v1278 = vmul.f32 %v1054, 0.35355338
        %v1279 = vmul.f32 %v1059, 0.35355338
        %v1280 = vmul.f32 %v1062, 0.35355338
        %v1281 = vmul.f32 %v1067, 0.35355338
        %v1282 = vmul.f32 %v1070, 0.35355338
        %v1283 = vmul.f32 %v1140, 0.35355338
        %v1284 = vmul.f32 %v1143, 0.35355338
        %v1285 = vmul.f32 %v1148, 0.35355338
        %v1286 = vmul.f32 %v1151, 0.35355338
        %v1287 = vmul.f32 %v1156, 0.35355338
        %v1288 = vmul.f32 %v1159, 0.35355338
        %v1289 = vmul.f32 %v1164, 0.35355338
        %v1290 = vmul.f32 %v1167, 0.35355338
        %v1291 = vmul.f32 %v1237, 0.35355338
        %v1292 = vmul.f32 %v1240, 0.35355338
        %v1293 = vmul.f32 %v1245, 0.35355338
        %v1294 = vmul.f32 %v1248, 0.35355338
        %v1295 = vmul.f32 %v1253, 0.35355338
        %v1296 = vmul.f32 %v1256, 0.35355338
        %v1297 = vmul.f32 %v1261, 0.35355338
        %v1298 = vmul.f32 %v1264, 0.35355338
        %vm1299 = vcmask 523264
        %v1300 = vsel %vm1299, %v1267, -inf
        %1301 = vmax.xlane.f32.xlu0 %v1300
        %v1302 = vpop.xlane.xlu0 %1301
        %v1303 = vsel %vm1299, %v1268, -inf
        %1304 = vmax.xlane.f32.xlu0 %v1303
        %v1305 = vpop.xlane.xlu0 %1304
        %v1306 = vsel %vm1299, %v1269, -inf
        %1307 = vmax.xlane.f32.xlu0 %v1306
        %v1308 = vpop.xlane.xlu0 %1307
        %v1309 = vsel %vm1299, %v1270, -inf
        %1310 = vmax.xlane.f32.xlu0 %v1309
        %v1311 = vpop.xlane.xlu0 %1310
        %v1312 = vsel %vm1299, %v1271, -inf
        %1313 = vmax.xlane.f32.xlu0 %v1312
        %v1314 = vpop.xlane.xlu0 %1313
        %v1315 = vsel %vm1299, %v1272, -inf
        %1316 = vmax.xlane.f32.xlu0 %v1315
        %v1317 = vpop.xlane.xlu0 %1316
        %v1318 = vsel %vm1299, %v1273, -inf
        %1319 = vmax.xlane.f32.xlu0 %v1318
        %v1320 = vpop.xlane.xlu0 %1319
        %v1321 = vsel %vm1299, %v1274, -inf
        %1322 = vmax.xlane.f32.xlu0 %v1321
        %v1323 = vpop.xlane.xlu0 %1322
        %v1324 = vsel %vm1299, %v1275, -inf
        %1325 = vmax.xlane.f32.xlu0 %v1324
        %v1326 = vpop.xlane.xlu0 %1325
        %v1327 = vsel %vm1299, %v1276, -inf
        %1328 = vmax.xlane.f32.xlu0 %v1327
        %v1329 = vpop.xlane.xlu0 %1328
        %v1330 = vsel %vm1299, %v1277, -inf
        %1331 = vmax.xlane.f32.xlu0 %v1330
        %v1332 = vpop.xlane.xlu0 %1331
        %v1333 = vsel %vm1299, %v1278, -inf
        %1334 = vmax.xlane.f32.xlu0 %v1333
        %v1335 = vpop.xlane.xlu0 %1334
        %v1336 = vsel %vm1299, %v1279, -inf
        %1337 = vmax.xlane.f32.xlu0 %v1336
        %v1338 = vpop.xlane.xlu0 %1337
        %v1339 = vsel %vm1299, %v1280, -inf
        %1340 = vmax.xlane.f32.xlu0 %v1339
        %v1341 = vpop.xlane.xlu0 %1340
        %v1342 = vsel %vm1299, %v1281, -inf
        %1343 = vmax.xlane.f32.xlu0 %v1342
        %v1344 = vpop.xlane.xlu0 %1343
        %v1345 = vsel %vm1299, %v1282, -inf
        %1346 = vmax.xlane.f32.xlu0 %v1345
        %v1347 = vpop.xlane.xlu0 %1346
        %v1348 = vsel %vm1299, %v1283, -inf
        %1349 = vmax.xlane.f32.xlu0 %v1348
        %v1350 = vpop.xlane.xlu0 %1349
        %v1351 = vsel %vm1299, %v1284, -inf
        %1352 = vmax.xlane.f32.xlu0 %v1351
        %v1353 = vpop.xlane.xlu0 %1352
        %v1354 = vsel %vm1299, %v1285, -inf
        %1355 = vmax.xlane.f32.xlu0 %v1354
        %v1356 = vpop.xlane.xlu0 %1355
        %v1357 = vsel %vm1299, %v1286, -inf
        %1358 = vmax.xlane.f32.xlu0 %v1357
        %v1359 = vpop.xlane.xlu0 %1358
        %v1360 = vsel %vm1299, %v1287, -inf
        %1361 = vmax.xlane.f32.xlu0 %v1360
        %v1362 = vpop.xlane.xlu0 %1361
        %v1363 = vsel %vm1299, %v1288, -inf
        %1364 = vmax.xlane.f32.xlu0 %v1363
        %v1365 = vpop.xlane.xlu0 %1364
        %v1366 = vsel %vm1299, %v1289, -inf
        %1367 = vmax.xlane.f32.xlu0 %v1366
        %v1368 = vpop.xlane.xlu0 %1367
        %v1369 = vsel %vm1299, %v1290, -inf
        %1370 = vmax.xlane.f32.xlu0 %v1369
        %v1371 = vpop.xlane.xlu0 %1370
        %v1372 = vsel %vm1299, %v1291, -inf
        %1373 = vmax.xlane.f32.xlu0 %v1372
        %v1374 = vpop.xlane.xlu0 %1373
        %v1375 = vsel %vm1299, %v1292, -inf
        %1376 = vmax.xlane.f32.xlu0 %v1375
        %v1377 = vpop.xlane.xlu0 %1376
        %v1378 = vsel %vm1299, %v1293, -inf
        %1379 = vmax.xlane.f32.xlu0 %v1378
        %v1380 = vpop.xlane.xlu0 %1379
        %v1381 = vsel %vm1299, %v1294, -inf
        %1382 = vmax.xlane.f32.xlu0 %v1381
        %v1383 = vpop.xlane.xlu0 %1382
        %v1384 = vsel %vm1299, %v1295, -inf
        %1385 = vmax.xlane.f32.xlu0 %v1384
        %v1386 = vpop.xlane.xlu0 %1385
        %v1387 = vsel %vm1299, %v1296, -inf
        %1388 = vmax.xlane.f32.xlu0 %v1387
        %v1389 = vpop.xlane.xlu0 %1388
        %v1390 = vsel %vm1299, %v1297, -inf
        %1391 = vmax.xlane.f32.xlu0 %v1390
        %v1392 = vpop.xlane.xlu0 %1391
        %v1393 = vsel %vm1299, %v1298, -inf
        %1394 = vmax.xlane.f32.xlu0 %v1393
        %v1395 = vpop.xlane.xlu0 %1394
        %v1396 = vsub.f32 %v1267, %v1302
        %v1397 = vsub.f32 %v1268, %v1305
        %v1398 = vsub.f32 %v1269, %v1308
        %v1399 = vsub.f32 %v1270, %v1311
        %v1400 = vsub.f32 %v1271, %v1314
        %v1401 = vsub.f32 %v1272, %v1317
        %v1402 = vsub.f32 %v1273, %v1320
        %v1403 = vsub.f32 %v1274, %v1323
        %v1404 = vsub.f32 %v1275, %v1326
        %v1405 = vsub.f32 %v1276, %v1329
        %v1406 = vsub.f32 %v1277, %v1332
        %v1407 = vsub.f32 %v1278, %v1335
        %v1408 = vsub.f32 %v1279, %v1338
        %v1409 = vsub.f32 %v1280, %v1341
        %v1410 = vsub.f32 %v1281, %v1344
        %v1411 = vsub.f32 %v1282, %v1347
        %v1412 = vsub.f32 %v1283, %v1350
        %v1413 = vsub.f32 %v1284, %v1353
        %v1414 = vsub.f32 %v1285, %v1356
        %v1415 = vsub.f32 %v1286, %v1359
        %v1416 = vsub.f32 %v1287, %v1362
        %v1417 = vsub.f32 %v1288, %v1365
        %v1418 = vsub.f32 %v1289, %v1368
        %v1419 = vsub.f32 %v1290, %v1371
        %v1420 = vsub.f32 %v1291, %v1374
        %v1421 = vsub.f32 %v1292, %v1377
        %v1422 = vsub.f32 %v1293, %v1380
        %v1423 = vsub.f32 %v1294, %v1383
        %v1424 = vsub.f32 %v1295, %v1386
        %v1425 = vsub.f32 %v1296, %v1389
        %v1426 = vsub.f32 %v1297, %v1392
        %v1427 = vsub.f32 %v1298, %v1395
        %v1428 = vmul.f32 %v1396, 1.442695
        %v1429 = vpow.pop %v1428
        %v1430 = vmul.f32 %v1397, 1.442695
        %v1431 = vpow.pop %v1430
        %v1432 = vmul.f32 %v1398, 1.442695
        %v1433 = vpow.pop %v1432
        %v1434 = vmul.f32 %v1399, 1.442695
        %v1435 = vpow.pop %v1434
        %v1436 = vmul.f32 %v1400, 1.442695
        %v1437 = vpow.pop %v1436
        %v1438 = vmul.f32 %v1401, 1.442695
        %v1439 = vpow.pop %v1438
        %v1440 = vmul.f32 %v1402, 1.442695
        %v1441 = vpow.pop %v1440
        %v1442 = vmul.f32 %v1403, 1.442695
        %v1443 = vpow.pop %v1442
        %v1444 = vmul.f32 %v1404, 1.442695
        %v1445 = vpow.pop %v1444
        %v1446 = vmul.f32 %v1405, 1.442695
        %v1447 = vpow.pop %v1446
        %v1448 = vmul.f32 %v1406, 1.442695
        %v1449 = vpow.pop %v1448
        %v1450 = vmul.f32 %v1407, 1.442695
        %v1451 = vpow.pop %v1450
        %v1452 = vmul.f32 %v1408, 1.442695
        %v1453 = vpow.pop %v1452
        %v1454 = vmul.f32 %v1409, 1.442695
        %v1455 = vpow.pop %v1454
        %v1456 = vmul.f32 %v1410, 1.442695
        %v1457 = vpow.pop %v1456
        %v1458 = vmul.f32 %v1411, 1.442695
        %v1459 = vpow.pop %v1458
        %v1460 = vmul.f32 %v1412, 1.442695
        %v1461 = vpow.pop %v1460
        %v1462 = vmul.f32 %v1413, 1.442695
        %v1463 = vpow.pop %v1462
        %v1464 = vmul.f32 %v1414, 1.442695
        %v1465 = vpow.pop %v1464
        %v1466 = vmul.f32 %v1415, 1.442695
        %v1467 = vpow.pop %v1466
        %v1468 = vmul.f32 %v1416, 1.442695
        %v1469 = vpow.pop %v1468
        %v1470 = vmul.f32 %v1417, 1.442695
        %v1471 = vpow.pop %v1470
        %v1472 = vmul.f32 %v1418, 1.442695
        %v1473 = vpow.pop %v1472
        %v1474 = vmul.f32 %v1419, 1.442695
        %v1475 = vpow.pop %v1474
        %v1476 = vmul.f32 %v1420, 1.442695
        %v1477 = vpow.pop %v1476
        %v1478 = vmul.f32 %v1421, 1.442695
        %v1479 = vpow.pop %v1478
        %v1480 = vmul.f32 %v1422, 1.442695
        %v1481 = vpow.pop %v1480
        %v1482 = vmul.f32 %v1423, 1.442695
        %v1483 = vpow.pop %v1482
        %v1484 = vmul.f32 %v1424, 1.442695
        %v1485 = vpow.pop %v1484
        %v1486 = vmul.f32 %v1425, 1.442695
        %v1487 = vpow.pop %v1486
        %v1488 = vmul.f32 %v1426, 1.442695
        %v1489 = vpow.pop %v1488
        %v1490 = vmul.f32 %v1427, 1.442695
        %v1491 = vpow.pop %v1490
        %v1492 = vsel %vm1299, %v1429, 0.0
        %1493 = vadd.xlane.f32.xlu0 %v1492
        %v1494 = vpop.xlane.xlu0 %1493
        %v1495 = vsel %vm1299, %v1431, 0.0
        %1496 = vadd.xlane.f32.xlu0 %v1495
        %v1497 = vpop.xlane.xlu0 %1496
        %v1498 = vsel %vm1299, %v1433, 0.0
        %1499 = vadd.xlane.f32.xlu0 %v1498
        %v1500 = vpop.xlane.xlu0 %1499
        %v1501 = vsel %vm1299, %v1435, 0.0
        %1502 = vadd.xlane.f32.xlu0 %v1501
        %v1503 = vpop.xlane.xlu0 %1502
        %v1504 = vsel %vm1299, %v1437, 0.0
        %1505 = vadd.xlane.f32.xlu0 %v1504
        %v1506 = vpop.xlane.xlu0 %1505
        %v1507 = vsel %vm1299, %v1439, 0.0
        %1508 = vadd.xlane.f32.xlu0 %v1507
        %v1509 = vpop.xlane.xlu0 %1508
        %v1510 = vsel %vm1299, %v1441, 0.0
        %1511 = vadd.xlane.f32.xlu0 %v1510
        %v1512 = vpop.xlane.xlu0 %1511
        %v1513 = vsel %vm1299, %v1443, 0.0
        %1514 = vadd.xlane.f32.xlu0 %v1513
        %v1515 = vpop.xlane.xlu0 %1514
        %v1516 = vsel %vm1299, %v1445, 0.0
        %1517 = vadd.xlane.f32.xlu0 %v1516
        %v1518 = vpop.xlane.xlu0 %1517
        %v1519 = vsel %vm1299, %v1447, 0.0
        %1520 = vadd.xlane.f32.xlu0 %v1519
        %v1521 = vpop.xlane.xlu0 %1520
        %v1522 = vsel %vm1299, %v1449, 0.0
        %1523 = vadd.xlane.f32.xlu0 %v1522
        %v1524 = vpop.xlane.xlu0 %1523
        %v1525 = vsel %vm1299, %v1451, 0.0
        %1526 = vadd.xlane.f32.xlu0 %v1525
        %v1527 = vpop.xlane.xlu0 %1526
        %v1528 = vsel %vm1299, %v1453, 0.0
        %1529 = vadd.xlane.f32.xlu0 %v1528
        %v1530 = vpop.xlane.xlu0 %1529
        %v1531 = vsel %vm1299, %v1455, 0.0
        %1532 = vadd.xlane.f32.xlu0 %v1531
        %v1533 = vpop.xlane.xlu0 %1532
        %v1534 = vsel %vm1299, %v1457, 0.0
        %1535 = vadd.xlane.f32.xlu0 %v1534
        %v1536 = vpop.xlane.xlu0 %1535
        %v1537 = vsel %vm1299, %v1459, 0.0
        %1538 = vadd.xlane.f32.xlu0 %v1537
        %v1539 = vpop.xlane.xlu0 %1538
        %v1540 = vsel %vm1299, %v1461, 0.0
        %1541 = vadd.xlane.f32.xlu0 %v1540
        %v1542 = vpop.xlane.xlu0 %1541
        %v1543 = vsel %vm1299, %v1463, 0.0
        %1544 = vadd.xlane.f32.xlu0 %v1543
        %v1545 = vpop.xlane.xlu0 %1544
        %v1546 = vsel %vm1299, %v1465, 0.0
        %1547 = vadd.xlane.f32.xlu0 %v1546
        %v1548 = vpop.xlane.xlu0 %1547
        %v1549 = vsel %vm1299, %v1467, 0.0
        %1550 = vadd.xlane.f32.xlu0 %v1549
        %v1551 = vpop.xlane.xlu0 %1550
        %v1552 = vsel %vm1299, %v1469, 0.0
        %1553 = vadd.xlane.f32.xlu0 %v1552
        %v1554 = vpop.xlane.xlu0 %1553
        %v1555 = vsel %vm1299, %v1471, 0.0
        %1556 = vadd.xlane.f32.xlu0 %v1555
        %v1557 = vpop.xlane.xlu0 %1556
        %v1558 = vsel %vm1299, %v1473, 0.0
        %1559 = vadd.xlane.f32.xlu0 %v1558
        %v1560 = vpop.xlane.xlu0 %1559
        %v1561 = vsel %vm1299, %v1475, 0.0
        %1562 = vadd.xlane.f32.xlu0 %v1561
        %v1563 = vpop.xlane.xlu0 %1562
        %v1564 = vsel %vm1299, %v1477, 0.0
        %1565 = vadd.xlane.f32.xlu0 %v1564
        %v1566 = vpop.xlane.xlu0 %1565
        %v1567 = vsel %vm1299, %v1479, 0.0
        %1568 = vadd.xlane.f32.xlu0 %v1567
        %v1569 = vpop.xlane.xlu0 %1568
        %v1570 = vsel %vm1299, %v1481, 0.0
        %1571 = vadd.xlane.f32.xlu0 %v1570
        %v1572 = vpop.xlane.xlu0 %1571
        %v1573 = vsel %vm1299, %v1483, 0.0
        %1574 = vadd.xlane.f32.xlu0 %v1573
        %v1575 = vpop.xlane.xlu0 %1574
        %v1576 = vsel %vm1299, %v1485, 0.0
        %1577 = vadd.xlane.f32.xlu0 %v1576
        %v1578 = vpop.xlane.xlu0 %1577
        %v1579 = vsel %vm1299, %v1487, 0.0
        %1580 = vadd.xlane.f32.xlu0 %v1579
        %v1581 = vpop.xlane.xlu0 %1580
        %v1582 = vsel %vm1299, %v1489, 0.0
        %1583 = vadd.xlane.f32.xlu0 %v1582
        %v1584 = vpop.xlane.xlu0 %1583
        %v1585 = vsel %vm1299, %v1491, 0.0
        %1586 = vadd.xlane.f32.xlu0 %v1585
        %v1587 = vpop.xlane.xlu0 %1586
        %v1588 = vrcp.pop %v1494
        %v1589 = vrcp.pop %v1497
        %v1590 = vrcp.pop %v1500
        %v1591 = vrcp.pop %v1503
        %v1592 = vrcp.pop %v1506
        %v1593 = vrcp.pop %v1509
        %v1594 = vrcp.pop %v1512
        %v1595 = vrcp.pop %v1515
        %v1596 = vrcp.pop %v1518
        %v1597 = vrcp.pop %v1521
        %v1598 = vrcp.pop %v1524
        %v1599 = vrcp.pop %v1527
        %v1600 = vrcp.pop %v1530
        %v1601 = vrcp.pop %v1533
        %v1602 = vrcp.pop %v1536
        %v1603 = vrcp.pop %v1539
        %v1604 = vrcp.pop %v1542
        %v1605 = vrcp.pop %v1545
        %v1606 = vrcp.pop %v1548
        %v1607 = vrcp.pop %v1551
        %v1608 = vrcp.pop %v1554
        %v1609 = vrcp.pop %v1557
        %v1610 = vrcp.pop %v1560
        %v1611 = vrcp.pop %v1563
        %v1612 = vrcp.pop %v1566
        %v1613 = vrcp.pop %v1569
        %v1614 = vrcp.pop %v1572
        %v1615 = vrcp.pop %v1575
        %v1616 = vrcp.pop %v1578
        %v1617 = vrcp.pop %v1581
        %v1618 = vrcp.pop %v1584
        %v1619 = vrcp.pop %v1587
        %v1620 = vmul.f32 %v1429, %v1588
        %v1621 = vmul.f32 %v1431, %v1589
        %v1622 = vmul.f32 %v1433, %v1590
        %v1623 = vmul.f32 %v1435, %v1591
        %v1624 = vmul.f32 %v1437, %v1592
        %v1625 = vmul.f32 %v1439, %v1593
        %v1626 = vmul.f32 %v1441, %v1594
        %v1627 = vmul.f32 %v1443, %v1595
        %v1628 = vmul.f32 %v1445, %v1596
        %v1629 = vmul.f32 %v1447, %v1597
        %v1630 = vmul.f32 %v1449, %v1598
        %v1631 = vmul.f32 %v1451, %v1599
        %v1632 = vmul.f32 %v1453, %v1600
        %v1633 = vmul.f32 %v1455, %v1601
        %v1634 = vmul.f32 %v1457, %v1602
        %v1635 = vmul.f32 %v1459, %v1603
        %v1636 = vmul.f32 %v1461, %v1604
        %v1637 = vmul.f32 %v1463, %v1605
        %v1638 = vmul.f32 %v1465, %v1606
        %v1639 = vmul.f32 %v1467, %v1607
        %v1640 = vmul.f32 %v1469, %v1608
        %v1641 = vmul.f32 %v1471, %v1609
        %v1642 = vmul.f32 %v1473, %v1610
        %v1643 = vmul.f32 %v1475, %v1611
        %v1644 = vmul.f32 %v1477, %v1612
        %v1645 = vmul.f32 %v1479, %v1613
        %v1646 = vmul.f32 %v1481, %v1614
        %v1647 = vmul.f32 %v1483, %v1615
        %v1648 = vmul.f32 %v1485, %v1616
        %v1649 = vmul.f32 %v1487, %v1617
        %v1650 = vmul.f32 %v1489, %v1618
        %v1651 = vmul.f32 %v1491, %v1619
        %v1652 = vpack.c.bf16 %v1621, %v1620
        %v1653 = vpack.c.bf16 %v1623, %v1622
        %v1654 = vpack.c.bf16 %v1625, %v1624
        %v1655 = vpack.c.bf16 %v1627, %v1626
        %v1656 = vpack.c.bf16 %v1629, %v1628
        %v1657 = vpack.c.bf16 %v1631, %v1630
        %v1658 = vpack.c.bf16 %v1633, %v1632
        %v1659 = vpack.c.bf16 %v1635, %v1634
        %v1660 = vpack.c.bf16 %v1637, %v1636
        %v1661 = vpack.c.bf16 %v1639, %v1638
        %v1662 = vpack.c.bf16 %v1641, %v1640
        %v1663 = vpack.c.bf16 %v1643, %v1642
        %v1664 = vpack.c.bf16 %v1645, %v1644
        %v1665 = vpack.c.bf16 %v1647, %v1646
        %v1666 = vpack.c.bf16 %v1649, %v1648
        %v1667 = vpack.c.bf16 %v1651, %v1650
        %1668 = vrot.lane.b32.xlu0 %v846, 64
        %v1669 = vpop.permute.xlu0 %1668
        %1670 = vrot.lane.b32.xlu0 %v847, 64
        %v1671 = vpop.permute.xlu0 %1670
        %1672 = vrot.lane.b32.xlu0 %v848, 64
        %v1673 = vpop.permute.xlu0 %1672
        %1674 = vrot.lane.b32.xlu0 %v849, 64
        %v1675 = vpop.permute.xlu0 %1674
        %v1681 = vsel %vm1299, %v1652, 0
        %v1684 = vsel %vm1299, %v1653, 0
        %v1687 = vsel %vm1299, %v1654, 0
        %v1690 = vsel %vm1299, %v1655, 0
        %1692 = vmatprep.subr.bf16.mxu0 0
        %1693 = vmatpush1.bf16.msra.mxu0 %v1669
        %1694 = vmatprep.subr.bf16.mxu0 0
        %1695 = vmatpush1.bf16.msra.mxu0 %v1671
        %1696 = vmatprep.subr.bf16.mxu0 0
        %1697 = vmatpush1.bf16.msra.mxu0 %v1673
        %1698 = vmatprep.subr.bf16.mxu0 0
        %1699 = vmatpush1.bf16.msra.mxu0 %v1675
        %1700 = vmatprep.subr.bf16.mxu0 0
        %1701 = vmatpush1.bf16.msra.mxu0 0
        %1702 = vmatprep.subr.bf16.mxu0 0
        %1703 = vmatpush1.bf16.msra.mxu0 0
        %1704 = vmatprep.subr.bf16.mxu0 0
        %1705 = vmatpush1.bf16.msra.mxu0 0
        %1706 = vmatprep.subr.bf16.mxu0 0
        %1707 = vmatpush1.bf16.msra.mxu0 0
        %1708 = vmatprep.subr.bf16.mxu0 0
        %1709 = vmatpush1.bf16.msra.mxu0 0
        %1710 = vmatprep.subr.bf16.mxu0 0
        %1711 = vmatpush1.bf16.msra.mxu0 0
        %1712 = vmatprep.subr.bf16.mxu0 0
        %1713 = vmatpush1.bf16.msra.mxu0 0
        %1714 = vmatprep.subr.bf16.mxu0 0
        %1715 = vmatpush1.bf16.msra.mxu0 0
        %1716 = vmatprep.subr.bf16.mxu0 0
        %1717 = vmatpush1.bf16.msra.mxu0 0
        %1718 = vmatprep.subr.bf16.mxu0 0
        %1719 = vmatpush1.bf16.msra.mxu0 0
        %1720 = vmatprep.subr.bf16.mxu0 0
        %1721 = vmatpush1.bf16.msra.mxu0 0
        %1722 = vmatprep.subr.bf16.mxu0 0
        %1723 = vmatpush1.bf16.msra.mxu0 0
        %1724 = vmatprep.mubr.bf16.mxu0 0
        %1725 = vmatmul.mubr.bf16.gmra.mrb[0].mxu0 %v1681
        %v1726 = vpop.f32.mrb[0].mxu0
        %v1727 = vadd.f32 0.0, %v1726
        %v1728 = vpop.f32.mrb[0].mxu0
        %v1729 = vpop.f32.mrb[0].mxu0
        %v1730 = vadd.f32 0.0, %v1729
        %v1731 = vpop.f32.mrb[0].mxu0
        %1732 = vmatprep.mubr.bf16.mxu0 0
        %1733 = vmatmul.mubr.bf16.gmra.mrb[0].mxu0 %v1684
        %v1734 = vpop.f32.mrb[0].mxu0
        %v1735 = vadd.f32 0.0, %v1734
        %v1736 = vpop.f32.mrb[0].mxu0
        %v1737 = vpop.f32.mrb[0].mxu0
        %v1738 = vadd.f32 0.0, %v1737
        %v1739 = vpop.f32.mrb[0].mxu0
        %1740 = vmatprep.mubr.bf16.mxu0 0
        %1741 = vmatmul.mubr.bf16.gmra.mrb[0].mxu0 %v1687
        %v1742 = vpop.f32.mrb[0].mxu0
        %v1743 = vadd.f32 0.0, %v1742
        %v1744 = vpop.f32.mrb[0].mxu0
        %v1745 = vpop.f32.mrb[0].mxu0
        %v1746 = vadd.f32 0.0, %v1745
        %v1747 = vpop.f32.mrb[0].mxu0
        %1748 = vmatprep.mubr.bf16.mxu0 0
        %1749 = vmatmul.mubr.bf16.gmra.mrb[0].mxu0 %v1690
        %v1750 = vpop.f32.mrb[0].mxu0
        %v1751 = vadd.f32 0.0, %v1750
        %v1752 = vpop.f32.mrb[0].mxu0
        %v1753 = vpop.f32.mrb[0].mxu0
        %v1754 = vadd.f32 0.0, %v1753
        %v1755 = vpop.f32.mrb[0].mxu0
        %1756 = vdwg.mxu0
        %1757 = vrot.lane.b32.xlu0 %v855, 64
        %v1758 = vpop.permute.xlu0 %1757
        %1759 = vrot.lane.b32.xlu0 %v857, 64
        %v1760 = vpop.permute.xlu0 %1759
        %1761 = vrot.lane.b32.xlu0 %v859, 64
        %v1762 = vpop.permute.xlu0 %1761
        %1763 = vrot.lane.b32.xlu0 %v861, 64
        %v1764 = vpop.permute.xlu0 %1763
        %v1770 = vsel %vm1299, %v1656, 0
        %v1773 = vsel %vm1299, %v1657, 0
        %v1776 = vsel %vm1299, %v1658, 0
        %v1779 = vsel %vm1299, %v1659, 0
        %1781 = vmatprep.subr.bf16.mxu0 0
        %1782 = vmatpush1.bf16.msra.mxu0 %v1758
        %1783 = vmatprep.subr.bf16.mxu0 0
        %1784 = vmatpush1.bf16.msra.mxu0 %v1760
        %1785 = vmatprep.subr.bf16.mxu0 0
        %1786 = vmatpush1.bf16.msra.mxu0 %v1762
        %1787 = vmatprep.subr.bf16.mxu0 0
        %1788 = vmatpush1.bf16.msra.mxu0 %v1764
        %1789 = vmatprep.subr.bf16.mxu0 0
        %1790 = vmatpush1.bf16.msra.mxu0 0
        %1791 = vmatprep.subr.bf16.mxu0 0
        %1792 = vmatpush1.bf16.msra.mxu0 0
        %1793 = vmatprep.subr.bf16.mxu0 0
        %1794 = vmatpush1.bf16.msra.mxu0 0
        %1795 = vmatprep.subr.bf16.mxu0 0
        %1796 = vmatpush1.bf16.msra.mxu0 0
        %1797 = vmatprep.subr.bf16.mxu0 0
        %1798 = vmatpush1.bf16.msra.mxu0 0
        %1799 = vmatprep.subr.bf16.mxu0 0
        %1800 = vmatpush1.bf16.msra.mxu0 0
        %1801 = vmatprep.subr.bf16.mxu0 0
        %1802 = vmatpush1.bf16.msra.mxu0 0
        %1803 = vmatprep.subr.bf16.mxu0 0
        %1804 = vmatpush1.bf16.msra.mxu0 0
        %1805 = vmatprep.subr.bf16.mxu0 0
        %1806 = vmatpush1.bf16.msra.mxu0 0
        %1807 = vmatprep.subr.bf16.mxu0 0
        %1808 = vmatpush1.bf16.msra.mxu0 0
        %1809 = vmatprep.subr.bf16.mxu0 0
        %1810 = vmatpush1.bf16.msra.mxu0 0
        %1811 = vmatprep.subr.bf16.mxu0 0
        %1812 = vmatpush1.bf16.msra.mxu0 0
        %1813 = vmatprep.mubr.bf16.mxu0 0
        %1814 = vmatmul.mubr.bf16.gmra.mrb[0].mxu0 %v1770
        %v1815 = vpop.f32.mrb[0].mxu0
        %v1816 = vadd.f32 0.0, %v1815
        %v1817 = vpop.f32.mrb[0].mxu0
        %v1818 = vpop.f32.mrb[0].mxu0
        %v1819 = vadd.f32 0.0, %v1818
        %v1820 = vpop.f32.mrb[0].mxu0
        %1821 = vmatprep.mubr.bf16.mxu0 0
        %1822 = vmatmul.mubr.bf16.gmra.mrb[0].mxu0 %v1773
        %v1823 = vpop.f32.mrb[0].mxu0
        %v1824 = vadd.f32 0.0, %v1823
        %v1825 = vpop.f32.mrb[0].mxu0
        %v1826 = vpop.f32.mrb[0].mxu0
        %v1827 = vadd.f32 0.0, %v1826
        %v1828 = vpop.f32.mrb[0].mxu0
        %1829 = vmatprep.mubr.bf16.mxu0 0
        %1830 = vmatmul.mubr.bf16.gmra.mrb[0].mxu0 %v1776
        %v1831 = vpop.f32.mrb[0].mxu0
        %v1832 = vadd.f32 0.0, %v1831
        %v1833 = vpop.f32.mrb[0].mxu0
        %v1834 = vpop.f32.mrb[0].mxu0
        %v1835 = vadd.f32 0.0, %v1834
        %v1836 = vpop.f32.mrb[0].mxu0
        %1837 = vmatprep.mubr.bf16.mxu0 0
        %1838 = vmatmul.mubr.bf16.gmra.mrb[0].mxu0 %v1779
        %v1839 = vpop.f32.mrb[0].mxu0
        %v1840 = vadd.f32 0.0, %v1839
        %v1841 = vpop.f32.mrb[0].mxu0
        %v1842 = vpop.f32.mrb[0].mxu0
        %v1843 = vadd.f32 0.0, %v1842
        %v1844 = vpop.f32.mrb[0].mxu0
        %1845 = vdwg.mxu0
        %1846 = vrot.lane.b32.xlu0 %v863, 64
        %v1847 = vpop.permute.xlu0 %1846
        %1848 = vrot.lane.b32.xlu0 %v865, 64
        %v1849 = vpop.permute.xlu0 %1848
        %1850 = vrot.lane.b32.xlu0 %v867, 64
        %v1851 = vpop.permute.xlu0 %1850
        %1852 = vrot.lane.b32.xlu0 %v869, 64
        %v1853 = vpop.permute.xlu0 %1852
        %v1859 = vsel %vm1299, %v1660, 0
        %v1862 = vsel %vm1299, %v1661, 0
        %v1865 = vsel %vm1299, %v1662, 0
        %v1868 = vsel %vm1299, %v1663, 0
        %1870 = vmatprep.subr.bf16.mxu0 0
        %1871 = vmatpush1.bf16.msra.mxu0 %v1847
        %1872 = vmatprep.subr.bf16.mxu0 0
        %1873 = vmatpush1.bf16.msra.mxu0 %v1849
        %1874 = vmatprep.subr.bf16.mxu0 0
        %1875 = vmatpush1.bf16.msra.mxu0 %v1851
        %1876 = vmatprep.subr.bf16.mxu0 0
        %1877 = vmatpush1.bf16.msra.mxu0 %v1853
        %1878 = vmatprep.subr.bf16.mxu0 0
        %1879 = vmatpush1.bf16.msra.mxu0 0
        %1880 = vmatprep.subr.bf16.mxu0 0
        %1881 = vmatpush1.bf16.msra.mxu0 0
        %1882 = vmatprep.subr.bf16.mxu0 0
        %1883 = vmatpush1.bf16.msra.mxu0 0
        %1884 = vmatprep.subr.bf16.mxu0 0
        %1885 = vmatpush1.bf16.msra.mxu0 0
        %1886 = vmatprep.subr.bf16.mxu0 0
        %1887 = vmatpush1.bf16.msra.mxu0 0
        %1888 = vmatprep.subr.bf16.mxu0 0
        %1889 = vmatpush1.bf16.msra.mxu0 0
        %1890 = vmatprep.subr.bf16.mxu0 0
        %1891 = vmatpush1.bf16.msra.mxu0 0
        %1892 = vmatprep.subr.bf16.mxu0 0
        %1893 = vmatpush1.bf16.msra.mxu0 0
        %1894 = vmatprep.subr.bf16.mxu0 0
        %1895 = vmatpush1.bf16.msra.mxu0 0
        %1896 = vmatprep.subr.bf16.mxu0 0
        %1897 = vmatpush1.bf16.msra.mxu0 0
        %1898 = vmatprep.subr.bf16.mxu0 0
        %1899 = vmatpush1.bf16.msra.mxu0 0
        %1900 = vmatprep.subr.bf16.mxu0 0
        %1901 = vmatpush1.bf16.msra.mxu0 0
        %1902 = vmatprep.mubr.bf16.mxu0 0
        %1903 = vmatmul.mubr.bf16.gmra.mrb[0].mxu0 %v1859
        %v1904 = vpop.f32.mrb[0].mxu0
        %v1905 = vadd.f32 0.0, %v1904
        %v1906 = vpop.f32.mrb[0].mxu0
        %v1907 = vpop.f32.mrb[0].mxu0
        %v1908 = vadd.f32 0.0, %v1907
        %v1909 = vpop.f32.mrb[0].mxu0
        %1910 = vmatprep.mubr.bf16.mxu0 0
        %1911 = vmatmul.mubr.bf16.gmra.mrb[0].mxu0 %v1862
        %v1912 = vpop.f32.mrb[0].mxu0
        %v1913 = vadd.f32 0.0, %v1912
        %v1914 = vpop.f32.mrb[0].mxu0
        %v1915 = vpop.f32.mrb[0].mxu0
        %v1916 = vadd.f32 0.0, %v1915
        %v1917 = vpop.f32.mrb[0].mxu0
        %1918 = vmatprep.mubr.bf16.mxu0 0
        %1919 = vmatmul.mubr.bf16.gmra.mrb[0].mxu0 %v1865
        %v1920 = vpop.f32.mrb[0].mxu0
        %v1921 = vadd.f32 0.0, %v1920
        %v1922 = vpop.f32.mrb[0].mxu0
        %v1923 = vpop.f32.mrb[0].mxu0
        %v1924 = vadd.f32 0.0, %v1923
        %v1925 = vpop.f32.mrb[0].mxu0
        %1926 = vmatprep.mubr.bf16.mxu0 0
        %1927 = vmatmul.mubr.bf16.gmra.mrb[0].mxu0 %v1868
        %v1928 = vpop.f32.mrb[0].mxu0
        %v1929 = vadd.f32 0.0, %v1928
        %v1930 = vpop.f32.mrb[0].mxu0
        %v1931 = vpop.f32.mrb[0].mxu0
        %v1932 = vadd.f32 0.0, %v1931
        %v1933 = vpop.f32.mrb[0].mxu0
        %1934 = vdwg.mxu0
        %1935 = vrot.lane.b32.xlu0 %v871, 64
        %v1936 = vpop.permute.xlu0 %1935
        %1937 = vrot.lane.b32.xlu0 %v873, 64
        %v1938 = vpop.permute.xlu0 %1937
        %1939 = vrot.lane.b32.xlu0 %v875, 64
        %v1940 = vpop.permute.xlu0 %1939
        %1941 = vrot.lane.b32.xlu0 %v877, 64
        %v1942 = vpop.permute.xlu0 %1941
        %v1948 = vsel %vm1299, %v1664, 0
        %v1951 = vsel %vm1299, %v1665, 0
        %v1954 = vsel %vm1299, %v1666, 0
        %v1957 = vsel %vm1299, %v1667, 0
        %1959 = vmatprep.subr.bf16.mxu0 0
        %1960 = vmatpush1.bf16.msra.mxu0 %v1936
        %1961 = vmatprep.subr.bf16.mxu0 0
        %1962 = vmatpush1.bf16.msra.mxu0 %v1938
        %1963 = vmatprep.subr.bf16.mxu0 0
        %1964 = vmatpush1.bf16.msra.mxu0 %v1940
        %1965 = vmatprep.subr.bf16.mxu0 0
        %1966 = vmatpush1.bf16.msra.mxu0 %v1942
        %1967 = vmatprep.subr.bf16.mxu0 0
        %1968 = vmatpush1.bf16.msra.mxu0 0
        %1969 = vmatprep.subr.bf16.mxu0 0
        %1970 = vmatpush1.bf16.msra.mxu0 0
        %1971 = vmatprep.subr.bf16.mxu0 0
        %1972 = vmatpush1.bf16.msra.mxu0 0
        %1973 = vmatprep.subr.bf16.mxu0 0
        %1974 = vmatpush1.bf16.msra.mxu0 0
        %1975 = vmatprep.subr.bf16.mxu0 0
        %1976 = vmatpush1.bf16.msra.mxu0 0
        %1977 = vmatprep.subr.bf16.mxu0 0
        %1978 = vmatpush1.bf16.msra.mxu0 0
        %1979 = vmatprep.subr.bf16.mxu0 0
        %1980 = vmatpush1.bf16.msra.mxu0 0
        %1981 = vmatprep.subr.bf16.mxu0 0
        %1982 = vmatpush1.bf16.msra.mxu0 0
        %1983 = vmatprep.subr.bf16.mxu0 0
        %1984 = vmatpush1.bf16.msra.mxu0 0
        %1985 = vmatprep.subr.bf16.mxu0 0
        %1986 = vmatpush1.bf16.msra.mxu0 0
        %1987 = vmatprep.subr.bf16.mxu0 0
        %1988 = vmatpush1.bf16.msra.mxu0 0
        %1989 = vmatprep.subr.bf16.mxu0 0
        %1990 = vmatpush1.bf16.msra.mxu0 0
        %1991 = vmatprep.mubr.bf16.mxu0 0
        %1992 = vmatmul.mubr.bf16.gmra.mrb[0].mxu0 %v1948
        %v1993 = vpop.f32.mrb[0].mxu0
        %v1994 = vadd.f32 0.0, %v1993
        %v1995 = vpop.f32.mrb[0].mxu0
        %v1996 = vpop.f32.mrb[0].mxu0
        %v1997 = vadd.f32 0.0, %v1996
        %v1998 = vpop.f32.mrb[0].mxu0
        %1999 = vmatprep.mubr.bf16.mxu0 0
        %2000 = vmatmul.mubr.bf16.gmra.mrb[0].mxu0 %v1951
        %v2001 = vpop.f32.mrb[0].mxu0
        %v2002 = vadd.f32 0.0, %v2001
        %v2003 = vpop.f32.mrb[0].mxu0
        %v2004 = vpop.f32.mrb[0].mxu0
        %v2005 = vadd.f32 0.0, %v2004
        %v2006 = vpop.f32.mrb[0].mxu0
        %2007 = vmatprep.mubr.bf16.mxu0 0
        %2008 = vmatmul.mubr.bf16.gmra.mrb[0].mxu0 %v1954
        %v2009 = vpop.f32.mrb[0].mxu0
        %v2010 = vadd.f32 0.0, %v2009
        %v2011 = vpop.f32.mrb[0].mxu0
        %v2012 = vpop.f32.mrb[0].mxu0
        %v2013 = vadd.f32 0.0, %v2012
        %v2014 = vpop.f32.mrb[0].mxu0
        %2015 = vmatprep.mubr.bf16.mxu0 0
        %2016 = vmatmul.mubr.bf16.gmra.mrb[0].mxu0 %v1957
        %v2017 = vpop.f32.mrb[0].mxu0
        %v2018 = vadd.f32 0.0, %v2017
        %v2019 = vpop.f32.mrb[0].mxu0
        %v2020 = vpop.f32.mrb[0].mxu0
        %v2021 = vadd.f32 0.0, %v2020
        %v2022 = vpop.f32.mrb[0].mxu0
        %2023 = vdwg.mxu0
        %v2024 = vpack.c.bf16 %v1730, %v1727
        %v2025 = vpack.c.bf16 %v1738, %v1735
        %v2026 = vpack.c.bf16 %v1746, %v1743
        %v2027 = vpack.c.bf16 %v1754, %v1751
        %v2028 = vpack.c.bf16 %v1819, %v1816
        %v2029 = vpack.c.bf16 %v1827, %v1824
        %v2030 = vpack.c.bf16 %v1835, %v1832
        %v2031 = vpack.c.bf16 %v1843, %v1840
        %v2032 = vpack.c.bf16 %v1908, %v1905
        %v2033 = vpack.c.bf16 %v1916, %v1913
        %v2034 = vpack.c.bf16 %v1924, %v1921
        %v2035 = vpack.c.bf16 %v1932, %v1929
        %v2036 = vpack.c.bf16 %v1997, %v1994
        %v2037 = vpack.c.bf16 %v2005, %v2002
        %v2038 = vpack.c.bf16 %v2013, %v2010
        %v2039 = vpack.c.bf16 %v2021, %v2018
        %v2041 = vsel %vm886, %v2024, 0
        %v2044 = vsel %vm886, %v2025, 0
        %v2047 = vsel %vm886, %v2026, 0
        %v2050 = vsel %vm886, %v2027, 0
        %vm2052 = vcmask 1043456
        %v2054 = vsel %vm2052, %v604, 0
        %2056 = vmatprep.subr.bf16.mxu0 0
        %2057 = vmatpush1.bf16.msra.mxu0 %v2054
        %2058 = vmatprep.subr.bf16.mxu0 0
        %2059 = vmatpush1.bf16.msra.mxu0 0
        %2060 = vmatprep.subr.bf16.mxu0 0
        %2061 = vmatpush1.bf16.msra.mxu0 0
        %2062 = vmatprep.subr.bf16.mxu0 0
        %2063 = vmatpush1.bf16.msra.mxu0 0
        %2064 = vmatprep.subr.bf16.mxu0 0
        %2065 = vmatpush1.bf16.msra.mxu0 0
        %2066 = vmatprep.subr.bf16.mxu0 0
        %2067 = vmatpush1.bf16.msra.mxu0 0
        %2068 = vmatprep.subr.bf16.mxu0 0
        %2069 = vmatpush1.bf16.msra.mxu0 0
        %2070 = vmatprep.subr.bf16.mxu0 0
        %2071 = vmatpush1.bf16.msra.mxu0 0
        %2072 = vmatprep.subr.bf16.mxu0 0
        %2073 = vmatpush1.bf16.msra.mxu0 0
        %2074 = vmatprep.subr.bf16.mxu0 0
        %2075 = vmatpush1.bf16.msra.mxu0 0
        %2076 = vmatprep.subr.bf16.mxu0 0
        %2077 = vmatpush1.bf16.msra.mxu0 0
        %2078 = vmatprep.subr.bf16.mxu0 0
        %2079 = vmatpush1.bf16.msra.mxu0 0
        %2080 = vmatprep.subr.bf16.mxu0 0
        %2081 = vmatpush1.bf16.msra.mxu0 0
        %2082 = vmatprep.subr.bf16.mxu0 0
        %2083 = vmatpush1.bf16.msra.mxu0 0
        %2084 = vmatprep.subr.bf16.mxu0 0
        %2085 = vmatpush1.bf16.msra.mxu0 0
        %2086 = vmatprep.subr.bf16.mxu0 0
        %2087 = vmatpush1.bf16.msra.mxu0 0
        %2088 = vmatprep.mubr.bf16.mxu0 0
        %2089 = vmatmul.mubr.bf16.gmra.mrb[0].mxu0 %v2041
        %v2090 = vpop.f32.mrb[0].mxu0
        %v2091 = vadd.f32 0.0, %v2090
        %v2092 = vpop.f32.mrb[0].mxu0
        %v2093 = vpop.f32.mrb[0].mxu0
        %v2094 = vadd.f32 0.0, %v2093
        %v2095 = vpop.f32.mrb[0].mxu0
        %2096 = vmatprep.mubr.bf16.mxu0 0
        %2097 = vmatmul.mubr.bf16.gmra.mrb[0].mxu0 %v2044
        %v2098 = vpop.f32.mrb[0].mxu0
        %v2099 = vadd.f32 0.0, %v2098
        %v2100 = vpop.f32.mrb[0].mxu0
        %v2101 = vpop.f32.mrb[0].mxu0
        %v2102 = vadd.f32 0.0, %v2101
        %v2103 = vpop.f32.mrb[0].mxu0
        %2104 = vmatprep.mubr.bf16.mxu0 0
        %2105 = vmatmul.mubr.bf16.gmra.mrb[0].mxu0 %v2047
        %v2106 = vpop.f32.mrb[0].mxu0
        %v2107 = vadd.f32 0.0, %v2106
        %v2108 = vpop.f32.mrb[0].mxu0
        %v2109 = vpop.f32.mrb[0].mxu0
        %v2110 = vadd.f32 0.0, %v2109
        %v2111 = vpop.f32.mrb[0].mxu0
        %2112 = vmatprep.mubr.bf16.mxu0 0
        %2113 = vmatmul.mubr.bf16.gmra.mrb[0].mxu0 %v2050
        %v2114 = vpop.f32.mrb[0].mxu0
        %v2115 = vadd.f32 0.0, %v2114
        %v2116 = vpop.f32.mrb[0].mxu0
        %v2117 = vpop.f32.mrb[0].mxu0
        %v2118 = vadd.f32 0.0, %v2117
        %v2119 = vpop.f32.mrb[0].mxu0
        %2120 = vdwg.mxu0
        %v2122 = vsel %vm886, %v2028, 0
        %v2125 = vsel %vm886, %v2029, 0
        %v2128 = vsel %vm886, %v2030, 0
        %v2131 = vsel %vm886, %v2031, 0
        %v2134 = vsel %vm2052, %v605, 0
        %2136 = vmatprep.subr.bf16.mxu0 0
        %2137 = vmatpush1.bf16.msra.mxu0 %v2134
        %2138 = vmatprep.subr.bf16.mxu0 0
        %2139 = vmatpush1.bf16.msra.mxu0 0
        %2140 = vmatprep.subr.bf16.mxu0 0
        %2141 = vmatpush1.bf16.msra.mxu0 0
        %2142 = vmatprep.subr.bf16.mxu0 0
        %2143 = vmatpush1.bf16.msra.mxu0 0
        %2144 = vmatprep.subr.bf16.mxu0 0
        %2145 = vmatpush1.bf16.msra.mxu0 0
        %2146 = vmatprep.subr.bf16.mxu0 0
        %2147 = vmatpush1.bf16.msra.mxu0 0
        %2148 = vmatprep.subr.bf16.mxu0 0
        %2149 = vmatpush1.bf16.msra.mxu0 0
        %2150 = vmatprep.subr.bf16.mxu0 0
        %2151 = vmatpush1.bf16.msra.mxu0 0
        %2152 = vmatprep.subr.bf16.mxu0 0
        %2153 = vmatpush1.bf16.msra.mxu0 0
        %2154 = vmatprep.subr.bf16.mxu0 0
        %2155 = vmatpush1.bf16.msra.mxu0 0
        %2156 = vmatprep.subr.bf16.mxu0 0
        %2157 = vmatpush1.bf16.msra.mxu0 0
        %2158 = vmatprep.subr.bf16.mxu0 0
        %2159 = vmatpush1.bf16.msra.mxu0 0
        %2160 = vmatprep.subr.bf16.mxu0 0
        %2161 = vmatpush1.bf16.msra.mxu0 0
        %2162 = vmatprep.subr.bf16.mxu0 0
        %2163 = vmatpush1.bf16.msra.mxu0 0
        %2164 = vmatprep.subr.bf16.mxu0 0
        %2165 = vmatpush1.bf16.msra.mxu0 0
        %2166 = vmatprep.subr.bf16.mxu0 0
        %2167 = vmatpush1.bf16.msra.mxu0 0
        %2168 = vmatprep.mubr.bf16.mxu0 0
        %2169 = vmatmul.mubr.bf16.gmra.mrb[0].mxu0 %v2122
        %v2170 = vpop.f32.mrb[0].mxu0
        %v2171 = vadd.f32 0.0, %v2170
        %v2172 = vpop.f32.mrb[0].mxu0
        %v2173 = vpop.f32.mrb[0].mxu0
        %v2174 = vadd.f32 0.0, %v2173
        %v2175 = vpop.f32.mrb[0].mxu0
        %2176 = vmatprep.mubr.bf16.mxu0 0
        %2177 = vmatmul.mubr.bf16.gmra.mrb[0].mxu0 %v2125
        %v2178 = vpop.f32.mrb[0].mxu0
        %v2179 = vadd.f32 0.0, %v2178
        %v2180 = vpop.f32.mrb[0].mxu0
        %v2181 = vpop.f32.mrb[0].mxu0
        %v2182 = vadd.f32 0.0, %v2181
        %v2183 = vpop.f32.mrb[0].mxu0
        %2184 = vmatprep.mubr.bf16.mxu0 0
        %2185 = vmatmul.mubr.bf16.gmra.mrb[0].mxu0 %v2128
        %v2186 = vpop.f32.mrb[0].mxu0
        %v2187 = vadd.f32 0.0, %v2186
        %v2188 = vpop.f32.mrb[0].mxu0
        %v2189 = vpop.f32.mrb[0].mxu0
        %v2190 = vadd.f32 0.0, %v2189
        %v2191 = vpop.f32.mrb[0].mxu0
        %2192 = vmatprep.mubr.bf16.mxu0 0
        %2193 = vmatmul.mubr.bf16.gmra.mrb[0].mxu0 %v2131
        %v2194 = vpop.f32.mrb[0].mxu0
        %v2195 = vadd.f32 0.0, %v2194
        %v2196 = vpop.f32.mrb[0].mxu0
        %v2197 = vpop.f32.mrb[0].mxu0
        %v2198 = vadd.f32 0.0, %v2197
        %v2199 = vpop.f32.mrb[0].mxu0
        %2200 = vdwg.mxu0
        %v2202 = vsel %vm886, %v2032, 0
        %v2205 = vsel %vm886, %v2033, 0
        %v2208 = vsel %vm886, %v2034, 0
        %v2211 = vsel %vm886, %v2035, 0
        %v2214 = vsel %vm2052, %v606, 0
        %2216 = vmatprep.subr.bf16.mxu0 0
        %2217 = vmatpush1.bf16.msra.mxu0 %v2214
        %2218 = vmatprep.subr.bf16.mxu0 0
        %2219 = vmatpush1.bf16.msra.mxu0 0
        %2220 = vmatprep.subr.bf16.mxu0 0
        %2221 = vmatpush1.bf16.msra.mxu0 0
        %2222 = vmatprep.subr.bf16.mxu0 0
        %2223 = vmatpush1.bf16.msra.mxu0 0
        %2224 = vmatprep.subr.bf16.mxu0 0
        %2225 = vmatpush1.bf16.msra.mxu0 0
        %2226 = vmatprep.subr.bf16.mxu0 0
        %2227 = vmatpush1.bf16.msra.mxu0 0
        %2228 = vmatprep.subr.bf16.mxu0 0
        %2229 = vmatpush1.bf16.msra.mxu0 0
        %2230 = vmatprep.subr.bf16.mxu0 0
        %2231 = vmatpush1.bf16.msra.mxu0 0
        %2232 = vmatprep.subr.bf16.mxu0 0
        %2233 = vmatpush1.bf16.msra.mxu0 0
        %2234 = vmatprep.subr.bf16.mxu0 0
        %2235 = vmatpush1.bf16.msra.mxu0 0
        %2236 = vmatprep.subr.bf16.mxu0 0
        %2237 = vmatpush1.bf16.msra.mxu0 0
        %2238 = vmatprep.subr.bf16.mxu0 0
        %2239 = vmatpush1.bf16.msra.mxu0 0
        %2240 = vmatprep.subr.bf16.mxu0 0
        %2241 = vmatpush1.bf16.msra.mxu0 0
        %2242 = vmatprep.subr.bf16.mxu0 0
        %2243 = vmatpush1.bf16.msra.mxu0 0
        %2244 = vmatprep.subr.bf16.mxu0 0
        %2245 = vmatpush1.bf16.msra.mxu0 0
        %2246 = vmatprep.subr.bf16.mxu0 0
        %2247 = vmatpush1.bf16.msra.mxu0 0
        %2248 = vmatprep.mubr.bf16.mxu0 0
        %2249 = vmatmul.mubr.bf16.gmra.mrb[0].mxu0 %v2202
        %v2250 = vpop.f32.mrb[0].mxu0
        %v2251 = vadd.f32 0.0, %v2250
        %v2252 = vpop.f32.mrb[0].mxu0
        %v2253 = vpop.f32.mrb[0].mxu0
        %v2254 = vadd.f32 0.0, %v2253
        %v2255 = vpop.f32.mrb[0].mxu0
        %2256 = vmatprep.mubr.bf16.mxu0 0
        %2257 = vmatmul.mubr.bf16.gmra.mrb[0].mxu0 %v2205
        %v2258 = vpop.f32.mrb[0].mxu0
        %v2259 = vadd.f32 0.0, %v2258
        %v2260 = vpop.f32.mrb[0].mxu0
        %v2261 = vpop.f32.mrb[0].mxu0
        %v2262 = vadd.f32 0.0, %v2261
        %v2263 = vpop.f32.mrb[0].mxu0
        %2264 = vmatprep.mubr.bf16.mxu0 0
        %2265 = vmatmul.mubr.bf16.gmra.mrb[0].mxu0 %v2208
        %v2266 = vpop.f32.mrb[0].mxu0
        %v2267 = vadd.f32 0.0, %v2266
        %v2268 = vpop.f32.mrb[0].mxu0
        %v2269 = vpop.f32.mrb[0].mxu0
        %v2270 = vadd.f32 0.0, %v2269
        %v2271 = vpop.f32.mrb[0].mxu0
        %2272 = vmatprep.mubr.bf16.mxu0 0
        %2273 = vmatmul.mubr.bf16.gmra.mrb[0].mxu0 %v2211
        %v2274 = vpop.f32.mrb[0].mxu0
        %v2275 = vadd.f32 0.0, %v2274
        %v2276 = vpop.f32.mrb[0].mxu0
        %v2277 = vpop.f32.mrb[0].mxu0
        %v2278 = vadd.f32 0.0, %v2277
        %v2279 = vpop.f32.mrb[0].mxu0
        %2280 = vdwg.mxu0
        %v2282 = vsel %vm886, %v2036, 0
        %v2285 = vsel %vm886, %v2037, 0
        %v2288 = vsel %vm886, %v2038, 0
        %v2291 = vsel %vm886, %v2039, 0
        %v2294 = vsel %vm2052, %v607, 0
        %2296 = vmatprep.subr.bf16.mxu0 0
        %2297 = vmatpush1.bf16.msra.mxu0 %v2294
        %2298 = vmatprep.subr.bf16.mxu0 0
        %2299 = vmatpush1.bf16.msra.mxu0 0
        %2300 = vmatprep.subr.bf16.mxu0 0
        %2301 = vmatpush1.bf16.msra.mxu0 0
        %2302 = vmatprep.subr.bf16.mxu0 0
        %2303 = vmatpush1.bf16.msra.mxu0 0
        %2304 = vmatprep.subr.bf16.mxu0 0
        %2305 = vmatpush1.bf16.msra.mxu0 0
        %2306 = vmatprep.subr.bf16.mxu0 0
        %2307 = vmatpush1.bf16.msra.mxu0 0
        %2308 = vmatprep.subr.bf16.mxu0 0
        %2309 = vmatpush1.bf16.msra.mxu0 0
        %2310 = vmatprep.subr.bf16.mxu0 0
        %2311 = vmatpush1.bf16.msra.mxu0 0
        %2312 = vmatprep.subr.bf16.mxu0 0
        %2313 = vmatpush1.bf16.msra.mxu0 0
        %2314 = vmatprep.subr.bf16.mxu0 0
        %2315 = vmatpush1.bf16.msra.mxu0 0
        %2316 = vmatprep.subr.bf16.mxu0 0
        %2317 = vmatpush1.bf16.msra.mxu0 0
        %2318 = vmatprep.subr.bf16.mxu0 0
        %2319 = vmatpush1.bf16.msra.mxu0 0
        %2320 = vmatprep.subr.bf16.mxu0 0
        %2321 = vmatpush1.bf16.msra.mxu0 0
        %2322 = vmatprep.subr.bf16.mxu0 0
        %2323 = vmatpush1.bf16.msra.mxu0 0
        %2324 = vmatprep.subr.bf16.mxu0 0
        %2325 = vmatpush1.bf16.msra.mxu0 0
        %2326 = vmatprep.subr.bf16.mxu0 0
        %2327 = vmatpush1.bf16.msra.mxu0 0
        %2328 = vmatprep.mubr.bf16.mxu0 0
        %2329 = vmatmul.mubr.bf16.gmra.mrb[0].mxu0 %v2282
        %v2330 = vpop.f32.mrb[0].mxu0
        %v2331 = vadd.f32 0.0, %v2330
        %v2332 = vpop.f32.mrb[0].mxu0
        %v2333 = vpop.f32.mrb[0].mxu0
        %v2334 = vadd.f32 0.0, %v2333
        %v2335 = vpop.f32.mrb[0].mxu0
        %2336 = vmatprep.mubr.bf16.mxu0 0
        %2337 = vmatmul.mubr.bf16.gmra.mrb[0].mxu0 %v2285
        %v2338 = vpop.f32.mrb[0].mxu0
        %v2339 = vadd.f32 0.0, %v2338
        %v2340 = vpop.f32.mrb[0].mxu0
        %v2341 = vpop.f32.mrb[0].mxu0
        %v2342 = vadd.f32 0.0, %v2341
        %v2343 = vpop.f32.mrb[0].mxu0
        %2344 = vmatprep.mubr.bf16.mxu0 0
        %2345 = vmatmul.mubr.bf16.gmra.mrb[0].mxu0 %v2288
        %v2346 = vpop.f32.mrb[0].mxu0
        %v2347 = vadd.f32 0.0, %v2346
        %v2348 = vpop.f32.mrb[0].mxu0
        %v2349 = vpop.f32.mrb[0].mxu0
        %v2350 = vadd.f32 0.0, %v2349
        %v2351 = vpop.f32.mrb[0].mxu0
        %2352 = vmatprep.mubr.bf16.mxu0 0
        %2353 = vmatmul.mubr.bf16.gmra.mrb[0].mxu0 %v2291
        %v2354 = vpop.f32.mrb[0].mxu0
        %v2355 = vadd.f32 0.0, %v2354
        %v2356 = vpop.f32.mrb[0].mxu0
        %v2357 = vpop.f32.mrb[0].mxu0
        %v2358 = vadd.f32 0.0, %v2357
        %v2359 = vpop.f32.mrb[0].mxu0
        %2360 = vdwg.mxu0
        %v2361 = vsel %vm621, %v2091, 0.0
        %v2362 = vsel %vm621, %v2171, 0.0
        %v2363 = vadd.f32 %v2361, %v2362
        %v2364 = vsel %vm621, %v2251, 0.0
        %v2365 = vadd.f32 %v2363, %v2364
        %v2366 = vsel %vm621, %v2331, 0.0
        %v2367 = vadd.f32 %v2365, %v2366
        %v2368 = vsel %vm621, %v2094, 0.0
        %v2369 = vsel %vm621, %v2174, 0.0
        %v2370 = vadd.f32 %v2368, %v2369
        %v2371 = vsel %vm621, %v2254, 0.0
        %v2372 = vadd.f32 %v2370, %v2371
        %v2373 = vsel %vm621, %v2334, 0.0
        %v2374 = vadd.f32 %v2372, %v2373
        %v2375 = vsel %vm621, %v2099, 0.0
        %v2376 = vsel %vm621, %v2179, 0.0
        %v2377 = vadd.f32 %v2375, %v2376
        %v2378 = vsel %vm621, %v2259, 0.0
        %v2379 = vadd.f32 %v2377, %v2378
        %v2380 = vsel %vm621, %v2339, 0.0
        %v2381 = vadd.f32 %v2379, %v2380
        %v2382 = vsel %vm621, %v2102, 0.0
        %v2383 = vsel %vm621, %v2182, 0.0
        %v2384 = vadd.f32 %v2382, %v2383
        %v2385 = vsel %vm621, %v2262, 0.0
        %v2386 = vadd.f32 %v2384, %v2385
        %v2387 = vsel %vm621, %v2342, 0.0
        %v2388 = vadd.f32 %v2386, %v2387
        %v2389 = vsel %vm621, %v2107, 0.0
        %v2390 = vsel %vm621, %v2187, 0.0
        %v2391 = vadd.f32 %v2389, %v2390
        %v2392 = vsel %vm621, %v2267, 0.0
        %v2393 = vadd.f32 %v2391, %v2392
        %v2394 = vsel %vm621, %v2347, 0.0
        %v2395 = vadd.f32 %v2393, %v2394
        %v2396 = vsel %vm621, %v2110, 0.0
        %v2397 = vsel %vm621, %v2190, 0.0
        %v2398 = vadd.f32 %v2396, %v2397
        %v2399 = vsel %vm621, %v2270, 0.0
        %v2400 = vadd.f32 %v2398, %v2399
        %v2401 = vsel %vm621, %v2350, 0.0
        %v2402 = vadd.f32 %v2400, %v2401
        %v2403 = vsel %vm621, %v2115, 0.0
        %v2404 = vsel %vm621, %v2195, 0.0
        %v2405 = vadd.f32 %v2403, %v2404
        %v2406 = vsel %vm621, %v2275, 0.0
        %v2407 = vadd.f32 %v2405, %v2406
        %v2408 = vsel %vm621, %v2355, 0.0
        %v2409 = vadd.f32 %v2407, %v2408
        %v2410 = vsel %vm621, %v2118, 0.0
        %v2411 = vsel %vm621, %v2198, 0.0
        %v2412 = vadd.f32 %v2410, %v2411
        %v2413 = vsel %vm621, %v2278, 0.0
        %v2414 = vadd.f32 %v2412, %v2413
        %v2415 = vsel %vm621, %v2358, 0.0
        %v2416 = vadd.f32 %v2414, %v2415
        %v2418 = vlaneseq
        %v2419 = vshrl.u32 %v2418, 7
        %v2420 = vsub.s32 0, %v2419
        %v2421 = vrot.slane %v608, %v2420
        %v2423 = vadd.f32 %v2367, %v2421
        %v2424 = vadd.f32 %v2374, %v2421
        %v2425 = vadd.f32 %v2381, %v2421
        %v2426 = vadd.f32 %v2388, %v2421
        %v2427 = vadd.f32 %v2395, %v2421
        %v2428 = vadd.f32 %v2402, %v2421
        %v2429 = vadd.f32 %v2409, %v2421
        %v2430 = vadd.f32 %v2416, %v2421
        %v2431 = vadd.f32 %v589, %v2423
        %v2432 = vadd.f32 %v590, %v2424
        %v2433 = vadd.f32 %v591, %v2425
        %v2434 = vadd.f32 %v592, %v2426
        %v2435 = vadd.f32 %v593, %v2427
        %v2436 = vadd.f32 %v594, %v2428
        %v2437 = vadd.f32 %v595, %v2429
        %v2438 = vadd.f32 %v596, %v2430
        %v2439 = vld [vmem:[%s587] sm:$0x1]
        %v2440 = vld [vmem:[%s8] sm:$0x1]
        %v2441 = vld [vmem:[%s9] sm:$0x1]
        %v2442 = vld [vmem:[%s10] sm:$0xf]
        %v2443 = vld [vmem:[%s10 + $0x4] sm:$0xf]
        %v2444 = vld [vmem:[%s10 + $0x8] sm:$0xf]
        %v2445 = vld [vmem:[%s10 + $0xc] sm:$0xf]
        %v2446 = vld [vmem:[%s10 + $0x10] sm:$0xf]
        %v2447 = vld [vmem:[%s10 + $0x14] sm:$0xf]
        %v2448 = vld [vmem:[%s10 + $0x18] sm:$0xf]
        %v2449 = vld [vmem:[%s10 + $0x1c] sm:$0xf]
        %v2450 = vld [vmem:[%s10 + $0x20] sm:$0xf]
        %v2451 = vld [vmem:[%s10 + $0x24] sm:$0xf]
        %v2452 = vld [vmem:[%s10 + $0x28] sm:$0xf]
        %v2453 = vld [vmem:[%s10 + $0x2c] sm:$0xf]
        %v2454 = vld [vmem:[%s10 + $0x30] sm:$0xf]
        %v2455 = vld [vmem:[%s10 + $0x34] sm:$0xf]
        %v2456 = vld [vmem:[%s10 + $0x38] sm:$0xf]
        %v2457 = vld [vmem:[%s10 + $0x3c] sm:$0xf]
        %v2458 = vld [vmem:[%s10 + $0x40] sm:$0xf]
        %v2459 = vld [vmem:[%s10 + $0x44] sm:$0xf]
        %v2460 = vld [vmem:[%s10 + $0x48] sm:$0xf]
        %v2461 = vld [vmem:[%s10 + $0x4c] sm:$0xf]
        %v2462 = vld [vmem:[%s10 + $0x50] sm:$0xf]
        %v2463 = vld [vmem:[%s10 + $0x54] sm:$0xf]
        %v2464 = vld [vmem:[%s10 + $0x58] sm:$0xf]
        %v2465 = vld [vmem:[%s10 + $0x5c] sm:$0xf]
        %v2466 = vld [vmem:[%s10 + $0x60] sm:$0xf]
        %v2467 = vld [vmem:[%s10 + $0x64] sm:$0xf]
        %v2468 = vld [vmem:[%s10 + $0x68] sm:$0xf]
        %v2469 = vld [vmem:[%s10 + $0x6c] sm:$0xf]
        %v2470 = vld [vmem:[%s10 + $0x70] sm:$0xf]
        %v2471 = vld [vmem:[%s10 + $0x74] sm:$0xf]
        %v2472 = vld [vmem:[%s10 + $0x78] sm:$0xf]
        %v2473 = vld [vmem:[%s10 + $0x7c] sm:$0xf]
        %v2474 = vld [vmem:[%s10 + $0x80] sm:$0xf]
        %v2475 = vld [vmem:[%s10 + $0x84] sm:$0xf]
        %v2476 = vld [vmem:[%s10 + $0x88] sm:$0xf]
        %v2477 = vld [vmem:[%s10 + $0x8c] sm:$0xf]
        %v2478 = vld [vmem:[%s11] sm:$0x1]
        %v2479 = vld [vmem:[%s12] sm:$0x1]
        %v2480 = vld [vmem:[%s13] sm:$0x1]
        %v2481 = vld [vmem:[%s14] sm:$0xf]
        %v2482 = vld [vmem:[%s14 + $0x4] sm:$0xf]
        %v2483 = vld [vmem:[%s14 + $0x8] sm:$0xf]
        %v2484 = vld [vmem:[%s14 + $0xc] sm:$0xf]
        %v2485 = vld [vmem:[%s14 + $0x10] sm:$0xf]
        %v2486 = vld [vmem:[%s14 + $0x14] sm:$0xf]
        %v2487 = vld [vmem:[%s14 + $0x18] sm:$0xf]
        %v2488 = vld [vmem:[%s14 + $0x1c] sm:$0xf]
        %v2489 = vld [vmem:[%s14 + $0x20] sm:$0xf]
        %v2490 = vld [vmem:[%s14 + $0x24] sm:$0xf]
        %v2491 = vld [vmem:[%s14 + $0x28] sm:$0xf]
        %v2492 = vld [vmem:[%s14 + $0x2c] sm:$0xf]
        %v2493 = vld [vmem:[%s14 + $0x30] sm:$0xf]
        %v2494 = vld [vmem:[%s14 + $0x34] sm:$0xf]
        %v2495 = vld [vmem:[%s14 + $0x38] sm:$0xf]
        %v2496 = vld [vmem:[%s14 + $0x3c] sm:$0xf]
        %v2497 = vld [vmem:[%s14 + $0x40] sm:$0xf]
        %v2498 = vld [vmem:[%s14 + $0x44] sm:$0xf]
        %v2499 = vld [vmem:[%s14 + $0x48] sm:$0xf]
        %v2500 = vld [vmem:[%s14 + $0x4c] sm:$0xf]
        %v2501 = vld [vmem:[%s14 + $0x50] sm:$0xf]
        %v2502 = vld [vmem:[%s14 + $0x54] sm:$0xf]
        %v2503 = vld [vmem:[%s14 + $0x58] sm:$0xf]
        %v2504 = vld [vmem:[%s14 + $0x5c] sm:$0xf]
        %v2505 = vld [vmem:[%s14 + $0x60] sm:$0xf]
        %v2506 = vld [vmem:[%s14 + $0x64] sm:$0xf]
        %v2507 = vld [vmem:[%s14 + $0x68] sm:$0xf]
        %v2508 = vld [vmem:[%s14 + $0x6c] sm:$0xf]
        %v2509 = vld [vmem:[%s14 + $0x70] sm:$0xf]
        %v2510 = vld [vmem:[%s14 + $0x74] sm:$0xf]
        %v2511 = vld [vmem:[%s14 + $0x78] sm:$0xf]
        %v2512 = vld [vmem:[%s14 + $0x7c] sm:$0xf]
        %v2513 = vld [vmem:[%s14 + $0x80] sm:$0xf]
        %v2514 = vld [vmem:[%s14 + $0x84] sm:$0xf]
        %v2515 = vld [vmem:[%s14 + $0x88] sm:$0xf]
        %v2516 = vld [vmem:[%s14 + $0x8c] sm:$0xf]
        %v2517 = vld [vmem:[%s15] sm:$0x1]
        %v2518 = vld [vmem:[%s16] sm:$0xf]
        %v2519 = vld [vmem:[%s16 + $0x4] sm:$0xf]
        %v2520 = vld [vmem:[%s16 + $0x8] sm:$0xf]
        %v2521 = vld [vmem:[%s16 + $0xc] sm:$0xf]
        %v2522 = vld [vmem:[%s17] sm:$0x1]
        %v2523 = vsel %vm621, %v2431, 0.0
        %v2524 = vsel %vm621, %v2432, 0.0
        %v2525 = vadd.f32 %v2523, %v2524
        %v2526 = vsel %vm621, %v2433, 0.0
        %v2527 = vadd.f32 %v2525, %v2526
        %v2528 = vsel %vm621, %v2434, 0.0
        %v2529 = vadd.f32 %v2527, %v2528
        %v2530 = vsel %vm621, %v2435, 0.0
        %v2531 = vadd.f32 %v2529, %v2530
        %v2532 = vsel %vm621, %v2436, 0.0
        %v2533 = vadd.f32 %v2531, %v2532
        %v2534 = vsel %vm621, %v2437, 0.0
        %v2535 = vadd.f32 %v2533, %v2534
        %v2536 = vsel %vm621, %v2438, 0.0
        %v2537 = vadd.f32 %v2535, %v2536
        %v2538 = vrot.slane %v2537, 4
        %v2539 = vadd.f32 %v2537, %v2538
        %v2540 = vrot.slane %v2539, 2
        %v2541 = vadd.f32 %v2539, %v2540
        %v2542 = vrot.slane %v2541, 1
        %v2543 = vadd.f32 %v2541, %v2542
        %v2544 = vmul.f32 %v2431, %v2431
        %v2545 = vmul.f32 %v2432, %v2432
        %v2546 = vmul.f32 %v2433, %v2433
        %v2547 = vmul.f32 %v2434, %v2434
        %v2548 = vmul.f32 %v2435, %v2435
        %v2549 = vmul.f32 %v2436, %v2436
        %v2550 = vmul.f32 %v2437, %v2437
        %v2551 = vmul.f32 %v2438, %v2438
        %v2552 = vsel %vm621, %v2544, 0.0
        %v2553 = vsel %vm621, %v2545, 0.0
        %v2554 = vadd.f32 %v2552, %v2553
        %v2555 = vsel %vm621, %v2546, 0.0
        %v2556 = vadd.f32 %v2554, %v2555
        %v2557 = vsel %vm621, %v2547, 0.0
        %v2558 = vadd.f32 %v2556, %v2557
        %v2559 = vsel %vm621, %v2548, 0.0
        %v2560 = vadd.f32 %v2558, %v2559
        %v2561 = vsel %vm621, %v2549, 0.0
        %v2562 = vadd.f32 %v2560, %v2561
        %v2563 = vsel %vm621, %v2550, 0.0
        %v2564 = vadd.f32 %v2562, %v2563
        %v2565 = vsel %vm621, %v2551, 0.0
        %v2566 = vadd.f32 %v2564, %v2565
        %v2567 = vrot.slane %v2566, 4
        %v2568 = vadd.f32 %v2566, %v2567
        %v2569 = vrot.slane %v2568, 2
        %v2570 = vadd.f32 %v2568, %v2569
        %v2571 = vrot.slane %v2570, 1
        %v2572 = vadd.f32 %v2570, %v2571
        %v2573 = vmul.f32 %v620, %v2543
        %v2574 = vsel %vm621, %v2573, 0.0
        %2575 = vadd.xlane.f32.xlu0 %v2574
        %v2576 = vpop.xlane.xlu0 %2575
        %v2577 = vmul.f32 %v620, %v2572
        %v2578 = vsel %vm621, %v2577, 0.0
        %2579 = vadd.xlane.f32.xlu0 %v2578
        %v2580 = vpop.xlane.xlu0 %2579
        %v2581 = vmul.f32 %v2576, %v680
        %v2582 = vmul.f32 %v2580, %v680
        %v2583 = vmul.f32 %v2581, %v2581
        %v2584 = vsub.f32 %v2582, %v2583
        %v2585 = vadd.f32 %v2584, 1e-05
        %v2586 = vrsqrt.pop %v2585
        %v2587 = vmul.f32 %v620, %v2581
        %v2588 = vsel %vm621, %v2587, 0.0
        %v2589 = vrot.slane %v2588, 4
        %v2590 = vadd.f32 %v2588, %v2589
        %v2591 = vrot.slane %v2590, 2
        %v2592 = vadd.f32 %v2590, %v2591
        %v2593 = vrot.slane %v2592, 1
        %v2594 = vadd.f32 %v2592, %v2593
        %v2595 = vmul.f32 %v620, %v2586
        %v2596 = vsel %vm621, %v2595, 0.0
        %v2597 = vrot.slane %v2596, 4
        %v2598 = vadd.f32 %v2596, %v2597
        %v2599 = vrot.slane %v2598, 2
        %v2600 = vadd.f32 %v2598, %v2599
        %v2601 = vrot.slane %v2600, 1
        %v2602 = vadd.f32 %v2600, %v2601
        %v2603 = vsub.f32 %v2431, %v2594
        %v2604 = vsub.f32 %v2432, %v2594
        %v2605 = vsub.f32 %v2433, %v2594
        %v2606 = vsub.f32 %v2434, %v2594
        %v2607 = vsub.f32 %v2435, %v2594
        %v2608 = vsub.f32 %v2436, %v2594
        %v2609 = vsub.f32 %v2437, %v2594
        %v2610 = vsub.f32 %v2438, %v2594
        %v2611 = vmul.f32 %v2603, %v2602
        %v2612 = vmul.f32 %v2604, %v2602
        %v2613 = vmul.f32 %v2605, %v2602
        %v2614 = vmul.f32 %v2606, %v2602
        %v2615 = vmul.f32 %v2607, %v2602
        %v2616 = vmul.f32 %v2608, %v2602
        %v2617 = vmul.f32 %v2609, %v2602
        %v2618 = vmul.f32 %v2610, %v2602
        %v2620 = vlaneseq
        %v2621 = vshrl.u32 %v2620, 7
        %v2622 = vsub.s32 0, %v2621
        %v2623 = vrot.slane %v2440, %v2622
        %v2625 = vmul.f32 %v2611, %v2623
        %v2626 = vmul.f32 %v2612, %v2623
        %v2627 = vmul.f32 %v2613, %v2623
        %v2628 = vmul.f32 %v2614, %v2623
        %v2629 = vmul.f32 %v2615, %v2623
        %v2630 = vmul.f32 %v2616, %v2623
        %v2631 = vmul.f32 %v2617, %v2623
        %v2632 = vmul.f32 %v2618, %v2623
        %v2634 = vlaneseq
        %v2635 = vshrl.u32 %v2634, 7
        %v2636 = vsub.s32 0, %v2635
        %v2637 = vrot.slane %v2441, %v2636
        %v2639 = vadd.f32 %v2625, %v2637
        %v2640 = vadd.f32 %v2626, %v2637
        %v2641 = vadd.f32 %v2627, %v2637
        %v2642 = vadd.f32 %v2628, %v2637
        %v2643 = vadd.f32 %v2629, %v2637
        %v2644 = vadd.f32 %v2630, %v2637
        %v2645 = vadd.f32 %v2631, %v2637
        %v2646 = vadd.f32 %v2632, %v2637
        %v2647 = vxor.u32 %v2639, 2147483648
        %v2648 = vxor.u32 %v2640, 2147483648
        %v2649 = vxor.u32 %v2641, 2147483648
        %v2650 = vxor.u32 %v2642, 2147483648
        %v2651 = vxor.u32 %v2643, 2147483648
        %v2652 = vxor.u32 %v2644, 2147483648
        %v2653 = vxor.u32 %v2645, 2147483648
        %v2654 = vxor.u32 %v2646, 2147483648
        %v2655 = vmul.f32 %v2647, 1.442695
        %v2656 = vpow.pop %v2655
        %v2657 = vmul.f32 %v2648, 1.442695
        %v2658 = vpow.pop %v2657
        %v2659 = vmul.f32 %v2649, 1.442695
        %v2660 = vpow.pop %v2659
        %v2661 = vmul.f32 %v2650, 1.442695
        %v2662 = vpow.pop %v2661
        %v2663 = vmul.f32 %v2651, 1.442695
        %v2664 = vpow.pop %v2663
        %v2665 = vmul.f32 %v2652, 1.442695
        %v2666 = vpow.pop %v2665
        %v2667 = vmul.f32 %v2653, 1.442695
        %v2668 = vpow.pop %v2667
        %v2669 = vmul.f32 %v2654, 1.442695
        %v2670 = vpow.pop %v2669
        %v2671 = vadd.f32 %v2656, 1.0
        %v2672 = vadd.f32 %v2658, 1.0
        %v2673 = vadd.f32 %v2660, 1.0
        %v2674 = vadd.f32 %v2662, 1.0
        %v2675 = vadd.f32 %v2664, 1.0
        %v2676 = vadd.f32 %v2666, 1.0
        %v2677 = vadd.f32 %v2668, 1.0
        %v2678 = vadd.f32 %v2670, 1.0
        %v2679 = vrcp.pop %v2671
        %v2680 = vmul.f32 1.0, %v2679
        %v2681 = vrcp.pop %v2672
        %v2682 = vmul.f32 1.0, %v2681
        %v2683 = vrcp.pop %v2673
        %v2684 = vmul.f32 1.0, %v2683
        %v2685 = vrcp.pop %v2674
        %v2686 = vmul.f32 1.0, %v2685
        %v2687 = vrcp.pop %v2675
        %v2688 = vmul.f32 1.0, %v2687
        %v2689 = vrcp.pop %v2676
        %v2690 = vmul.f32 1.0, %v2689
        %v2691 = vrcp.pop %v2677
        %v2692 = vmul.f32 1.0, %v2691
        %v2693 = vrcp.pop %v2678
        %v2694 = vmul.f32 1.0, %v2693
        %v2695 = vmul.f32 %v2639, %v2680
        %v2696 = vmul.f32 %v2640, %v2682
        %v2697 = vmul.f32 %v2641, %v2684
        %v2698 = vmul.f32 %v2642, %v2686
        %v2699 = vmul.f32 %v2643, %v2688
        %v2700 = vmul.f32 %v2644, %v2690
        %v2701 = vmul.f32 %v2645, %v2692
        %v2702 = vmul.f32 %v2646, %v2694
        %v2703 = vpack.c.bf16 %v2696, %v2695
        %v2704 = vpack.c.bf16 %v2698, %v2697
        %v2705 = vpack.c.bf16 %v2700, %v2699
        %v2706 = vpack.c.bf16 %v2702, %v2701
        %v2711 = vunpack.c.l.b16 %v2703
        %v2712 = vunpack.c.h.b16 %v2703
        %v2713 = vunpack.c.l.b16 %v2704
        %v2714 = vunpack.c.h.b16 %v2704
        %v2715 = vunpack.c.l.b16 %v2705
        %v2716 = vunpack.c.h.b16 %v2705
        %v2717 = vunpack.c.l.b16 %v2706
        %v2718 = vunpack.c.h.b16 %v2706
        %v2719 = vpack.c.b16 %v2711, %v2711
        %v2720 = vpack.c.b16 %v2712, %v2712
        %v2721 = vpack.c.b16 %v2713, %v2713
        %v2722 = vpack.c.b16 %v2714, %v2714
        %v2723 = vpack.c.b16 %v2715, %v2715
        %v2724 = vpack.c.b16 %v2716, %v2716
        %v2725 = vpack.c.b16 %v2717, %v2717
        %v2726 = vpack.c.b16 %v2718, %v2718
        %v2728 = vshrl.u32 %v2719, 16
        %v2730 = vrot.slane %v2728, 7
        %v2731 = vshll.u32 %v2719, 16
        %v2733 = vor.u32 %v2730, %v2731
        %v2735 = vshrl.u32 %v2720, 16
        %v2737 = vrot.slane %v2735, 7
        %v2738 = vshll.u32 %v2720, 16
        %v2740 = vor.u32 %v2737, %v2738
        %v2742 = vshrl.u32 %v2721, 16
        %v2744 = vrot.slane %v2742, 7
        %v2745 = vshll.u32 %v2721, 16
        %v2747 = vor.u32 %v2744, %v2745
        %v2749 = vshrl.u32 %v2722, 16
        %v2751 = vrot.slane %v2749, 7
        %v2752 = vshll.u32 %v2722, 16
        %v2754 = vor.u32 %v2751, %v2752
        %v2756 = vshrl.u32 %v2723, 16
        %v2758 = vrot.slane %v2756, 7
        %v2759 = vshll.u32 %v2723, 16
        %v2761 = vor.u32 %v2758, %v2759
        %v2763 = vshrl.u32 %v2724, 16
        %v2765 = vrot.slane %v2763, 7
        %v2766 = vshll.u32 %v2724, 16
        %v2768 = vor.u32 %v2765, %v2766
        %v2770 = vshrl.u32 %v2725, 16
        %v2772 = vrot.slane %v2770, 7
        %v2773 = vshll.u32 %v2725, 16
        %v2775 = vor.u32 %v2772, %v2773
        %v2777 = vshrl.u32 %v2726, 16
        %v2779 = vrot.slane %v2777, 7
        %v2780 = vshll.u32 %v2726, 16
        %v2782 = vor.u32 %v2779, %v2780
        %vm2791 = vcmask 1040384
        %vm2792 = vsmask.f32 256
        %vm2793 = vmand %vm2791, %vm2792
        %v2794 = vsel %vm2793, 0, %v2733
        %v2795 = vsel %vm2793, 0, %v2740
        %v2796 = vsel %vm2793, 0, %v2747
        %v2797 = vsel %vm2793, 0, %v2754
        %v2798 = vsel %vm2793, 0, %v2761
        %v2799 = vsel %vm2793, 0, %v2768
        %v2800 = vsel %vm2793, 0, %v2775
        %v2801 = vsel %vm2793, 0, %v2782
        %vm2802 = vcmask 1044480
        %vm2803 = vsmask.f32 4352
        %vm2804 = vmand %vm2802, %vm2803
        %v2805 = vsel %vm2804, %v2794, 0
        %v2806 = vsel %vm2804, %v2795, 0
        %v2807 = vsel %vm2804, %v2796, 0
        %v2808 = vsel %vm2804, %v2797, 0
        %v2809 = vsel %vm2804, %v2798, 0
        %v2810 = vsel %vm2804, %v2799, 0
        %v2811 = vsel %vm2804, %v2800, 0
        %v2812 = vsel %vm2804, %v2801, 0
        %v2814 = vshrl.u32 0, 16
        %v2816 = vshll.u32 0, 16
        %v2818 = vrot.slane %v2816, 1
        %v2819 = vor.u32 %v2814, %v2818
        %v2821 = vshrl.u32 %v2805, 16
        %v2823 = vshll.u32 %v2805, 16
        %v2825 = vrot.slane %v2823, 1
        %v2826 = vor.u32 %v2821, %v2825
        %v2828 = vshrl.u32 %v2806, 16
        %v2830 = vshll.u32 %v2806, 16
        %v2832 = vrot.slane %v2830, 1
        %v2833 = vor.u32 %v2828, %v2832
        %v2835 = vshrl.u32 %v2807, 16
        %v2837 = vshll.u32 %v2807, 16
        %v2839 = vrot.slane %v2837, 1
        %v2840 = vor.u32 %v2835, %v2839
        %v2842 = vshrl.u32 %v2808, 16
        %v2844 = vshll.u32 %v2808, 16
        %v2846 = vrot.slane %v2844, 1
        %v2847 = vor.u32 %v2842, %v2846
        %v2849 = vshrl.u32 %v2809, 16
        %v2851 = vshll.u32 %v2809, 16
        %v2853 = vrot.slane %v2851, 1
        %v2854 = vor.u32 %v2849, %v2853
        %v2856 = vshrl.u32 %v2810, 16
        %v2858 = vshll.u32 %v2810, 16
        %v2860 = vrot.slane %v2858, 1
        %v2861 = vor.u32 %v2856, %v2860
        %v2863 = vshrl.u32 %v2811, 16
        %v2865 = vshll.u32 %v2811, 16
        %v2867 = vrot.slane %v2865, 1
        %v2868 = vor.u32 %v2863, %v2867
        %2869 = vrot.lane.b32.xlu0 %v2819, 32
        %v2870 = vpop.permute.xlu0 %2869
        %2871 = vrot.lane.b32.xlu0 %v2826, 32
        %v2872 = vpop.permute.xlu0 %2871
        %2873 = vrot.lane.b32.xlu0 %v2833, 32
        %v2874 = vpop.permute.xlu0 %2873
        %2875 = vrot.lane.b32.xlu0 %v2840, 32
        %v2876 = vpop.permute.xlu0 %2875
        %2877 = vrot.lane.b32.xlu0 %v2847, 32
        %v2878 = vpop.permute.xlu0 %2877
        %2879 = vrot.lane.b32.xlu0 %v2854, 32
        %v2880 = vpop.permute.xlu0 %2879
        %2881 = vrot.lane.b32.xlu0 %v2861, 32
        %v2882 = vpop.permute.xlu0 %2881
        %2883 = vrot.lane.b32.xlu0 %v2868, 32
        %v2884 = vpop.permute.xlu0 %2883
        %v2893 = vrot.slane 0, 1
        %v2894 = vrot.slane %v2805, 1
        %v2895 = vrot.slane %v2806, 1
        %v2896 = vrot.slane %v2807, 1
        %v2897 = vrot.slane %v2808, 1
        %v2898 = vrot.slane %v2809, 1
        %v2899 = vrot.slane %v2810, 1
        %v2900 = vrot.slane %v2811, 1
        %2901 = vrot.lane.b32.xlu0 %v2893, 64
        %v2902 = vpop.permute.xlu0 %2901
        %2903 = vrot.lane.b32.xlu0 %v2894, 64
        %v2904 = vpop.permute.xlu0 %2903
        %2905 = vrot.lane.b32.xlu0 %v2895, 64
        %v2906 = vpop.permute.xlu0 %2905
        %2907 = vrot.lane.b32.xlu0 %v2896, 64
        %v2908 = vpop.permute.xlu0 %2907
        %2909 = vrot.lane.b32.xlu0 %v2897, 64
        %v2910 = vpop.permute.xlu0 %2909
        %2911 = vrot.lane.b32.xlu0 %v2898, 64
        %v2912 = vpop.permute.xlu0 %2911
        %2913 = vrot.lane.b32.xlu0 %v2899, 64
        %v2914 = vpop.permute.xlu0 %2913
        %2915 = vrot.lane.b32.xlu0 %v2900, 64
        %v2916 = vpop.permute.xlu0 %2915
        %2918 = vrot.lane.b32.xlu0 %v2805, 96
        %v2919 = vpop.permute.xlu0 %2918
        %2920 = vrot.lane.b32.xlu0 %v2806, 96
        %v2921 = vpop.permute.xlu0 %2920
        %2922 = vrot.lane.b32.xlu0 %v2807, 96
        %v2923 = vpop.permute.xlu0 %2922
        %2924 = vrot.lane.b32.xlu0 %v2808, 96
        %v2925 = vpop.permute.xlu0 %2924
        %2926 = vrot.lane.b32.xlu0 %v2809, 96
        %v2927 = vpop.permute.xlu0 %2926
        %2928 = vrot.lane.b32.xlu0 %v2810, 96
        %v2929 = vpop.permute.xlu0 %2928
        %2930 = vrot.lane.b32.xlu0 %v2811, 96
        %v2931 = vpop.permute.xlu0 %2930
        %2932 = vrot.lane.b32.xlu0 %v2812, 96
        %v2933 = vpop.permute.xlu0 %2932
        %v2935 = vshrl.u32 %v2812, 16
        %v2937 = vshll.u32 %v2812, 16
        %v2939 = vrot.slane %v2937, 1
        %v2940 = vor.u32 %v2935, %v2939
        %v2941 = vrot.slane %v2812, 1
        %2942 = vrot.lane.b32.xlu0 %v2894, 32
        %v2943 = vpop.permute.xlu0 %2942
        %2944 = vrot.lane.b32.xlu0 %v2895, 32
        %v2945 = vpop.permute.xlu0 %2944
        %2946 = vrot.lane.b32.xlu0 %v2896, 32
        %v2947 = vpop.permute.xlu0 %2946
        %2948 = vrot.lane.b32.xlu0 %v2897, 32
        %v2949 = vpop.permute.xlu0 %2948
        %2950 = vrot.lane.b32.xlu0 %v2898, 32
        %v2951 = vpop.permute.xlu0 %2950
        %2952 = vrot.lane.b32.xlu0 %v2899, 32
        %v2953 = vpop.permute.xlu0 %2952
        %2954 = vrot.lane.b32.xlu0 %v2900, 32
        %v2955 = vpop.permute.xlu0 %2954
        %2956 = vrot.lane.b32.xlu0 %v2941, 32
        %v2957 = vpop.permute.xlu0 %2956
        %2958 = vrot.lane.b32.xlu0 %v2806, 64
        %v2959 = vpop.permute.xlu0 %2958
        %2960 = vrot.lane.b32.xlu0 %v2807, 64
        %v2961 = vpop.permute.xlu0 %2960
        %2962 = vrot.lane.b32.xlu0 %v2808, 64
        %v2963 = vpop.permute.xlu0 %2962
        %2964 = vrot.lane.b32.xlu0 %v2809, 64
        %v2965 = vpop.permute.xlu0 %2964
        %2966 = vrot.lane.b32.xlu0 %v2810, 64
        %v2967 = vpop.permute.xlu0 %2966
        %2968 = vrot.lane.b32.xlu0 %v2811, 64
        %v2969 = vpop.permute.xlu0 %2968
        %2970 = vrot.lane.b32.xlu0 %v2812, 64
        %v2971 = vpop.permute.xlu0 %2970
        %2972 = vrot.lane.b32.xlu0 0, 64
        %v2973 = vpop.permute.xlu0 %2972
        %2974 = vrot.lane.b32.xlu0 %v2833, 96
        %v2975 = vpop.permute.xlu0 %2974
        %2976 = vrot.lane.b32.xlu0 %v2840, 96
        %v2977 = vpop.permute.xlu0 %2976
        %2978 = vrot.lane.b32.xlu0 %v2847, 96
        %v2979 = vpop.permute.xlu0 %2978
        %2980 = vrot.lane.b32.xlu0 %v2854, 96
        %v2981 = vpop.permute.xlu0 %2980
        %2982 = vrot.lane.b32.xlu0 %v2861, 96
        %v2983 = vpop.permute.xlu0 %2982
        %2984 = vrot.lane.b32.xlu0 %v2868, 96
        %v2985 = vpop.permute.xlu0 %2984
        %2986 = vrot.lane.b32.xlu0 %v2940, 96
        %v2987 = vpop.permute.xlu0 %2986
        %2988 = vrot.lane.b32.xlu0 %v2819, 96
        %v2989 = vpop.permute.xlu0 %2988
        %v2991 = vsel %vm621, 0, %v2870
        %v2993 = vsel %vm621, %v2805, %v2872
        %v2995 = vsel %vm621, %v2806, %v2874
        %v2997 = vsel %vm621, %v2807, %v2876
        %v2999 = vsel %vm621, %v2808, %v2878
        %v3001 = vsel %vm621, %v2809, %v2880
        %v3003 = vsel %vm621, %v2810, %v2882
        %v3005 = vsel %vm621, %v2811, %v2884
        %v3007 = vsel %vm1299, %v2991, %v2902
        %v3009 = vsel %vm1299, %v2993, %v2904
        %v3011 = vsel %vm1299, %v2995, %v2906
        %v3013 = vsel %vm1299, %v2997, %v2908
        %v3015 = vsel %vm1299, %v2999, %v2910
        %v3017 = vsel %vm1299, %v3001, %v2912
        %v3019 = vsel %vm1299, %v3003, %v2914
        %v3021 = vsel %vm1299, %v3005, %v2916
        %vm3022 = vcmask 785408
        %v3024 = vsel %vm3022, %v3007, %v2919
        %v3026 = vsel %vm3022, %v3009, %v2921
        %v3028 = vsel %vm3022, %v3011, %v2923
        %v3030 = vsel %vm3022, %v3013, %v2925
        %v3032 = vsel %vm3022, %v3015, %v2927
        %v3034 = vsel %vm3022, %v3017, %v2929
        %v3036 = vsel %vm3022, %v3019, %v2931
        %v3038 = vsel %vm3022, %v3021, %v2933
        %v3041 = vsel %vm621, %v2826, %v2943
        %v3044 = vsel %vm621, %v2833, %v2945
        %v3047 = vsel %vm621, %v2840, %v2947
        %v3050 = vsel %vm621, %v2847, %v2949
        %v3053 = vsel %vm621, %v2854, %v2951
        %v3056 = vsel %vm621, %v2861, %v2953
        %v3059 = vsel %vm621, %v2868, %v2955
        %v3062 = vsel %vm621, %v2940, %v2957
        %v3064 = vsel %vm1299, %v3041, %v2959
        %v3066 = vsel %vm1299, %v3044, %v2961
        %v3068 = vsel %vm1299, %v3047, %v2963
        %v3070 = vsel %vm1299, %v3050, %v2965
        %v3072 = vsel %vm1299, %v3053, %v2967
        %v3074 = vsel %vm1299, %v3056, %v2969
        %v3076 = vsel %vm1299, %v3059, %v2971
        %v3078 = vsel %vm1299, %v3062, %v2973
        %v3080 = vsel %vm3022, %v3064, %v2975
        %v3082 = vsel %vm3022, %v3066, %v2977
        %v3084 = vsel %vm3022, %v3068, %v2979
        %v3086 = vsel %vm3022, %v3070, %v2981
        %v3088 = vsel %vm3022, %v3072, %v2983
        %v3090 = vsel %vm3022, %v3074, %v2985
        %v3092 = vsel %vm3022, %v3076, %v2987
        %v3094 = vsel %vm3022, %v3078, %v2989
        %v3111 = vunpack.c.l.b16 %v3024
        %v3112 = vunpack.c.l.b16 %v3080
        %v3113 = vunpack.c.l.b16 %v2895
        %v3114 = vunpack.c.l.b16 %v3026
        %v3115 = vunpack.c.l.b16 %v3082
        %v3116 = vunpack.c.l.b16 %v2896
        %v3117 = vunpack.c.l.b16 %v3028
        %v3118 = vunpack.c.l.b16 %v3084
        %v3119 = vunpack.c.l.b16 %v2897
        %v3120 = vunpack.c.l.b16 %v3030
        %v3121 = vunpack.c.l.b16 %v3086
        %v3122 = vunpack.c.l.b16 %v2898
        %v3123 = vunpack.c.l.b16 %v3032
        %v3124 = vunpack.c.l.b16 %v3088
        %v3125 = vunpack.c.l.b16 %v2899
        %v3126 = vunpack.c.l.b16 %v3034
        %v3127 = vunpack.c.l.b16 %v3090
        %v3128 = vunpack.c.l.b16 %v2900
        %v3129 = vunpack.c.l.b16 %v3036
        %v3130 = vunpack.c.l.b16 %v3092
        %v3131 = vunpack.c.l.b16 %v2941
        %v3132 = vunpack.c.l.b16 %v3038
        %v3133 = vunpack.c.l.b16 %v3094
        %v3134 = vunpack.c.l.b16 %v2893
        %v3136 = vlaneseq
        %v3137 = vshrl.u32 %v3136, 7
        %v3138 = vsub.s32 0, %v3137
        %v3139 = vrot.slane %v2478, %v3138
        %v3141 = vpack.c.b16 %v3114, %v3111
        %v3142 = vpack.c.b16 %v3115, %v3112
        %v3143 = vpack.c.b16 %v3116, %v3113
        %v3144 = vpack.c.b16 %v3120, %v3117
        %v3145 = vpack.c.b16 %v3121, %v3118
        %v3146 = vpack.c.b16 %v3122, %v3119
        %v3147 = vpack.c.b16 %v3126, %v3123
        %v3148 = vpack.c.b16 %v3127, %v3124
        %v3149 = vpack.c.b16 %v3128, %v3125
        %v3150 = vpack.c.b16 %v3132, %v3129
        %v3151 = vpack.c.b16 %v3133, %v3130
        %v3152 = vpack.c.b16 %v3134, %v3131
        %v3197 = vunpack.c.l.b16 %v2442
        %v3198 = vunpack.c.l.b16 %v2443
        %v3199 = vunpack.c.l.b16 %v2444
        %v3200 = vunpack.c.l.b16 %v2445
        %v3201 = vunpack.c.l.b16 %v2446
        %v3202 = vunpack.c.l.b16 %v2447
        %v3203 = vunpack.c.l.b16 %v2448
        %v3204 = vunpack.c.l.b16 %v2449
        %v3205 = vunpack.c.l.b16 %v2450
        %v3206 = vunpack.c.l.b16 %v2451
        %v3207 = vunpack.c.l.b16 %v2452
        %v3208 = vunpack.c.l.b16 %v2453
        %v3209 = vunpack.c.l.b16 %v2454
        %v3210 = vunpack.c.l.b16 %v2455
        %v3211 = vunpack.c.l.b16 %v2456
        %v3212 = vunpack.c.l.b16 %v2457
        %v3213 = vunpack.c.l.b16 %v2458
        %v3214 = vunpack.c.l.b16 %v2459
        %v3215 = vunpack.c.l.b16 %v2460
        %v3216 = vunpack.c.l.b16 %v2461
        %v3217 = vunpack.c.l.b16 %v2462
        %v3218 = vunpack.c.l.b16 %v2463
        %v3219 = vunpack.c.l.b16 %v2464
        %v3220 = vunpack.c.l.b16 %v2465
        %v3221 = vunpack.c.l.b16 %v2466
        %v3222 = vunpack.c.l.b16 %v2467
        %v3223 = vunpack.c.l.b16 %v2468
        %v3224 = vunpack.c.l.b16 %v2469
        %v3225 = vunpack.c.l.b16 %v2470
        %v3226 = vunpack.c.l.b16 %v2471
        %v3227 = vunpack.c.l.b16 %v2472
        %v3228 = vunpack.c.l.b16 %v2473
        %v3229 = vunpack.c.l.b16 %v2474
        %v3230 = vunpack.c.l.b16 %v2475
        %v3231 = vunpack.c.l.b16 %v2476
        %v3232 = vunpack.c.l.b16 %v2477
        %v3233 = vpack.c.b16 %v3198, %v3197
        %v3234 = vpack.c.b16 %v3200, %v3199
        %v3235 = vpack.c.b16 %v3202, %v3201
        %v3236 = vpack.c.b16 %v3204, %v3203
        %v3237 = vpack.c.b16 %v3206, %v3205
        %v3238 = vpack.c.b16 %v3208, %v3207
        %v3239 = vpack.c.b16 %v3210, %v3209
        %v3240 = vpack.c.b16 %v3212, %v3211
        %v3241 = vpack.c.b16 %v3214, %v3213
        %v3242 = vpack.c.b16 %v3216, %v3215
        %v3243 = vpack.c.b16 %v3218, %v3217
        %v3244 = vpack.c.b16 %v3220, %v3219
        %v3245 = vpack.c.b16 %v3222, %v3221
        %v3246 = vpack.c.b16 %v3224, %v3223
        %v3247 = vpack.c.b16 %v3226, %v3225
        %v3248 = vpack.c.b16 %v3228, %v3227
        %v3249 = vpack.c.b16 %v3230, %v3229
        %v3250 = vpack.c.b16 %v3232, %v3231
        %v3270 = vsel %vm621, %v3143, 0
        %v3273 = vsel %vm621, %v3146, 0
        %v3276 = vsel %vm621, %v3149, 0
        %v3279 = vsel %vm621, %v3152, 0
        %3281 = vmatprep.subr.bf16.mxu0 0
        %3282 = vmatpush1.bf16.msra.mxu0 %v3233
        %3283 = vmatprep.subr.bf16.mxu0 0
        %3284 = vmatpush1.bf16.msra.mxu0 %v3234
        %3285 = vmatprep.subr.bf16.mxu0 0
        %3286 = vmatpush1.bf16.msra.mxu0 %v3235
        %3287 = vmatprep.subr.bf16.mxu0 0
        %3288 = vmatpush1.bf16.msra.mxu0 %v3236
        %3289 = vmatprep.subr.bf16.mxu0 0
        %3290 = vmatpush1.bf16.msra.mxu0 %v3237
        %3291 = vmatprep.subr.bf16.mxu0 0
        %3292 = vmatpush1.bf16.msra.mxu0 %v3238
        %3293 = vmatprep.subr.bf16.mxu0 0
        %3294 = vmatpush1.bf16.msra.mxu0 %v3239
        %3295 = vmatprep.subr.bf16.mxu0 0
        %3296 = vmatpush1.bf16.msra.mxu0 %v3240
        %3297 = vmatprep.subr.bf16.mxu0 0
        %3298 = vmatpush1.bf16.msra.mxu0 %v3241
        %3299 = vmatprep.subr.bf16.mxu0 0
        %3300 = vmatpush1.bf16.msra.mxu0 %v3242
        %3301 = vmatprep.subr.bf16.mxu0 0
        %3302 = vmatpush1.bf16.msra.mxu0 %v3243
        %3303 = vmatprep.subr.bf16.mxu0 0
        %3304 = vmatpush1.bf16.msra.mxu0 %v3244
        %3305 = vmatprep.subr.bf16.mxu0 0
        %3306 = vmatpush1.bf16.msra.mxu0 %v3245
        %3307 = vmatprep.subr.bf16.mxu0 0
        %3308 = vmatpush1.bf16.msra.mxu0 %v3246
        %3309 = vmatprep.subr.bf16.mxu0 0
        %3310 = vmatpush1.bf16.msra.mxu0 %v3247
        %3311 = vmatprep.subr.bf16.mxu0 0
        %3312 = vmatpush1.bf16.msra.mxu0 %v3248
        %3313 = vmatprep.mubr.bf16.mxu0 %v3142
        %3314 = vmatmul.mubr.bf16.gmra.mrb[0].mxu0 %v3141
        %v3315 = vpop.f32.mrb[0].mxu0
        %v3316 = vadd.f32 %v3139, %v3315
        %v3317 = vpop.f32.mrb[0].mxu0
        %v3318 = vpop.f32.mrb[0].mxu0
        %v3319 = vadd.f32 %v3139, %v3318
        %v3320 = vpop.f32.mrb[0].mxu0
        %3321 = vmatprep.mubr.bf16.mxu0 %v3145
        %3322 = vmatmul.mubr.bf16.gmra.mrb[0].mxu0 %v3144
        %v3323 = vpop.f32.mrb[0].mxu0
        %v3324 = vadd.f32 %v3139, %v3323
        %v3325 = vpop.f32.mrb[0].mxu0
        %v3326 = vpop.f32.mrb[0].mxu0
        %v3327 = vadd.f32 %v3139, %v3326
        %v3328 = vpop.f32.mrb[0].mxu0
        %3329 = vmatprep.mubr.bf16.mxu0 %v3148
        %3330 = vmatmul.mubr.bf16.gmra.mrb[0].mxu0 %v3147
        %v3331 = vpop.f32.mrb[0].mxu0
        %v3332 = vadd.f32 %v3139, %v3331
        %v3333 = vpop.f32.mrb[0].mxu0
        %v3334 = vpop.f32.mrb[0].mxu0
        %v3335 = vadd.f32 %v3139, %v3334
        %v3336 = vpop.f32.mrb[0].mxu0
        %3337 = vmatprep.mubr.bf16.mxu0 %v3151
        %3338 = vmatmul.mubr.bf16.gmra.mrb[0].mxu0 %v3150
        %v3339 = vpop.f32.mrb[0].mxu0
        %v3340 = vadd.f32 %v3139, %v3339
        %v3341 = vpop.f32.mrb[0].mxu0
        %v3342 = vpop.f32.mrb[0].mxu0
        %v3343 = vadd.f32 %v3139, %v3342
        %v3344 = vpop.f32.mrb[0].mxu0
        %3345 = vdwg.mxu0
        %3346 = vmatprep.subr.bf16.mxu0 0
        %3347 = vmatpush1.bf16.msra.mxu0 %v3249
        %3348 = vmatprep.subr.bf16.mxu0 0
        %3349 = vmatpush1.bf16.msra.mxu0 %v3250
        %3350 = vmatprep.subr.bf16.mxu0 0
        %3351 = vmatpush1.bf16.msra.mxu0 0
        %3352 = vmatprep.subr.bf16.mxu0 0
        %3353 = vmatpush1.bf16.msra.mxu0 0
        %3354 = vmatprep.subr.bf16.mxu0 0
        %3355 = vmatpush1.bf16.msra.mxu0 0
        %3356 = vmatprep.subr.bf16.mxu0 0
        %3357 = vmatpush1.bf16.msra.mxu0 0
        %3358 = vmatprep.subr.bf16.mxu0 0
        %3359 = vmatpush1.bf16.msra.mxu0 0
        %3360 = vmatprep.subr.bf16.mxu0 0
        %3361 = vmatpush1.bf16.msra.mxu0 0
        %3362 = vmatprep.subr.bf16.mxu0 0
        %3363 = vmatpush1.bf16.msra.mxu0 0
        %3364 = vmatprep.subr.bf16.mxu0 0
        %3365 = vmatpush1.bf16.msra.mxu0 0
        %3366 = vmatprep.subr.bf16.mxu0 0
        %3367 = vmatpush1.bf16.msra.mxu0 0
        %3368 = vmatprep.subr.bf16.mxu0 0
        %3369 = vmatpush1.bf16.msra.mxu0 0
        %3370 = vmatprep.subr.bf16.mxu0 0
        %3371 = vmatpush1.bf16.msra.mxu0 0
        %3372 = vmatprep.subr.bf16.mxu0 0
        %3373 = vmatpush1.bf16.msra.mxu0 0
        %3374 = vmatprep.subr.bf16.mxu0 0
        %3375 = vmatpush1.bf16.msra.mxu0 0
        %3376 = vmatprep.subr.bf16.mxu0 0
        %3377 = vmatpush1.bf16.msra.mxu0 0
        %3378 = vmatprep.mubr.bf16.mxu0 0
        %3379 = vmatmul.mubr.bf16.gmra.mrb[0].mxu0 %v3270
        %v3380 = vpop.f32.mrb[0].mxu0
        %v3381 = vadd.f32 %v3316, %v3380
        %v3382 = vpop.f32.mrb[0].mxu0
        %v3383 = vpop.f32.mrb[0].mxu0
        %v3384 = vadd.f32 %v3319, %v3383
        %v3385 = vpop.f32.mrb[0].mxu0
        %3386 = vmatprep.mubr.bf16.mxu0 0
        %3387 = vmatmul.mubr.bf16.gmra.mrb[0].mxu0 %v3273
        %v3388 = vpop.f32.mrb[0].mxu0
        %v3389 = vadd.f32 %v3324, %v3388
        %v3390 = vpop.f32.mrb[0].mxu0
        %v3391 = vpop.f32.mrb[0].mxu0
        %v3392 = vadd.f32 %v3327, %v3391
        %v3393 = vpop.f32.mrb[0].mxu0
        %3394 = vmatprep.mubr.bf16.mxu0 0
        %3395 = vmatmul.mubr.bf16.gmra.mrb[0].mxu0 %v3276
        %v3396 = vpop.f32.mrb[0].mxu0
        %v3397 = vadd.f32 %v3332, %v3396
        %v3398 = vpop.f32.mrb[0].mxu0
        %v3399 = vpop.f32.mrb[0].mxu0
        %v3400 = vadd.f32 %v3335, %v3399
        %v3401 = vpop.f32.mrb[0].mxu0
        %3402 = vmatprep.mubr.bf16.mxu0 0
        %3403 = vmatmul.mubr.bf16.gmra.mrb[0].mxu0 %v3279
        %v3404 = vpop.f32.mrb[0].mxu0
        %v3405 = vadd.f32 %v3340, %v3404
        %v3406 = vpop.f32.mrb[0].mxu0
        %v3407 = vpop.f32.mrb[0].mxu0
        %v3408 = vadd.f32 %v3343, %v3407
        %v3409 = vpop.f32.mrb[0].mxu0
        %3410 = vdwg.mxu0
        %v3412 = vlaneseq
        %v3413 = vshrl.u32 %v3412, 7
        %v3414 = vsub.s32 0, %v3413
        %v3415 = vrot.slane %v2439, %v3414
        %v3417 = vadd.f32 %v3381, %v3415
        %v3418 = vadd.f32 %v3384, %v3415
        %v3419 = vadd.f32 %v3389, %v3415
        %v3420 = vadd.f32 %v3392, %v3415
        %v3421 = vadd.f32 %v3397, %v3415
        %v3422 = vadd.f32 %v3400, %v3415
        %v3423 = vadd.f32 %v3405, %v3415
        %v3424 = vadd.f32 %v3408, %v3415
        %v3425 = vsel %vm621, %v3417, 0.0
        %v3426 = vsel %vm621, %v3418, 0.0
        %v3427 = vadd.f32 %v3425, %v3426
        %v3428 = vsel %vm621, %v3419, 0.0
        %v3429 = vadd.f32 %v3427, %v3428
        %v3430 = vsel %vm621, %v3420, 0.0
        %v3431 = vadd.f32 %v3429, %v3430
        %v3432 = vsel %vm621, %v3421, 0.0
        %v3433 = vadd.f32 %v3431, %v3432
        %v3434 = vsel %vm621, %v3422, 0.0
        %v3435 = vadd.f32 %v3433, %v3434
        %v3436 = vsel %vm621, %v3423, 0.0
        %v3437 = vadd.f32 %v3435, %v3436
        %v3438 = vsel %vm621, %v3424, 0.0
        %v3439 = vadd.f32 %v3437, %v3438
        %v3440 = vrot.slane %v3439, 4
        %v3441 = vadd.f32 %v3439, %v3440
        %v3442 = vrot.slane %v3441, 2
        %v3443 = vadd.f32 %v3441, %v3442
        %v3444 = vrot.slane %v3443, 1
        %v3445 = vadd.f32 %v3443, %v3444
        %v3446 = vmul.f32 %v3417, %v3417
        %v3447 = vmul.f32 %v3418, %v3418
        %v3448 = vmul.f32 %v3419, %v3419
        %v3449 = vmul.f32 %v3420, %v3420
        %v3450 = vmul.f32 %v3421, %v3421
        %v3451 = vmul.f32 %v3422, %v3422
        %v3452 = vmul.f32 %v3423, %v3423
        %v3453 = vmul.f32 %v3424, %v3424
        %v3454 = vsel %vm621, %v3446, 0.0
        %v3455 = vsel %vm621, %v3447, 0.0
        %v3456 = vadd.f32 %v3454, %v3455
        %v3457 = vsel %vm621, %v3448, 0.0
        %v3458 = vadd.f32 %v3456, %v3457
        %v3459 = vsel %vm621, %v3449, 0.0
        %v3460 = vadd.f32 %v3458, %v3459
        %v3461 = vsel %vm621, %v3450, 0.0
        %v3462 = vadd.f32 %v3460, %v3461
        %v3463 = vsel %vm621, %v3451, 0.0
        %v3464 = vadd.f32 %v3462, %v3463
        %v3465 = vsel %vm621, %v3452, 0.0
        %v3466 = vadd.f32 %v3464, %v3465
        %v3467 = vsel %vm621, %v3453, 0.0
        %v3468 = vadd.f32 %v3466, %v3467
        %v3469 = vrot.slane %v3468, 4
        %v3470 = vadd.f32 %v3468, %v3469
        %v3471 = vrot.slane %v3470, 2
        %v3472 = vadd.f32 %v3470, %v3471
        %v3473 = vrot.slane %v3472, 1
        %v3474 = vadd.f32 %v3472, %v3473
        %v3475 = vmul.f32 %v620, %v3445
        %v3476 = vsel %vm621, %v3475, 0.0
        %3477 = vadd.xlane.f32.xlu0 %v3476
        %v3478 = vpop.xlane.xlu0 %3477
        %v3479 = vmul.f32 %v620, %v3474
        %v3480 = vsel %vm621, %v3479, 0.0
        %3481 = vadd.xlane.f32.xlu0 %v3480
        %v3482 = vpop.xlane.xlu0 %3481
        %v3483 = vmul.f32 %v3478, %v680
        %v3484 = vmul.f32 %v3482, %v680
        %v3485 = vmul.f32 %v3483, %v3483
        %v3486 = vsub.f32 %v3484, %v3485
        %v3487 = vadd.f32 %v3486, 1e-05
        %v3488 = vrsqrt.pop %v3487
        %v3489 = vmul.f32 %v620, %v3483
        %v3490 = vsel %vm621, %v3489, 0.0
        %v3491 = vrot.slane %v3490, 4
        %v3492 = vadd.f32 %v3490, %v3491
        %v3493 = vrot.slane %v3492, 2
        %v3494 = vadd.f32 %v3492, %v3493
        %v3495 = vrot.slane %v3494, 1
        %v3496 = vadd.f32 %v3494, %v3495
        %v3497 = vmul.f32 %v620, %v3488
        %v3498 = vsel %vm621, %v3497, 0.0
        %v3499 = vrot.slane %v3498, 4
        %v3500 = vadd.f32 %v3498, %v3499
        %v3501 = vrot.slane %v3500, 2
        %v3502 = vadd.f32 %v3500, %v3501
        %v3503 = vrot.slane %v3502, 1
        %v3504 = vadd.f32 %v3502, %v3503
        %v3505 = vsub.f32 %v3417, %v3496
        %v3506 = vsub.f32 %v3418, %v3496
        %v3507 = vsub.f32 %v3419, %v3496
        %v3508 = vsub.f32 %v3420, %v3496
        %v3509 = vsub.f32 %v3421, %v3496
        %v3510 = vsub.f32 %v3422, %v3496
        %v3511 = vsub.f32 %v3423, %v3496
        %v3512 = vsub.f32 %v3424, %v3496
        %v3513 = vmul.f32 %v3505, %v3504
        %v3514 = vmul.f32 %v3506, %v3504
        %v3515 = vmul.f32 %v3507, %v3504
        %v3516 = vmul.f32 %v3508, %v3504
        %v3517 = vmul.f32 %v3509, %v3504
        %v3518 = vmul.f32 %v3510, %v3504
        %v3519 = vmul.f32 %v3511, %v3504
        %v3520 = vmul.f32 %v3512, %v3504
        %v3522 = vlaneseq
        %v3523 = vshrl.u32 %v3522, 7
        %v3524 = vsub.s32 0, %v3523
        %v3525 = vrot.slane %v2479, %v3524
        %v3527 = vmul.f32 %v3513, %v3525
        %v3528 = vmul.f32 %v3514, %v3525
        %v3529 = vmul.f32 %v3515, %v3525
        %v3530 = vmul.f32 %v3516, %v3525
        %v3531 = vmul.f32 %v3517, %v3525
        %v3532 = vmul.f32 %v3518, %v3525
        %v3533 = vmul.f32 %v3519, %v3525
        %v3534 = vmul.f32 %v3520, %v3525
        %v3536 = vlaneseq
        %v3537 = vshrl.u32 %v3536, 7
        %v3538 = vsub.s32 0, %v3537
        %v3539 = vrot.slane %v2480, %v3538
        %v3541 = vadd.f32 %v3527, %v3539
        %v3542 = vadd.f32 %v3528, %v3539
        %v3543 = vadd.f32 %v3529, %v3539
        %v3544 = vadd.f32 %v3530, %v3539
        %v3545 = vadd.f32 %v3531, %v3539
        %v3546 = vadd.f32 %v3532, %v3539
        %v3547 = vadd.f32 %v3533, %v3539
        %v3548 = vadd.f32 %v3534, %v3539
        %v3549 = vxor.u32 %v3541, 2147483648
        %v3550 = vxor.u32 %v3542, 2147483648
        %v3551 = vxor.u32 %v3543, 2147483648
        %v3552 = vxor.u32 %v3544, 2147483648
        %v3553 = vxor.u32 %v3545, 2147483648
        %v3554 = vxor.u32 %v3546, 2147483648
        %v3555 = vxor.u32 %v3547, 2147483648
        %v3556 = vxor.u32 %v3548, 2147483648
        %v3557 = vmul.f32 %v3549, 1.442695
        %v3558 = vpow.pop %v3557
        %v3559 = vmul.f32 %v3550, 1.442695
        %v3560 = vpow.pop %v3559
        %v3561 = vmul.f32 %v3551, 1.442695
        %v3562 = vpow.pop %v3561
        %v3563 = vmul.f32 %v3552, 1.442695
        %v3564 = vpow.pop %v3563
        %v3565 = vmul.f32 %v3553, 1.442695
        %v3566 = vpow.pop %v3565
        %v3567 = vmul.f32 %v3554, 1.442695
        %v3568 = vpow.pop %v3567
        %v3569 = vmul.f32 %v3555, 1.442695
        %v3570 = vpow.pop %v3569
        %v3571 = vmul.f32 %v3556, 1.442695
        %v3572 = vpow.pop %v3571
        %v3573 = vadd.f32 %v3558, 1.0
        %v3574 = vadd.f32 %v3560, 1.0
        %v3575 = vadd.f32 %v3562, 1.0
        %v3576 = vadd.f32 %v3564, 1.0
        %v3577 = vadd.f32 %v3566, 1.0
        %v3578 = vadd.f32 %v3568, 1.0
        %v3579 = vadd.f32 %v3570, 1.0
        %v3580 = vadd.f32 %v3572, 1.0
        %v3581 = vrcp.pop %v3573
        %v3582 = vmul.f32 1.0, %v3581
        %v3583 = vrcp.pop %v3574
        %v3584 = vmul.f32 1.0, %v3583
        %v3585 = vrcp.pop %v3575
        %v3586 = vmul.f32 1.0, %v3585
        %v3587 = vrcp.pop %v3576
        %v3588 = vmul.f32 1.0, %v3587
        %v3589 = vrcp.pop %v3577
        %v3590 = vmul.f32 1.0, %v3589
        %v3591 = vrcp.pop %v3578
        %v3592 = vmul.f32 1.0, %v3591
        %v3593 = vrcp.pop %v3579
        %v3594 = vmul.f32 1.0, %v3593
        %v3595 = vrcp.pop %v3580
        %v3596 = vmul.f32 1.0, %v3595
        %v3597 = vmul.f32 %v3541, %v3582
        %v3598 = vmul.f32 %v3542, %v3584
        %v3599 = vmul.f32 %v3543, %v3586
        %v3600 = vmul.f32 %v3544, %v3588
        %v3601 = vmul.f32 %v3545, %v3590
        %v3602 = vmul.f32 %v3546, %v3592
        %v3603 = vmul.f32 %v3547, %v3594
        %v3604 = vmul.f32 %v3548, %v3596
        %v3605 = vpack.c.bf16 %v3598, %v3597
        %v3606 = vpack.c.bf16 %v3600, %v3599
        %v3607 = vpack.c.bf16 %v3602, %v3601
        %v3608 = vpack.c.bf16 %v3604, %v3603
        %v3613 = vunpack.c.l.b16 %v3605
        %v3614 = vunpack.c.h.b16 %v3605
        %v3615 = vunpack.c.l.b16 %v3606
        %v3616 = vunpack.c.h.b16 %v3606
        %v3617 = vunpack.c.l.b16 %v3607
        %v3618 = vunpack.c.h.b16 %v3607
        %v3619 = vunpack.c.l.b16 %v3608
        %v3620 = vunpack.c.h.b16 %v3608
        %v3621 = vpack.c.b16 %v3613, %v3613
        %v3622 = vpack.c.b16 %v3614, %v3614
        %v3623 = vpack.c.b16 %v3615, %v3615
        %v3624 = vpack.c.b16 %v3616, %v3616
        %v3625 = vpack.c.b16 %v3617, %v3617
        %v3626 = vpack.c.b16 %v3618, %v3618
        %v3627 = vpack.c.b16 %v3619, %v3619
        %v3628 = vpack.c.b16 %v3620, %v3620
        %v3630 = vshrl.u32 %v3621, 16
        %v3632 = vrot.slane %v3630, 7
        %v3633 = vshll.u32 %v3621, 16
        %v3635 = vor.u32 %v3632, %v3633
        %v3637 = vshrl.u32 %v3622, 16
        %v3639 = vrot.slane %v3637, 7
        %v3640 = vshll.u32 %v3622, 16
        %v3642 = vor.u32 %v3639, %v3640
        %v3644 = vshrl.u32 %v3623, 16
        %v3646 = vrot.slane %v3644, 7
        %v3647 = vshll.u32 %v3623, 16
        %v3649 = vor.u32 %v3646, %v3647
        %v3651 = vshrl.u32 %v3624, 16
        %v3653 = vrot.slane %v3651, 7
        %v3654 = vshll.u32 %v3624, 16
        %v3656 = vor.u32 %v3653, %v3654
        %v3658 = vshrl.u32 %v3625, 16
        %v3660 = vrot.slane %v3658, 7
        %v3661 = vshll.u32 %v3625, 16
        %v3663 = vor.u32 %v3660, %v3661
        %v3665 = vshrl.u32 %v3626, 16
        %v3667 = vrot.slane %v3665, 7
        %v3668 = vshll.u32 %v3626, 16
        %v3670 = vor.u32 %v3667, %v3668
        %v3672 = vshrl.u32 %v3627, 16
        %v3674 = vrot.slane %v3672, 7
        %v3675 = vshll.u32 %v3627, 16
        %v3677 = vor.u32 %v3674, %v3675
        %v3679 = vshrl.u32 %v3628, 16
        %v3681 = vrot.slane %v3679, 7
        %v3682 = vshll.u32 %v3628, 16
        %v3684 = vor.u32 %v3681, %v3682
        %v3693 = vsel %vm2793, 0, %v3635
        %v3694 = vsel %vm2793, 0, %v3642
        %v3695 = vsel %vm2793, 0, %v3649
        %v3696 = vsel %vm2793, 0, %v3656
        %v3697 = vsel %vm2793, 0, %v3663
        %v3698 = vsel %vm2793, 0, %v3670
        %v3699 = vsel %vm2793, 0, %v3677
        %v3700 = vsel %vm2793, 0, %v3684
        %v3701 = vsel %vm2804, %v3693, 0
        %v3702 = vsel %vm2804, %v3694, 0
        %v3703 = vsel %vm2804, %v3695, 0
        %v3704 = vsel %vm2804, %v3696, 0
        %v3705 = vsel %vm2804, %v3697, 0
        %v3706 = vsel %vm2804, %v3698, 0
        %v3707 = vsel %vm2804, %v3699, 0
        %v3708 = vsel %vm2804, %v3700, 0
        %v3710 = vshrl.u32 %v3701, 16
        %v3712 = vshll.u32 %v3701, 16
        %v3714 = vrot.slane %v3712, 1
        %v3715 = vor.u32 %v3710, %v3714
        %v3717 = vshrl.u32 %v3702, 16
        %v3719 = vshll.u32 %v3702, 16
        %v3721 = vrot.slane %v3719, 1
        %v3722 = vor.u32 %v3717, %v3721
        %v3724 = vshrl.u32 %v3703, 16
        %v3726 = vshll.u32 %v3703, 16
        %v3728 = vrot.slane %v3726, 1
        %v3729 = vor.u32 %v3724, %v3728
        %v3731 = vshrl.u32 %v3704, 16
        %v3733 = vshll.u32 %v3704, 16
        %v3735 = vrot.slane %v3733, 1
        %v3736 = vor.u32 %v3731, %v3735
        %v3738 = vshrl.u32 %v3705, 16
        %v3740 = vshll.u32 %v3705, 16
        %v3742 = vrot.slane %v3740, 1
        %v3743 = vor.u32 %v3738, %v3742
        %v3745 = vshrl.u32 %v3706, 16
        %v3747 = vshll.u32 %v3706, 16
        %v3749 = vrot.slane %v3747, 1
        %v3750 = vor.u32 %v3745, %v3749
        %v3752 = vshrl.u32 %v3707, 16
        %v3754 = vshll.u32 %v3707, 16
        %v3756 = vrot.slane %v3754, 1
        %v3757 = vor.u32 %v3752, %v3756
        %3758 = vrot.lane.b32.xlu0 %v3715, 32
        %v3759 = vpop.permute.xlu0 %3758
        %3760 = vrot.lane.b32.xlu0 %v3722, 32
        %v3761 = vpop.permute.xlu0 %3760
        %3762 = vrot.lane.b32.xlu0 %v3729, 32
        %v3763 = vpop.permute.xlu0 %3762
        %3764 = vrot.lane.b32.xlu0 %v3736, 32
        %v3765 = vpop.permute.xlu0 %3764
        %3766 = vrot.lane.b32.xlu0 %v3743, 32
        %v3767 = vpop.permute.xlu0 %3766
        %3768 = vrot.lane.b32.xlu0 %v3750, 32
        %v3769 = vpop.permute.xlu0 %3768
        %3770 = vrot.lane.b32.xlu0 %v3757, 32
        %v3771 = vpop.permute.xlu0 %3770
        %v3779 = vrot.slane %v3701, 1
        %v3780 = vrot.slane %v3702, 1
        %v3781 = vrot.slane %v3703, 1
        %v3782 = vrot.slane %v3704, 1
        %v3783 = vrot.slane %v3705, 1
        %v3784 = vrot.slane %v3706, 1
        %v3785 = vrot.slane %v3707, 1
        %3786 = vrot.lane.b32.xlu0 %v3779, 64
        %v3787 = vpop.permute.xlu0 %3786
        %3788 = vrot.lane.b32.xlu0 %v3780, 64
        %v3789 = vpop.permute.xlu0 %3788
        %3790 = vrot.lane.b32.xlu0 %v3781, 64
        %v3791 = vpop.permute.xlu0 %3790
        %3792 = vrot.lane.b32.xlu0 %v3782, 64
        %v3793 = vpop.permute.xlu0 %3792
        %3794 = vrot.lane.b32.xlu0 %v3783, 64
        %v3795 = vpop.permute.xlu0 %3794
        %3796 = vrot.lane.b32.xlu0 %v3784, 64
        %v3797 = vpop.permute.xlu0 %3796
        %3798 = vrot.lane.b32.xlu0 %v3785, 64
        %v3799 = vpop.permute.xlu0 %3798
        %3801 = vrot.lane.b32.xlu0 %v3701, 96
        %v3802 = vpop.permute.xlu0 %3801
        %3803 = vrot.lane.b32.xlu0 %v3702, 96
        %v3804 = vpop.permute.xlu0 %3803
        %3805 = vrot.lane.b32.xlu0 %v3703, 96
        %v3806 = vpop.permute.xlu0 %3805
        %3807 = vrot.lane.b32.xlu0 %v3704, 96
        %v3808 = vpop.permute.xlu0 %3807
        %3809 = vrot.lane.b32.xlu0 %v3705, 96
        %v3810 = vpop.permute.xlu0 %3809
        %3811 = vrot.lane.b32.xlu0 %v3706, 96
        %v3812 = vpop.permute.xlu0 %3811
        %3813 = vrot.lane.b32.xlu0 %v3707, 96
        %v3814 = vpop.permute.xlu0 %3813
        %3815 = vrot.lane.b32.xlu0 %v3708, 96
        %v3816 = vpop.permute.xlu0 %3815
        %v3818 = vshrl.u32 %v3708, 16
        %v3820 = vshll.u32 %v3708, 16
        %v3822 = vrot.slane %v3820, 1
        %v3823 = vor.u32 %v3818, %v3822
        %v3824 = vrot.slane %v3708, 1
        %3825 = vrot.lane.b32.xlu0 %v3779, 32
        %v3826 = vpop.permute.xlu0 %3825
        %3827 = vrot.lane.b32.xlu0 %v3780, 32
        %v3828 = vpop.permute.xlu0 %3827
        %3829 = vrot.lane.b32.xlu0 %v3781, 32
        %v3830 = vpop.permute.xlu0 %3829
        %3831 = vrot.lane.b32.xlu0 %v3782, 32
        %v3832 = vpop.permute.xlu0 %3831
        %3833 = vrot.lane.b32.xlu0 %v3783, 32
        %v3834 = vpop.permute.xlu0 %3833
        %3835 = vrot.lane.b32.xlu0 %v3784, 32
        %v3836 = vpop.permute.xlu0 %3835
        %3837 = vrot.lane.b32.xlu0 %v3785, 32
        %v3838 = vpop.permute.xlu0 %3837
        %3839 = vrot.lane.b32.xlu0 %v3824, 32
        %v3840 = vpop.permute.xlu0 %3839
        %3841 = vrot.lane.b32.xlu0 %v3702, 64
        %v3842 = vpop.permute.xlu0 %3841
        %3843 = vrot.lane.b32.xlu0 %v3703, 64
        %v3844 = vpop.permute.xlu0 %3843
        %3845 = vrot.lane.b32.xlu0 %v3704, 64
        %v3846 = vpop.permute.xlu0 %3845
        %3847 = vrot.lane.b32.xlu0 %v3705, 64
        %v3848 = vpop.permute.xlu0 %3847
        %3849 = vrot.lane.b32.xlu0 %v3706, 64
        %v3850 = vpop.permute.xlu0 %3849
        %3851 = vrot.lane.b32.xlu0 %v3707, 64
        %v3852 = vpop.permute.xlu0 %3851
        %3853 = vrot.lane.b32.xlu0 %v3708, 64
        %v3854 = vpop.permute.xlu0 %3853
        %3855 = vrot.lane.b32.xlu0 %v3722, 96
        %v3856 = vpop.permute.xlu0 %3855
        %3857 = vrot.lane.b32.xlu0 %v3729, 96
        %v3858 = vpop.permute.xlu0 %3857
        %3859 = vrot.lane.b32.xlu0 %v3736, 96
        %v3860 = vpop.permute.xlu0 %3859
        %3861 = vrot.lane.b32.xlu0 %v3743, 96
        %v3862 = vpop.permute.xlu0 %3861
        %3863 = vrot.lane.b32.xlu0 %v3750, 96
        %v3864 = vpop.permute.xlu0 %3863
        %3865 = vrot.lane.b32.xlu0 %v3757, 96
        %v3866 = vpop.permute.xlu0 %3865
        %3867 = vrot.lane.b32.xlu0 %v3823, 96
        %v3868 = vpop.permute.xlu0 %3867
        %v3870 = vsel %vm621, %v3701, %v3759
        %v3872 = vsel %vm621, %v3702, %v3761
        %v3874 = vsel %vm621, %v3703, %v3763
        %v3876 = vsel %vm621, %v3704, %v3765
        %v3878 = vsel %vm621, %v3705, %v3767
        %v3880 = vsel %vm621, %v3706, %v3769
        %v3882 = vsel %vm621, %v3707, %v3771
        %v3884 = vsel %vm1299, %v3870, %v3787
        %v3886 = vsel %vm1299, %v3872, %v3789
        %v3888 = vsel %vm1299, %v3874, %v3791
        %v3890 = vsel %vm1299, %v3876, %v3793
        %v3892 = vsel %vm1299, %v3878, %v3795
        %v3894 = vsel %vm1299, %v3880, %v3797
        %v3896 = vsel %vm1299, %v3882, %v3799
        %v3898 = vsel %vm3022, %v3007, %v3802
        %v3900 = vsel %vm3022, %v3884, %v3804
        %v3902 = vsel %vm3022, %v3886, %v3806
        %v3904 = vsel %vm3022, %v3888, %v3808
        %v3906 = vsel %vm3022, %v3890, %v3810
        %v3908 = vsel %vm3022, %v3892, %v3812
        %v3910 = vsel %vm3022, %v3894, %v3814
        %v3912 = vsel %vm3022, %v3896, %v3816
        %v3915 = vsel %vm621, %v3715, %v3826
        %v3918 = vsel %vm621, %v3722, %v3828
        %v3921 = vsel %vm621, %v3729, %v3830
        %v3924 = vsel %vm621, %v3736, %v3832
        %v3927 = vsel %vm621, %v3743, %v3834
        %v3930 = vsel %vm621, %v3750, %v3836
        %v3933 = vsel %vm621, %v3757, %v3838
        %v3936 = vsel %vm621, %v3823, %v3840
        %v3938 = vsel %vm1299, %v3915, %v3842
        %v3940 = vsel %vm1299, %v3918, %v3844
        %v3942 = vsel %vm1299, %v3921, %v3846
        %v3944 = vsel %vm1299, %v3924, %v3848
        %v3946 = vsel %vm1299, %v3927, %v3850
        %v3948 = vsel %vm1299, %v3930, %v3852
        %v3950 = vsel %vm1299, %v3933, %v3854
        %v3951 = vsel %vm1299, %v3936, %v2973
        %v3953 = vsel %vm3022, %v3938, %v3856
        %v3955 = vsel %vm3022, %v3940, %v3858
        %v3957 = vsel %vm3022, %v3942, %v3860
        %v3959 = vsel %vm3022, %v3944, %v3862
        %v3961 = vsel %vm3022, %v3946, %v3864
        %v3963 = vsel %vm3022, %v3948, %v3866
        %v3965 = vsel %vm3022, %v3950, %v3868
        %v3966 = vsel %vm3022, %v3951, %v2989
        %v3983 = vunpack.c.l.b16 %v3898
        %v3984 = vunpack.c.l.b16 %v3953
        %v3985 = vunpack.c.l.b16 %v3780
        %v3986 = vunpack.c.l.b16 %v3900
        %v3987 = vunpack.c.l.b16 %v3955
        %v3988 = vunpack.c.l.b16 %v3781
        %v3989 = vunpack.c.l.b16 %v3902
        %v3990 = vunpack.c.l.b16 %v3957
        %v3991 = vunpack.c.l.b16 %v3782
        %v3992 = vunpack.c.l.b16 %v3904
        %v3993 = vunpack.c.l.b16 %v3959
        %v3994 = vunpack.c.l.b16 %v3783
        %v3995 = vunpack.c.l.b16 %v3906
        %v3996 = vunpack.c.l.b16 %v3961
        %v3997 = vunpack.c.l.b16 %v3784
        %v3998 = vunpack.c.l.b16 %v3908
        %v3999 = vunpack.c.l.b16 %v3963
        %v4000 = vunpack.c.l.b16 %v3785
        %v4001 = vunpack.c.l.b16 %v3910
        %v4002 = vunpack.c.l.b16 %v3965
        %v4003 = vunpack.c.l.b16 %v3824
        %v4004 = vunpack.c.l.b16 %v3912
        %v4005 = vunpack.c.l.b16 %v3966
        %v4007 = vlaneseq
        %v4008 = vshrl.u32 %v4007, 7
        %v4009 = vsub.s32 0, %v4008
        %v4010 = vrot.slane %v2517, %v4009
        %v4012 = vpack.c.b16 %v3986, %v3983
        %v4013 = vpack.c.b16 %v3987, %v3984
        %v4014 = vpack.c.b16 %v3988, %v3985
        %v4015 = vpack.c.b16 %v3992, %v3989
        %v4016 = vpack.c.b16 %v3993, %v3990
        %v4017 = vpack.c.b16 %v3994, %v3991
        %v4018 = vpack.c.b16 %v3998, %v3995
        %v4019 = vpack.c.b16 %v3999, %v3996
        %v4020 = vpack.c.b16 %v4000, %v3997
        %v4021 = vpack.c.b16 %v4004, %v4001
        %v4022 = vpack.c.b16 %v4005, %v4002
        %v4023 = vpack.c.b16 %v3134, %v4003
        %v4068 = vunpack.c.l.b16 %v2481
        %v4069 = vunpack.c.l.b16 %v2482
        %v4070 = vunpack.c.l.b16 %v2483
        %v4071 = vunpack.c.l.b16 %v2484
        %v4072 = vunpack.c.l.b16 %v2485
        %v4073 = vunpack.c.l.b16 %v2486
        %v4074 = vunpack.c.l.b16 %v2487
        %v4075 = vunpack.c.l.b16 %v2488
        %v4076 = vunpack.c.l.b16 %v2489
        %v4077 = vunpack.c.l.b16 %v2490
        %v4078 = vunpack.c.l.b16 %v2491
        %v4079 = vunpack.c.l.b16 %v2492
        %v4080 = vunpack.c.l.b16 %v2493
        %v4081 = vunpack.c.l.b16 %v2494
        %v4082 = vunpack.c.l.b16 %v2495
        %v4083 = vunpack.c.l.b16 %v2496
        %v4084 = vunpack.c.l.b16 %v2497
        %v4085 = vunpack.c.l.b16 %v2498
        %v4086 = vunpack.c.l.b16 %v2499
        %v4087 = vunpack.c.l.b16 %v2500
        %v4088 = vunpack.c.l.b16 %v2501
        %v4089 = vunpack.c.l.b16 %v2502
        %v4090 = vunpack.c.l.b16 %v2503
        %v4091 = vunpack.c.l.b16 %v2504
        %v4092 = vunpack.c.l.b16 %v2505
        %v4093 = vunpack.c.l.b16 %v2506
        %v4094 = vunpack.c.l.b16 %v2507
        %v4095 = vunpack.c.l.b16 %v2508
        %v4096 = vunpack.c.l.b16 %v2509
        %v4097 = vunpack.c.l.b16 %v2510
        %v4098 = vunpack.c.l.b16 %v2511
        %v4099 = vunpack.c.l.b16 %v2512
        %v4100 = vunpack.c.l.b16 %v2513
        %v4101 = vunpack.c.l.b16 %v2514
        %v4102 = vunpack.c.l.b16 %v2515
        %v4103 = vunpack.c.l.b16 %v2516
        %v4104 = vpack.c.b16 %v4069, %v4068
        %v4105 = vpack.c.b16 %v4071, %v4070
        %v4106 = vpack.c.b16 %v4073, %v4072
        %v4107 = vpack.c.b16 %v4075, %v4074
        %v4108 = vpack.c.b16 %v4077, %v4076
        %v4109 = vpack.c.b16 %v4079, %v4078
        %v4110 = vpack.c.b16 %v4081, %v4080
        %v4111 = vpack.c.b16 %v4083, %v4082
        %v4112 = vpack.c.b16 %v4085, %v4084
        %v4113 = vpack.c.b16 %v4087, %v4086
        %v4114 = vpack.c.b16 %v4089, %v4088
        %v4115 = vpack.c.b16 %v4091, %v4090
        %v4116 = vpack.c.b16 %v4093, %v4092
        %v4117 = vpack.c.b16 %v4095, %v4094
        %v4118 = vpack.c.b16 %v4097, %v4096
        %v4119 = vpack.c.b16 %v4099, %v4098
        %v4120 = vpack.c.b16 %v4101, %v4100
        %v4121 = vpack.c.b16 %v4103, %v4102
        %v4141 = vsel %vm621, %v4014, 0
        %v4144 = vsel %vm621, %v4017, 0
        %v4147 = vsel %vm621, %v4020, 0
        %v4150 = vsel %vm621, %v4023, 0
        %4152 = vmatprep.subr.bf16.mxu0 0
        %4153 = vmatpush1.bf16.msra.mxu0 %v4104
        %4154 = vmatprep.subr.bf16.mxu0 0
        %4155 = vmatpush1.bf16.msra.mxu0 %v4105
        %4156 = vmatprep.subr.bf16.mxu0 0
        %4157 = vmatpush1.bf16.msra.mxu0 %v4106
        %4158 = vmatprep.subr.bf16.mxu0 0
        %4159 = vmatpush1.bf16.msra.mxu0 %v4107
        %4160 = vmatprep.subr.bf16.mxu0 0
        %4161 = vmatpush1.bf16.msra.mxu0 %v4108
        %4162 = vmatprep.subr.bf16.mxu0 0
        %4163 = vmatpush1.bf16.msra.mxu0 %v4109
        %4164 = vmatprep.subr.bf16.mxu0 0
        %4165 = vmatpush1.bf16.msra.mxu0 %v4110
        %4166 = vmatprep.subr.bf16.mxu0 0
        %4167 = vmatpush1.bf16.msra.mxu0 %v4111
        %4168 = vmatprep.subr.bf16.mxu0 0
        %4169 = vmatpush1.bf16.msra.mxu0 %v4112
        %4170 = vmatprep.subr.bf16.mxu0 0
        %4171 = vmatpush1.bf16.msra.mxu0 %v4113
        %4172 = vmatprep.subr.bf16.mxu0 0
        %4173 = vmatpush1.bf16.msra.mxu0 %v4114
        %4174 = vmatprep.subr.bf16.mxu0 0
        %4175 = vmatpush1.bf16.msra.mxu0 %v4115
        %4176 = vmatprep.subr.bf16.mxu0 0
        %4177 = vmatpush1.bf16.msra.mxu0 %v4116
        %4178 = vmatprep.subr.bf16.mxu0 0
        %4179 = vmatpush1.bf16.msra.mxu0 %v4117
        %4180 = vmatprep.subr.bf16.mxu0 0
        %4181 = vmatpush1.bf16.msra.mxu0 %v4118
        %4182 = vmatprep.subr.bf16.mxu0 0
        %4183 = vmatpush1.bf16.msra.mxu0 %v4119
        %4184 = vmatprep.mubr.bf16.mxu0 %v4013
        %4185 = vmatmul.mubr.bf16.gmra.mrb[0].mxu0 %v4012
        %v4186 = vpop.f32.mrb[0].mxu0
        %v4187 = vadd.f32 %v4010, %v4186
        %v4188 = vpop.f32.mrb[0].mxu0
        %v4189 = vpop.f32.mrb[0].mxu0
        %v4190 = vadd.f32 %v4010, %v4189
        %v4191 = vpop.f32.mrb[0].mxu0
        %4192 = vmatprep.mubr.bf16.mxu0 %v4016
        %4193 = vmatmul.mubr.bf16.gmra.mrb[0].mxu0 %v4015
        %v4194 = vpop.f32.mrb[0].mxu0
        %v4195 = vadd.f32 %v4010, %v4194
        %v4196 = vpop.f32.mrb[0].mxu0
        %v4197 = vpop.f32.mrb[0].mxu0
        %v4198 = vadd.f32 %v4010, %v4197
        %v4199 = vpop.f32.mrb[0].mxu0
        %4200 = vmatprep.mubr.bf16.mxu0 %v4019
        %4201 = vmatmul.mubr.bf16.gmra.mrb[0].mxu0 %v4018
        %v4202 = vpop.f32.mrb[0].mxu0
        %v4203 = vadd.f32 %v4010, %v4202
        %v4204 = vpop.f32.mrb[0].mxu0
        %v4205 = vpop.f32.mrb[0].mxu0
        %v4206 = vadd.f32 %v4010, %v4205
        %v4207 = vpop.f32.mrb[0].mxu0
        %4208 = vmatprep.mubr.bf16.mxu0 %v4022
        %4209 = vmatmul.mubr.bf16.gmra.mrb[0].mxu0 %v4021
        %v4210 = vpop.f32.mrb[0].mxu0
        %v4211 = vadd.f32 %v4010, %v4210
        %v4212 = vpop.f32.mrb[0].mxu0
        %v4213 = vpop.f32.mrb[0].mxu0
        %v4214 = vadd.f32 %v4010, %v4213
        %v4215 = vpop.f32.mrb[0].mxu0
        %4216 = vdwg.mxu0
        %4217 = vmatprep.subr.bf16.mxu0 0
        %4218 = vmatpush1.bf16.msra.mxu0 %v4120
        %4219 = vmatprep.subr.bf16.mxu0 0
        %4220 = vmatpush1.bf16.msra.mxu0 %v4121
        %4221 = vmatprep.subr.bf16.mxu0 0
        %4222 = vmatpush1.bf16.msra.mxu0 0
        %4223 = vmatprep.subr.bf16.mxu0 0
        %4224 = vmatpush1.bf16.msra.mxu0 0
        %4225 = vmatprep.subr.bf16.mxu0 0
        %4226 = vmatpush1.bf16.msra.mxu0 0
        %4227 = vmatprep.subr.bf16.mxu0 0
        %4228 = vmatpush1.bf16.msra.mxu0 0
        %4229 = vmatprep.subr.bf16.mxu0 0
        %4230 = vmatpush1.bf16.msra.mxu0 0
        %4231 = vmatprep.subr.bf16.mxu0 0
        %4232 = vmatpush1.bf16.msra.mxu0 0
        %4233 = vmatprep.subr.bf16.mxu0 0
        %4234 = vmatpush1.bf16.msra.mxu0 0
        %4235 = vmatprep.subr.bf16.mxu0 0
        %4236 = vmatpush1.bf16.msra.mxu0 0
        %4237 = vmatprep.subr.bf16.mxu0 0
        %4238 = vmatpush1.bf16.msra.mxu0 0
        %4239 = vmatprep.subr.bf16.mxu0 0
        %4240 = vmatpush1.bf16.msra.mxu0 0
        %4241 = vmatprep.subr.bf16.mxu0 0
        %4242 = vmatpush1.bf16.msra.mxu0 0
        %4243 = vmatprep.subr.bf16.mxu0 0
        %4244 = vmatpush1.bf16.msra.mxu0 0
        %4245 = vmatprep.subr.bf16.mxu0 0
        %4246 = vmatpush1.bf16.msra.mxu0 0
        %4247 = vmatprep.subr.bf16.mxu0 0
        %4248 = vmatpush1.bf16.msra.mxu0 0
        %4249 = vmatprep.mubr.bf16.mxu0 0
        %4250 = vmatmul.mubr.bf16.gmra.mrb[0].mxu0 %v4141
        %v4251 = vpop.f32.mrb[0].mxu0
        %v4252 = vadd.f32 %v4187, %v4251
        %v4253 = vpop.f32.mrb[0].mxu0
        %v4254 = vpop.f32.mrb[0].mxu0
        %v4255 = vadd.f32 %v4190, %v4254
        %v4256 = vpop.f32.mrb[0].mxu0
        %4257 = vmatprep.mubr.bf16.mxu0 0
        %4258 = vmatmul.mubr.bf16.gmra.mrb[0].mxu0 %v4144
        %v4259 = vpop.f32.mrb[0].mxu0
        %v4260 = vadd.f32 %v4195, %v4259
        %v4261 = vpop.f32.mrb[0].mxu0
        %v4262 = vpop.f32.mrb[0].mxu0
        %v4263 = vadd.f32 %v4198, %v4262
        %v4264 = vpop.f32.mrb[0].mxu0
        %4265 = vmatprep.mubr.bf16.mxu0 0
        %4266 = vmatmul.mubr.bf16.gmra.mrb[0].mxu0 %v4147
        %v4267 = vpop.f32.mrb[0].mxu0
        %v4268 = vadd.f32 %v4203, %v4267
        %v4269 = vpop.f32.mrb[0].mxu0
        %v4270 = vpop.f32.mrb[0].mxu0
        %v4271 = vadd.f32 %v4206, %v4270
        %v4272 = vpop.f32.mrb[0].mxu0
        %4273 = vmatprep.mubr.bf16.mxu0 0
        %4274 = vmatmul.mubr.bf16.gmra.mrb[0].mxu0 %v4150
        %v4275 = vpop.f32.mrb[0].mxu0
        %v4276 = vadd.f32 %v4211, %v4275
        %v4277 = vpop.f32.mrb[0].mxu0
        %v4278 = vpop.f32.mrb[0].mxu0
        %v4279 = vadd.f32 %v4214, %v4278
        %v4280 = vpop.f32.mrb[0].mxu0
        %4281 = vdwg.mxu0
        %v4282 = vpack.c.bf16 %v2432, %v2431
        %v4283 = vpack.c.bf16 %v2434, %v2433
        %v4284 = vpack.c.bf16 %v2436, %v2435
        %v4285 = vpack.c.bf16 %v2438, %v2437
        %v4287 = vlaneseq
        %v4288 = vshrl.u32 %v4287, 7
        %v4289 = vsub.s32 0, %v4288
        %v4290 = vrot.slane %v2522, %v4289
        %v4296 = vunpack.c.l.b16 %v2518
        %v4297 = vunpack.c.l.b16 %v2519
        %v4298 = vunpack.c.l.b16 %v2520
        %v4299 = vunpack.c.l.b16 %v2521
        %v4300 = vpack.c.b16 %v4297, %v4296
        %v4301 = vpack.c.b16 %v4299, %v4298
        %v4305 = vsel %vm621, %v4282, 0
        %v4308 = vsel %vm621, %v4283, 0
        %v4311 = vsel %vm621, %v4284, 0
        %v4314 = vsel %vm621, %v4285, 0
        %4316 = vmatprep.subr.bf16.mxu0 0
        %4317 = vmatpush1.bf16.msra.mxu0 %v4300
        %4318 = vmatprep.subr.bf16.mxu0 0
        %4319 = vmatpush1.bf16.msra.mxu0 %v4301
        %4320 = vmatprep.subr.bf16.mxu0 0
        %4321 = vmatpush1.bf16.msra.mxu0 0
        %4322 = vmatprep.subr.bf16.mxu0 0
        %4323 = vmatpush1.bf16.msra.mxu0 0
        %4324 = vmatprep.subr.bf16.mxu0 0
        %4325 = vmatpush1.bf16.msra.mxu0 0
        %4326 = vmatprep.subr.bf16.mxu0 0
        %4327 = vmatpush1.bf16.msra.mxu0 0
        %4328 = vmatprep.subr.bf16.mxu0 0
        %4329 = vmatpush1.bf16.msra.mxu0 0
        %4330 = vmatprep.subr.bf16.mxu0 0
        %4331 = vmatpush1.bf16.msra.mxu0 0
        %4332 = vmatprep.subr.bf16.mxu0 0
        %4333 = vmatpush1.bf16.msra.mxu0 0
        %4334 = vmatprep.subr.bf16.mxu0 0
        %4335 = vmatpush1.bf16.msra.mxu0 0
        %4336 = vmatprep.subr.bf16.mxu0 0
        %4337 = vmatpush1.bf16.msra.mxu0 0
        %4338 = vmatprep.subr.bf16.mxu0 0
        %4339 = vmatpush1.bf16.msra.mxu0 0
        %4340 = vmatprep.subr.bf16.mxu0 0
        %4341 = vmatpush1.bf16.msra.mxu0 0
        %4342 = vmatprep.subr.bf16.mxu0 0
        %4343 = vmatpush1.bf16.msra.mxu0 0
        %4344 = vmatprep.subr.bf16.mxu0 0
        %4345 = vmatpush1.bf16.msra.mxu0 0
        %4346 = vmatprep.subr.bf16.mxu0 0
        %4347 = vmatpush1.bf16.msra.mxu0 0
        %4348 = vmatprep.mubr.bf16.mxu0 0
        %4349 = vmatmul.mubr.bf16.gmra.mrb[0].mxu0 %v4305
        %v4350 = vpop.f32.mrb[0].mxu0
        %v4351 = vadd.f32 %v4290, %v4350
        %v4352 = vpop.f32.mrb[0].mxu0
        %v4353 = vpop.f32.mrb[0].mxu0
        %v4354 = vadd.f32 %v4290, %v4353
        %v4355 = vpop.f32.mrb[0].mxu0
        %4356 = vmatprep.mubr.bf16.mxu0 0
        %4357 = vmatmul.mubr.bf16.gmra.mrb[0].mxu0 %v4308
        %v4358 = vpop.f32.mrb[0].mxu0
        %v4359 = vadd.f32 %v4290, %v4358
        %v4360 = vpop.f32.mrb[0].mxu0
        %v4361 = vpop.f32.mrb[0].mxu0
        %v4362 = vadd.f32 %v4290, %v4361
        %v4363 = vpop.f32.mrb[0].mxu0
        %4364 = vmatprep.mubr.bf16.mxu0 0
        %4365 = vmatmul.mubr.bf16.gmra.mrb[0].mxu0 %v4311
        %v4366 = vpop.f32.mrb[0].mxu0
        %v4367 = vadd.f32 %v4290, %v4366
        %v4368 = vpop.f32.mrb[0].mxu0
        %v4369 = vpop.f32.mrb[0].mxu0
        %v4370 = vadd.f32 %v4290, %v4369
        %v4371 = vpop.f32.mrb[0].mxu0
        %4372 = vmatprep.mubr.bf16.mxu0 0
        %4373 = vmatmul.mubr.bf16.gmra.mrb[0].mxu0 %v4314
        %v4374 = vpop.f32.mrb[0].mxu0
        %v4375 = vadd.f32 %v4290, %v4374
        %v4376 = vpop.f32.mrb[0].mxu0
        %v4377 = vpop.f32.mrb[0].mxu0
        %v4378 = vadd.f32 %v4290, %v4377
        %v4379 = vpop.f32.mrb[0].mxu0
        %4380 = vdwg.mxu0
        %v4381 = vadd.f32 %v4252, %v4351
        %v4382 = vadd.f32 %v4255, %v4354
        %v4383 = vadd.f32 %v4260, %v4359
        %v4384 = vadd.f32 %v4263, %v4362
        %v4385 = vadd.f32 %v4268, %v4367
        %v4386 = vadd.f32 %v4271, %v4370
        %v4387 = vadd.f32 %v4276, %v4375
        %v4388 = vadd.f32 %v4279, %v4378
        %4389 = vst.msk [vmem:[%s579] sm:$0xff] %vm621, %v4381
        %4390 = vst.msk [vmem:[%s579 + $0x8] sm:$0xff] %vm621, %v4382
        %4391 = vst.msk [vmem:[%s579 + $0x10] sm:$0xff] %vm621, %v4383
        %4392 = vst.msk [vmem:[%s579 + $0x18] sm:$0xff] %vm621, %v4384
        %4393 = vst.msk [vmem:[%s579 + $0x20] sm:$0xff] %vm621, %v4385
        %4394 = vst.msk [vmem:[%s579 + $0x28] sm:$0xff] %vm621, %v4386
        %4395 = vst.msk [vmem:[%s579 + $0x30] sm:$0xff] %vm621, %v4387
        %4396 = vst.msk [vmem:[%s579 + $0x38] sm:$0xff] %vm621, %v4388
        %s4397 = sand.u32 %s428, 1
        %s4398 = scalar_lea.sflag [#allocation3], %s4397
        %s4399 = sand.u32 %s428, 1
        %s4400 = smul.addr %s4399, 64
        %s4401 = scalar_lea.vmem [#allocation2], %s4400
        // Predicated region
        $region93: #{mid_block_forward.3} parent=91 // pred_check
          %p4402 = pneg %p438
        $region94: #{mid_block_forward.3} parent=91 // pred_check_branch
          %4404 = sbr.rel (%p4402) target = $region96
        $region95: #{mid_block_forward.3} parent=91 // pred_region
          %s4406 = ssub.s32 1024, 1024
          %4407 = vsyncadd %s4398, %s4406
          %s4408 = smul.addr %s32, 8
          %s4409 = smul.addr %s4408, 128
          %s4410 = scalar_lea.hbm %s18, %s4409
          %s4411 = sshll.u32 %s4401, 4
          %s4412 = int_to_ptr.vmem [resolvable:$true] %s4411
          %4417 = dma.vmem_to_hbm [thread:$0]  %s4412, 1024, %s4410, %s4398, 128, 128, 8
        $region96: #{mid_block_forward.3} parent=91 // pred_fallthru
          _
      $region92: #{mid_block_forward.3} parent=5 // pred_fallthru
        _
      %p4418 = scmp.le.s32.totalorder 2, %s27
      // Predicated region
      $region97: #{mid_block_forward.3} parent=5 // pred_check
        %p4419 = pneg %p4418
      $region98: #{mid_block_forward.3} parent=5 // pred_check_branch
        %4421 = sbr.rel (%p4419) target = $region100
      $region99: #{mid_block_forward.3} parent=5 // pred_region
        %s4422 = ssub.s32 %s27, 2
        // Predicated region
        $region101: #{mid_block_forward.3} parent=99 // pred_check
          %p4423 = pneg %p444
        $region102: #{mid_block_forward.3} parent=99 // pred_check_branch
          %4425 = sbr.rel (%p4423) target = $region104
        $region103: #{mid_block_forward.3} parent=99 // pred_region
          %s4426 = sand.u32 %s429, 1
          %s4427 = scalar_lea.sflag [#allocation3], %s4426
          %s4428 = sand.u32 %s429, 1
          %s4429 = smul.addr %s4428, 64
          %s4430 = scalar_lea.vmem [#allocation2], %s4429
          %4431 = dma.done %s4427, 1024
        $region104: #{mid_block_forward.3} parent=99 // pred_fallthru
          _
      $region100: #{mid_block_forward.3} parent=5 // pred_fallthru
        _
    $region6: #{mid_block_forward.3} parent=1 // loop_footer
      %s31 = sadd.s32 1, %s27
    $region7: #{mid_block_forward.3} parent=1 // loop_footer_branch
      %26 = sbr.rel target = $region3
    $region8: #{mid_block_forward.3} parent=1 // loop_exit
      _
    %4432 = vsyncpa [#allocation3], 1
    %s4433 = scalar_lea.sflag [#allocation3], 1
    %4434 = vsyncpa %s4433, 1

</llo_original>
